<compile_context>
chip_gen: v6e
topology: v6e:2x2x1
jax: 0.10.0
libtpu: 0.0.40
codegen_flags: <defaults>
</compile_context>

<pallas_src>
import functools

import numpy as np
import jax
import jax.numpy as jnp
from jax import lax
from jax.experimental import pallas as pl
from jax.experimental.pallas import tpu as pltpu


# ---------------------------------------------------------------------------
# Deterministic "parameter" init (matches _fspecial_gauss_1d in the module).
# ---------------------------------------------------------------------------
def _round_up(v: int, m: int) -> int:
    return ((v + m - 1) // m) * m


def _fspecial_gauss_1d(size: int, sigma: float) -> np.ndarray:
    coords = np.arange(size, dtype=np.float32) - size // 2
    g = np.exp(-(coords ** 2) / (2.0 * sigma ** 2))
    g = g / g.sum()
    return g.astype(np.float32)  # shape (size,)


# ---------------------------------------------------------------------------
# Static per-level geometry and constant band / pooling matrices.
# ---------------------------------------------------------------------------
def _level_geometry(H, W, levels, ws):
    metas = []
    h, w = H, W
    for lvl in range(levels):
        rh = h if lvl == 0 else _round_up(h, 8)      # plane rows (zero padded)
        rw = w if lvl == 0 else _round_up(w, 128)    # plane cols (zero padded)
        ho, wo = h - ws + 1, w - ws + 1              # valid blur output size
        metas.append(dict(H=h, W=w, RH=rh, RW=rw, Ho=ho, Wo=wo,
                          HoP=_round_up(max(ho, 1), 8),
                          WoP=_round_up(max(wo, 1), 128)))
        ph, pw = h % 2, w % 2                        # F.avg_pool2d padding
        h = (h + 2 * ph - 2) // 2 + 1
        w = (w + 2 * pw - 2) // 2 + 1
    return metas


def _build_matrices(metas, win):
    """Band (blur) and pooling matrices.

    INVARIANT the kernel relies on: every row/col outside the valid region is
    EXACTLY zero, so blurred moments are exactly 0 in padded rows/cols and
    cs_map / ssim_map are exactly 1.0 there (enables the un-masked mean).
    """
    ws = int(win.size)
    mats = []
    # Blur: h = plane @ Bw (width pass), v = Bh @ h (height pass).
    for m in metas:
        Bw = np.zeros((m["RW"], m["WoP"]), np.float32)
        for o in range(m["Wo"]):
            Bw[o:o + ws, o] = win
        Bh = np.zeros((m["HoP"], m["RH"]), np.float32)
        for o in range(m["Ho"]):
            Bh[o, o:o + ws] = win
        mats += [Bw, Bh]
    # Pooling: pooled = Ph @ plane @ Pw reproduces
    # F.avg_pool2d(kernel=2, padding=(H%2, W%2), count_include_pad=True).
    for lvl in range(len(metas) - 1):
        cur, nxt = metas[lvl], metas[lvl + 1]
        pad_h, pad_w = cur["H"] % 2, cur["W"] % 2
        Pw = np.zeros((cur["RW"], nxt["RW"]), np.float32)
        for j in range(nxt["W"]):
            for t in range(2):
                src = 2 * j + t - pad_w
                if 0 <= src < cur["W"]:
                    Pw[src, j] = 0.5
        Ph = np.zeros((nxt["RH"], cur["RH"]), np.float32)
        for i in range(nxt["H"]):
            for t in range(2):
                src = 2 * i + t - pad_h
                if 0 <= src < cur["H"]:
                    Ph[i, src] = 0.5
        mats += [Pw, Ph]
    return mats


# ---------------------------------------------------------------------------
# Fused Pallas kernel: one (n*c) plane through all MS-SSIM levels.
# ---------------------------------------------------------------------------
def _ms_ssim_kernel(x_ref, y_ref, *refs, metas, c1, c2, inv_range, lp):
    L = len(metas)
    out_ref = refs[-1]          # (1, LP, 128) VMEM
    mat_refs = refs[:-1]        # Bw0, Bh0, ..., Bw4, Bh4, Pw0, Ph0, ..., Pw3, Ph3

    # Scale to [0, 1] in VMEM (c1/c2 already use data_range = 1).
    x2 = x_ref[0] * inv_range   # (H, W) f32, resident for all levels
    y2 = y_ref[0] * inv_range

    stats = []
    for lvl in range(L):
        m = metas[lvl]
        RH, RW = m["RH"], m["RW"]
        Ho, Wo = m["Ho"], m["Wo"]
        bw = mat_refs[2 * lvl][...]        # (RW, WoP)  bf16
        bh = mat_refs[2 * lvl + 1][...]    # (HoP, RH)  bf16

        xb = x2.astype(jnp.bfloat16)
        yb = y2.astype(jnp.bfloat16)

        # ---- separable Gaussian blur of the 5 statistics on the MXU (bf16).
        # Concatenate in f32 (offsets stay 8-sublane aligned), cast once.
        stacked = jnp.concatenate(
            [x2, y2, x2 * x2, y2 * y2, x2 * y2],
            axis=0).astype(jnp.bfloat16)                          # (5*RH, RW)
        hpass = jnp.dot(stacked, bw,
                        preferred_element_type=jnp.float32)       # (5*RH, WoP)

        def vpass(s):
            sl = hpass[s * RH:(s + 1) * RH, :].astype(jnp.bfloat16)
            return jnp.dot(bh, sl, preferred_element_type=jnp.float32)

        mu1, mu2 = vpass(0), vpass(1)
        e_xx, e_yy, e_xy = vpass(2), vpass(3), vpass(4)

        mu1_sq = mu1 * mu1
        mu2_sq = mu2 * mu2
        mu1_mu2 = mu1 * mu2
        sigma1_sq = e_xx - mu1_sq
        sigma2_sq = e_yy - mu2_sq
        sigma12 = e_xy - mu1_mu2

        cs_map = (2.0 * sigma12 + c2) / (sigma1_sq + sigma2_sq + c2)

        # Padded entries of cs_map / ssim_map are exactly 1.0 (zero band
        # padding + exact c/c division), so mean over the valid Ho x Wo region
        # is  1 + sum(map - 1) / (Ho * Wo)  -- no iota masks, no cancellation.
        inv_area = 1.0 / float(Ho * Wo)
        if lvl == L - 1:
            ssim_map = (2.0 * mu1_mu2 + c1) / (mu1_sq + mu2_sq + c1) * cs_map
            stat = 1.0 + jnp.sum(ssim_map - 1.0) * inv_area
        else:
            stat = 1.0 + jnp.sum(cs_map - 1.0) * inv_area
        stats.append(stat)

        # ---- 2x2 avg-pool for the next level, also bf16 on the MXU.
        if lvl < L - 1:
            pool_w = mat_refs[2 * L + 2 * lvl][...]        # (RW, RW_next) bf16
            pool_h = mat_refs[2 * L + 2 * lvl + 1][...]    # (RH_next, RH) bf16
            x2 = jnp.dot(
                pool_h,
                jnp.dot(xb, pool_w,
                        preferred_element_type=jnp.float32).astype(jnp.bfloat16),
                preferred_element_type=jnp.float32)
            y2 = jnp.dot(
                pool_h,
                jnp.dot(yb, pool_w,
                        preferred_element_type=jnp.float32).astype(jnp.bfloat16),
                preferred_element_type=jnp.float32)

    # Single unmasked (LP, 128) store; row `lvl` carries that level's scalar.
    rows = lax.broadcasted_iota(jnp.int32, (lp, 128), 0)
    outv = jnp.zeros((lp, 128), jnp.float32)
    for lvl in range(L):
        outv = jnp.where(rows == lvl, stats[lvl], outv)
    out_ref[0] = outv


def _ms_ssim_levels_pallas(x, y, win, c1, c2, inv_range, levels):
    """Returns (N, C, levels): cs for levels 0..L-2, ssim_per_channel at L-1."""
    N, C, H, W = x.shape
    metas = _level_geometry(H, W, levels, int(win.size))
    # Constant band/pool matrices in bf16 (half the resident VMEM, bf16 MXU).
    mats = [jnp.asarray(m, dtype=jnp.bfloat16) for m in _build_matrices(metas, win)]

    # Flat (N*C,) grid: balances v7x's 2 TensorCores even for small/odd N, C.
    NC = N * C
    xf = jnp.reshape(jnp.asarray(x, jnp.float32), (NC, H, W))
    yf = jnp.reshape(jnp.asarray(y, jnp.float32), (NC, H, W))

    LP = _round_up(levels, 8)
    kernel = functools.partial(_ms_ssim_kernel, metas=metas,
                               c1=float(c1), c2=float(c2),
                               inv_range=float(inv_range), lp=LP)

    in_specs = [
        pl.BlockSpec((1, H, W), lambda i: (i, 0, 0)),
        pl.BlockSpec((1, H, W), lambda i: (i, 0, 0)),
    ]
    for mat in mats:  # constant, loaded once, kept resident across the grid
        in_specs.append(pl.BlockSpec(mat.shape, lambda i: (0, 0)))

    out = pl.pallas_call(
        kernel,
        out_shape=jax.ShapeDtypeStruct((NC, LP, 128), jnp.float32),
        grid=(NC,),
        in_specs=in_specs,
        out_specs=pl.BlockSpec((1, LP, 128), lambda i: (i, 0, 0)),
        compiler_params=pltpu.CompilerParams(
            dimension_semantics=("parallel",),
            vmem_limit_bytes=32 << 20,
        ),
    )(xf, yf, *mats)
    return out[:, :levels, 0].reshape(N, C, levels)


# ---------------------------------------------------------------------------
# ms_ssim (mirrors the PyTorch reference function).
# ---------------------------------------------------------------------------
def ms_ssim(x, y, data_range=255.0, reduction=True, win_size=11, win_sigma=3.0,
            win=None, weights=None, k=(1e-13, 1e-13)):
    if x.ndim != 4:
        raise ValueError("Input images should be 4-d tensors.")
    if x.dtype != y.dtype:
        raise ValueError("Input images should have the same dtype.")
    if x.shape != y.shape:
        raise ValueError("Input images should have the same dimensions.")

    if win is not None:
        win_size = int(np.asarray(win).shape[-1])
    if win_size % 2 != 1:
        raise ValueError("Window size should be odd.")

    smaller_side = min(x.shape[-2:])
    assert smaller_side > (win_size - 1) * 2 ** 4, (
        "Image size should be larger than %d due to the 4 downsamplings in ms-ssim"
        % ((win_size - 1) * 2 ** 4))

    if weights is None:
        weights = [0.0448, 0.2856, 0.3001, 0.2363, 0.1333]
    weights_arr = jnp.asarray(weights, dtype=jnp.float32)

    if win is None:
        win = _fspecial_gauss_1d(win_size, win_sigma)
    # Accept depthwise-repeated windows ((C,1,1,size) etc.): same 1-D filter.
    win_1d = np.asarray(win, np.float32).reshape(-1, win_size)[0]

    # data_range is folded into the kernel: planes are scaled by 1/data_range
    # in VMEM and c1/c2 use data_range = 1 (mathematically identical).
    k1, k2 = k
    c1 = float(k1) ** 2
    c2 = float(k2) ** 2

    levels = int(weights_arr.shape[0])

    level_stats = _ms_ssim_levels_pallas(x, y, win_1d, c1, c2,
                                         1.0 / float(data_range), levels)  # (N,C,L)
    level_stats = jnp.maximum(level_stats, 0.0)      # relu(cs) / relu(ssim)
    ms_ssim_val = jnp.prod(level_stats ** weights_arr[None, None, :], axis=-1)

    if reduction == 'mean':
        return ms_ssim_val.mean()
    elif reduction == 'none':
        return ms_ssim_val.mean(axis=1)
    # TODO(synk): the PyTorch reference silently returns None for any other
    # `reduction` value (including the default bool True); we return the
    # per-(N, C) values instead so the result is usable.
    return ms_ssim_val


# ---------------------------------------------------------------------------
# MS_SSIM "module" equivalent.
# ---------------------------------------------------------------------------
class MS_SSIM:
    def __init__(self, data_range=255, reduction=True, win_size=11, win_sigma=1.5,
                 channel=3, weights=None, k=(0.01, 0.03)):
        self.win_size = win_size
        # Deterministic Gaussian window "parameter"; the PyTorch
        # .repeat(channel, 1, 1, 1) is a depthwise broadcast of the same filter.
        self.win = _fspecial_gauss_1d(win_size, win_sigma)
        self.reduction = reduction
        self.data_range = data_range
        self.weights = weights
        self.k = k

    def __call__(self, x, y):
        return ms_ssim(x, y, data_range=self.data_range, reduction=self.reduction,
                       win=self.win, weights=self.weights, k=self.k)


if __name__ == "__main__":
    key = jax.random.PRNGKey(0)
    kx, ky = jax.random.split(key)
    # Smallest spatial side must exceed (11 - 1) * 2**4 = 160 (ms-ssim assert).
    N, C, H, W = 2, 3, 176, 176
    x = jax.random.uniform(kx, (N, C, H, W), dtype=jnp.float32) * 255.0
    y = jax.random.uniform(ky, (N, C, H, W), dtype=jnp.float32) * 255.0

    model = MS_SSIM(data_range=255.0, reduction='mean', channel=C)
    out = model(x, y)
    out = jax.block_until_ready(out)
    assert bool(jnp.isfinite(out))
    print("KERNEL_OK")
</pallas_src>

<mosaic_0001>
module attributes {stable_mosaic.version = 11 : i64} {
  func.func @_ms_ssim_kernel(%arg0: i32, %arg1: memref<1x176x176xf32, #tpu.memory_space<vmem>>, %arg2: memref<1x176x176xf32, #tpu.memory_space<vmem>>, %arg3: memref<176x256xbf16, #tpu.memory_space<vmem>>, %arg4: memref<168x176xbf16, #tpu.memory_space<vmem>>, %arg5: memref<128x128xbf16, #tpu.memory_space<vmem>>, %arg6: memref<80x88xbf16, #tpu.memory_space<vmem>>, %arg7: memref<128x128xbf16, #tpu.memory_space<vmem>>, %arg8: memref<40x48xbf16, #tpu.memory_space<vmem>>, %arg9: memref<128x128xbf16, #tpu.memory_space<vmem>>, %arg10: memref<16x24xbf16, #tpu.memory_space<vmem>>, %arg11: memref<128x128xbf16, #tpu.memory_space<vmem>>, %arg12: memref<8x16xbf16, #tpu.memory_space<vmem>>, %arg13: memref<176x128xbf16, #tpu.memory_space<vmem>>, %arg14: memref<88x176xbf16, #tpu.memory_space<vmem>>, %arg15: memref<128x128xbf16, #tpu.memory_space<vmem>>, %arg16: memref<48x88xbf16, #tpu.memory_space<vmem>>, %arg17: memref<128x128xbf16, #tpu.memory_space<vmem>>, %arg18: memref<24x48xbf16, #tpu.memory_space<vmem>>, %arg19: memref<128x128xbf16, #tpu.memory_space<vmem>>, %arg20: memref<16x24xbf16, #tpu.memory_space<vmem>>, %arg21: memref<1x8x128xf32, #tpu.memory_space<vmem>>) attributes {dimension_semantics = [#tpu.dimension_semantics<parallel>], iteration_bounds = array<i64: 6>, scalar_prefetch = 0 : i64, scratch_operands = 0 : i64, tpu.core_type = #tpu.core_type<tc>, window_params = [{transform_indices = @transform_0, window_bounds = array<i64: 1, 176, 176>}, {transform_indices = @transform_1, window_bounds = array<i64: 1, 176, 176>}, {pipeline_mode = #tpu.pipeline_mode<synchronous>, transform_indices = @transform_2, window_bounds = array<i64: 176, 256>}, {pipeline_mode = #tpu.pipeline_mode<synchronous>, transform_indices = @transform_3, window_bounds = array<i64: 168, 176>}, {pipeline_mode = #tpu.pipeline_mode<synchronous>, transform_indices = @transform_4, window_bounds = array<i64: 128, 128>}, {pipeline_mode = #tpu.pipeline_mode<synchronous>, transform_indices = @transform_5, window_bounds = array<i64: 80, 88>}, {pipeline_mode = #tpu.pipeline_mode<synchronous>, transform_indices = @transform_6, window_bounds = array<i64: 128, 128>}, {pipeline_mode = #tpu.pipeline_mode<synchronous>, transform_indices = @transform_7, window_bounds = array<i64: 40, 48>}, {pipeline_mode = #tpu.pipeline_mode<synchronous>, transform_indices = @transform_8, window_bounds = array<i64: 128, 128>}, {pipeline_mode = #tpu.pipeline_mode<synchronous>, transform_indices = @transform_9, window_bounds = array<i64: 16, 24>}, {pipeline_mode = #tpu.pipeline_mode<synchronous>, transform_indices = @transform_10, window_bounds = array<i64: 128, 128>}, {pipeline_mode = #tpu.pipeline_mode<synchronous>, transform_indices = @transform_11, window_bounds = array<i64: 8, 16>}, {pipeline_mode = #tpu.pipeline_mode<synchronous>, transform_indices = @transform_12, window_bounds = array<i64: 176, 128>}, {pipeline_mode = #tpu.pipeline_mode<synchronous>, transform_indices = @transform_13, window_bounds = array<i64: 88, 176>}, {pipeline_mode = #tpu.pipeline_mode<synchronous>, transform_indices = @transform_14, window_bounds = array<i64: 128, 128>}, {pipeline_mode = #tpu.pipeline_mode<synchronous>, transform_indices = @transform_15, window_bounds = array<i64: 48, 88>}, {pipeline_mode = #tpu.pipeline_mode<synchronous>, transform_indices = @transform_16, window_bounds = array<i64: 128, 128>}, {pipeline_mode = #tpu.pipeline_mode<synchronous>, transform_indices = @transform_17, window_bounds = array<i64: 24, 48>}, {pipeline_mode = #tpu.pipeline_mode<synchronous>, transform_indices = @transform_18, window_bounds = array<i64: 128, 128>}, {pipeline_mode = #tpu.pipeline_mode<synchronous>, transform_indices = @transform_19, window_bounds = array<i64: 16, 24>}, {transform_indices = @transform_20, window_bounds = array<i64: 1, 8, 128>}]} {
    %c0 = arith.constant 0 : index
    %c0_0 = arith.constant 0 : index
    %c0_1 = arith.constant 0 : index
    %0 = vector.load %arg1[%c0, %c0_0, %c0_1] : memref<1x176x176xf32, #tpu.memory_space<vmem>>, vector<1x176x176xf32>
    %1 = vector.shape_cast %0 : vector<1x176x176xf32> to vector<176x176xf32>
    %cst = arith.constant 0.00392156886 : f32
    %2 = vector.broadcast %cst : f32 to vector<176x176xf32>
    %3 = arith.mulf %1, %2 : vector<176x176xf32>
    %c0_2 = arith.constant 0 : index
    %c0_3 = arith.constant 0 : index
    %c0_4 = arith.constant 0 : index
    %4 = vector.load %arg2[%c0_2, %c0_3, %c0_4] : memref<1x176x176xf32, #tpu.memory_space<vmem>>, vector<1x176x176xf32>
    %5 = vector.shape_cast %4 : vector<1x176x176xf32> to vector<176x176xf32>
    %cst_5 = arith.constant 0.00392156886 : f32
    %6 = vector.broadcast %cst_5 : f32 to vector<176x176xf32>
    %7 = arith.mulf %5, %6 : vector<176x176xf32>
    %c0_6 = arith.constant 0 : index
    %c0_7 = arith.constant 0 : index
    %8 = vector.load %arg3[%c0_6, %c0_7] : memref<176x256xbf16, #tpu.memory_space<vmem>>, vector<176x256xbf16>
    %c0_8 = arith.constant 0 : index
    %c0_9 = arith.constant 0 : index
    %9 = vector.load %arg4[%c0_8, %c0_9] : memref<168x176xbf16, #tpu.memory_space<vmem>>, vector<168x176xbf16>
    %10 = arith.truncf %3 : vector<176x176xf32> to vector<176x176xbf16>
    %11 = arith.truncf %7 : vector<176x176xf32> to vector<176x176xbf16>
    %12 = arith.mulf %3, %3 : vector<176x176xf32>
    %13 = arith.mulf %7, %7 : vector<176x176xf32>
    %14 = arith.mulf %3, %7 : vector<176x176xf32>
    %15 = tpu.concatenate %3, %7, %12, %13, %14 in 0 : vector<176x176xf32>, vector<176x176xf32>, vector<176x176xf32>, vector<176x176xf32>, vector<176x176xf32> -> vector<880x176xf32>
    %16 = arith.truncf %15 : vector<880x176xf32> to vector<880x176xbf16>
    %cst_10 = arith.constant dense<0.000000e+00> : vector<880x256xf32>
    %17 = tpu.matmul %16, %8, %cst_10 {dimension_numbers = #tpu.dot_dimension_numbers<[1], [0], [0], [1], [0, 0, 1, 1], [], []>} : vector<880x176xbf16>, vector<176x256xbf16>, vector<880x256xf32> -> vector<880x256xf32>
    %18 = vector.extract_strided_slice %17 {offsets = [0, 0], sizes = [176, 256], strides = [1, 1]} : vector<880x256xf32> to vector<176x256xf32>
    %19 = arith.truncf %18 : vector<176x256xf32> to vector<176x256xbf16>
    %cst_11 = arith.constant dense<0.000000e+00> : vector<168x256xf32>
    %20 = tpu.matmul %9, %19, %cst_11 {dimension_numbers = #tpu.dot_dimension_numbers<[1], [0], [0], [1], [0, 0, 1, 1], [], []>} : vector<168x176xbf16>, vector<176x256xbf16>, vector<168x256xf32> -> vector<168x256xf32>
    %21 = vector.extract_strided_slice %17 {offsets = [176, 0], sizes = [176, 256], strides = [1, 1]} : vector<880x256xf32> to vector<176x256xf32>
    %22 = arith.truncf %21 : vector<176x256xf32> to vector<176x256xbf16>
    %cst_12 = arith.constant dense<0.000000e+00> : vector<168x256xf32>
    %23 = tpu.matmul %9, %22, %cst_12 {dimension_numbers = #tpu.dot_dimension_numbers<[1], [0], [0], [1], [0, 0, 1, 1], [], []>} : vector<168x176xbf16>, vector<176x256xbf16>, vector<168x256xf32> -> vector<168x256xf32>
    %24 = vector.extract_strided_slice %17 {offsets = [352, 0], sizes = [176, 256], strides = [1, 1]} : vector<880x256xf32> to vector<176x256xf32>
    %25 = arith.truncf %24 : vector<176x256xf32> to vector<176x256xbf16>
    %cst_13 = arith.constant dense<0.000000e+00> : vector<168x256xf32>
    %26 = tpu.matmul %9, %25, %cst_13 {dimension_numbers = #tpu.dot_dimension_numbers<[1], [0], [0], [1], [0, 0, 1, 1], [], []>} : vector<168x176xbf16>, vector<176x256xbf16>, vector<168x256xf32> -> vector<168x256xf32>
    %27 = vector.extract_strided_slice %17 {offsets = [528, 0], sizes = [176, 256], strides = [1, 1]} : vector<880x256xf32> to vector<176x256xf32>
    %28 = arith.truncf %27 : vector<176x256xf32> to vector<176x256xbf16>
    %cst_14 = arith.constant dense<0.000000e+00> : vector<168x256xf32>
    %29 = tpu.matmul %9, %28, %cst_14 {dimension_numbers = #tpu.dot_dimension_numbers<[1], [0], [0], [1], [0, 0, 1, 1], [], []>} : vector<168x176xbf16>, vector<176x256xbf16>, vector<168x256xf32> -> vector<168x256xf32>
    %30 = vector.extract_strided_slice %17 {offsets = [704, 0], sizes = [176, 256], strides = [1, 1]} : vector<880x256xf32> to vector<176x256xf32>
    %31 = arith.truncf %30 : vector<176x256xf32> to vector<176x256xbf16>
    %cst_15 = arith.constant dense<0.000000e+00> : vector<168x256xf32>
    %32 = tpu.matmul %9, %31, %cst_15 {dimension_numbers = #tpu.dot_dimension_numbers<[1], [0], [0], [1], [0, 0, 1, 1], [], []>} : vector<168x176xbf16>, vector<176x256xbf16>, vector<168x256xf32> -> vector<168x256xf32>
    %33 = arith.mulf %20, %20 : vector<168x256xf32>
    %34 = arith.mulf %23, %23 : vector<168x256xf32>
    %35 = arith.mulf %20, %23 : vector<168x256xf32>
    %36 = arith.subf %26, %33 : vector<168x256xf32>
    %37 = arith.subf %29, %34 : vector<168x256xf32>
    %38 = arith.subf %32, %35 : vector<168x256xf32>
    %cst_16 = arith.constant 2.000000e+00 : f32
    %39 = vector.broadcast %cst_16 : f32 to vector<168x256xf32>
    %40 = arith.mulf %39, %38 : vector<168x256xf32>
    %cst_17 = arith.constant 8.99999984E-4 : f32
    %41 = vector.broadcast %cst_17 : f32 to vector<168x256xf32>
    %42 = arith.addf %40, %41 : vector<168x256xf32>
    %43 = arith.addf %36, %37 : vector<168x256xf32>
    %cst_18 = arith.constant 8.99999984E-4 : f32
    %44 = vector.broadcast %cst_18 : f32 to vector<168x256xf32>
    %45 = arith.addf %43, %44 : vector<168x256xf32>
    %46 = arith.divf %42, %45 : vector<168x256xf32>
    %cst_19 = arith.constant 1.000000e+00 : f32
    %47 = vector.broadcast %cst_19 : f32 to vector<168x256xf32>
    %48 = arith.subf %46, %47 : vector<168x256xf32>
    %49 = vector.shape_cast %48 : vector<168x256xf32> to vector<1x168x256xf32>
    %cst_20 = arith.constant dense<0.000000e+00> : vector<1xf32>
    %50 = vector.multi_reduction <add>, %49, %cst_20 [1, 2] : vector<1x168x256xf32> to vector<1xf32>
    %51 = vector.shape_cast %50 : vector<1xf32> to vector<1x1x1xf32>
    %52 = vector.extract %51[0, 0, 0] : f32 from vector<1x1x1xf32>
    %cst_21 = arith.constant 3.62897372E-5 : f32
    %53 = arith.mulf %52, %cst_21 : f32
    %cst_22 = arith.constant 1.000000e+00 : f32
    %54 = arith.addf %cst_22, %53 : f32
    %c0_23 = arith.constant 0 : index
    %c0_24 = arith.constant 0 : index
    %55 = vector.load %arg13[%c0_23, %c0_24] : memref<176x128xbf16, #tpu.memory_space<vmem>>, vector<176x128xbf16>
    %c0_25 = arith.constant 0 : index
    %c0_26 = arith.constant 0 : index
    %56 = vector.load %arg14[%c0_25, %c0_26] : memref<88x176xbf16, #tpu.memory_space<vmem>>, vector<88x176xbf16>
    %cst_27 = arith.constant dense<0.000000e+00> : vector<176x128xf32>
    %57 = tpu.matmul %10, %55, %cst_27 {dimension_numbers = #tpu.dot_dimension_numbers<[1], [0], [0], [1], [0, 0, 1, 1], [], []>} : vector<176x176xbf16>, vector<176x128xbf16>, vector<176x128xf32> -> vector<176x128xf32>
    %58 = arith.truncf %57 : vector<176x128xf32> to vector<176x128xbf16>
    %cst_28 = arith.constant dense<0.000000e+00> : vector<88x128xf32>
    %59 = tpu.matmul %56, %58, %cst_28 {dimension_numbers = #tpu.dot_dimension_numbers<[1], [0], [0], [1], [0, 0, 1, 1], [], []>} : vector<88x176xbf16>, vector<176x128xbf16>, vector<88x128xf32> -> vector<88x128xf32>
    %cst_29 = arith.constant dense<0.000000e+00> : vector<176x128xf32>
    %60 = tpu.matmul %11, %55, %cst_29 {dimension_numbers = #tpu.dot_dimension_numbers<[1], [0], [0], [1], [0, 0, 1, 1], [], []>} : vector<176x176xbf16>, vector<176x128xbf16>, vector<176x128xf32> -> vector<176x128xf32>
    %61 = arith.truncf %60 : vector<176x128xf32> to vector<176x128xbf16>
    %cst_30 = arith.constant dense<0.000000e+00> : vector<88x128xf32>
    %62 = tpu.matmul %56, %61, %cst_30 {dimension_numbers = #tpu.dot_dimension_numbers<[1], [0], [0], [1], [0, 0, 1, 1], [], []>} : vector<88x176xbf16>, vector<176x128xbf16>, vector<88x128xf32> -> vector<88x128xf32>
    %c0_31 = arith.constant 0 : index
    %c0_32 = arith.constant 0 : index
    %63 = vector.load %arg5[%c0_31, %c0_32] : memref<128x128xbf16, #tpu.memory_space<vmem>>, vector<128x128xbf16>
    %c0_33 = arith.constant 0 : index
    %c0_34 = arith.constant 0 : index
    %64 = vector.load %arg6[%c0_33, %c0_34] : memref<80x88xbf16, #tpu.memory_space<vmem>>, vector<80x88xbf16>
    %65 = arith.truncf %59 : vector<88x128xf32> to vector<88x128xbf16>
    %66 = arith.truncf %62 : vector<88x128xf32> to vector<88x128xbf16>
    %67 = arith.mulf %59, %59 : vector<88x128xf32>
    %68 = arith.mulf %62, %62 : vector<88x128xf32>
    %69 = arith.mulf %59, %62 : vector<88x128xf32>
    %70 = tpu.concatenate %59, %62, %67, %68, %69 in 0 : vector<88x128xf32>, vector<88x128xf32>, vector<88x128xf32>, vector<88x128xf32>, vector<88x128xf32> -> vector<440x128xf32>
    %71 = arith.truncf %70 : vector<440x128xf32> to vector<440x128xbf16>
    %cst_35 = arith.constant dense<0.000000e+00> : vector<440x128xf32>
    %72 = tpu.matmul %71, %63, %cst_35 {dimension_numbers = #tpu.dot_dimension_numbers<[1], [0], [0], [1], [0, 0, 1, 1], [], []>} : vector<440x128xbf16>, vector<128x128xbf16>, vector<440x128xf32> -> vector<440x128xf32>
    %73 = vector.extract_strided_slice %72 {offsets = [0, 0], sizes = [88, 128], strides = [1, 1]} : vector<440x128xf32> to vector<88x128xf32>
    %74 = arith.truncf %73 : vector<88x128xf32> to vector<88x128xbf16>
    %cst_36 = arith.constant dense<0.000000e+00> : vector<80x128xf32>
    %75 = tpu.matmul %64, %74, %cst_36 {dimension_numbers = #tpu.dot_dimension_numbers<[1], [0], [0], [1], [0, 0, 1, 1], [], []>} : vector<80x88xbf16>, vector<88x128xbf16>, vector<80x128xf32> -> vector<80x128xf32>
    %76 = vector.extract_strided_slice %72 {offsets = [88, 0], sizes = [88, 128], strides = [1, 1]} : vector<440x128xf32> to vector<88x128xf32>
    %77 = arith.truncf %76 : vector<88x128xf32> to vector<88x128xbf16>
    %cst_37 = arith.constant dense<0.000000e+00> : vector<80x128xf32>
    %78 = tpu.matmul %64, %77, %cst_37 {dimension_numbers = #tpu.dot_dimension_numbers<[1], [0], [0], [1], [0, 0, 1, 1], [], []>} : vector<80x88xbf16>, vector<88x128xbf16>, vector<80x128xf32> -> vector<80x128xf32>
    %79 = vector.extract_strided_slice %72 {offsets = [176, 0], sizes = [88, 128], strides = [1, 1]} : vector<440x128xf32> to vector<88x128xf32>
    %80 = arith.truncf %79 : vector<88x128xf32> to vector<88x128xbf16>
    %cst_38 = arith.constant dense<0.000000e+00> : vector<80x128xf32>
    %81 = tpu.matmul %64, %80, %cst_38 {dimension_numbers = #tpu.dot_dimension_numbers<[1], [0], [0], [1], [0, 0, 1, 1], [], []>} : vector<80x88xbf16>, vector<88x128xbf16>, vector<80x128xf32> -> vector<80x128xf32>
    %82 = vector.extract_strided_slice %72 {offsets = [264, 0], sizes = [88, 128], strides = [1, 1]} : vector<440x128xf32> to vector<88x128xf32>
    %83 = arith.truncf %82 : vector<88x128xf32> to vector<88x128xbf16>
    %cst_39 = arith.constant dense<0.000000e+00> : vector<80x128xf32>
    %84 = tpu.matmul %64, %83, %cst_39 {dimension_numbers = #tpu.dot_dimension_numbers<[1], [0], [0], [1], [0, 0, 1, 1], [], []>} : vector<80x88xbf16>, vector<88x128xbf16>, vector<80x128xf32> -> vector<80x128xf32>
    %85 = vector.extract_strided_slice %72 {offsets = [352, 0], sizes = [88, 128], strides = [1, 1]} : vector<440x128xf32> to vector<88x128xf32>
    %86 = arith.truncf %85 : vector<88x128xf32> to vector<88x128xbf16>
    %cst_40 = arith.constant dense<0.000000e+00> : vector<80x128xf32>
    %87 = tpu.matmul %64, %86, %cst_40 {dimension_numbers = #tpu.dot_dimension_numbers<[1], [0], [0], [1], [0, 0, 1, 1], [], []>} : vector<80x88xbf16>, vector<88x128xbf16>, vector<80x128xf32> -> vector<80x128xf32>
    %88 = arith.mulf %75, %75 : vector<80x128xf32>
    %89 = arith.mulf %78, %78 : vector<80x128xf32>
    %90 = arith.mulf %75, %78 : vector<80x128xf32>
    %91 = arith.subf %81, %88 : vector<80x128xf32>
    %92 = arith.subf %84, %89 : vector<80x128xf32>
    %93 = arith.subf %87, %90 : vector<80x128xf32>
    %cst_41 = arith.constant 2.000000e+00 : f32
    %94 = vector.broadcast %cst_41 : f32 to vector<80x128xf32>
    %95 = arith.mulf %94, %93 : vector<80x128xf32>
    %cst_42 = arith.constant 8.99999984E-4 : f32
    %96 = vector.broadcast %cst_42 : f32 to vector<80x128xf32>
    %97 = arith.addf %95, %96 : vector<80x128xf32>
    %98 = arith.addf %91, %92 : vector<80x128xf32>
    %cst_43 = arith.constant 8.99999984E-4 : f32
    %99 = vector.broadcast %cst_43 : f32 to vector<80x128xf32>
    %100 = arith.addf %98, %99 : vector<80x128xf32>
    %101 = arith.divf %97, %100 : vector<80x128xf32>
    %cst_44 = arith.constant 1.000000e+00 : f32
    %102 = vector.broadcast %cst_44 : f32 to vector<80x128xf32>
    %103 = arith.subf %101, %102 : vector<80x128xf32>
    %104 = vector.shape_cast %103 : vector<80x128xf32> to vector<1x80x128xf32>
    %cst_45 = arith.constant dense<0.000000e+00> : vector<1xf32>
    %105 = vector.multi_reduction <add>, %104, %cst_45 [1, 2] : vector<1x80x128xf32> to vector<1xf32>
    %106 = vector.shape_cast %105 : vector<1xf32> to vector<1x1x1xf32>
    %107 = vector.extract %106[0, 0, 0] : f32 from vector<1x1x1xf32>
    %cst_46 = arith.constant 1.64365556E-4 : f32
    %108 = arith.mulf %107, %cst_46 : f32
    %cst_47 = arith.constant 1.000000e+00 : f32
    %109 = arith.addf %cst_47, %108 : f32
    %c0_48 = arith.constant 0 : index
    %c0_49 = arith.constant 0 : index
    %110 = vector.load %arg15[%c0_48, %c0_49] : memref<128x128xbf16, #tpu.memory_space<vmem>>, vector<128x128xbf16>
    %c0_50 = arith.constant 0 : index
    %c0_51 = arith.constant 0 : index
    %111 = vector.load %arg16[%c0_50, %c0_51] : memref<48x88xbf16, #tpu.memory_space<vmem>>, vector<48x88xbf16>
    %cst_52 = arith.constant dense<0.000000e+00> : vector<88x128xf32>
    %112 = tpu.matmul %65, %110, %cst_52 {dimension_numbers = #tpu.dot_dimension_numbers<[1], [0], [0], [1], [0, 0, 1, 1], [], []>} : vector<88x128xbf16>, vector<128x128xbf16>, vector<88x128xf32> -> vector<88x128xf32>
    %113 = arith.truncf %112 : vector<88x128xf32> to vector<88x128xbf16>
    %cst_53 = arith.constant dense<0.000000e+00> : vector<48x128xf32>
    %114 = tpu.matmul %111, %113, %cst_53 {dimension_numbers = #tpu.dot_dimension_numbers<[1], [0], [0], [1], [0, 0, 1, 1], [], []>} : vector<48x88xbf16>, vector<88x128xbf16>, vector<48x128xf32> -> vector<48x128xf32>
    %cst_54 = arith.constant dense<0.000000e+00> : vector<88x128xf32>
    %115 = tpu.matmul %66, %110, %cst_54 {dimension_numbers = #tpu.dot_dimension_numbers<[1], [0], [0], [1], [0, 0, 1, 1], [], []>} : vector<88x128xbf16>, vector<128x128xbf16>, vector<88x128xf32> -> vector<88x128xf32>
    %116 = arith.truncf %115 : vector<88x128xf32> to vector<88x128xbf16>
    %cst_55 = arith.constant dense<0.000000e+00> : vector<48x128xf32>
    %117 = tpu.matmul %111, %116, %cst_55 {dimension_numbers = #tpu.dot_dimension_numbers<[1], [0], [0], [1], [0, 0, 1, 1], [], []>} : vector<48x88xbf16>, vector<88x128xbf16>, vector<48x128xf32> -> vector<48x128xf32>
    %c0_56 = arith.constant 0 : index
    %c0_57 = arith.constant 0 : index
    %118 = vector.load %arg7[%c0_56, %c0_57] : memref<128x128xbf16, #tpu.memory_space<vmem>>, vector<128x128xbf16>
    %c0_58 = arith.constant 0 : index
    %c0_59 = arith.constant 0 : index
    %119 = vector.load %arg8[%c0_58, %c0_59] : memref<40x48xbf16, #tpu.memory_space<vmem>>, vector<40x48xbf16>
    %120 = arith.truncf %114 : vector<48x128xf32> to vector<48x128xbf16>
    %121 = arith.truncf %117 : vector<48x128xf32> to vector<48x128xbf16>
    %122 = arith.mulf %114, %114 : vector<48x128xf32>
    %123 = arith.mulf %117, %117 : vector<48x128xf32>
    %124 = arith.mulf %114, %117 : vector<48x128xf32>
    %125 = tpu.concatenate %114, %117, %122, %123, %124 in 0 : vector<48x128xf32>, vector<48x128xf32>, vector<48x128xf32>, vector<48x128xf32>, vector<48x128xf32> -> vector<240x128xf32>
    %126 = arith.truncf %125 : vector<240x128xf32> to vector<240x128xbf16>
    %cst_60 = arith.constant dense<0.000000e+00> : vector<240x128xf32>
    %127 = tpu.matmul %126, %118, %cst_60 {dimension_numbers = #tpu.dot_dimension_numbers<[1], [0], [0], [1], [0, 0, 1, 1], [], []>} : vector<240x128xbf16>, vector<128x128xbf16>, vector<240x128xf32> -> vector<240x128xf32>
    %128 = vector.extract_strided_slice %127 {offsets = [0, 0], sizes = [48, 128], strides = [1, 1]} : vector<240x128xf32> to vector<48x128xf32>
    %129 = arith.truncf %128 : vector<48x128xf32> to vector<48x128xbf16>
    %cst_61 = arith.constant dense<0.000000e+00> : vector<40x128xf32>
    %130 = tpu.matmul %119, %129, %cst_61 {dimension_numbers = #tpu.dot_dimension_numbers<[1], [0], [0], [1], [0, 0, 1, 1], [], []>} : vector<40x48xbf16>, vector<48x128xbf16>, vector<40x128xf32> -> vector<40x128xf32>
    %131 = vector.extract_strided_slice %127 {offsets = [48, 0], sizes = [48, 128], strides = [1, 1]} : vector<240x128xf32> to vector<48x128xf32>
    %132 = arith.truncf %131 : vector<48x128xf32> to vector<48x128xbf16>
    %cst_62 = arith.constant dense<0.000000e+00> : vector<40x128xf32>
    %133 = tpu.matmul %119, %132, %cst_62 {dimension_numbers = #tpu.dot_dimension_numbers<[1], [0], [0], [1], [0, 0, 1, 1], [], []>} : vector<40x48xbf16>, vector<48x128xbf16>, vector<40x128xf32> -> vector<40x128xf32>
    %134 = vector.extract_strided_slice %127 {offsets = [96, 0], sizes = [48, 128], strides = [1, 1]} : vector<240x128xf32> to vector<48x128xf32>
    %135 = arith.truncf %134 : vector<48x128xf32> to vector<48x128xbf16>
    %cst_63 = arith.constant dense<0.000000e+00> : vector<40x128xf32>
    %136 = tpu.matmul %119, %135, %cst_63 {dimension_numbers = #tpu.dot_dimension_numbers<[1], [0], [0], [1], [0, 0, 1, 1], [], []>} : vector<40x48xbf16>, vector<48x128xbf16>, vector<40x128xf32> -> vector<40x128xf32>
    %137 = vector.extract_strided_slice %127 {offsets = [144, 0], sizes = [48, 128], strides = [1, 1]} : vector<240x128xf32> to vector<48x128xf32>
    %138 = arith.truncf %137 : vector<48x128xf32> to vector<48x128xbf16>
    %cst_64 = arith.constant dense<0.000000e+00> : vector<40x128xf32>
    %139 = tpu.matmul %119, %138, %cst_64 {dimension_numbers = #tpu.dot_dimension_numbers<[1], [0], [0], [1], [0, 0, 1, 1], [], []>} : vector<40x48xbf16>, vector<48x128xbf16>, vector<40x128xf32> -> vector<40x128xf32>
    %140 = vector.extract_strided_slice %127 {offsets = [192, 0], sizes = [48, 128], strides = [1, 1]} : vector<240x128xf32> to vector<48x128xf32>
    %141 = arith.truncf %140 : vector<48x128xf32> to vector<48x128xbf16>
    %cst_65 = arith.constant dense<0.000000e+00> : vector<40x128xf32>
    %142 = tpu.matmul %119, %141, %cst_65 {dimension_numbers = #tpu.dot_dimension_numbers<[1], [0], [0], [1], [0, 0, 1, 1], [], []>} : vector<40x48xbf16>, vector<48x128xbf16>, vector<40x128xf32> -> vector<40x128xf32>
    %143 = arith.mulf %130, %130 : vector<40x128xf32>
    %144 = arith.mulf %133, %133 : vector<40x128xf32>
    %145 = arith.mulf %130, %133 : vector<40x128xf32>
    %146 = arith.subf %136, %143 : vector<40x128xf32>
    %147 = arith.subf %139, %144 : vector<40x128xf32>
    %148 = arith.subf %142, %145 : vector<40x128xf32>
    %cst_66 = arith.constant 2.000000e+00 : f32
    %149 = vector.broadcast %cst_66 : f32 to vector<40x128xf32>
    %150 = arith.mulf %149, %148 : vector<40x128xf32>
    %cst_67 = arith.constant 8.99999984E-4 : f32
    %151 = vector.broadcast %cst_67 : f32 to vector<40x128xf32>
    %152 = arith.addf %150, %151 : vector<40x128xf32>
    %153 = arith.addf %146, %147 : vector<40x128xf32>
    %cst_68 = arith.constant 8.99999984E-4 : f32
    %154 = vector.broadcast %cst_68 : f32 to vector<40x128xf32>
    %155 = arith.addf %153, %154 : vector<40x128xf32>
    %156 = arith.divf %152, %155 : vector<40x128xf32>
    %cst_69 = arith.constant 1.000000e+00 : f32
    %157 = vector.broadcast %cst_69 : f32 to vector<40x128xf32>
    %158 = arith.subf %156, %157 : vector<40x128xf32>
    %159 = vector.shape_cast %158 : vector<40x128xf32> to vector<1x40x128xf32>
    %cst_70 = arith.constant dense<0.000000e+00> : vector<1xf32>
    %160 = vector.multi_reduction <add>, %159, %cst_70 [1, 2] : vector<1x40x128xf32> to vector<1xf32>
    %161 = vector.shape_cast %160 : vector<1xf32> to vector<1x1x1xf32>
    %162 = vector.extract %161[0, 0, 0] : f32 from vector<1x1x1xf32>
    %cst_71 = arith.constant 8.6505193E-4 : f32
    %163 = arith.mulf %162, %cst_71 : f32
    %cst_72 = arith.constant 1.000000e+00 : f32
    %164 = arith.addf %cst_72, %163 : f32
    %c0_73 = arith.constant 0 : index
    %c0_74 = arith.constant 0 : index
    %165 = vector.load %arg17[%c0_73, %c0_74] : memref<128x128xbf16, #tpu.memory_space<vmem>>, vector<128x128xbf16>
    %c0_75 = arith.constant 0 : index
    %c0_76 = arith.constant 0 : index
    %166 = vector.load %arg18[%c0_75, %c0_76] : memref<24x48xbf16, #tpu.memory_space<vmem>>, vector<24x48xbf16>
    %cst_77 = arith.constant dense<0.000000e+00> : vector<48x128xf32>
    %167 = tpu.matmul %120, %165, %cst_77 {dimension_numbers = #tpu.dot_dimension_numbers<[1], [0], [0], [1], [0, 0, 1, 1], [], []>} : vector<48x128xbf16>, vector<128x128xbf16>, vector<48x128xf32> -> vector<48x128xf32>
    %168 = arith.truncf %167 : vector<48x128xf32> to vector<48x128xbf16>
    %cst_78 = arith.constant dense<0.000000e+00> : vector<24x128xf32>
    %169 = tpu.matmul %166, %168, %cst_78 {dimension_numbers = #tpu.dot_dimension_numbers<[1], [0], [0], [1], [0, 0, 1, 1], [], []>} : vector<24x48xbf16>, vector<48x128xbf16>, vector<24x128xf32> -> vector<24x128xf32>
    %cst_79 = arith.constant dense<0.000000e+00> : vector<48x128xf32>
    %170 = tpu.matmul %121, %165, %cst_79 {dimension_numbers = #tpu.dot_dimension_numbers<[1], [0], [0], [1], [0, 0, 1, 1], [], []>} : vector<48x128xbf16>, vector<128x128xbf16>, vector<48x128xf32> -> vector<48x128xf32>
    %171 = arith.truncf %170 : vector<48x128xf32> to vector<48x128xbf16>
    %cst_80 = arith.constant dense<0.000000e+00> : vector<24x128xf32>
    %172 = tpu.matmul %166, %171, %cst_80 {dimension_numbers = #tpu.dot_dimension_numbers<[1], [0], [0], [1], [0, 0, 1, 1], [], []>} : vector<24x48xbf16>, vector<48x128xbf16>, vector<24x128xf32> -> vector<24x128xf32>
    %c0_81 = arith.constant 0 : index
    %c0_82 = arith.constant 0 : index
    %173 = vector.load %arg9[%c0_81, %c0_82] : memref<128x128xbf16, #tpu.memory_space<vmem>>, vector<128x128xbf16>
    %c0_83 = arith.constant 0 : index
    %c0_84 = arith.constant 0 : index
    %174 = vector.load %arg10[%c0_83, %c0_84] : memref<16x24xbf16, #tpu.memory_space<vmem>>, vector<16x24xbf16>
    %175 = arith.truncf %169 : vector<24x128xf32> to vector<24x128xbf16>
    %176 = arith.truncf %172 : vector<24x128xf32> to vector<24x128xbf16>
    %177 = arith.mulf %169, %169 : vector<24x128xf32>
    %178 = arith.mulf %172, %172 : vector<24x128xf32>
    %179 = arith.mulf %169, %172 : vector<24x128xf32>
    %180 = tpu.concatenate %169, %172, %177, %178, %179 in 0 : vector<24x128xf32>, vector<24x128xf32>, vector<24x128xf32>, vector<24x128xf32>, vector<24x128xf32> -> vector<120x128xf32>
    %181 = arith.truncf %180 : vector<120x128xf32> to vector<120x128xbf16>
    %cst_85 = arith.constant dense<0.000000e+00> : vector<120x128xf32>
    %182 = tpu.matmul %181, %173, %cst_85 {dimension_numbers = #tpu.dot_dimension_numbers<[1], [0], [0], [1], [0, 0, 1, 1], [], []>} : vector<120x128xbf16>, vector<128x128xbf16>, vector<120x128xf32> -> vector<120x128xf32>
    %183 = vector.extract_strided_slice %182 {offsets = [0, 0], sizes = [24, 128], strides = [1, 1]} : vector<120x128xf32> to vector<24x128xf32>
    %184 = arith.truncf %183 : vector<24x128xf32> to vector<24x128xbf16>
    %cst_86 = arith.constant dense<0.000000e+00> : vector<16x128xf32>
    %185 = tpu.matmul %174, %184, %cst_86 {dimension_numbers = #tpu.dot_dimension_numbers<[1], [0], [0], [1], [0, 0, 1, 1], [], []>} : vector<16x24xbf16>, vector<24x128xbf16>, vector<16x128xf32> -> vector<16x128xf32>
    %186 = vector.extract_strided_slice %182 {offsets = [24, 0], sizes = [24, 128], strides = [1, 1]} : vector<120x128xf32> to vector<24x128xf32>
    %187 = arith.truncf %186 : vector<24x128xf32> to vector<24x128xbf16>
    %cst_87 = arith.constant dense<0.000000e+00> : vector<16x128xf32>
    %188 = tpu.matmul %174, %187, %cst_87 {dimension_numbers = #tpu.dot_dimension_numbers<[1], [0], [0], [1], [0, 0, 1, 1], [], []>} : vector<16x24xbf16>, vector<24x128xbf16>, vector<16x128xf32> -> vector<16x128xf32>
    %189 = vector.extract_strided_slice %182 {offsets = [48, 0], sizes = [24, 128], strides = [1, 1]} : vector<120x128xf32> to vector<24x128xf32>
    %190 = arith.truncf %189 : vector<24x128xf32> to vector<24x128xbf16>
    %cst_88 = arith.constant dense<0.000000e+00> : vector<16x128xf32>
    %191 = tpu.matmul %174, %190, %cst_88 {dimension_numbers = #tpu.dot_dimension_numbers<[1], [0], [0], [1], [0, 0, 1, 1], [], []>} : vector<16x24xbf16>, vector<24x128xbf16>, vector<16x128xf32> -> vector<16x128xf32>
    %192 = vector.extract_strided_slice %182 {offsets = [72, 0], sizes = [24, 128], strides = [1, 1]} : vector<120x128xf32> to vector<24x128xf32>
    %193 = arith.truncf %192 : vector<24x128xf32> to vector<24x128xbf16>
    %cst_89 = arith.constant dense<0.000000e+00> : vector<16x128xf32>
    %194 = tpu.matmul %174, %193, %cst_89 {dimension_numbers = #tpu.dot_dimension_numbers<[1], [0], [0], [1], [0, 0, 1, 1], [], []>} : vector<16x24xbf16>, vector<24x128xbf16>, vector<16x128xf32> -> vector<16x128xf32>
    %195 = vector.extract_strided_slice %182 {offsets = [96, 0], sizes = [24, 128], strides = [1, 1]} : vector<120x128xf32> to vector<24x128xf32>
    %196 = arith.truncf %195 : vector<24x128xf32> to vector<24x128xbf16>
    %cst_90 = arith.constant dense<0.000000e+00> : vector<16x128xf32>
    %197 = tpu.matmul %174, %196, %cst_90 {dimension_numbers = #tpu.dot_dimension_numbers<[1], [0], [0], [1], [0, 0, 1, 1], [], []>} : vector<16x24xbf16>, vector<24x128xbf16>, vector<16x128xf32> -> vector<16x128xf32>
    %198 = arith.mulf %185, %185 : vector<16x128xf32>
    %199 = arith.mulf %188, %188 : vector<16x128xf32>
    %200 = arith.mulf %185, %188 : vector<16x128xf32>
    %201 = arith.subf %191, %198 : vector<16x128xf32>
    %202 = arith.subf %194, %199 : vector<16x128xf32>
    %203 = arith.subf %197, %200 : vector<16x128xf32>
    %cst_91 = arith.constant 2.000000e+00 : f32
    %204 = vector.broadcast %cst_91 : f32 to vector<16x128xf32>
    %205 = arith.mulf %204, %203 : vector<16x128xf32>
    %cst_92 = arith.constant 8.99999984E-4 : f32
    %206 = vector.broadcast %cst_92 : f32 to vector<16x128xf32>
    %207 = arith.addf %205, %206 : vector<16x128xf32>
    %208 = arith.addf %201, %202 : vector<16x128xf32>
    %cst_93 = arith.constant 8.99999984E-4 : f32
    %209 = vector.broadcast %cst_93 : f32 to vector<16x128xf32>
    %210 = arith.addf %208, %209 : vector<16x128xf32>
    %211 = arith.divf %207, %210 : vector<16x128xf32>
    %cst_94 = arith.constant 1.000000e+00 : f32
    %212 = vector.broadcast %cst_94 : f32 to vector<16x128xf32>
    %213 = arith.subf %211, %212 : vector<16x128xf32>
    %214 = vector.shape_cast %213 : vector<16x128xf32> to vector<1x16x128xf32>
    %cst_95 = arith.constant dense<0.000000e+00> : vector<1xf32>
    %215 = vector.multi_reduction <add>, %214, %cst_95 [1, 2] : vector<1x16x128xf32> to vector<1xf32>
    %216 = vector.shape_cast %215 : vector<1xf32> to vector<1x1x1xf32>
    %217 = vector.extract %216[0, 0, 0] : f32 from vector<1x1x1xf32>
    %cst_96 = arith.constant 0.0069444445 : f32
    %218 = arith.mulf %217, %cst_96 : f32
    %cst_97 = arith.constant 1.000000e+00 : f32
    %219 = arith.addf %cst_97, %218 : f32
    %c0_98 = arith.constant 0 : index
    %c0_99 = arith.constant 0 : index
    %220 = vector.load %arg19[%c0_98, %c0_99] : memref<128x128xbf16, #tpu.memory_space<vmem>>, vector<128x128xbf16>
    %c0_100 = arith.constant 0 : index
    %c0_101 = arith.constant 0 : index
    %221 = vector.load %arg20[%c0_100, %c0_101] : memref<16x24xbf16, #tpu.memory_space<vmem>>, vector<16x24xbf16>
    %cst_102 = arith.constant dense<0.000000e+00> : vector<24x128xf32>
    %222 = tpu.matmul %175, %220, %cst_102 {dimension_numbers = #tpu.dot_dimension_numbers<[1], [0], [0], [1], [0, 0, 1, 1], [], []>} : vector<24x128xbf16>, vector<128x128xbf16>, vector<24x128xf32> -> vector<24x128xf32>
    %223 = arith.truncf %222 : vector<24x128xf32> to vector<24x128xbf16>
    %cst_103 = arith.constant dense<0.000000e+00> : vector<16x128xf32>
    %224 = tpu.matmul %221, %223, %cst_103 {dimension_numbers = #tpu.dot_dimension_numbers<[1], [0], [0], [1], [0, 0, 1, 1], [], []>} : vector<16x24xbf16>, vector<24x128xbf16>, vector<16x128xf32> -> vector<16x128xf32>
    %cst_104 = arith.constant dense<0.000000e+00> : vector<24x128xf32>
    %225 = tpu.matmul %176, %220, %cst_104 {dimension_numbers = #tpu.dot_dimension_numbers<[1], [0], [0], [1], [0, 0, 1, 1], [], []>} : vector<24x128xbf16>, vector<128x128xbf16>, vector<24x128xf32> -> vector<24x128xf32>
    %226 = arith.truncf %225 : vector<24x128xf32> to vector<24x128xbf16>
    %cst_105 = arith.constant dense<0.000000e+00> : vector<16x128xf32>
    %227 = tpu.matmul %221, %226, %cst_105 {dimension_numbers = #tpu.dot_dimension_numbers<[1], [0], [0], [1], [0, 0, 1, 1], [], []>} : vector<16x24xbf16>, vector<24x128xbf16>, vector<16x128xf32> -> vector<16x128xf32>
    %c0_106 = arith.constant 0 : index
    %c0_107 = arith.constant 0 : index
    %228 = vector.load %arg11[%c0_106, %c0_107] : memref<128x128xbf16, #tpu.memory_space<vmem>>, vector<128x128xbf16>
    %c0_108 = arith.constant 0 : index
    %c0_109 = arith.constant 0 : index
    %229 = vector.load %arg12[%c0_108, %c0_109] : memref<8x16xbf16, #tpu.memory_space<vmem>>, vector<8x16xbf16>
    %230 = arith.mulf %224, %224 : vector<16x128xf32>
    %231 = arith.mulf %227, %227 : vector<16x128xf32>
    %232 = arith.mulf %224, %227 : vector<16x128xf32>
    %233 = tpu.concatenate %224, %227, %230, %231, %232 in 0 : vector<16x128xf32>, vector<16x128xf32>, vector<16x128xf32>, vector<16x128xf32>, vector<16x128xf32> -> vector<80x128xf32>
    %234 = arith.truncf %233 : vector<80x128xf32> to vector<80x128xbf16>
    %cst_110 = arith.constant dense<0.000000e+00> : vector<80x128xf32>
    %235 = tpu.matmul %234, %228, %cst_110 {dimension_numbers = #tpu.dot_dimension_numbers<[1], [0], [0], [1], [0, 0, 1, 1], [], []>} : vector<80x128xbf16>, vector<128x128xbf16>, vector<80x128xf32> -> vector<80x128xf32>
    %236 = vector.extract_strided_slice %235 {offsets = [0, 0], sizes = [16, 128], strides = [1, 1]} : vector<80x128xf32> to vector<16x128xf32>
    %237 = arith.truncf %236 : vector<16x128xf32> to vector<16x128xbf16>
    %cst_111 = arith.constant dense<0.000000e+00> : vector<8x128xf32>
    %238 = tpu.matmul %229, %237, %cst_111 {dimension_numbers = #tpu.dot_dimension_numbers<[1], [0], [0], [1], [0, 0, 1, 1], [], []>} : vector<8x16xbf16>, vector<16x128xbf16>, vector<8x128xf32> -> vector<8x128xf32>
    %239 = vector.extract_strided_slice %235 {offsets = [16, 0], sizes = [16, 128], strides = [1, 1]} : vector<80x128xf32> to vector<16x128xf32>
    %240 = arith.truncf %239 : vector<16x128xf32> to vector<16x128xbf16>
    %cst_112 = arith.constant dense<0.000000e+00> : vector<8x128xf32>
    %241 = tpu.matmul %229, %240, %cst_112 {dimension_numbers = #tpu.dot_dimension_numbers<[1], [0], [0], [1], [0, 0, 1, 1], [], []>} : vector<8x16xbf16>, vector<16x128xbf16>, vector<8x128xf32> -> vector<8x128xf32>
    %242 = vector.extract_strided_slice %235 {offsets = [32, 0], sizes = [16, 128], strides = [1, 1]} : vector<80x128xf32> to vector<16x128xf32>
    %243 = arith.truncf %242 : vector<16x128xf32> to vector<16x128xbf16>
    %cst_113 = arith.constant dense<0.000000e+00> : vector<8x128xf32>
    %244 = tpu.matmul %229, %243, %cst_113 {dimension_numbers = #tpu.dot_dimension_numbers<[1], [0], [0], [1], [0, 0, 1, 1], [], []>} : vector<8x16xbf16>, vector<16x128xbf16>, vector<8x128xf32> -> vector<8x128xf32>
    %245 = vector.extract_strided_slice %235 {offsets = [48, 0], sizes = [16, 128], strides = [1, 1]} : vector<80x128xf32> to vector<16x128xf32>
    %246 = arith.truncf %245 : vector<16x128xf32> to vector<16x128xbf16>
    %cst_114 = arith.constant dense<0.000000e+00> : vector<8x128xf32>
    %247 = tpu.matmul %229, %246, %cst_114 {dimension_numbers = #tpu.dot_dimension_numbers<[1], [0], [0], [1], [0, 0, 1, 1], [], []>} : vector<8x16xbf16>, vector<16x128xbf16>, vector<8x128xf32> -> vector<8x128xf32>
    %248 = vector.extract_strided_slice %235 {offsets = [64, 0], sizes = [16, 128], strides = [1, 1]} : vector<80x128xf32> to vector<16x128xf32>
    %249 = arith.truncf %248 : vector<16x128xf32> to vector<16x128xbf16>
    %cst_115 = arith.constant dense<0.000000e+00> : vector<8x128xf32>
    %250 = tpu.matmul %229, %249, %cst_115 {dimension_numbers = #tpu.dot_dimension_numbers<[1], [0], [0], [1], [0, 0, 1, 1], [], []>} : vector<8x16xbf16>, vector<16x128xbf16>, vector<8x128xf32> -> vector<8x128xf32>
    %251 = arith.mulf %238, %238 : vector<8x128xf32>
    %252 = arith.mulf %241, %241 : vector<8x128xf32>
    %253 = arith.mulf %238, %241 : vector<8x128xf32>
    %254 = arith.subf %244, %251 : vector<8x128xf32>
    %255 = arith.subf %247, %252 : vector<8x128xf32>
    %256 = arith.subf %250, %253 : vector<8x128xf32>
    %cst_116 = arith.constant 2.000000e+00 : f32
    %257 = vector.broadcast %cst_116 : f32 to vector<8x128xf32>
    %258 = arith.mulf %257, %256 : vector<8x128xf32>
    %cst_117 = arith.constant 8.99999984E-4 : f32
    %259 = vector.broadcast %cst_117 : f32 to vector<8x128xf32>
    %260 = arith.addf %258, %259 : vector<8x128xf32>
    %261 = arith.addf %254, %255 : vector<8x128xf32>
    %cst_118 = arith.constant 8.99999984E-4 : f32
    %262 = vector.broadcast %cst_118 : f32 to vector<8x128xf32>
    %263 = arith.addf %261, %262 : vector<8x128xf32>
    %264 = arith.divf %260, %263 : vector<8x128xf32>
    %cst_119 = arith.constant 2.000000e+00 : f32
    %265 = vector.broadcast %cst_119 : f32 to vector<8x128xf32>
    %266 = arith.mulf %265, %253 : vector<8x128xf32>
    %cst_120 = arith.constant 9.99999974E-5 : f32
    %267 = vector.broadcast %cst_120 : f32 to vector<8x128xf32>
    %268 = arith.addf %266, %267 : vector<8x128xf32>
    %269 = arith.addf %251, %252 : vector<8x128xf32>
    %cst_121 = arith.constant 9.99999974E-5 : f32
    %270 = vector.broadcast %cst_121 : f32 to vector<8x128xf32>
    %271 = arith.addf %269, %270 : vector<8x128xf32>
    %272 = arith.divf %268, %271 : vector<8x128xf32>
    %273 = arith.mulf %272, %264 : vector<8x128xf32>
    %cst_122 = arith.constant 1.000000e+00 : f32
    %274 = vector.broadcast %cst_122 : f32 to vector<8x128xf32>
    %275 = arith.subf %273, %274 : vector<8x128xf32>
    %276 = vector.shape_cast %275 : vector<8x128xf32> to vector<1x8x128xf32>
    %cst_123 = arith.constant dense<0.000000e+00> : vector<1xf32>
    %277 = vector.multi_reduction <add>, %276, %cst_123 [1, 2] : vector<1x8x128xf32> to vector<1xf32>
    %278 = vector.shape_cast %277 : vector<1xf32> to vector<1x1x1xf32>
    %279 = vector.extract %278[0, 0, 0] : f32 from vector<1x1x1xf32>
    %cst_124 = arith.constant 1.000000e+00 : f32
    %280 = arith.mulf %279, %cst_124 : f32
    %cst_125 = arith.constant 1.000000e+00 : f32
    %281 = arith.addf %cst_125, %280 : f32
    %282 = tpu.iota {dimensions = array<i32: 0>} : vector<8x128xi32>
    %cst_126 = arith.constant 0.000000e+00 : f32
    %283 = vector.broadcast %cst_126 : f32 to vector<8x128xf32>
    %c0_i32 = arith.constant 0 : i32
    %284 = vector.broadcast %c0_i32 : i32 to vector<8x128xi32>
    %285 = arith.cmpi eq, %282, %284 : vector<8x128xi32>
    %286 = vector.broadcast %54 : f32 to vector<8x128xf32>
    %287 = arith.select %285, %286, %283 : vector<8x128xi1>, vector<8x128xf32>
    %c1_i32 = arith.constant 1 : i32
    %288 = vector.broadcast %c1_i32 : i32 to vector<8x128xi32>
    %289 = arith.cmpi eq, %282, %288 : vector<8x128xi32>
    %290 = vector.broadcast %109 : f32 to vector<8x128xf32>
    %291 = arith.select %289, %290, %287 : vector<8x128xi1>, vector<8x128xf32>
    %c2_i32 = arith.constant 2 : i32
    %292 = vector.broadcast %c2_i32 : i32 to vector<8x128xi32>
    %293 = arith.cmpi eq, %282, %292 : vector<8x128xi32>
    %294 = vector.broadcast %164 : f32 to vector<8x128xf32>
    %295 = arith.select %293, %294, %291 : vector<8x128xi1>, vector<8x128xf32>
    %c3_i32 = arith.constant 3 : i32
    %296 = vector.broadcast %c3_i32 : i32 to vector<8x128xi32>
    %297 = arith.cmpi eq, %282, %296 : vector<8x128xi32>
    %298 = vector.broadcast %219 : f32 to vector<8x128xf32>
    %299 = arith.select %297, %298, %295 : vector<8x128xi1>, vector<8x128xf32>
    %c4_i32 = arith.constant 4 : i32
    %300 = vector.broadcast %c4_i32 : i32 to vector<8x128xi32>
    %301 = arith.cmpi eq, %282, %300 : vector<8x128xi32>
    %302 = vector.broadcast %281 : f32 to vector<8x128xf32>
    %303 = arith.select %301, %302, %299 : vector<8x128xi1>, vector<8x128xf32>
    %c0_127 = arith.constant 0 : index
    %c0_128 = arith.constant 0 : index
    %c0_129 = arith.constant 0 : index
    %304 = vector.load %arg21[%c0_127, %c0_128, %c0_129] : memref<1x8x128xf32, #tpu.memory_space<vmem>>, vector<1x8x128xf32>
    %305 = vector.shape_cast %304 : vector<1x8x128xf32> to vector<8x128xf32>
    %306 = vector.shape_cast %303 : vector<8x128xf32> to vector<1x8x128xf32>
    tpu.vector_store %arg21[%c0_127, %c0_128, %c0_129], %306 {strides = array<i32>} : memref<1x8x128xf32, #tpu.memory_space<vmem>>, vector<1x8x128xf32>,
    return
  }
  func.func @transform_0(%arg0: i32) -> (i32, i32, i32) {
    %c0_i32 = arith.constant 0 : i32
    %c0_i32_0 = arith.constant 0 : i32
    %c0_i32_1 = arith.constant 0 : i32
    return %arg0, %c0_i32, %c0_i32_0 : i32, i32, i32
  }
  func.func @transform_1(%arg0: i32) -> (i32, i32, i32) {
    %c0_i32 = arith.constant 0 : i32
    %c0_i32_0 = arith.constant 0 : i32
    %c0_i32_1 = arith.constant 0 : i32
    return %arg0, %c0_i32, %c0_i32_0 : i32, i32, i32
  }
  func.func @transform_2(%arg0: i32) -> (i32, i32) {
    %c0_i32 = arith.constant 0 : i32
    %c0_i32_0 = arith.constant 0 : i32
    %c0_i32_1 = arith.constant 0 : i32
    return %c0_i32, %c0_i32_0 : i32, i32
  }
  func.func @transform_3(%arg0: i32) -> (i32, i32) {
    %c0_i32 = arith.constant 0 : i32
    %c0_i32_0 = arith.constant 0 : i32
    %c0_i32_1 = arith.constant 0 : i32
    return %c0_i32, %c0_i32_0 : i32, i32
  }
  func.func @transform_4(%arg0: i32) -> (i32, i32) {
    %c0_i32 = arith.constant 0 : i32
    %c0_i32_0 = arith.constant 0 : i32
    %c0_i32_1 = arith.constant 0 : i32
    return %c0_i32, %c0_i32_0 : i32, i32
  }
  func.func @transform_5(%arg0: i32) -> (i32, i32) {
    %c0_i32 = arith.constant 0 : i32
    %c0_i32_0 = arith.constant 0 : i32
    %c0_i32_1 = arith.constant 0 : i32
    return %c0_i32, %c0_i32_0 : i32, i32
  }
  func.func @transform_6(%arg0: i32) -> (i32, i32) {
    %c0_i32 = arith.constant 0 : i32
    %c0_i32_0 = arith.constant 0 : i32
    %c0_i32_1 = arith.constant 0 : i32
    return %c0_i32, %c0_i32_0 : i32, i32
  }
  func.func @transform_7(%arg0: i32) -> (i32, i32) {
    %c0_i32 = arith.constant 0 : i32
    %c0_i32_0 = arith.constant 0 : i32
    %c0_i32_1 = arith.constant 0 : i32
    return %c0_i32, %c0_i32_0 : i32, i32
  }
  func.func @transform_8(%arg0: i32) -> (i32, i32) {
    %c0_i32 = arith.constant 0 : i32
    %c0_i32_0 = arith.constant 0 : i32
    %c0_i32_1 = arith.constant 0 : i32
    return %c0_i32, %c0_i32_0 : i32, i32
  }
  func.func @transform_9(%arg0: i32) -> (i32, i32) {
    %c0_i32 = arith.constant 0 : i32
    %c0_i32_0 = arith.constant 0 : i32
    %c0_i32_1 = arith.constant 0 : i32
    return %c0_i32, %c0_i32_0 : i32, i32
  }
  func.func @transform_10(%arg0: i32) -> (i32, i32) {
    %c0_i32 = arith.constant 0 : i32
    %c0_i32_0 = arith.constant 0 : i32
    %c0_i32_1 = arith.constant 0 : i32
    return %c0_i32, %c0_i32_0 : i32, i32
  }
  func.func @transform_11(%arg0: i32) -> (i32, i32) {
    %c0_i32 = arith.constant 0 : i32
    %c0_i32_0 = arith.constant 0 : i32
    %c0_i32_1 = arith.constant 0 : i32
    return %c0_i32, %c0_i32_0 : i32, i32
  }
  func.func @transform_12(%arg0: i32) -> (i32, i32) {
    %c0_i32 = arith.constant 0 : i32
    %c0_i32_0 = arith.constant 0 : i32
    %c0_i32_1 = arith.constant 0 : i32
    return %c0_i32, %c0_i32_0 : i32, i32
  }
  func.func @transform_13(%arg0: i32) -> (i32, i32) {
    %c0_i32 = arith.constant 0 : i32
    %c0_i32_0 = arith.constant 0 : i32
    %c0_i32_1 = arith.constant 0 : i32
    return %c0_i32, %c0_i32_0 : i32, i32
  }
  func.func @transform_14(%arg0: i32) -> (i32, i32) {
    %c0_i32 = arith.constant 0 : i32
    %c0_i32_0 = arith.constant 0 : i32
    %c0_i32_1 = arith.constant 0 : i32
    return %c0_i32, %c0_i32_0 : i32, i32
  }
  func.func @transform_15(%arg0: i32) -> (i32, i32) {
    %c0_i32 = arith.constant 0 : i32
    %c0_i32_0 = arith.constant 0 : i32
    %c0_i32_1 = arith.constant 0 : i32
    return %c0_i32, %c0_i32_0 : i32, i32
  }
  func.func @transform_16(%arg0: i32) -> (i32, i32) {
    %c0_i32 = arith.constant 0 : i32
    %c0_i32_0 = arith.constant 0 : i32
    %c0_i32_1 = arith.constant 0 : i32
    return %c0_i32, %c0_i32_0 : i32, i32
  }
  func.func @transform_17(%arg0: i32) -> (i32, i32) {
    %c0_i32 = arith.constant 0 : i32
    %c0_i32_0 = arith.constant 0 : i32
    %c0_i32_1 = arith.constant 0 : i32
    return %c0_i32, %c0_i32_0 : i32, i32
  }
  func.func @transform_18(%arg0: i32) -> (i32, i32) {
    %c0_i32 = arith.constant 0 : i32
    %c0_i32_0 = arith.constant 0 : i32
    %c0_i32_1 = arith.constant 0 : i32
    return %c0_i32, %c0_i32_0 : i32, i32
  }
  func.func @transform_19(%arg0: i32) -> (i32, i32) {
    %c0_i32 = arith.constant 0 : i32
    %c0_i32_0 = arith.constant 0 : i32
    %c0_i32_1 = arith.constant 0 : i32
    return %c0_i32, %c0_i32_0 : i32, i32
  }
  func.func @transform_20(%arg0: i32) -> (i32, i32, i32) {
    %c0_i32 = arith.constant 0 : i32
    %c0_i32_0 = arith.constant 0 : i32
    %c0_i32_1 = arith.constant 0 : i32
    return %arg0, %c0_i32, %c0_i32_0 : i32, i32, i32
  }
}

</mosaic_0001>

<llo_original>
// kernel: tpu_custom_call.1
$region0: #{tpu_custom_call.1}
  #allocation0 [shape = 'u32[]', space=smem, size = 0x4, offset = 0x4, fixed_abs, tag = 'smem constant byte address 0x4 - core index']
  #allocation1 [shape = 'u32[144,128]{1,0:T(1,128)}', space=vmem, size = 0x12000, scoped, tag = 'internal scratch']
  %s0 = inlined_call_operand.hbm [shape: f32[6,176,176], index: 0, kind: input, shape index: {}]
  %s1 = inlined_call_operand.hbm [shape: f32[6,176,176], index: 1, kind: input, shape index: {}]
  %s2 = inlined_call_operand.hbm [shape: bf16[176,256], index: 2, kind: input, shape index: {}]
  %s3 = inlined_call_operand.hbm [shape: bf16[168,176], index: 3, kind: input, shape index: {}]
  %s4 = inlined_call_operand.hbm [shape: bf16[128,128], index: 4, kind: input, shape index: {}]
  %s5 = inlined_call_operand.hbm [shape: bf16[80,88], index: 5, kind: input, shape index: {}]
  %s6 = inlined_call_operand.hbm [shape: bf16[128,128], index: 6, kind: input, shape index: {}]
  %s7 = inlined_call_operand.hbm [shape: bf16[40,48], index: 7, kind: input, shape index: {}]
  %s8 = inlined_call_operand.hbm [shape: bf16[128,128], index: 8, kind: input, shape index: {}]
  %s9 = inlined_call_operand.hbm [shape: bf16[16,24], index: 9, kind: input, shape index: {}]
  %s10 = inlined_call_operand.hbm [shape: bf16[128,128], index: 10, kind: input, shape index: {}]
  %s11 = inlined_call_operand.hbm [shape: bf16[8,16], index: 11, kind: input, shape index: {}]
  %s12 = inlined_call_operand.hbm [shape: bf16[176,128], index: 12, kind: input, shape index: {}]
  %s13 = inlined_call_operand.hbm [shape: bf16[88,176], index: 13, kind: input, shape index: {}]
  %s14 = inlined_call_operand.hbm [shape: bf16[128,128], index: 14, kind: input, shape index: {}]
  %s15 = inlined_call_operand.hbm [shape: bf16[48,88], index: 15, kind: input, shape index: {}]
  %s16 = inlined_call_operand.hbm [shape: bf16[128,128], index: 16, kind: input, shape index: {}]
  %s17 = inlined_call_operand.hbm [shape: bf16[24,48], index: 17, kind: input, shape index: {}]
  %s18 = inlined_call_operand.hbm [shape: bf16[128,128], index: 18, kind: input, shape index: {}]
  %s19 = inlined_call_operand.hbm [shape: bf16[16,24], index: 19, kind: input, shape index: {}]
  %s20 = inlined_call_operand.hbm [shape: f32[6,8,128], index: 20, kind: output, shape index: {}]
  %s21 = sld [smem:[#allocation0]]
  $region193: #{tpu_custom_call.1} parent=0
    _
  %s23 = ssub.s32 1, %s21
  %s24 = scalar_select 0, %s23, %s21
  $region1: #{tpu_custom_call.1} parent=0
    #allocation2 [shape = 'u8[360448]{0}', space=vmem, size = 0x58000, scoped, tag = 'input window, operand 0']
    #allocation3 [shape = 's32[2]{0}', space=sflag, size = 0x8, scoped, tag = 'scoped memory for tpu_custom_call.1']
    #allocation4 [shape = 's32[2]{0}', space=sflag, size = 0x8, scoped, tag = 'scoped memory for tpu_custom_call.1']
    #allocation5 [shape = 'u8[360448]{0}', space=vmem, size = 0x58000, scoped, tag = 'input window, operand 1']
    #allocation6 [shape = 's32[2]{0}', space=sflag, size = 0x8, scoped, tag = 'scoped memory for tpu_custom_call.1']
    #allocation7 [shape = 'u8[90112]{0}', space=vmem, size = 0x16000, scoped, tag = 'input window, operand 2, single buffered']
    #allocation8 [shape = 'u8[86016]{0}', space=vmem, size = 0x15000, scoped, tag = 'input window, operand 3, single buffered']
    #allocation9 [shape = 's32[1]{0}', space=sflag, size = 0x4, scoped, tag = 'scoped memory for tpu_custom_call.1']
    #allocation10 [shape = 'u8[32768]{0}', space=vmem, size = 0x8000, scoped, tag = 'input window, operand 4, single buffered']
    #allocation11 [shape = 'u8[20480]{0}', space=vmem, size = 0x5000, scoped, tag = 'input window, operand 5, single buffered']
    #allocation12 [shape = 's32[1]{0}', space=sflag, size = 0x4, scoped, tag = 'scoped memory for tpu_custom_call.1']
    #allocation13 [shape = 'u8[32768]{0}', space=vmem, size = 0x8000, scoped, tag = 'input window, operand 6, single buffered']
    #allocation14 [shape = 'u8[10240]{0}', space=vmem, size = 0x2800, scoped, tag = 'input window, operand 7, single buffered']
    #allocation15 [shape = 's32[1]{0}', space=sflag, size = 0x4, scoped, tag = 'scoped memory for tpu_custom_call.1']
    #allocation16 [shape = 'u8[32768]{0}', space=vmem, size = 0x8000, scoped, tag = 'input window, operand 8, single buffered']
    #allocation17 [shape = 'u8[4096]{0}', space=vmem, size = 0x1000, scoped, tag = 'input window, operand 9, single buffered']
    #allocation18 [shape = 's32[1]{0}', space=sflag, size = 0x4, scoped, tag = 'scoped memory for tpu_custom_call.1']
    #allocation19 [shape = 'u8[32768]{0}', space=vmem, size = 0x8000, scoped, tag = 'input window, operand 10, single buffered']
    #allocation20 [shape = 'u8[2048]{0}', space=vmem, size = 0x800, scoped, tag = 'input window, operand 11, single buffered']
    #allocation21 [shape = 's32[1]{0}', space=sflag, size = 0x4, scoped, tag = 'scoped memory for tpu_custom_call.1']
    #allocation22 [shape = 'u8[45056]{0}', space=vmem, size = 0xb000, scoped, tag = 'input window, operand 12, single buffered']
    #allocation23 [shape = 'u8[45056]{0}', space=vmem, size = 0xb000, scoped, tag = 'input window, operand 13, single buffered']
    #allocation24 [shape = 's32[1]{0}', space=sflag, size = 0x4, scoped, tag = 'scoped memory for tpu_custom_call.1']
    #allocation25 [shape = 'u8[32768]{0}', space=vmem, size = 0x8000, scoped, tag = 'input window, operand 14, single buffered']
    #allocation26 [shape = 'u8[12288]{0}', space=vmem, size = 0x3000, scoped, tag = 'input window, operand 15, single buffered']
    #allocation27 [shape = 's32[1]{0}', space=sflag, size = 0x4, scoped, tag = 'scoped memory for tpu_custom_call.1']
    #allocation28 [shape = 'u8[32768]{0}', space=vmem, size = 0x8000, scoped, tag = 'input window, operand 16, single buffered']
    #allocation29 [shape = 'u8[6144]{0}', space=vmem, size = 0x1800, scoped, tag = 'input window, operand 17, single buffered']
    #allocation30 [shape = 's32[1]{0}', space=sflag, size = 0x4, scoped, tag = 'scoped memory for tpu_custom_call.1']
    #allocation31 [shape = 'u8[32768]{0}', space=vmem, size = 0x8000, scoped, tag = 'input window, operand 18, single buffered']
    #allocation32 [shape = 'u8[4096]{0}', space=vmem, size = 0x1000, scoped, tag = 'input window, operand 19, single buffered']
    #allocation33 [shape = 's32[1]{0}', space=sflag, size = 0x4, scoped, tag = 'scoped memory for tpu_custom_call.1']
    #allocation34 [shape = 'u8[8192]{0}', space=vmem, size = 0x2000, scoped, tag = 'output window, operand 0']
    %25 = vsyncpa [#allocation3], 0
    %s26 = scalar_lea.sflag [#allocation3], 1
    %27 = vsyncpa %s26, 0
    %28 = vsyncpa [#allocation6], 0
    %s29 = scalar_lea.sflag [#allocation6], 1
    %30 = vsyncpa %s29, 0
    %31 = vsyncpa [#allocation9], 0
    %32 = vsyncpa [#allocation12], 0
    %33 = vsyncpa [#allocation15], 0
    %34 = vsyncpa [#allocation18], 0
    %35 = vsyncpa [#allocation21], 0
    %36 = vsyncpa [#allocation24], 0
    %37 = vsyncpa [#allocation27], 0
    %38 = vsyncpa [#allocation30], 0
    %39 = vsyncpa [#allocation33], 0
    %40 = vsyncpa [#allocation4], 0
    %s41 = scalar_lea.sflag [#allocation4], 1
    %42 = vsyncpa %s41, 0
    loop: start=0, step=1, limit=8
    $region2: #{tpu_custom_call.1} parent=1 // loop_pre_header
      _
    $region3: #{tpu_custom_call.1} parent=1 // loop_header
      %s44 = sphi 0, %s48
      %p45 = scmp.ge.s32.totalorder %s44, 8
      %s54 = sphi 0, %s56
      %s57 = sphi 0, %s54
      %s58 = sphi 0, %s57
      %s74 = sphi 0, %s58
      %s80 = sphi 0, %s82
      %s83 = sphi 0, %s80
      %s84 = sphi 0, %s83
      %s100 = sphi 0, %s84
      %s104 = sphi 0, %s104
      %s106 = sphi 0, %s104
      %s107 = sphi 0, %s106
      %s121 = sphi 0, %s107
      %s125 = sphi 0, %s125
      %s127 = sphi 0, %s125
      %s128 = sphi 0, %s127
      %s142 = sphi 0, %s128
      %s146 = sphi 0, %s146
      %s148 = sphi 0, %s146
      %s149 = sphi 0, %s148
      %s163 = sphi 0, %s149
      %s167 = sphi 0, %s167
      %s169 = sphi 0, %s167
      %s170 = sphi 0, %s169
      %s184 = sphi 0, %s170
      %s188 = sphi 0, %s188
      %s190 = sphi 0, %s188
      %s191 = sphi 0, %s190
      %s205 = sphi 0, %s191
      %s209 = sphi 0, %s209
      %s211 = sphi 0, %s209
      %s212 = sphi 0, %s211
      %s226 = sphi 0, %s212
      %s230 = sphi 0, %s230
      %s232 = sphi 0, %s230
      %s233 = sphi 0, %s232
      %s247 = sphi 0, %s233
      %s251 = sphi 0, %s251
      %s253 = sphi 0, %s251
      %s254 = sphi 0, %s253
      %s268 = sphi 0, %s254
      %s272 = sphi 0, %s272
      %s274 = sphi 0, %s272
      %s275 = sphi 0, %s274
      %s289 = sphi 0, %s275
      %s293 = sphi 0, %s293
      %s295 = sphi 0, %s293
      %s296 = sphi 0, %s295
      %s310 = sphi 0, %s296
      %s314 = sphi 0, %s314
      %s316 = sphi 0, %s314
      %s317 = sphi 0, %s316
      %s331 = sphi 0, %s317
      %s335 = sphi 0, %s335
      %s337 = sphi 0, %s335
      %s338 = sphi 0, %s337
      %s352 = sphi 0, %s338
      %s356 = sphi 0, %s356
      %s358 = sphi 0, %s356
      %s359 = sphi 0, %s358
      %s373 = sphi 0, %s359
      %s377 = sphi 0, %s377
      %s379 = sphi 0, %s377
      %s380 = sphi 0, %s379
      %s394 = sphi 0, %s380
      %s398 = sphi 0, %s398
      %s400 = sphi 0, %s398
      %s401 = sphi 0, %s400
      %s415 = sphi 0, %s401
      %s419 = sphi 0, %s419
      %s421 = sphi 0, %s419
      %s422 = sphi 0, %s421
      %s436 = sphi 0, %s422
      %s440 = sphi 0, %s440
      %s442 = sphi 0, %s440
      %s443 = sphi 0, %s442
      %s457 = sphi 0, %s443
      %s461 = sphi 0, %s461
      %s463 = sphi 0, %s461
      %s464 = sphi 0, %s463
      %s478 = sphi 0, %s464
      %s484 = sphi 0, %s486
      %s487 = sphi 0, %s484
      %s488 = sphi 0, %s487
      %s504 = sphi 0, %s488
    $region4: #{tpu_custom_call.1} parent=1 // loop_header_branch
      %47 = sbr.rel (%p45) target = $region8
    $region5: #{tpu_custom_call.1} parent=1 // loop_body
      %s49 = ssub.s32 %s44, 1
      %s50 = ssub.s32 %s44, 2
      %s51 = sadd.s32 %s44, 1
      %s52 = ssub.s32 %s44, %s51
      %p53 = scmp.eq.s32.totalorder %s52, 0
      %s55 = sadd.s32 %s54, 1
      %s56 = scalar_select %p53, %s54, %s55
      %p59 = pneg %p53
      %p60 = scmp.eq.s32.totalorder %s44, 5
      %p61 = por %p59, %p60
      %p62 = scmp.ne.s32.totalorder %s54, %s57
      %p63 = scmp.eq.s32.totalorder %s44, 0
      %p64 = por %p62, %p63
      %p65 = scmp.ne.s32.totalorder %s54, %s57
      %p66 = scmp.eq.s32.totalorder %s49, 5
      %p67 = por %p65, %p66
      %p68 = scmp.ne.s32.totalorder %s57, %s58
      %p69 = scmp.eq.s32.totalorder %s49, 0
      %p70 = por %p68, %p69
      %p71 = scmp.ne.s32.totalorder %s57, %s58
      %p72 = scmp.eq.s32.totalorder %s50, 5
      %p73 = por %p71, %p72
      %p75 = scmp.ne.s32.totalorder %s58, %s74
      %p76 = scmp.eq.s32.totalorder %s50, 0
      %p77 = por %p75, %p76
      %s78 = ssub.s32 %s44, %s51
      %p79 = scmp.eq.s32.totalorder %s78, 0
      %s81 = sadd.s32 %s80, 1
      %s82 = scalar_select %p79, %s80, %s81
      %p85 = pneg %p79
      %p86 = scmp.eq.s32.totalorder %s44, 5
      %p87 = por %p85, %p86
      %p88 = scmp.ne.s32.totalorder %s80, %s83
      %p89 = scmp.eq.s32.totalorder %s44, 0
      %p90 = por %p88, %p89
      %p91 = scmp.ne.s32.totalorder %s80, %s83
      %p92 = scmp.eq.s32.totalorder %s49, 5
      %p93 = por %p91, %p92
      %p94 = scmp.ne.s32.totalorder %s83, %s84
      %p95 = scmp.eq.s32.totalorder %s49, 0
      %p96 = por %p94, %p95
      %p97 = scmp.ne.s32.totalorder %s83, %s84
      %p98 = scmp.eq.s32.totalorder %s50, 5
      %p99 = por %p97, %p98
      %p101 = scmp.ne.s32.totalorder %s84, %s100
      %p102 = scmp.eq.s32.totalorder %s50, 0
      %p103 = por %p101, %p102
      %s105 = sadd.s32 %s104, 1
      %p108 = scmp.eq.s32.totalorder %s44, 5
      %p109 = scmp.ne.s32.totalorder %s104, %s106
      %p110 = scmp.eq.s32.totalorder %s44, 0
      %p111 = por %p109, %p110
      %p112 = scmp.ne.s32.totalorder %s104, %s106
      %p113 = scmp.eq.s32.totalorder %s49, 5
      %p114 = por %p112, %p113
      %p115 = scmp.ne.s32.totalorder %s106, %s107
      %p116 = scmp.eq.s32.totalorder %s49, 0
      %p117 = por %p115, %p116
      %p118 = scmp.ne.s32.totalorder %s106, %s107
      %p119 = scmp.eq.s32.totalorder %s50, 5
      %p120 = por %p118, %p119
      %p122 = scmp.ne.s32.totalorder %s107, %s121
      %p123 = scmp.eq.s32.totalorder %s50, 0
      %p124 = por %p122, %p123
      %s126 = sadd.s32 %s125, 1
      %p129 = scmp.eq.s32.totalorder %s44, 5
      %p130 = scmp.ne.s32.totalorder %s125, %s127
      %p131 = scmp.eq.s32.totalorder %s44, 0
      %p132 = por %p130, %p131
      %p133 = scmp.ne.s32.totalorder %s125, %s127
      %p134 = scmp.eq.s32.totalorder %s49, 5
      %p135 = por %p133, %p134
      %p136 = scmp.ne.s32.totalorder %s127, %s128
      %p137 = scmp.eq.s32.totalorder %s49, 0
      %p138 = por %p136, %p137
      %p139 = scmp.ne.s32.totalorder %s127, %s128
      %p140 = scmp.eq.s32.totalorder %s50, 5
      %p141 = por %p139, %p140
      %p143 = scmp.ne.s32.totalorder %s128, %s142
      %p144 = scmp.eq.s32.totalorder %s50, 0
      %p145 = por %p143, %p144
      %s147 = sadd.s32 %s146, 1
      %p150 = scmp.eq.s32.totalorder %s44, 5
      %p151 = scmp.ne.s32.totalorder %s146, %s148
      %p152 = scmp.eq.s32.totalorder %s44, 0
      %p153 = por %p151, %p152
      %p154 = scmp.ne.s32.totalorder %s146, %s148
      %p155 = scmp.eq.s32.totalorder %s49, 5
      %p156 = por %p154, %p155
      %p157 = scmp.ne.s32.totalorder %s148, %s149
      %p158 = scmp.eq.s32.totalorder %s49, 0
      %p159 = por %p157, %p158
      %p160 = scmp.ne.s32.totalorder %s148, %s149
      %p161 = scmp.eq.s32.totalorder %s50, 5
      %p162 = por %p160, %p161
      %p164 = scmp.ne.s32.totalorder %s149, %s163
      %p165 = scmp.eq.s32.totalorder %s50, 0
      %p166 = por %p164, %p165
      %s168 = sadd.s32 %s167, 1
      %p171 = scmp.eq.s32.totalorder %s44, 5
      %p172 = scmp.ne.s32.totalorder %s167, %s169
      %p173 = scmp.eq.s32.totalorder %s44, 0
      %p174 = por %p172, %p173
      %p175 = scmp.ne.s32.totalorder %s167, %s169
      %p176 = scmp.eq.s32.totalorder %s49, 5
      %p177 = por %p175, %p176
      %p178 = scmp.ne.s32.totalorder %s169, %s170
      %p179 = scmp.eq.s32.totalorder %s49, 0
      %p180 = por %p178, %p179
      %p181 = scmp.ne.s32.totalorder %s169, %s170
      %p182 = scmp.eq.s32.totalorder %s50, 5
      %p183 = por %p181, %p182
      %p185 = scmp.ne.s32.totalorder %s170, %s184
      %p186 = scmp.eq.s32.totalorder %s50, 0
      %p187 = por %p185, %p186
      %s189 = sadd.s32 %s188, 1
      %p192 = scmp.eq.s32.totalorder %s44, 5
      %p193 = scmp.ne.s32.totalorder %s188, %s190
      %p194 = scmp.eq.s32.totalorder %s44, 0
      %p195 = por %p193, %p194
      %p196 = scmp.ne.s32.totalorder %s188, %s190
      %p197 = scmp.eq.s32.totalorder %s49, 5
      %p198 = por %p196, %p197
      %p199 = scmp.ne.s32.totalorder %s190, %s191
      %p200 = scmp.eq.s32.totalorder %s49, 0
      %p201 = por %p199, %p200
      %p202 = scmp.ne.s32.totalorder %s190, %s191
      %p203 = scmp.eq.s32.totalorder %s50, 5
      %p204 = por %p202, %p203
      %p206 = scmp.ne.s32.totalorder %s191, %s205
      %p207 = scmp.eq.s32.totalorder %s50, 0
      %p208 = por %p206, %p207
      %s210 = sadd.s32 %s209, 1
      %p213 = scmp.eq.s32.totalorder %s44, 5
      %p214 = scmp.ne.s32.totalorder %s209, %s211
      %p215 = scmp.eq.s32.totalorder %s44, 0
      %p216 = por %p214, %p215
      %p217 = scmp.ne.s32.totalorder %s209, %s211
      %p218 = scmp.eq.s32.totalorder %s49, 5
      %p219 = por %p217, %p218
      %p220 = scmp.ne.s32.totalorder %s211, %s212
      %p221 = scmp.eq.s32.totalorder %s49, 0
      %p222 = por %p220, %p221
      %p223 = scmp.ne.s32.totalorder %s211, %s212
      %p224 = scmp.eq.s32.totalorder %s50, 5
      %p225 = por %p223, %p224
      %p227 = scmp.ne.s32.totalorder %s212, %s226
      %p228 = scmp.eq.s32.totalorder %s50, 0
      %p229 = por %p227, %p228
      %s231 = sadd.s32 %s230, 1
      %p234 = scmp.eq.s32.totalorder %s44, 5
      %p235 = scmp.ne.s32.totalorder %s230, %s232
      %p236 = scmp.eq.s32.totalorder %s44, 0
      %p237 = por %p235, %p236
      %p238 = scmp.ne.s32.totalorder %s230, %s232
      %p239 = scmp.eq.s32.totalorder %s49, 5
      %p240 = por %p238, %p239
      %p241 = scmp.ne.s32.totalorder %s232, %s233
      %p242 = scmp.eq.s32.totalorder %s49, 0
      %p243 = por %p241, %p242
      %p244 = scmp.ne.s32.totalorder %s232, %s233
      %p245 = scmp.eq.s32.totalorder %s50, 5
      %p246 = por %p244, %p245
      %p248 = scmp.ne.s32.totalorder %s233, %s247
      %p249 = scmp.eq.s32.totalorder %s50, 0
      %p250 = por %p248, %p249
      %s252 = sadd.s32 %s251, 1
      %p255 = scmp.eq.s32.totalorder %s44, 5
      %p256 = scmp.ne.s32.totalorder %s251, %s253
      %p257 = scmp.eq.s32.totalorder %s44, 0
      %p258 = por %p256, %p257
      %p259 = scmp.ne.s32.totalorder %s251, %s253
      %p260 = scmp.eq.s32.totalorder %s49, 5
      %p261 = por %p259, %p260
      %p262 = scmp.ne.s32.totalorder %s253, %s254
      %p263 = scmp.eq.s32.totalorder %s49, 0
      %p264 = por %p262, %p263
      %p265 = scmp.ne.s32.totalorder %s253, %s254
      %p266 = scmp.eq.s32.totalorder %s50, 5
      %p267 = por %p265, %p266
      %p269 = scmp.ne.s32.totalorder %s254, %s268
      %p270 = scmp.eq.s32.totalorder %s50, 0
      %p271 = por %p269, %p270
      %s273 = sadd.s32 %s272, 1
      %p276 = scmp.eq.s32.totalorder %s44, 5
      %p277 = scmp.ne.s32.totalorder %s272, %s274
      %p278 = scmp.eq.s32.totalorder %s44, 0
      %p279 = por %p277, %p278
      %p280 = scmp.ne.s32.totalorder %s272, %s274
      %p281 = scmp.eq.s32.totalorder %s49, 5
      %p282 = por %p280, %p281
      %p283 = scmp.ne.s32.totalorder %s274, %s275
      %p284 = scmp.eq.s32.totalorder %s49, 0
      %p285 = por %p283, %p284
      %p286 = scmp.ne.s32.totalorder %s274, %s275
      %p287 = scmp.eq.s32.totalorder %s50, 5
      %p288 = por %p286, %p287
      %p290 = scmp.ne.s32.totalorder %s275, %s289
      %p291 = scmp.eq.s32.totalorder %s50, 0
      %p292 = por %p290, %p291
      %s294 = sadd.s32 %s293, 1
      %p297 = scmp.eq.s32.totalorder %s44, 5
      %p298 = scmp.ne.s32.totalorder %s293, %s295
      %p299 = scmp.eq.s32.totalorder %s44, 0
      %p300 = por %p298, %p299
      %p301 = scmp.ne.s32.totalorder %s293, %s295
      %p302 = scmp.eq.s32.totalorder %s49, 5
      %p303 = por %p301, %p302
      %p304 = scmp.ne.s32.totalorder %s295, %s296
      %p305 = scmp.eq.s32.totalorder %s49, 0
      %p306 = por %p304, %p305
      %p307 = scmp.ne.s32.totalorder %s295, %s296
      %p308 = scmp.eq.s32.totalorder %s50, 5
      %p309 = por %p307, %p308
      %p311 = scmp.ne.s32.totalorder %s296, %s310
      %p312 = scmp.eq.s32.totalorder %s50, 0
      %p313 = por %p311, %p312
      %s315 = sadd.s32 %s314, 1
      %p318 = scmp.eq.s32.totalorder %s44, 5
      %p319 = scmp.ne.s32.totalorder %s314, %s316
      %p320 = scmp.eq.s32.totalorder %s44, 0
      %p321 = por %p319, %p320
      %p322 = scmp.ne.s32.totalorder %s314, %s316
      %p323 = scmp.eq.s32.totalorder %s49, 5
      %p324 = por %p322, %p323
      %p325 = scmp.ne.s32.totalorder %s316, %s317
      %p326 = scmp.eq.s32.totalorder %s49, 0
      %p327 = por %p325, %p326
      %p328 = scmp.ne.s32.totalorder %s316, %s317
      %p329 = scmp.eq.s32.totalorder %s50, 5
      %p330 = por %p328, %p329
      %p332 = scmp.ne.s32.totalorder %s317, %s331
      %p333 = scmp.eq.s32.totalorder %s50, 0
      %p334 = por %p332, %p333
      %s336 = sadd.s32 %s335, 1
      %p339 = scmp.eq.s32.totalorder %s44, 5
      %p340 = scmp.ne.s32.totalorder %s335, %s337
      %p341 = scmp.eq.s32.totalorder %s44, 0
      %p342 = por %p340, %p341
      %p343 = scmp.ne.s32.totalorder %s335, %s337
      %p344 = scmp.eq.s32.totalorder %s49, 5
      %p345 = por %p343, %p344
      %p346 = scmp.ne.s32.totalorder %s337, %s338
      %p347 = scmp.eq.s32.totalorder %s49, 0
      %p348 = por %p346, %p347
      %p349 = scmp.ne.s32.totalorder %s337, %s338
      %p350 = scmp.eq.s32.totalorder %s50, 5
      %p351 = por %p349, %p350
      %p353 = scmp.ne.s32.totalorder %s338, %s352
      %p354 = scmp.eq.s32.totalorder %s50, 0
      %p355 = por %p353, %p354
      %s357 = sadd.s32 %s356, 1
      %p360 = scmp.eq.s32.totalorder %s44, 5
      %p361 = scmp.ne.s32.totalorder %s356, %s358
      %p362 = scmp.eq.s32.totalorder %s44, 0
      %p363 = por %p361, %p362
      %p364 = scmp.ne.s32.totalorder %s356, %s358
      %p365 = scmp.eq.s32.totalorder %s49, 5
      %p366 = por %p364, %p365
      %p367 = scmp.ne.s32.totalorder %s358, %s359
      %p368 = scmp.eq.s32.totalorder %s49, 0
      %p369 = por %p367, %p368
      %p370 = scmp.ne.s32.totalorder %s358, %s359
      %p371 = scmp.eq.s32.totalorder %s50, 5
      %p372 = por %p370, %p371
      %p374 = scmp.ne.s32.totalorder %s359, %s373
      %p375 = scmp.eq.s32.totalorder %s50, 0
      %p376 = por %p374, %p375
      %s378 = sadd.s32 %s377, 1
      %p381 = scmp.eq.s32.totalorder %s44, 5
      %p382 = scmp.ne.s32.totalorder %s377, %s379
      %p383 = scmp.eq.s32.totalorder %s44, 0
      %p384 = por %p382, %p383
      %p385 = scmp.ne.s32.totalorder %s377, %s379
      %p386 = scmp.eq.s32.totalorder %s49, 5
      %p387 = por %p385, %p386
      %p388 = scmp.ne.s32.totalorder %s379, %s380
      %p389 = scmp.eq.s32.totalorder %s49, 0
      %p390 = por %p388, %p389
      %p391 = scmp.ne.s32.totalorder %s379, %s380
      %p392 = scmp.eq.s32.totalorder %s50, 5
      %p393 = por %p391, %p392
      %p395 = scmp.ne.s32.totalorder %s380, %s394
      %p396 = scmp.eq.s32.totalorder %s50, 0
      %p397 = por %p395, %p396
      %s399 = sadd.s32 %s398, 1
      %p402 = scmp.eq.s32.totalorder %s44, 5
      %p403 = scmp.ne.s32.totalorder %s398, %s400
      %p404 = scmp.eq.s32.totalorder %s44, 0
      %p405 = por %p403, %p404
      %p406 = scmp.ne.s32.totalorder %s398, %s400
      %p407 = scmp.eq.s32.totalorder %s49, 5
      %p408 = por %p406, %p407
      %p409 = scmp.ne.s32.totalorder %s400, %s401
      %p410 = scmp.eq.s32.totalorder %s49, 0
      %p411 = por %p409, %p410
      %p412 = scmp.ne.s32.totalorder %s400, %s401
      %p413 = scmp.eq.s32.totalorder %s50, 5
      %p414 = por %p412, %p413
      %p416 = scmp.ne.s32.totalorder %s401, %s415
      %p417 = scmp.eq.s32.totalorder %s50, 0
      %p418 = por %p416, %p417
      %s420 = sadd.s32 %s419, 1
      %p423 = scmp.eq.s32.totalorder %s44, 5
      %p424 = scmp.ne.s32.totalorder %s419, %s421
      %p425 = scmp.eq.s32.totalorder %s44, 0
      %p426 = por %p424, %p425
      %p427 = scmp.ne.s32.totalorder %s419, %s421
      %p428 = scmp.eq.s32.totalorder %s49, 5
      %p429 = por %p427, %p428
      %p430 = scmp.ne.s32.totalorder %s421, %s422
      %p431 = scmp.eq.s32.totalorder %s49, 0
      %p432 = por %p430, %p431
      %p433 = scmp.ne.s32.totalorder %s421, %s422
      %p434 = scmp.eq.s32.totalorder %s50, 5
      %p435 = por %p433, %p434
      %p437 = scmp.ne.s32.totalorder %s422, %s436
      %p438 = scmp.eq.s32.totalorder %s50, 0
      %p439 = por %p437, %p438
      %s441 = sadd.s32 %s440, 1
      %p444 = scmp.eq.s32.totalorder %s44, 5
      %p445 = scmp.ne.s32.totalorder %s440, %s442
      %p446 = scmp.eq.s32.totalorder %s44, 0
      %p447 = por %p445, %p446
      %p448 = scmp.ne.s32.totalorder %s440, %s442
      %p449 = scmp.eq.s32.totalorder %s49, 5
      %p450 = por %p448, %p449
      %p451 = scmp.ne.s32.totalorder %s442, %s443
      %p452 = scmp.eq.s32.totalorder %s49, 0
      %p453 = por %p451, %p452
      %p454 = scmp.ne.s32.totalorder %s442, %s443
      %p455 = scmp.eq.s32.totalorder %s50, 5
      %p456 = por %p454, %p455
      %p458 = scmp.ne.s32.totalorder %s443, %s457
      %p459 = scmp.eq.s32.totalorder %s50, 0
      %p460 = por %p458, %p459
      %s462 = sadd.s32 %s461, 1
      %p465 = scmp.eq.s32.totalorder %s44, 5
      %p466 = scmp.ne.s32.totalorder %s461, %s463
      %p467 = scmp.eq.s32.totalorder %s44, 0
      %p468 = por %p466, %p467
      %p469 = scmp.ne.s32.totalorder %s461, %s463
      %p470 = scmp.eq.s32.totalorder %s49, 5
      %p471 = por %p469, %p470
      %p472 = scmp.ne.s32.totalorder %s463, %s464
      %p473 = scmp.eq.s32.totalorder %s49, 0
      %p474 = por %p472, %p473
      %p475 = scmp.ne.s32.totalorder %s463, %s464
      %p476 = scmp.eq.s32.totalorder %s50, 5
      %p477 = por %p475, %p476
      %p479 = scmp.ne.s32.totalorder %s464, %s478
      %p480 = scmp.eq.s32.totalorder %s50, 0
      %p481 = por %p479, %p480
      %s482 = ssub.s32 %s44, %s51
      %p483 = scmp.eq.s32.totalorder %s482, 0
      %s485 = sadd.s32 %s484, 1
      %s486 = scalar_select %p483, %s484, %s485
      %p489 = pneg %p483
      %p490 = scmp.eq.s32.totalorder %s44, 5
      %p491 = por %p489, %p490
      %p492 = scmp.ne.s32.totalorder %s484, %s487
      %p493 = scmp.eq.s32.totalorder %s44, 0
      %p494 = por %p492, %p493
      %p495 = scmp.ne.s32.totalorder %s484, %s487
      %p496 = scmp.eq.s32.totalorder %s49, 5
      %p497 = por %p495, %p496
      %p498 = scmp.ne.s32.totalorder %s487, %s488
      %p499 = scmp.eq.s32.totalorder %s49, 0
      %p500 = por %p498, %p499
      %p501 = scmp.ne.s32.totalorder %s487, %s488
      %p502 = scmp.eq.s32.totalorder %s50, 5
      %p503 = por %p501, %p502
      %p505 = scmp.ne.s32.totalorder %s488, %s504
      %p506 = scmp.eq.s32.totalorder %s50, 0
      %p507 = por %p505, %p506
      %p508 = scmp.le.s32.totalorder 1, %s44
      %p509 = scmp.lt.s32.totalorder %s44, 7
      %p510 = pnand %p508, %p509
      %p511 = pneg %p510
      // Predicated region
      $region9: #{tpu_custom_call.1} parent=5 // pred_check
        _
      $region10: #{tpu_custom_call.1} parent=5 // pred_check_branch
        %513 = sbr.rel (%p510) target = $region12
      $region11: #{tpu_custom_call.1} parent=5 // pred_region
        %s514 = ssub.s32 %s44, 1
        // Predicated region
        $region13: #{tpu_custom_call.1} parent=11 // pred_check
          %p515 = pneg %p117
        $region14: #{tpu_custom_call.1} parent=11 // pred_check_branch
          %517 = sbr.rel (%p515) target = $region16
        $region15: #{tpu_custom_call.1} parent=11 // pred_region
          %s519 = ssub.s32 2816, 2816
          %520 = vsyncadd [#allocation6], %s519
          %s521 = sshll.u32 [#allocation7], 4
          %s522 = int_to_ptr.vmem [resolvable:$true] %s521
          %527 = dma.hbm_to_vmem [thread:$0]  %s2, 2816, %s522, [#allocation6], 128, 128, 8
        $region16: #{tpu_custom_call.1} parent=11 // pred_fallthru
          _
        // Predicated region
        $region17: #{tpu_custom_call.1} parent=11 // pred_check
          %p528 = pneg %p138
        $region18: #{tpu_custom_call.1} parent=11 // pred_check_branch
          %530 = sbr.rel (%p528) target = $region20
        $region19: #{tpu_custom_call.1} parent=11 // pred_region
          %s532 = ssub.s32 2688, 2688
          %533 = vsyncadd [#allocation9], %s532
          %s534 = sshll.u32 [#allocation8], 4
          %s535 = int_to_ptr.vmem [resolvable:$true] %s534
          %540 = dma.hbm_to_vmem [thread:$0]  %s3, 2688, %s535, [#allocation9], 128, 128, 8
        $region20: #{tpu_custom_call.1} parent=11 // pred_fallthru
          _
        // Predicated region
        $region21: #{tpu_custom_call.1} parent=11 // pred_check
          %p541 = pneg %p159
        $region22: #{tpu_custom_call.1} parent=11 // pred_check_branch
          %543 = sbr.rel (%p541) target = $region24
        $region23: #{tpu_custom_call.1} parent=11 // pred_region
          %s545 = ssub.s32 1024, 1024
          %546 = vsyncadd [#allocation9], %s545
          %s547 = sshll.u32 [#allocation10], 4
          %s548 = int_to_ptr.vmem [resolvable:$true] %s547
          %553 = dma.hbm_to_vmem [thread:$0]  %s4, 1024, %s548, [#allocation9], 64, 64, 4
        $region24: #{tpu_custom_call.1} parent=11 // pred_fallthru
          _
        // Predicated region
        $region25: #{tpu_custom_call.1} parent=11 // pred_check
          %p554 = pneg %p180
        $region26: #{tpu_custom_call.1} parent=11 // pred_check_branch
          %556 = sbr.rel (%p554) target = $region28
        $region27: #{tpu_custom_call.1} parent=11 // pred_region
          %s558 = ssub.s32 640, 640
          %559 = vsyncadd [#allocation12], %s558
          %s560 = sshll.u32 [#allocation11], 4
          %s561 = int_to_ptr.vmem [resolvable:$true] %s560
          %566 = dma.hbm_to_vmem [thread:$0]  %s5, 640, %s561, [#allocation12], 64, 64, 4
        $region28: #{tpu_custom_call.1} parent=11 // pred_fallthru
          _
        // Predicated region
        $region29: #{tpu_custom_call.1} parent=11 // pred_check
          %p567 = pneg %p201
        $region30: #{tpu_custom_call.1} parent=11 // pred_check_branch
          %569 = sbr.rel (%p567) target = $region32
        $region31: #{tpu_custom_call.1} parent=11 // pred_region
          %s571 = ssub.s32 1024, 1024
          %572 = vsyncadd [#allocation12], %s571
          %s573 = sshll.u32 [#allocation13], 4
          %s574 = int_to_ptr.vmem [resolvable:$true] %s573
          %579 = dma.hbm_to_vmem [thread:$0]  %s6, 1024, %s574, [#allocation12], 64, 64, 4
        $region32: #{tpu_custom_call.1} parent=11 // pred_fallthru
          _
        // Predicated region
        $region33: #{tpu_custom_call.1} parent=11 // pred_check
          %p580 = pneg %p222
        $region34: #{tpu_custom_call.1} parent=11 // pred_check_branch
          %582 = sbr.rel (%p580) target = $region36
        $region35: #{tpu_custom_call.1} parent=11 // pred_region
          %s584 = ssub.s32 320, 320
          %585 = vsyncadd [#allocation15], %s584
          %s586 = sshll.u32 [#allocation14], 4
          %s587 = int_to_ptr.vmem [resolvable:$true] %s586
          %592 = dma.hbm_to_vmem [thread:$0]  %s7, 320, %s587, [#allocation15], 64, 64, 4
        $region36: #{tpu_custom_call.1} parent=11 // pred_fallthru
          _
        // Predicated region
        $region37: #{tpu_custom_call.1} parent=11 // pred_check
          %p593 = pneg %p243
        $region38: #{tpu_custom_call.1} parent=11 // pred_check_branch
          %595 = sbr.rel (%p593) target = $region40
        $region39: #{tpu_custom_call.1} parent=11 // pred_region
          %s597 = ssub.s32 1024, 1024
          %598 = vsyncadd [#allocation15], %s597
          %s599 = sshll.u32 [#allocation16], 4
          %s600 = int_to_ptr.vmem [resolvable:$true] %s599
          %605 = dma.hbm_to_vmem [thread:$0]  %s8, 1024, %s600, [#allocation15], 64, 64, 4
        $region40: #{tpu_custom_call.1} parent=11 // pred_fallthru
          _
        // Predicated region
        $region41: #{tpu_custom_call.1} parent=11 // pred_check
          %p606 = pneg %p264
        $region42: #{tpu_custom_call.1} parent=11 // pred_check_branch
          %608 = sbr.rel (%p606) target = $region44
        $region43: #{tpu_custom_call.1} parent=11 // pred_region
          %s610 = ssub.s32 128, 128
          %611 = vsyncadd [#allocation18], %s610
          %s612 = sshll.u32 [#allocation17], 4
          %s613 = int_to_ptr.vmem [resolvable:$true] %s612
          %618 = dma.hbm_to_vmem [thread:$0]  %s9, 128, %s613, [#allocation18], 64, 64, 4
        $region44: #{tpu_custom_call.1} parent=11 // pred_fallthru
          _
        // Predicated region
        $region45: #{tpu_custom_call.1} parent=11 // pred_check
          %p619 = pneg %p285
        $region46: #{tpu_custom_call.1} parent=11 // pred_check_branch
          %621 = sbr.rel (%p619) target = $region48
        $region47: #{tpu_custom_call.1} parent=11 // pred_region
          %s623 = ssub.s32 1024, 1024
          %624 = vsyncadd [#allocation18], %s623
          %s625 = sshll.u32 [#allocation19], 4
          %s626 = int_to_ptr.vmem [resolvable:$true] %s625
          %631 = dma.hbm_to_vmem [thread:$0]  %s10, 1024, %s626, [#allocation18], 64, 64, 4
        $region48: #{tpu_custom_call.1} parent=11 // pred_fallthru
          _
        // Predicated region
        $region49: #{tpu_custom_call.1} parent=11 // pred_check
          %p632 = pneg %p306
        $region50: #{tpu_custom_call.1} parent=11 // pred_check_branch
          %634 = sbr.rel (%p632) target = $region52
        $region51: #{tpu_custom_call.1} parent=11 // pred_region
          %s636 = ssub.s32 64, 64
          %637 = vsyncadd [#allocation21], %s636
          %s639 = sshll.u32 [#allocation20], 4
          %s640 = int_to_ptr.vmem [resolvable:$true] %s639
          %642 = dma.hbm_to_vmem [thread:$0]  %s11, 64, %s640, [#allocation21]
        $region52: #{tpu_custom_call.1} parent=11 // pred_fallthru
          _
        // Predicated region
        $region53: #{tpu_custom_call.1} parent=11 // pred_check
          %p643 = pneg %p327
        $region54: #{tpu_custom_call.1} parent=11 // pred_check_branch
          %645 = sbr.rel (%p643) target = $region56
        $region55: #{tpu_custom_call.1} parent=11 // pred_region
          %s647 = ssub.s32 1408, 1408
          %648 = vsyncadd [#allocation21], %s647
          %s649 = sshll.u32 [#allocation22], 4
          %s650 = int_to_ptr.vmem [resolvable:$true] %s649
          %655 = dma.hbm_to_vmem [thread:$0]  %s12, 1408, %s650, [#allocation21], 64, 64, 4
        $region56: #{tpu_custom_call.1} parent=11 // pred_fallthru
          _
        // Predicated region
        $region57: #{tpu_custom_call.1} parent=11 // pred_check
          %p656 = pneg %p348
        $region58: #{tpu_custom_call.1} parent=11 // pred_check_branch
          %658 = sbr.rel (%p656) target = $region60
        $region59: #{tpu_custom_call.1} parent=11 // pred_region
          %s660 = ssub.s32 1408, 1408
          %661 = vsyncadd [#allocation24], %s660
          %s662 = sshll.u32 [#allocation23], 4
          %s663 = int_to_ptr.vmem [resolvable:$true] %s662
          %668 = dma.hbm_to_vmem [thread:$0]  %s13, 1408, %s663, [#allocation24], 128, 128, 8
        $region60: #{tpu_custom_call.1} parent=11 // pred_fallthru
          _
        // Predicated region
        $region61: #{tpu_custom_call.1} parent=11 // pred_check
          %p669 = pneg %p369
        $region62: #{tpu_custom_call.1} parent=11 // pred_check_branch
          %671 = sbr.rel (%p669) target = $region64
        $region63: #{tpu_custom_call.1} parent=11 // pred_region
          %s673 = ssub.s32 1024, 1024
          %674 = vsyncadd [#allocation24], %s673
          %s675 = sshll.u32 [#allocation25], 4
          %s676 = int_to_ptr.vmem [resolvable:$true] %s675
          %681 = dma.hbm_to_vmem [thread:$0]  %s14, 1024, %s676, [#allocation24], 64, 64, 4
        $region64: #{tpu_custom_call.1} parent=11 // pred_fallthru
          _
        // Predicated region
        $region65: #{tpu_custom_call.1} parent=11 // pred_check
          %p682 = pneg %p390
        $region66: #{tpu_custom_call.1} parent=11 // pred_check_branch
          %684 = sbr.rel (%p682) target = $region68
        $region67: #{tpu_custom_call.1} parent=11 // pred_region
          %s686 = ssub.s32 384, 384
          %687 = vsyncadd [#allocation27], %s686
          %s688 = sshll.u32 [#allocation26], 4
          %s689 = int_to_ptr.vmem [resolvable:$true] %s688
          %694 = dma.hbm_to_vmem [thread:$0]  %s15, 384, %s689, [#allocation27], 64, 64, 4
        $region68: #{tpu_custom_call.1} parent=11 // pred_fallthru
          _
        // Predicated region
        $region69: #{tpu_custom_call.1} parent=11 // pred_check
          %p695 = pneg %p411
        $region70: #{tpu_custom_call.1} parent=11 // pred_check_branch
          %697 = sbr.rel (%p695) target = $region72
        $region71: #{tpu_custom_call.1} parent=11 // pred_region
          %s699 = ssub.s32 1024, 1024
          %700 = vsyncadd [#allocation27], %s699
          %s701 = sshll.u32 [#allocation28], 4
          %s702 = int_to_ptr.vmem [resolvable:$true] %s701
          %707 = dma.hbm_to_vmem [thread:$0]  %s16, 1024, %s702, [#allocation27], 64, 64, 4
        $region72: #{tpu_custom_call.1} parent=11 // pred_fallthru
          _
        // Predicated region
        $region73: #{tpu_custom_call.1} parent=11 // pred_check
          %p708 = pneg %p432
        $region74: #{tpu_custom_call.1} parent=11 // pred_check_branch
          %710 = sbr.rel (%p708) target = $region76
        $region75: #{tpu_custom_call.1} parent=11 // pred_region
          %s712 = ssub.s32 192, 192
          %713 = vsyncadd [#allocation30], %s712
          %s714 = sshll.u32 [#allocation29], 4
          %s715 = int_to_ptr.vmem [resolvable:$true] %s714
          %720 = dma.hbm_to_vmem [thread:$0]  %s17, 192, %s715, [#allocation30], 64, 64, 4
        $region76: #{tpu_custom_call.1} parent=11 // pred_fallthru
          _
        // Predicated region
        $region77: #{tpu_custom_call.1} parent=11 // pred_check
          %p721 = pneg %p453
        $region78: #{tpu_custom_call.1} parent=11 // pred_check_branch
          %723 = sbr.rel (%p721) target = $region80
        $region79: #{tpu_custom_call.1} parent=11 // pred_region
          %s725 = ssub.s32 1024, 1024
          %726 = vsyncadd [#allocation30], %s725
          %s727 = sshll.u32 [#allocation31], 4
          %s728 = int_to_ptr.vmem [resolvable:$true] %s727
          %733 = dma.hbm_to_vmem [thread:$0]  %s18, 1024, %s728, [#allocation30], 64, 64, 4
        $region80: #{tpu_custom_call.1} parent=11 // pred_fallthru
          _
        // Predicated region
        $region81: #{tpu_custom_call.1} parent=11 // pred_check
          %p734 = pneg %p474
        $region82: #{tpu_custom_call.1} parent=11 // pred_check_branch
          %736 = sbr.rel (%p734) target = $region84
        $region83: #{tpu_custom_call.1} parent=11 // pred_region
          %s738 = ssub.s32 128, 128
          %739 = vsyncadd [#allocation33], %s738
          %s740 = sshll.u32 [#allocation32], 4
          %s741 = int_to_ptr.vmem [resolvable:$true] %s740
          %746 = dma.hbm_to_vmem [thread:$0]  %s19, 128, %s741, [#allocation33], 64, 64, 4
        $region84: #{tpu_custom_call.1} parent=11 // pred_fallthru
          _
      $region12: #{tpu_custom_call.1} parent=5 // pred_fallthru
        _
      %p747 = scmp.lt.s32.totalorder %s44, 6
      // Predicated region
      $region85: #{tpu_custom_call.1} parent=5 // pred_check
        %p748 = pneg %p747
      $region86: #{tpu_custom_call.1} parent=5 // pred_check_branch
        %750 = sbr.rel (%p748) target = $region88
      $region87: #{tpu_custom_call.1} parent=5 // pred_region
        // Predicated region
        $region89: #{tpu_custom_call.1} parent=87 // pred_check
          %p751 = pneg %p64
        $region90: #{tpu_custom_call.1} parent=87 // pred_check_branch
          %753 = sbr.rel (%p751) target = $region92
        $region91: #{tpu_custom_call.1} parent=87 // pred_region
          %s754 = sand.u32 %s54, 1
          %s755 = scalar_lea.sflag [#allocation3], %s754
          %s756 = sand.u32 %s54, 1
          %s757 = smul.addr %s756, 352
          %s758 = scalar_lea.vmem [#allocation2], %s757
          %s760 = ssub.s32 5632, 5632
          %761 = vsyncadd %s755, %s760
          %s762 = smul.addr %s44, 44
          %s763 = smul.addr %s762, 128
          %s764 = scalar_lea.hbm %s0, %s763
          %s765 = sshll.u32 %s758, 4
          %s766 = int_to_ptr.vmem [resolvable:$true] %s765
          %771 = dma.hbm_to_vmem [thread:$0]  %s764, 5632, %s766, %s755, 256, 256, 16
        $region92: #{tpu_custom_call.1} parent=87 // pred_fallthru
          _
        // Predicated region
        $region93: #{tpu_custom_call.1} parent=87 // pred_check
          %p772 = pneg %p90
        $region94: #{tpu_custom_call.1} parent=87 // pred_check_branch
          %774 = sbr.rel (%p772) target = $region96
        $region95: #{tpu_custom_call.1} parent=87 // pred_region
          %s775 = sand.u32 %s44, 1
          %s776 = scalar_lea.sflag [#allocation6], %s775
          %s777 = sand.u32 %s80, 1
          %s778 = smul.addr %s777, 352
          %s779 = scalar_lea.vmem [#allocation5], %s778
          %s781 = ssub.s32 5632, 5632
          %782 = vsyncadd %s776, %s781
          %s783 = smul.addr %s44, 44
          %s784 = smul.addr %s783, 128
          %s785 = scalar_lea.hbm %s1, %s784
          %s786 = sshll.u32 %s779, 4
          %s787 = int_to_ptr.vmem [resolvable:$true] %s786
          %792 = dma.hbm_to_vmem [thread:$0]  %s785, 5632, %s787, %s776, 256, 256, 16
        $region96: #{tpu_custom_call.1} parent=87 // pred_fallthru
          _
      $region88: #{tpu_custom_call.1} parent=5 // pred_fallthru
        _
      %p793 = scmp.le.s32.totalorder 1, %s44
      %p794 = scmp.lt.s32.totalorder %s44, 7
      %p795 = pnand %p793, %p794
      %p796 = pneg %p795
      // Predicated region
      $region97: #{tpu_custom_call.1} parent=5 // pred_check
        _
      $region98: #{tpu_custom_call.1} parent=5 // pred_check_branch
        %798 = sbr.rel (%p795) target = $region100
      $region99: #{tpu_custom_call.1} parent=5 // pred_region
        %s799 = ssub.s32 %s44, 1
        %s800 = sand.u32 %s57, 1
        %s801 = scalar_lea.sflag [#allocation3], %s800
        %s802 = sand.u32 %s57, 1
        %s803 = smul.addr %s802, 352
        %s804 = scalar_lea.vmem [#allocation2], %s803
        // Predicated region
        $region101: #{tpu_custom_call.1} parent=99 // pred_check
          %p805 = pneg %p70
        $region102: #{tpu_custom_call.1} parent=99 // pred_check_branch
          %807 = sbr.rel (%p805) target = $region104
        $region103: #{tpu_custom_call.1} parent=99 // pred_region
          %808 = dma.done %s801, 5632
        $region104: #{tpu_custom_call.1} parent=99 // pred_fallthru
          _
        %s809 = sand.u32 %s49, 1
        %s810 = scalar_lea.sflag [#allocation6], %s809
        %s811 = sand.u32 %s83, 1
        %s812 = smul.addr %s811, 352
        %s813 = scalar_lea.vmem [#allocation5], %s812
        // Predicated region
        $region105: #{tpu_custom_call.1} parent=99 // pred_check
          %p814 = pneg %p96
        $region106: #{tpu_custom_call.1} parent=99 // pred_check_branch
          %816 = sbr.rel (%p814) target = $region108
        $region107: #{tpu_custom_call.1} parent=99 // pred_region
          %817 = dma.done %s810, 5632
        $region108: #{tpu_custom_call.1} parent=99 // pred_fallthru
          _
        // Predicated region
        $region109: #{tpu_custom_call.1} parent=99 // pred_check
          %p818 = pneg %p117
        $region110: #{tpu_custom_call.1} parent=99 // pred_check_branch
          %820 = sbr.rel (%p818) target = $region112
        $region111: #{tpu_custom_call.1} parent=99 // pred_region
          %821 = dma.done [#allocation6], 2816
        $region112: #{tpu_custom_call.1} parent=99 // pred_fallthru
          _
        // Predicated region
        $region113: #{tpu_custom_call.1} parent=99 // pred_check
          %p822 = pneg %p138
        $region114: #{tpu_custom_call.1} parent=99 // pred_check_branch
          %824 = sbr.rel (%p822) target = $region116
        $region115: #{tpu_custom_call.1} parent=99 // pred_region
          %825 = dma.done [#allocation9], 2688
        $region116: #{tpu_custom_call.1} parent=99 // pred_fallthru
          _
        // Predicated region
        $region117: #{tpu_custom_call.1} parent=99 // pred_check
          %p826 = pneg %p159
        $region118: #{tpu_custom_call.1} parent=99 // pred_check_branch
          %828 = sbr.rel (%p826) target = $region120
        $region119: #{tpu_custom_call.1} parent=99 // pred_region
          %829 = dma.done [#allocation9], 1024
        $region120: #{tpu_custom_call.1} parent=99 // pred_fallthru
          _
        // Predicated region
        $region121: #{tpu_custom_call.1} parent=99 // pred_check
          %p830 = pneg %p180
        $region122: #{tpu_custom_call.1} parent=99 // pred_check_branch
          %832 = sbr.rel (%p830) target = $region124
        $region123: #{tpu_custom_call.1} parent=99 // pred_region
          %833 = dma.done [#allocation12], 640
        $region124: #{tpu_custom_call.1} parent=99 // pred_fallthru
          _
        // Predicated region
        $region125: #{tpu_custom_call.1} parent=99 // pred_check
          %p834 = pneg %p201
        $region126: #{tpu_custom_call.1} parent=99 // pred_check_branch
          %836 = sbr.rel (%p834) target = $region128
        $region127: #{tpu_custom_call.1} parent=99 // pred_region
          %837 = dma.done [#allocation12], 1024
        $region128: #{tpu_custom_call.1} parent=99 // pred_fallthru
          _
        // Predicated region
        $region129: #{tpu_custom_call.1} parent=99 // pred_check
          %p838 = pneg %p222
        $region130: #{tpu_custom_call.1} parent=99 // pred_check_branch
          %840 = sbr.rel (%p838) target = $region132
        $region131: #{tpu_custom_call.1} parent=99 // pred_region
          %841 = dma.done [#allocation15], 320
        $region132: #{tpu_custom_call.1} parent=99 // pred_fallthru
          _
        // Predicated region
        $region133: #{tpu_custom_call.1} parent=99 // pred_check
          %p842 = pneg %p243
        $region134: #{tpu_custom_call.1} parent=99 // pred_check_branch
          %844 = sbr.rel (%p842) target = $region136
        $region135: #{tpu_custom_call.1} parent=99 // pred_region
          %845 = dma.done [#allocation15], 1024
        $region136: #{tpu_custom_call.1} parent=99 // pred_fallthru
          _
        // Predicated region
        $region137: #{tpu_custom_call.1} parent=99 // pred_check
          %p846 = pneg %p264
        $region138: #{tpu_custom_call.1} parent=99 // pred_check_branch
          %848 = sbr.rel (%p846) target = $region140
        $region139: #{tpu_custom_call.1} parent=99 // pred_region
          %849 = dma.done [#allocation18], 128
        $region140: #{tpu_custom_call.1} parent=99 // pred_fallthru
          _
        // Predicated region
        $region141: #{tpu_custom_call.1} parent=99 // pred_check
          %p850 = pneg %p285
        $region142: #{tpu_custom_call.1} parent=99 // pred_check_branch
          %852 = sbr.rel (%p850) target = $region144
        $region143: #{tpu_custom_call.1} parent=99 // pred_region
          %853 = dma.done [#allocation18], 1024
        $region144: #{tpu_custom_call.1} parent=99 // pred_fallthru
          _
        // Predicated region
        $region145: #{tpu_custom_call.1} parent=99 // pred_check
          %p854 = pneg %p306
        $region146: #{tpu_custom_call.1} parent=99 // pred_check_branch
          %856 = sbr.rel (%p854) target = $region148
        $region147: #{tpu_custom_call.1} parent=99 // pred_region
          %857 = dma.done [#allocation21], 64
        $region148: #{tpu_custom_call.1} parent=99 // pred_fallthru
          _
        // Predicated region
        $region149: #{tpu_custom_call.1} parent=99 // pred_check
          %p858 = pneg %p327
        $region150: #{tpu_custom_call.1} parent=99 // pred_check_branch
          %860 = sbr.rel (%p858) target = $region152
        $region151: #{tpu_custom_call.1} parent=99 // pred_region
          %861 = dma.done [#allocation21], 1408
        $region152: #{tpu_custom_call.1} parent=99 // pred_fallthru
          _
        // Predicated region
        $region153: #{tpu_custom_call.1} parent=99 // pred_check
          %p862 = pneg %p348
        $region154: #{tpu_custom_call.1} parent=99 // pred_check_branch
          %864 = sbr.rel (%p862) target = $region156
        $region155: #{tpu_custom_call.1} parent=99 // pred_region
          %865 = dma.done [#allocation24], 1408
        $region156: #{tpu_custom_call.1} parent=99 // pred_fallthru
          _
        // Predicated region
        $region157: #{tpu_custom_call.1} parent=99 // pred_check
          %p866 = pneg %p369
        $region158: #{tpu_custom_call.1} parent=99 // pred_check_branch
          %868 = sbr.rel (%p866) target = $region160
        $region159: #{tpu_custom_call.1} parent=99 // pred_region
          %869 = dma.done [#allocation24], 1024
        $region160: #{tpu_custom_call.1} parent=99 // pred_fallthru
          _
        // Predicated region
        $region161: #{tpu_custom_call.1} parent=99 // pred_check
          %p870 = pneg %p390
        $region162: #{tpu_custom_call.1} parent=99 // pred_check_branch
          %872 = sbr.rel (%p870) target = $region164
        $region163: #{tpu_custom_call.1} parent=99 // pred_region
          %873 = dma.done [#allocation27], 384
        $region164: #{tpu_custom_call.1} parent=99 // pred_fallthru
          _
        // Predicated region
        $region165: #{tpu_custom_call.1} parent=99 // pred_check
          %p874 = pneg %p411
        $region166: #{tpu_custom_call.1} parent=99 // pred_check_branch
          %876 = sbr.rel (%p874) target = $region168
        $region167: #{tpu_custom_call.1} parent=99 // pred_region
          %877 = dma.done [#allocation27], 1024
        $region168: #{tpu_custom_call.1} parent=99 // pred_fallthru
          _
        // Predicated region
        $region169: #{tpu_custom_call.1} parent=99 // pred_check
          %p878 = pneg %p432
        $region170: #{tpu_custom_call.1} parent=99 // pred_check_branch
          %880 = sbr.rel (%p878) target = $region172
        $region171: #{tpu_custom_call.1} parent=99 // pred_region
          %881 = dma.done [#allocation30], 192
        $region172: #{tpu_custom_call.1} parent=99 // pred_fallthru
          _
        // Predicated region
        $region173: #{tpu_custom_call.1} parent=99 // pred_check
          %p882 = pneg %p453
        $region174: #{tpu_custom_call.1} parent=99 // pred_check_branch
          %884 = sbr.rel (%p882) target = $region176
        $region175: #{tpu_custom_call.1} parent=99 // pred_region
          %885 = dma.done [#allocation30], 1024
        $region176: #{tpu_custom_call.1} parent=99 // pred_fallthru
          _
        // Predicated region
        $region177: #{tpu_custom_call.1} parent=99 // pred_check
          %p886 = pneg %p474
        $region178: #{tpu_custom_call.1} parent=99 // pred_check_branch
          %888 = sbr.rel (%p886) target = $region180
        $region179: #{tpu_custom_call.1} parent=99 // pred_region
          %889 = dma.done [#allocation33], 128
        $region180: #{tpu_custom_call.1} parent=99 // pred_fallthru
          _
        %s890 = sand.u32 %s57, 1
        %s891 = scalar_lea.sflag [#allocation3], %s890
        %s892 = sand.u32 %s57, 1
        %s893 = smul.addr %s892, 352
        %s894 = scalar_lea.vmem [#allocation2], %s893
        %p895 = pneg %p70
        %p896 = pneg %p67
        %s897 = sand.u32 %s49, 1
        %s898 = scalar_lea.sflag [#allocation6], %s897
        %s899 = sand.u32 %s83, 1
        %s900 = smul.addr %s899, 352
        %s901 = scalar_lea.vmem [#allocation5], %s900
        %p902 = pneg %p96
        %p903 = pneg %p93
        %p904 = pneg %p117
        %p905 = pneg %p114
        %p906 = pneg %p138
        %p907 = pneg %p135
        %p908 = pneg %p159
        %p909 = pneg %p156
        %p910 = pneg %p180
        %p911 = pneg %p177
        %p912 = pneg %p201
        %p913 = pneg %p198
        %p914 = pneg %p222
        %p915 = pneg %p219
        %p916 = pneg %p243
        %p917 = pneg %p240
        %p918 = pneg %p264
        %p919 = pneg %p261
        %p920 = pneg %p285
        %p921 = pneg %p282
        %p922 = pneg %p306
        %p923 = pneg %p303
        %p924 = pneg %p327
        %p925 = pneg %p324
        %p926 = pneg %p348
        %p927 = pneg %p345
        %p928 = pneg %p369
        %p929 = pneg %p366
        %p930 = pneg %p390
        %p931 = pneg %p387
        %p932 = pneg %p411
        %p933 = pneg %p408
        %p934 = pneg %p432
        %p935 = pneg %p429
        %p936 = pneg %p453
        %p937 = pneg %p450
        %p938 = pneg %p474
        %p939 = pneg %p471
        %p940 = pneg %p500
        %p941 = pneg %p497
        %s942 = sand.u32 %s487, 1
        %s943 = scalar_lea.sflag [#allocation4], %s942
        %s944 = sand.u32 %s487, 1
        %s945 = smul.addr %s944, 8
        %s946 = scalar_lea.vmem [#allocation34], %s945
        %v948 = vld [vmem:[%s804] sm:$0xff]
        %v949 = vld [vmem:[%s804 + $0x8] sm:$0xff]
        %v950 = vld [vmem:[%s804 + $0x10] sm:$0xff]
        %v951 = vld [vmem:[%s804 + $0x18] sm:$0xff]
        %v952 = vld [vmem:[%s804 + $0x20] sm:$0xff]
        %v953 = vld [vmem:[%s804 + $0x28] sm:$0xff]
        %v954 = vld [vmem:[%s804 + $0x30] sm:$0xff]
        %v955 = vld [vmem:[%s804 + $0x38] sm:$0xff]
        %v956 = vld [vmem:[%s804 + $0x40] sm:$0xff]
        %v957 = vld [vmem:[%s804 + $0x48] sm:$0xff]
        %v958 = vld [vmem:[%s804 + $0x50] sm:$0xff]
        %v959 = vld [vmem:[%s804 + $0x58] sm:$0xff]
        %v960 = vld [vmem:[%s804 + $0x60] sm:$0xff]
        %v961 = vld [vmem:[%s804 + $0x68] sm:$0xff]
        %v962 = vld [vmem:[%s804 + $0x70] sm:$0xff]
        %v963 = vld [vmem:[%s804 + $0x78] sm:$0xff]
        %v964 = vld [vmem:[%s804 + $0x80] sm:$0xff]
        %v965 = vld [vmem:[%s804 + $0x88] sm:$0xff]
        %v966 = vld [vmem:[%s804 + $0x90] sm:$0xff]
        %v967 = vld [vmem:[%s804 + $0x98] sm:$0xff]
        %v968 = vld [vmem:[%s804 + $0xa0] sm:$0xff]
        %v969 = vld [vmem:[%s804 + $0xa8] sm:$0xff]
        %v970 = vld [vmem:[%s804 + $0xb0] sm:$0xff]
        %v971 = vld [vmem:[%s804 + $0xb8] sm:$0xff]
        %v972 = vld [vmem:[%s804 + $0xc0] sm:$0xff]
        %v973 = vld [vmem:[%s804 + $0xc8] sm:$0xff]
        %v974 = vld [vmem:[%s804 + $0xd0] sm:$0xff]
        %v975 = vld [vmem:[%s804 + $0xd8] sm:$0xff]
        %v976 = vld [vmem:[%s804 + $0xe0] sm:$0xff]
        %v977 = vld [vmem:[%s804 + $0xe8] sm:$0xff]
        %v978 = vld [vmem:[%s804 + $0xf0] sm:$0xff]
        %v979 = vld [vmem:[%s804 + $0xf8] sm:$0xff]
        %v980 = vld [vmem:[%s804 + $0x100] sm:$0xff]
        %v981 = vld [vmem:[%s804 + $0x108] sm:$0xff]
        %v982 = vld [vmem:[%s804 + $0x110] sm:$0xff]
        %v983 = vld [vmem:[%s804 + $0x118] sm:$0xff]
        %v984 = vld [vmem:[%s804 + $0x120] sm:$0xff]
        %v985 = vld [vmem:[%s804 + $0x128] sm:$0xff]
        %v986 = vld [vmem:[%s804 + $0x130] sm:$0xff]
        %v987 = vld [vmem:[%s804 + $0x138] sm:$0xff]
        %v988 = vld [vmem:[%s804 + $0x140] sm:$0xff]
        %v989 = vld [vmem:[%s804 + $0x148] sm:$0xff]
        %v990 = vld [vmem:[%s804 + $0x150] sm:$0xff]
        %v991 = vld [vmem:[%s804 + $0x158] sm:$0xff]
        %v992 = vmul.f32 %v948, 0.003921569
        %v993 = vmul.f32 %v949, 0.003921569
        %v994 = vmul.f32 %v950, 0.003921569
        %v995 = vmul.f32 %v951, 0.003921569
        %v996 = vmul.f32 %v952, 0.003921569
        %v997 = vmul.f32 %v953, 0.003921569
        %v998 = vmul.f32 %v954, 0.003921569
        %v999 = vmul.f32 %v955, 0.003921569
        %v1000 = vmul.f32 %v956, 0.003921569
        %v1001 = vmul.f32 %v957, 0.003921569
        %v1002 = vmul.f32 %v958, 0.003921569
        %v1003 = vmul.f32 %v959, 0.003921569
        %v1004 = vmul.f32 %v960, 0.003921569
        %v1005 = vmul.f32 %v961, 0.003921569
        %v1006 = vmul.f32 %v962, 0.003921569
        %v1007 = vmul.f32 %v963, 0.003921569
        %v1008 = vmul.f32 %v964, 0.003921569
        %v1009 = vmul.f32 %v965, 0.003921569
        %v1010 = vmul.f32 %v966, 0.003921569
        %v1011 = vmul.f32 %v967, 0.003921569
        %v1012 = vmul.f32 %v968, 0.003921569
        %v1013 = vmul.f32 %v969, 0.003921569
        %v1014 = vmul.f32 %v970, 0.003921569
        %v1015 = vmul.f32 %v971, 0.003921569
        %v1016 = vmul.f32 %v972, 0.003921569
        %v1017 = vmul.f32 %v973, 0.003921569
        %v1018 = vmul.f32 %v974, 0.003921569
        %v1019 = vmul.f32 %v975, 0.003921569
        %v1020 = vmul.f32 %v976, 0.003921569
        %v1021 = vmul.f32 %v977, 0.003921569
        %v1022 = vmul.f32 %v978, 0.003921569
        %v1023 = vmul.f32 %v979, 0.003921569
        %v1024 = vmul.f32 %v980, 0.003921569
        %v1025 = vmul.f32 %v981, 0.003921569
        %v1026 = vmul.f32 %v982, 0.003921569
        %v1027 = vmul.f32 %v983, 0.003921569
        %v1028 = vmul.f32 %v984, 0.003921569
        %v1029 = vmul.f32 %v985, 0.003921569
        %v1030 = vmul.f32 %v986, 0.003921569
        %v1031 = vmul.f32 %v987, 0.003921569
        %v1032 = vmul.f32 %v988, 0.003921569
        %v1033 = vmul.f32 %v989, 0.003921569
        %v1034 = vmul.f32 %v990, 0.003921569
        %v1035 = vmul.f32 %v991, 0.003921569
        %v1036 = vld [vmem:[%s813] sm:$0xff]
        %v1037 = vld [vmem:[%s813 + $0x8] sm:$0xff]
        %v1038 = vld [vmem:[%s813 + $0x10] sm:$0xff]
        %v1039 = vld [vmem:[%s813 + $0x18] sm:$0xff]
        %v1040 = vld [vmem:[%s813 + $0x20] sm:$0xff]
        %v1041 = vld [vmem:[%s813 + $0x28] sm:$0xff]
        %v1042 = vld [vmem:[%s813 + $0x30] sm:$0xff]
        %v1043 = vld [vmem:[%s813 + $0x38] sm:$0xff]
        %v1044 = vld [vmem:[%s813 + $0x40] sm:$0xff]
        %v1045 = vld [vmem:[%s813 + $0x48] sm:$0xff]
        %v1046 = vld [vmem:[%s813 + $0x50] sm:$0xff]
        %v1047 = vld [vmem:[%s813 + $0x58] sm:$0xff]
        %v1048 = vld [vmem:[%s813 + $0x60] sm:$0xff]
        %v1049 = vld [vmem:[%s813 + $0x68] sm:$0xff]
        %v1050 = vld [vmem:[%s813 + $0x70] sm:$0xff]
        %v1051 = vld [vmem:[%s813 + $0x78] sm:$0xff]
        %v1052 = vld [vmem:[%s813 + $0x80] sm:$0xff]
        %v1053 = vld [vmem:[%s813 + $0x88] sm:$0xff]
        %v1054 = vld [vmem:[%s813 + $0x90] sm:$0xff]
        %v1055 = vld [vmem:[%s813 + $0x98] sm:$0xff]
        %v1056 = vld [vmem:[%s813 + $0xa0] sm:$0xff]
        %v1057 = vld [vmem:[%s813 + $0xa8] sm:$0xff]
        %v1058 = vld [vmem:[%s813 + $0xb0] sm:$0xff]
        %v1059 = vld [vmem:[%s813 + $0xb8] sm:$0xff]
        %v1060 = vld [vmem:[%s813 + $0xc0] sm:$0xff]
        %v1061 = vld [vmem:[%s813 + $0xc8] sm:$0xff]
        %v1062 = vld [vmem:[%s813 + $0xd0] sm:$0xff]
        %v1063 = vld [vmem:[%s813 + $0xd8] sm:$0xff]
        %v1064 = vld [vmem:[%s813 + $0xe0] sm:$0xff]
        %v1065 = vld [vmem:[%s813 + $0xe8] sm:$0xff]
        %v1066 = vld [vmem:[%s813 + $0xf0] sm:$0xff]
        %v1067 = vld [vmem:[%s813 + $0xf8] sm:$0xff]
        %v1068 = vld [vmem:[%s813 + $0x100] sm:$0xff]
        %v1069 = vld [vmem:[%s813 + $0x108] sm:$0xff]
        %v1070 = vld [vmem:[%s813 + $0x110] sm:$0xff]
        %v1071 = vld [vmem:[%s813 + $0x118] sm:$0xff]
        %v1072 = vld [vmem:[%s813 + $0x120] sm:$0xff]
        %v1073 = vld [vmem:[%s813 + $0x128] sm:$0xff]
        %v1074 = vld [vmem:[%s813 + $0x130] sm:$0xff]
        %v1075 = vld [vmem:[%s813 + $0x138] sm:$0xff]
        %v1076 = vld [vmem:[%s813 + $0x140] sm:$0xff]
        %v1077 = vld [vmem:[%s813 + $0x148] sm:$0xff]
        %v1078 = vld [vmem:[%s813 + $0x150] sm:$0xff]
        %v1079 = vld [vmem:[%s813 + $0x158] sm:$0xff]
        %v1080 = vmul.f32 %v1036, 0.003921569
        %v1081 = vmul.f32 %v1037, 0.003921569
        %v1082 = vmul.f32 %v1038, 0.003921569
        %v1083 = vmul.f32 %v1039, 0.003921569
        %v1084 = vmul.f32 %v1040, 0.003921569
        %v1085 = vmul.f32 %v1041, 0.003921569
        %v1086 = vmul.f32 %v1042, 0.003921569
        %v1087 = vmul.f32 %v1043, 0.003921569
        %v1088 = vmul.f32 %v1044, 0.003921569
        %v1089 = vmul.f32 %v1045, 0.003921569
        %v1090 = vmul.f32 %v1046, 0.003921569
        %v1091 = vmul.f32 %v1047, 0.003921569
        %v1092 = vmul.f32 %v1048, 0.003921569
        %v1093 = vmul.f32 %v1049, 0.003921569
        %v1094 = vmul.f32 %v1050, 0.003921569
        %v1095 = vmul.f32 %v1051, 0.003921569
        %v1096 = vmul.f32 %v1052, 0.003921569
        %v1097 = vmul.f32 %v1053, 0.003921569
        %v1098 = vmul.f32 %v1054, 0.003921569
        %v1099 = vmul.f32 %v1055, 0.003921569
        %v1100 = vmul.f32 %v1056, 0.003921569
        %v1101 = vmul.f32 %v1057, 0.003921569
        %v1102 = vmul.f32 %v1058, 0.003921569
        %v1103 = vmul.f32 %v1059, 0.003921569
        %v1104 = vmul.f32 %v1060, 0.003921569
        %v1105 = vmul.f32 %v1061, 0.003921569
        %v1106 = vmul.f32 %v1062, 0.003921569
        %v1107 = vmul.f32 %v1063, 0.003921569
        %v1108 = vmul.f32 %v1064, 0.003921569
        %v1109 = vmul.f32 %v1065, 0.003921569
        %v1110 = vmul.f32 %v1066, 0.003921569
        %v1111 = vmul.f32 %v1067, 0.003921569
        %v1112 = vmul.f32 %v1068, 0.003921569
        %v1113 = vmul.f32 %v1069, 0.003921569
        %v1114 = vmul.f32 %v1070, 0.003921569
        %v1115 = vmul.f32 %v1071, 0.003921569
        %v1116 = vmul.f32 %v1072, 0.003921569
        %v1117 = vmul.f32 %v1073, 0.003921569
        %v1118 = vmul.f32 %v1074, 0.003921569
        %v1119 = vmul.f32 %v1075, 0.003921569
        %v1120 = vmul.f32 %v1076, 0.003921569
        %v1121 = vmul.f32 %v1077, 0.003921569
        %v1122 = vmul.f32 %v1078, 0.003921569
        %v1123 = vmul.f32 %v1079, 0.003921569
        %v1124 = vld [vmem:[#allocation7] sm:$0xff]
        %v1125 = vld [vmem:[#allocation7 + $0x8] sm:$0xff]
        %v1126 = vld [vmem:[#allocation7 + $0x10] sm:$0xff]
        %v1127 = vld [vmem:[#allocation7 + $0x18] sm:$0xff]
        %v1128 = vld [vmem:[#allocation7 + $0x20] sm:$0xff]
        %v1129 = vld [vmem:[#allocation7 + $0x28] sm:$0xff]
        %v1130 = vld [vmem:[#allocation7 + $0x30] sm:$0xff]
        %v1131 = vld [vmem:[#allocation7 + $0x38] sm:$0xff]
        %v1132 = vld [vmem:[#allocation7 + $0x40] sm:$0xff]
        %v1133 = vld [vmem:[#allocation7 + $0x48] sm:$0xff]
        %v1134 = vld [vmem:[#allocation7 + $0x50] sm:$0xff]
        %v1135 = vld [vmem:[#allocation7 + $0x58] sm:$0xff]
        %v1136 = vld [vmem:[#allocation7 + $0x60] sm:$0xff]
        %v1137 = vld [vmem:[#allocation7 + $0x68] sm:$0xff]
        %v1138 = vld [vmem:[#allocation7 + $0x70] sm:$0xff]
        %v1139 = vld [vmem:[#allocation7 + $0x78] sm:$0xff]
        %v1140 = vld [vmem:[#allocation7 + $0x80] sm:$0xff]
        %v1141 = vld [vmem:[#allocation7 + $0x88] sm:$0xff]
        %v1142 = vld [vmem:[#allocation7 + $0x90] sm:$0xff]
        %v1143 = vld [vmem:[#allocation7 + $0x98] sm:$0xff]
        %v1144 = vld [vmem:[#allocation7 + $0xa0] sm:$0xff]
        %v1145 = vld [vmem:[#allocation7 + $0xa8] sm:$0xff]
        %v1146 = vld [vmem:[#allocation8] sm:$0xff]
        %v1147 = vld [vmem:[#allocation8 + $0x8] sm:$0xff]
        %v1148 = vld [vmem:[#allocation8 + $0x10] sm:$0xff]
        %v1149 = vld [vmem:[#allocation8 + $0x18] sm:$0xff]
        %v1150 = vld [vmem:[#allocation8 + $0x20] sm:$0xff]
        %v1151 = vld [vmem:[#allocation8 + $0x28] sm:$0xff]
        %v1152 = vld [vmem:[#allocation8 + $0x30] sm:$0xff]
        %v1153 = vld [vmem:[#allocation8 + $0x38] sm:$0xff]
        %v1154 = vld [vmem:[#allocation8 + $0x40] sm:$0xff]
        %v1155 = vld [vmem:[#allocation8 + $0x48] sm:$0xff]
        %v1156 = vld [vmem:[#allocation8 + $0x50] sm:$0xff]
        %v1157 = vld [vmem:[#allocation8 + $0x58] sm:$0xff]
        %v1158 = vld [vmem:[#allocation8 + $0x60] sm:$0xff]
        %v1159 = vld [vmem:[#allocation8 + $0x68] sm:$0xff]
        %v1160 = vld [vmem:[#allocation8 + $0x70] sm:$0xff]
        %v1161 = vld [vmem:[#allocation8 + $0x78] sm:$0xff]
        %v1162 = vld [vmem:[#allocation8 + $0x80] sm:$0xff]
        %v1163 = vld [vmem:[#allocation8 + $0x88] sm:$0xff]
        %v1164 = vld [vmem:[#allocation8 + $0x90] sm:$0xff]
        %v1165 = vld [vmem:[#allocation8 + $0x98] sm:$0xff]
        %v1166 = vld [vmem:[#allocation8 + $0xa0] sm:$0xff]
        %v1167 = vpack.c.bf16 %v994, %v992
        %v1168 = vpack.c.bf16 %v995, %v993
        %v1169 = vpack.c.bf16 %v998, %v996
        %v1170 = vpack.c.bf16 %v999, %v997
        %v1171 = vpack.c.bf16 %v1002, %v1000
        %v1172 = vpack.c.bf16 %v1003, %v1001
        %v1173 = vpack.c.bf16 %v1006, %v1004
        %v1174 = vpack.c.bf16 %v1007, %v1005
        %v1175 = vpack.c.bf16 %v1010, %v1008
        %v1176 = vpack.c.bf16 %v1011, %v1009
        %v1177 = vpack.c.bf16 %v1014, %v1012
        %v1178 = vpack.c.bf16 %v1015, %v1013
        %v1179 = vpack.c.bf16 %v1018, %v1016
        %v1180 = vpack.c.bf16 %v1019, %v1017
        %v1181 = vpack.c.bf16 %v1022, %v1020
        %v1182 = vpack.c.bf16 %v1023, %v1021
        %v1183 = vpack.c.bf16 %v1026, %v1024
        %v1184 = vpack.c.bf16 %v1027, %v1025
        %v1185 = vpack.c.bf16 %v1030, %v1028
        %v1186 = vpack.c.bf16 %v1031, %v1029
        %v1187 = vpack.c.bf16 %v1034, %v1032
        %v1188 = vpack.c.bf16 %v1035, %v1033
        %v1189 = vpack.c.bf16 %v1082, %v1080
        %v1190 = vpack.c.bf16 %v1083, %v1081
        %v1191 = vpack.c.bf16 %v1086, %v1084
        %v1192 = vpack.c.bf16 %v1087, %v1085
        %v1193 = vpack.c.bf16 %v1090, %v1088
        %v1194 = vpack.c.bf16 %v1091, %v1089
        %v1195 = vpack.c.bf16 %v1094, %v1092
        %v1196 = vpack.c.bf16 %v1095, %v1093
        %v1197 = vpack.c.bf16 %v1098, %v1096
        %v1198 = vpack.c.bf16 %v1099, %v1097
        %v1199 = vpack.c.bf16 %v1102, %v1100
        %v1200 = vpack.c.bf16 %v1103, %v1101
        %v1201 = vpack.c.bf16 %v1106, %v1104
        %v1202 = vpack.c.bf16 %v1107, %v1105
        %v1203 = vpack.c.bf16 %v1110, %v1108
        %v1204 = vpack.c.bf16 %v1111, %v1109
        %v1205 = vpack.c.bf16 %v1114, %v1112
        %v1206 = vpack.c.bf16 %v1115, %v1113
        %v1207 = vpack.c.bf16 %v1118, %v1116
        %v1208 = vpack.c.bf16 %v1119, %v1117
        %v1209 = vpack.c.bf16 %v1122, %v1120
        %v1210 = vpack.c.bf16 %v1123, %v1121
        %v1211 = vmul.f32 %v992, %v992
        %v1212 = vmul.f32 %v993, %v993
        %v1213 = vmul.f32 %v994, %v994
        %v1214 = vmul.f32 %v995, %v995
        %v1215 = vmul.f32 %v996, %v996
        %v1216 = vmul.f32 %v997, %v997
        %v1217 = vmul.f32 %v998, %v998
        %v1218 = vmul.f32 %v999, %v999
        %v1219 = vmul.f32 %v1000, %v1000
        %v1220 = vmul.f32 %v1001, %v1001
        %v1221 = vmul.f32 %v1002, %v1002
        %v1222 = vmul.f32 %v1003, %v1003
        %v1223 = vmul.f32 %v1004, %v1004
        %v1224 = vmul.f32 %v1005, %v1005
        %v1225 = vmul.f32 %v1006, %v1006
        %v1226 = vmul.f32 %v1007, %v1007
        %v1227 = vmul.f32 %v1008, %v1008
        %v1228 = vmul.f32 %v1009, %v1009
        %v1229 = vmul.f32 %v1010, %v1010
        %v1230 = vmul.f32 %v1011, %v1011
        %v1231 = vmul.f32 %v1012, %v1012
        %v1232 = vmul.f32 %v1013, %v1013
        %v1233 = vmul.f32 %v1014, %v1014
        %v1234 = vmul.f32 %v1015, %v1015
        %v1235 = vmul.f32 %v1016, %v1016
        %v1236 = vmul.f32 %v1017, %v1017
        %v1237 = vmul.f32 %v1018, %v1018
        %v1238 = vmul.f32 %v1019, %v1019
        %v1239 = vmul.f32 %v1020, %v1020
        %v1240 = vmul.f32 %v1021, %v1021
        %v1241 = vmul.f32 %v1022, %v1022
        %v1242 = vmul.f32 %v1023, %v1023
        %v1243 = vmul.f32 %v1024, %v1024
        %v1244 = vmul.f32 %v1025, %v1025
        %v1245 = vmul.f32 %v1026, %v1026
        %v1246 = vmul.f32 %v1027, %v1027
        %v1247 = vmul.f32 %v1028, %v1028
        %v1248 = vmul.f32 %v1029, %v1029
        %v1249 = vmul.f32 %v1030, %v1030
        %v1250 = vmul.f32 %v1031, %v1031
        %v1251 = vmul.f32 %v1032, %v1032
        %v1252 = vmul.f32 %v1033, %v1033
        %v1253 = vmul.f32 %v1034, %v1034
        %v1254 = vmul.f32 %v1035, %v1035
        %v1255 = vmul.f32 %v1080, %v1080
        %v1256 = vmul.f32 %v1081, %v1081
        %v1257 = vmul.f32 %v1082, %v1082
        %v1258 = vmul.f32 %v1083, %v1083
        %v1259 = vmul.f32 %v1084, %v1084
        %v1260 = vmul.f32 %v1085, %v1085
        %v1261 = vmul.f32 %v1086, %v1086
        %v1262 = vmul.f32 %v1087, %v1087
        %v1263 = vmul.f32 %v1088, %v1088
        %v1264 = vmul.f32 %v1089, %v1089
        %v1265 = vmul.f32 %v1090, %v1090
        %v1266 = vmul.f32 %v1091, %v1091
        %v1267 = vmul.f32 %v1092, %v1092
        %v1268 = vmul.f32 %v1093, %v1093
        %v1269 = vmul.f32 %v1094, %v1094
        %v1270 = vmul.f32 %v1095, %v1095
        %v1271 = vmul.f32 %v1096, %v1096
        %v1272 = vmul.f32 %v1097, %v1097
        %v1273 = vmul.f32 %v1098, %v1098
        %v1274 = vmul.f32 %v1099, %v1099
        %v1275 = vmul.f32 %v1100, %v1100
        %v1276 = vmul.f32 %v1101, %v1101
        %v1277 = vmul.f32 %v1102, %v1102
        %v1278 = vmul.f32 %v1103, %v1103
        %v1279 = vmul.f32 %v1104, %v1104
        %v1280 = vmul.f32 %v1105, %v1105
        %v1281 = vmul.f32 %v1106, %v1106
        %v1282 = vmul.f32 %v1107, %v1107
        %v1283 = vmul.f32 %v1108, %v1108
        %v1284 = vmul.f32 %v1109, %v1109
        %v1285 = vmul.f32 %v1110, %v1110
        %v1286 = vmul.f32 %v1111, %v1111
        %v1287 = vmul.f32 %v1112, %v1112
        %v1288 = vmul.f32 %v1113, %v1113
        %v1289 = vmul.f32 %v1114, %v1114
        %v1290 = vmul.f32 %v1115, %v1115
        %v1291 = vmul.f32 %v1116, %v1116
        %v1292 = vmul.f32 %v1117, %v1117
        %v1293 = vmul.f32 %v1118, %v1118
        %v1294 = vmul.f32 %v1119, %v1119
        %v1295 = vmul.f32 %v1120, %v1120
        %v1296 = vmul.f32 %v1121, %v1121
        %v1297 = vmul.f32 %v1122, %v1122
        %v1298 = vmul.f32 %v1123, %v1123
        %v1299 = vmul.f32 %v992, %v1080
        %v1300 = vmul.f32 %v993, %v1081
        %v1301 = vmul.f32 %v994, %v1082
        %v1302 = vmul.f32 %v995, %v1083
        %v1303 = vmul.f32 %v996, %v1084
        %v1304 = vmul.f32 %v997, %v1085
        %v1305 = vmul.f32 %v998, %v1086
        %v1306 = vmul.f32 %v999, %v1087
        %v1307 = vmul.f32 %v1000, %v1088
        %v1308 = vmul.f32 %v1001, %v1089
        %v1309 = vmul.f32 %v1002, %v1090
        %v1310 = vmul.f32 %v1003, %v1091
        %v1311 = vmul.f32 %v1004, %v1092
        %v1312 = vmul.f32 %v1005, %v1093
        %v1313 = vmul.f32 %v1006, %v1094
        %v1314 = vmul.f32 %v1007, %v1095
        %v1315 = vmul.f32 %v1008, %v1096
        %v1316 = vmul.f32 %v1009, %v1097
        %v1317 = vmul.f32 %v1010, %v1098
        %v1318 = vmul.f32 %v1011, %v1099
        %v1319 = vmul.f32 %v1012, %v1100
        %v1320 = vmul.f32 %v1013, %v1101
        %v1321 = vmul.f32 %v1014, %v1102
        %v1322 = vmul.f32 %v1015, %v1103
        %v1323 = vmul.f32 %v1016, %v1104
        %v1324 = vmul.f32 %v1017, %v1105
        %v1325 = vmul.f32 %v1018, %v1106
        %v1326 = vmul.f32 %v1019, %v1107
        %v1327 = vmul.f32 %v1020, %v1108
        %v1328 = vmul.f32 %v1021, %v1109
        %v1329 = vmul.f32 %v1022, %v1110
        %v1330 = vmul.f32 %v1023, %v1111
        %v1331 = vmul.f32 %v1024, %v1112
        %v1332 = vmul.f32 %v1025, %v1113
        %v1333 = vmul.f32 %v1026, %v1114
        %v1334 = vmul.f32 %v1027, %v1115
        %v1335 = vmul.f32 %v1028, %v1116
        %v1336 = vmul.f32 %v1029, %v1117
        %v1337 = vmul.f32 %v1030, %v1118
        %v1338 = vmul.f32 %v1031, %v1119
        %v1339 = vmul.f32 %v1032, %v1120
        %v1340 = vmul.f32 %v1033, %v1121
        %v1341 = vmul.f32 %v1034, %v1122
        %v1342 = vmul.f32 %v1035, %v1123
        %v1343 = vpack.c.bf16 %v1213, %v1211
        %v1344 = vpack.c.bf16 %v1214, %v1212
        %v1345 = vpack.c.bf16 %v1217, %v1215
        %v1346 = vpack.c.bf16 %v1218, %v1216
        %v1347 = vpack.c.bf16 %v1221, %v1219
        %v1348 = vpack.c.bf16 %v1222, %v1220
        %v1349 = vpack.c.bf16 %v1225, %v1223
        %v1350 = vpack.c.bf16 %v1226, %v1224
        %v1351 = vpack.c.bf16 %v1229, %v1227
        %v1352 = vpack.c.bf16 %v1230, %v1228
        %v1353 = vpack.c.bf16 %v1233, %v1231
        %v1354 = vpack.c.bf16 %v1234, %v1232
        %v1355 = vpack.c.bf16 %v1237, %v1235
        %v1356 = vpack.c.bf16 %v1238, %v1236
        %v1357 = vpack.c.bf16 %v1241, %v1239
        %v1358 = vpack.c.bf16 %v1242, %v1240
        %v1359 = vpack.c.bf16 %v1245, %v1243
        %v1360 = vpack.c.bf16 %v1246, %v1244
        %v1361 = vpack.c.bf16 %v1249, %v1247
        %v1362 = vpack.c.bf16 %v1250, %v1248
        %v1363 = vpack.c.bf16 %v1253, %v1251
        %v1364 = vpack.c.bf16 %v1254, %v1252
        %v1365 = vpack.c.bf16 %v1257, %v1255
        %v1366 = vpack.c.bf16 %v1258, %v1256
        %v1367 = vpack.c.bf16 %v1261, %v1259
        %v1368 = vpack.c.bf16 %v1262, %v1260
        %v1369 = vpack.c.bf16 %v1265, %v1263
        %v1370 = vpack.c.bf16 %v1266, %v1264
        %v1371 = vpack.c.bf16 %v1269, %v1267
        %v1372 = vpack.c.bf16 %v1270, %v1268
        %v1373 = vpack.c.bf16 %v1273, %v1271
        %v1374 = vpack.c.bf16 %v1274, %v1272
        %v1375 = vpack.c.bf16 %v1277, %v1275
        %v1376 = vpack.c.bf16 %v1278, %v1276
        %v1377 = vpack.c.bf16 %v1281, %v1279
        %v1378 = vpack.c.bf16 %v1282, %v1280
        %v1379 = vpack.c.bf16 %v1285, %v1283
        %v1380 = vpack.c.bf16 %v1286, %v1284
        %v1381 = vpack.c.bf16 %v1289, %v1287
        %v1382 = vpack.c.bf16 %v1290, %v1288
        %v1383 = vpack.c.bf16 %v1293, %v1291
        %v1384 = vpack.c.bf16 %v1294, %v1292
        %v1385 = vpack.c.bf16 %v1297, %v1295
        %v1386 = vpack.c.bf16 %v1298, %v1296
        %v1387 = vpack.c.bf16 %v1301, %v1299
        %v1388 = vpack.c.bf16 %v1302, %v1300
        %v1389 = vpack.c.bf16 %v1305, %v1303
        %v1390 = vpack.c.bf16 %v1306, %v1304
        %v1391 = vpack.c.bf16 %v1309, %v1307
        %v1392 = vpack.c.bf16 %v1310, %v1308
        %v1393 = vpack.c.bf16 %v1313, %v1311
        %v1394 = vpack.c.bf16 %v1314, %v1312
        %v1395 = vpack.c.bf16 %v1317, %v1315
        %v1396 = vpack.c.bf16 %v1318, %v1316
        %v1397 = vpack.c.bf16 %v1321, %v1319
        %v1398 = vpack.c.bf16 %v1322, %v1320
        %v1399 = vpack.c.bf16 %v1325, %v1323
        %v1400 = vpack.c.bf16 %v1326, %v1324
        %v1401 = vpack.c.bf16 %v1329, %v1327
        %v1402 = vpack.c.bf16 %v1330, %v1328
        %v1403 = vpack.c.bf16 %v1333, %v1331
        %v1404 = vpack.c.bf16 %v1334, %v1332
        %v1405 = vpack.c.bf16 %v1337, %v1335
        %v1406 = vpack.c.bf16 %v1338, %v1336
        %v1407 = vpack.c.bf16 %v1341, %v1339
        %v1408 = vpack.c.bf16 %v1342, %v1340
        %v1431 = vunpack.c.l.b16 %v1124
        %v1432 = vunpack.c.h.b16 %v1124
        %v1433 = vunpack.c.l.b16 %v1125
        %v1434 = vunpack.c.h.b16 %v1125
        %v1435 = vunpack.c.l.b16 %v1126
        %v1436 = vunpack.c.h.b16 %v1126
        %v1437 = vunpack.c.l.b16 %v1127
        %v1438 = vunpack.c.h.b16 %v1127
        %v1439 = vunpack.c.l.b16 %v1128
        %v1440 = vunpack.c.h.b16 %v1128
        %v1441 = vunpack.c.l.b16 %v1129
        %v1442 = vunpack.c.h.b16 %v1129
        %v1443 = vunpack.c.l.b16 %v1130
        %v1444 = vunpack.c.h.b16 %v1130
        %v1445 = vunpack.c.l.b16 %v1131
        %v1446 = vunpack.c.h.b16 %v1131
        %v1447 = vunpack.c.l.b16 %v1132
        %v1448 = vunpack.c.h.b16 %v1132
        %v1449 = vunpack.c.l.b16 %v1133
        %v1450 = vunpack.c.h.b16 %v1133
        %v1451 = vunpack.c.l.b16 %v1134
        %v1452 = vunpack.c.h.b16 %v1134
        %v1453 = vunpack.c.l.b16 %v1135
        %v1454 = vunpack.c.h.b16 %v1135
        %v1455 = vunpack.c.l.b16 %v1136
        %v1456 = vunpack.c.h.b16 %v1136
        %v1457 = vunpack.c.l.b16 %v1137
        %v1458 = vunpack.c.h.b16 %v1137
        %v1459 = vunpack.c.l.b16 %v1138
        %v1460 = vunpack.c.h.b16 %v1138
        %v1461 = vunpack.c.l.b16 %v1139
        %v1462 = vunpack.c.h.b16 %v1139
        %v1463 = vunpack.c.l.b16 %v1140
        %v1464 = vunpack.c.h.b16 %v1140
        %v1465 = vunpack.c.l.b16 %v1141
        %v1466 = vunpack.c.h.b16 %v1141
        %v1467 = vunpack.c.l.b16 %v1142
        %v1468 = vunpack.c.h.b16 %v1142
        %v1469 = vunpack.c.l.b16 %v1143
        %v1470 = vunpack.c.h.b16 %v1143
        %v1471 = vunpack.c.l.b16 %v1144
        %v1472 = vunpack.c.h.b16 %v1144
        %v1473 = vunpack.c.l.b16 %v1145
        %v1474 = vunpack.c.h.b16 %v1145
        %v1475 = vpack.c.b16 %v1433, %v1431
        %v1476 = vpack.c.b16 %v1434, %v1432
        %v1477 = vpack.c.b16 %v1437, %v1435
        %v1478 = vpack.c.b16 %v1438, %v1436
        %v1479 = vpack.c.b16 %v1441, %v1439
        %v1480 = vpack.c.b16 %v1442, %v1440
        %v1481 = vpack.c.b16 %v1445, %v1443
        %v1482 = vpack.c.b16 %v1446, %v1444
        %v1483 = vpack.c.b16 %v1449, %v1447
        %v1484 = vpack.c.b16 %v1450, %v1448
        %v1485 = vpack.c.b16 %v1453, %v1451
        %v1486 = vpack.c.b16 %v1454, %v1452
        %v1487 = vpack.c.b16 %v1457, %v1455
        %v1488 = vpack.c.b16 %v1458, %v1456
        %v1489 = vpack.c.b16 %v1461, %v1459
        %v1490 = vpack.c.b16 %v1462, %v1460
        %v1491 = vpack.c.b16 %v1465, %v1463
        %v1492 = vpack.c.b16 %v1466, %v1464
        %v1493 = vpack.c.b16 %v1469, %v1467
        %v1494 = vpack.c.b16 %v1470, %v1468
        %v1495 = vpack.c.b16 %v1473, %v1471
        %v1496 = vpack.c.b16 %v1474, %v1472
        %vm1519 = vcmask 392192
        %v1521 = vsel %vm1519, %v1168, 0
        %v1524 = vsel %vm1519, %v1170, 0
        %v1527 = vsel %vm1519, %v1172, 0
        %v1530 = vsel %vm1519, %v1174, 0
        %v1533 = vsel %vm1519, %v1176, 0
        %v1536 = vsel %vm1519, %v1178, 0
        %v1539 = vsel %vm1519, %v1180, 0
        %v1542 = vsel %vm1519, %v1182, 0
        %v1545 = vsel %vm1519, %v1184, 0
        %v1548 = vsel %vm1519, %v1186, 0
        %v1551 = vsel %vm1519, %v1188, 0
        %v1554 = vsel %vm1519, %v1190, 0
        %v1557 = vsel %vm1519, %v1192, 0
        %v1560 = vsel %vm1519, %v1194, 0
        %v1563 = vsel %vm1519, %v1196, 0
        %v1566 = vsel %vm1519, %v1198, 0
        %v1569 = vsel %vm1519, %v1200, 0
        %v1572 = vsel %vm1519, %v1202, 0
        %v1575 = vsel %vm1519, %v1204, 0
        %v1578 = vsel %vm1519, %v1206, 0
        %v1581 = vsel %vm1519, %v1208, 0
        %v1584 = vsel %vm1519, %v1210, 0
        %v1587 = vsel %vm1519, %v1344, 0
        %v1590 = vsel %vm1519, %v1346, 0
        %v1593 = vsel %vm1519, %v1348, 0
        %v1596 = vsel %vm1519, %v1350, 0
        %v1599 = vsel %vm1519, %v1352, 0
        %v1602 = vsel %vm1519, %v1354, 0
        %v1605 = vsel %vm1519, %v1356, 0
        %v1608 = vsel %vm1519, %v1358, 0
        %v1611 = vsel %vm1519, %v1360, 0
        %v1614 = vsel %vm1519, %v1362, 0
        %v1617 = vsel %vm1519, %v1364, 0
        %v1620 = vsel %vm1519, %v1366, 0
        %v1623 = vsel %vm1519, %v1368, 0
        %v1626 = vsel %vm1519, %v1370, 0
        %v1629 = vsel %vm1519, %v1372, 0
        %v1632 = vsel %vm1519, %v1374, 0
        %v1635 = vsel %vm1519, %v1376, 0
        %v1638 = vsel %vm1519, %v1378, 0
        %v1641 = vsel %vm1519, %v1380, 0
        %v1644 = vsel %vm1519, %v1382, 0
        %v1647 = vsel %vm1519, %v1384, 0
        %v1650 = vsel %vm1519, %v1386, 0
        %v1653 = vsel %vm1519, %v1388, 0
        %v1656 = vsel %vm1519, %v1390, 0
        %v1659 = vsel %vm1519, %v1392, 0
        %v1662 = vsel %vm1519, %v1394, 0
        %v1665 = vsel %vm1519, %v1396, 0
        %v1668 = vsel %vm1519, %v1398, 0
        %v1671 = vsel %vm1519, %v1400, 0
        %v1674 = vsel %vm1519, %v1402, 0
        %v1677 = vsel %vm1519, %v1404, 0
        %v1680 = vsel %vm1519, %v1406, 0
        %v1683 = vsel %vm1519, %v1408, 0
        %1685 = vmatprep.subr.bf16.mxu0 %v1490
        %1686 = vmatpush1.bf16.msra.mxu0 %v1489
        %1687 = vmatprep.subr.bf16.mxu0 %v1488
        %1688 = vmatpush1.bf16.msra.mxu0 %v1487
        %1689 = vmatprep.subr.bf16.mxu0 %v1486
        %1690 = vmatpush1.bf16.msra.mxu0 %v1485
        %1691 = vmatprep.subr.bf16.mxu0 %v1484
        %1692 = vmatpush1.bf16.msra.mxu0 %v1483
        %1693 = vmatprep.subr.bf16.mxu0 %v1482
        %1694 = vmatpush1.bf16.msra.mxu0 %v1481
        %1695 = vmatprep.subr.bf16.mxu0 %v1480
        %1696 = vmatpush1.bf16.msra.mxu0 %v1479
        %1697 = vmatprep.subr.bf16.mxu0 %v1478
        %1698 = vmatpush1.bf16.msra.mxu0 %v1477
        %1699 = vmatprep.subr.bf16.mxu0 %v1476
        %1700 = vmatpush1.bf16.msra.mxu0 %v1475
        %1701 = vmatprep.subr.bf16.mxu0 0
        %1702 = vmatpush2.bf16.msra.mxu0 0
        %1703 = vmatprep.subr.bf16.mxu0 0
        %1704 = vmatpush2.bf16.msra.mxu0 0
        %1705 = vmatprep.subr.bf16.mxu0 0
        %1706 = vmatpush2.bf16.msra.mxu0 0
        %1707 = vmatprep.subr.bf16.mxu0 0
        %1708 = vmatpush2.bf16.msra.mxu0 0
        %1709 = vmatprep.subr.bf16.mxu0 0
        %1710 = vmatpush2.bf16.msra.mxu0 0
        %1711 = vmatprep.subr.bf16.mxu0 %v1496
        %1712 = vmatpush2.bf16.msra.mxu0 %v1495
        %1713 = vmatprep.subr.bf16.mxu0 %v1494
        %1714 = vmatpush2.bf16.msra.mxu0 %v1493
        %1715 = vmatprep.subr.bf16.mxu0 %v1492
        %1716 = vmatpush2.bf16.msra.mxu0 %v1491
        %1717 = vmatprep.mubr.bf16.mxu0 %v1521
        %1718 = vmatmul.mubr.bf16.gmra.mxu0 %v1167
        %v1719 = vpop.f32.mrf.mxu0
        %v1720 = vadd.f32 0.0, %v1719
        %v1721 = vpop.f32.mrf.mxu0
        %v1722 = vadd.f32 0.0, %v1721
        %v1723 = vpop.f32.mrf.mxu0
        %v1724 = vadd.f32 0.0, %v1723
        %v1725 = vpop.f32.mrf.mxu0
        %v1726 = vadd.f32 0.0, %v1725
        %1727 = vmatprep.mubr.bf16.mxu0 %v1524
        %1728 = vmatmul.mubr.bf16.gmra.mxu0 %v1169
        %v1729 = vpop.f32.mrf.mxu0
        %v1730 = vadd.f32 0.0, %v1729
        %v1731 = vpop.f32.mrf.mxu0
        %v1732 = vadd.f32 0.0, %v1731
        %v1733 = vpop.f32.mrf.mxu0
        %v1734 = vadd.f32 0.0, %v1733
        %v1735 = vpop.f32.mrf.mxu0
        %v1736 = vadd.f32 0.0, %v1735
        %1737 = vmatprep.mubr.bf16.mxu0 %v1527
        %1738 = vmatmul.mubr.bf16.gmra.mxu0 %v1171
        %v1739 = vpop.f32.mrf.mxu0
        %v1740 = vadd.f32 0.0, %v1739
        %v1741 = vpop.f32.mrf.mxu0
        %v1742 = vadd.f32 0.0, %v1741
        %v1743 = vpop.f32.mrf.mxu0
        %v1744 = vadd.f32 0.0, %v1743
        %v1745 = vpop.f32.mrf.mxu0
        %v1746 = vadd.f32 0.0, %v1745
        %1747 = vmatprep.mubr.bf16.mxu0 %v1530
        %1748 = vmatmul.mubr.bf16.gmra.mxu0 %v1173
        %v1749 = vpop.f32.mrf.mxu0
        %v1750 = vadd.f32 0.0, %v1749
        %v1751 = vpop.f32.mrf.mxu0
        %v1752 = vadd.f32 0.0, %v1751
        %v1753 = vpop.f32.mrf.mxu0
        %v1754 = vadd.f32 0.0, %v1753
        %v1755 = vpop.f32.mrf.mxu0
        %v1756 = vadd.f32 0.0, %v1755
        %1757 = vmatprep.mubr.bf16.mxu0 %v1533
        %1758 = vmatmul.mubr.bf16.gmra.mxu0 %v1175
        %v1759 = vpop.f32.mrf.mxu0
        %v1760 = vadd.f32 0.0, %v1759
        %v1761 = vpop.f32.mrf.mxu0
        %v1762 = vadd.f32 0.0, %v1761
        %v1763 = vpop.f32.mrf.mxu0
        %v1764 = vadd.f32 0.0, %v1763
        %v1765 = vpop.f32.mrf.mxu0
        %v1766 = vadd.f32 0.0, %v1765
        %1767 = vmatprep.mubr.bf16.mxu0 %v1536
        %1768 = vmatmul.mubr.bf16.gmra.mxu0 %v1177
        %v1769 = vpop.f32.mrf.mxu0
        %v1770 = vadd.f32 0.0, %v1769
        %v1771 = vpop.f32.mrf.mxu0
        %v1772 = vadd.f32 0.0, %v1771
        %v1773 = vpop.f32.mrf.mxu0
        %v1774 = vadd.f32 0.0, %v1773
        %v1775 = vpop.f32.mrf.mxu0
        %v1776 = vadd.f32 0.0, %v1775
        %1777 = vmatprep.mubr.bf16.mxu0 %v1539
        %1778 = vmatmul.mubr.bf16.gmra.mxu0 %v1179
        %v1779 = vpop.f32.mrf.mxu0
        %v1780 = vadd.f32 0.0, %v1779
        %v1781 = vpop.f32.mrf.mxu0
        %v1782 = vadd.f32 0.0, %v1781
        %v1783 = vpop.f32.mrf.mxu0
        %v1784 = vadd.f32 0.0, %v1783
        %v1785 = vpop.f32.mrf.mxu0
        %v1786 = vadd.f32 0.0, %v1785
        %1787 = vmatprep.mubr.bf16.mxu0 %v1542
        %1788 = vmatmul.mubr.bf16.gmra.mxu0 %v1181
        %v1789 = vpop.f32.mrf.mxu0
        %v1790 = vadd.f32 0.0, %v1789
        %v1791 = vpop.f32.mrf.mxu0
        %v1792 = vadd.f32 0.0, %v1791
        %v1793 = vpop.f32.mrf.mxu0
        %v1794 = vadd.f32 0.0, %v1793
        %v1795 = vpop.f32.mrf.mxu0
        %v1796 = vadd.f32 0.0, %v1795
        %1797 = vmatprep.mubr.bf16.mxu0 %v1545
        %1798 = vmatmul.mubr.bf16.gmra.mxu0 %v1183
        %v1799 = vpop.f32.mrf.mxu0
        %v1800 = vadd.f32 0.0, %v1799
        %v1801 = vpop.f32.mrf.mxu0
        %v1802 = vadd.f32 0.0, %v1801
        %v1803 = vpop.f32.mrf.mxu0
        %v1804 = vadd.f32 0.0, %v1803
        %v1805 = vpop.f32.mrf.mxu0
        %v1806 = vadd.f32 0.0, %v1805
        %1807 = vmatprep.mubr.bf16.mxu0 %v1548
        %1808 = vmatmul.mubr.bf16.gmra.mxu0 %v1185
        %v1809 = vpop.f32.mrf.mxu0
        %v1810 = vadd.f32 0.0, %v1809
        %v1811 = vpop.f32.mrf.mxu0
        %v1812 = vadd.f32 0.0, %v1811
        %v1813 = vpop.f32.mrf.mxu0
        %v1814 = vadd.f32 0.0, %v1813
        %v1815 = vpop.f32.mrf.mxu0
        %v1816 = vadd.f32 0.0, %v1815
        %1817 = vmatprep.mubr.bf16.mxu0 %v1551
        %1818 = vmatmul.mubr.bf16.gmra.mxu0 %v1187
        %v1819 = vpop.f32.mrf.mxu0
        %v1820 = vadd.f32 0.0, %v1819
        %v1821 = vpop.f32.mrf.mxu0
        %v1822 = vadd.f32 0.0, %v1821
        %v1823 = vpop.f32.mrf.mxu0
        %v1824 = vadd.f32 0.0, %v1823
        %v1825 = vpop.f32.mrf.mxu0
        %v1826 = vadd.f32 0.0, %v1825
        %1827 = vmatprep.mubr.bf16.mxu0 %v1554
        %1828 = vmatmul.mubr.bf16.gmra.mxu0 %v1189
        %v1829 = vpop.f32.mrf.mxu0
        %v1830 = vadd.f32 0.0, %v1829
        %v1831 = vpop.f32.mrf.mxu0
        %v1832 = vadd.f32 0.0, %v1831
        %v1833 = vpop.f32.mrf.mxu0
        %v1834 = vadd.f32 0.0, %v1833
        %v1835 = vpop.f32.mrf.mxu0
        %v1836 = vadd.f32 0.0, %v1835
        %1837 = vmatprep.mubr.bf16.mxu0 %v1557
        %1838 = vmatmul.mubr.bf16.gmra.mxu0 %v1191
        %v1839 = vpop.f32.mrf.mxu0
        %v1840 = vadd.f32 0.0, %v1839
        %v1841 = vpop.f32.mrf.mxu0
        %v1842 = vadd.f32 0.0, %v1841
        %v1843 = vpop.f32.mrf.mxu0
        %v1844 = vadd.f32 0.0, %v1843
        %v1845 = vpop.f32.mrf.mxu0
        %v1846 = vadd.f32 0.0, %v1845
        %1847 = vmatprep.mubr.bf16.mxu0 %v1560
        %1848 = vmatmul.mubr.bf16.gmra.mxu0 %v1193
        %v1849 = vpop.f32.mrf.mxu0
        %v1850 = vadd.f32 0.0, %v1849
        %v1851 = vpop.f32.mrf.mxu0
        %v1852 = vadd.f32 0.0, %v1851
        %v1853 = vpop.f32.mrf.mxu0
        %v1854 = vadd.f32 0.0, %v1853
        %v1855 = vpop.f32.mrf.mxu0
        %v1856 = vadd.f32 0.0, %v1855
        %1857 = vmatprep.mubr.bf16.mxu0 %v1563
        %1858 = vmatmul.mubr.bf16.gmra.mxu0 %v1195
        %v1859 = vpop.f32.mrf.mxu0
        %v1860 = vadd.f32 0.0, %v1859
        %v1861 = vpop.f32.mrf.mxu0
        %v1862 = vadd.f32 0.0, %v1861
        %v1863 = vpop.f32.mrf.mxu0
        %v1864 = vadd.f32 0.0, %v1863
        %v1865 = vpop.f32.mrf.mxu0
        %v1866 = vadd.f32 0.0, %v1865
        %1867 = vmatprep.mubr.bf16.mxu0 %v1566
        %1868 = vmatmul.mubr.bf16.gmra.mxu0 %v1197
        %v1869 = vpop.f32.mrf.mxu0
        %v1870 = vadd.f32 0.0, %v1869
        %v1871 = vpop.f32.mrf.mxu0
        %v1872 = vadd.f32 0.0, %v1871
        %v1873 = vpop.f32.mrf.mxu0
        %v1874 = vadd.f32 0.0, %v1873
        %v1875 = vpop.f32.mrf.mxu0
        %v1876 = vadd.f32 0.0, %v1875
        %1877 = vmatprep.mubr.bf16.mxu0 %v1569
        %1878 = vmatmul.mubr.bf16.gmra.mxu0 %v1199
        %v1879 = vpop.f32.mrf.mxu0
        %v1880 = vadd.f32 0.0, %v1879
        %v1881 = vpop.f32.mrf.mxu0
        %v1882 = vadd.f32 0.0, %v1881
        %v1883 = vpop.f32.mrf.mxu0
        %v1884 = vadd.f32 0.0, %v1883
        %v1885 = vpop.f32.mrf.mxu0
        %v1886 = vadd.f32 0.0, %v1885
        %1887 = vmatprep.mubr.bf16.mxu0 %v1572
        %1888 = vmatmul.mubr.bf16.gmra.mxu0 %v1201
        %v1889 = vpop.f32.mrf.mxu0
        %v1890 = vadd.f32 0.0, %v1889
        %v1891 = vpop.f32.mrf.mxu0
        %v1892 = vadd.f32 0.0, %v1891
        %v1893 = vpop.f32.mrf.mxu0
        %v1894 = vadd.f32 0.0, %v1893
        %v1895 = vpop.f32.mrf.mxu0
        %v1896 = vadd.f32 0.0, %v1895
        %1897 = vmatprep.mubr.bf16.mxu0 %v1575
        %1898 = vmatmul.mubr.bf16.gmra.mxu0 %v1203
        %v1899 = vpop.f32.mrf.mxu0
        %v1900 = vadd.f32 0.0, %v1899
        %v1901 = vpop.f32.mrf.mxu0
        %v1902 = vadd.f32 0.0, %v1901
        %v1903 = vpop.f32.mrf.mxu0
        %v1904 = vadd.f32 0.0, %v1903
        %v1905 = vpop.f32.mrf.mxu0
        %v1906 = vadd.f32 0.0, %v1905
        %1907 = vmatprep.mubr.bf16.mxu0 %v1578
        %1908 = vmatmul.mubr.bf16.gmra.mxu0 %v1205
        %v1909 = vpop.f32.mrf.mxu0
        %v1910 = vadd.f32 0.0, %v1909
        %v1911 = vpop.f32.mrf.mxu0
        %v1912 = vadd.f32 0.0, %v1911
        %v1913 = vpop.f32.mrf.mxu0
        %v1914 = vadd.f32 0.0, %v1913
        %v1915 = vpop.f32.mrf.mxu0
        %v1916 = vadd.f32 0.0, %v1915
        %1917 = vmatprep.mubr.bf16.mxu0 %v1581
        %1918 = vmatmul.mubr.bf16.gmra.mxu0 %v1207
        %v1919 = vpop.f32.mrf.mxu0
        %v1920 = vadd.f32 0.0, %v1919
        %v1921 = vpop.f32.mrf.mxu0
        %v1922 = vadd.f32 0.0, %v1921
        %v1923 = vpop.f32.mrf.mxu0
        %v1924 = vadd.f32 0.0, %v1923
        %v1925 = vpop.f32.mrf.mxu0
        %v1926 = vadd.f32 0.0, %v1925
        %1927 = vmatprep.mubr.bf16.mxu0 %v1584
        %1928 = vmatmul.mubr.bf16.gmra.mxu0 %v1209
        %v1929 = vpop.f32.mrf.mxu0
        %v1930 = vadd.f32 0.0, %v1929
        %v1931 = vpop.f32.mrf.mxu0
        %v1932 = vadd.f32 0.0, %v1931
        %v1933 = vpop.f32.mrf.mxu0
        %v1934 = vadd.f32 0.0, %v1933
        %v1935 = vpop.f32.mrf.mxu0
        %v1936 = vadd.f32 0.0, %v1935
        %1937 = vmatprep.mubr.bf16.mxu0 %v1587
        %1938 = vmatmul.mubr.bf16.gmra.mxu0 %v1343
        %v1939 = vpop.f32.mrf.mxu0
        %v1940 = vadd.f32 0.0, %v1939
        %v1941 = vpop.f32.mrf.mxu0
        %v1942 = vadd.f32 0.0, %v1941
        %v1943 = vpop.f32.mrf.mxu0
        %v1944 = vadd.f32 0.0, %v1943
        %v1945 = vpop.f32.mrf.mxu0
        %v1946 = vadd.f32 0.0, %v1945
        %1947 = vmatprep.mubr.bf16.mxu0 %v1590
        %1948 = vmatmul.mubr.bf16.gmra.mxu0 %v1345
        %v1949 = vpop.f32.mrf.mxu0
        %v1950 = vadd.f32 0.0, %v1949
        %v1951 = vpop.f32.mrf.mxu0
        %v1952 = vadd.f32 0.0, %v1951
        %v1953 = vpop.f32.mrf.mxu0
        %v1954 = vadd.f32 0.0, %v1953
        %v1955 = vpop.f32.mrf.mxu0
        %v1956 = vadd.f32 0.0, %v1955
        %1957 = vmatprep.mubr.bf16.mxu0 %v1593
        %1958 = vmatmul.mubr.bf16.gmra.mxu0 %v1347
        %v1959 = vpop.f32.mrf.mxu0
        %v1960 = vadd.f32 0.0, %v1959
        %v1961 = vpop.f32.mrf.mxu0
        %v1962 = vadd.f32 0.0, %v1961
        %v1963 = vpop.f32.mrf.mxu0
        %v1964 = vadd.f32 0.0, %v1963
        %v1965 = vpop.f32.mrf.mxu0
        %v1966 = vadd.f32 0.0, %v1965
        %1967 = vmatprep.mubr.bf16.mxu0 %v1596
        %1968 = vmatmul.mubr.bf16.gmra.mxu0 %v1349
        %v1969 = vpop.f32.mrf.mxu0
        %v1970 = vadd.f32 0.0, %v1969
        %v1971 = vpop.f32.mrf.mxu0
        %v1972 = vadd.f32 0.0, %v1971
        %v1973 = vpop.f32.mrf.mxu0
        %v1974 = vadd.f32 0.0, %v1973
        %v1975 = vpop.f32.mrf.mxu0
        %v1976 = vadd.f32 0.0, %v1975
        %1977 = vmatprep.mubr.bf16.mxu0 %v1599
        %1978 = vmatmul.mubr.bf16.gmra.mxu0 %v1351
        %v1979 = vpop.f32.mrf.mxu0
        %v1980 = vadd.f32 0.0, %v1979
        %v1981 = vpop.f32.mrf.mxu0
        %v1982 = vadd.f32 0.0, %v1981
        %v1983 = vpop.f32.mrf.mxu0
        %v1984 = vadd.f32 0.0, %v1983
        %v1985 = vpop.f32.mrf.mxu0
        %v1986 = vadd.f32 0.0, %v1985
        %1987 = vmatprep.mubr.bf16.mxu0 %v1602
        %1988 = vmatmul.mubr.bf16.gmra.mxu0 %v1353
        %v1989 = vpop.f32.mrf.mxu0
        %v1990 = vadd.f32 0.0, %v1989
        %v1991 = vpop.f32.mrf.mxu0
        %v1992 = vadd.f32 0.0, %v1991
        %v1993 = vpop.f32.mrf.mxu0
        %v1994 = vadd.f32 0.0, %v1993
        %v1995 = vpop.f32.mrf.mxu0
        %v1996 = vadd.f32 0.0, %v1995
        %1997 = vmatprep.mubr.bf16.mxu0 %v1605
        %1998 = vmatmul.mubr.bf16.gmra.mxu0 %v1355
        %v1999 = vpop.f32.mrf.mxu0
        %v2000 = vadd.f32 0.0, %v1999
        %v2001 = vpop.f32.mrf.mxu0
        %v2002 = vadd.f32 0.0, %v2001
        %v2003 = vpop.f32.mrf.mxu0
        %v2004 = vadd.f32 0.0, %v2003
        %v2005 = vpop.f32.mrf.mxu0
        %v2006 = vadd.f32 0.0, %v2005
        %2007 = vmatprep.mubr.bf16.mxu0 %v1608
        %2008 = vmatmul.mubr.bf16.gmra.mxu0 %v1357
        %v2009 = vpop.f32.mrf.mxu0
        %v2010 = vadd.f32 0.0, %v2009
        %v2011 = vpop.f32.mrf.mxu0
        %v2012 = vadd.f32 0.0, %v2011
        %v2013 = vpop.f32.mrf.mxu0
        %v2014 = vadd.f32 0.0, %v2013
        %v2015 = vpop.f32.mrf.mxu0
        %v2016 = vadd.f32 0.0, %v2015
        %2017 = vmatprep.mubr.bf16.mxu0 %v1611
        %2018 = vmatmul.mubr.bf16.gmra.mxu0 %v1359
        %v2019 = vpop.f32.mrf.mxu0
        %v2020 = vadd.f32 0.0, %v2019
        %v2021 = vpop.f32.mrf.mxu0
        %v2022 = vadd.f32 0.0, %v2021
        %v2023 = vpop.f32.mrf.mxu0
        %v2024 = vadd.f32 0.0, %v2023
        %v2025 = vpop.f32.mrf.mxu0
        %v2026 = vadd.f32 0.0, %v2025
        %2027 = vmatprep.mubr.bf16.mxu0 %v1614
        %2028 = vmatmul.mubr.bf16.gmra.mxu0 %v1361
        %v2029 = vpop.f32.mrf.mxu0
        %v2030 = vadd.f32 0.0, %v2029
        %v2031 = vpop.f32.mrf.mxu0
        %v2032 = vadd.f32 0.0, %v2031
        %v2033 = vpop.f32.mrf.mxu0
        %v2034 = vadd.f32 0.0, %v2033
        %v2035 = vpop.f32.mrf.mxu0
        %v2036 = vadd.f32 0.0, %v2035
        %2037 = vmatprep.mubr.bf16.mxu0 %v1617
        %2038 = vmatmul.mubr.bf16.gmra.mxu0 %v1363
        %v2039 = vpop.f32.mrf.mxu0
        %v2040 = vadd.f32 0.0, %v2039
        %v2041 = vpop.f32.mrf.mxu0
        %v2042 = vadd.f32 0.0, %v2041
        %v2043 = vpop.f32.mrf.mxu0
        %v2044 = vadd.f32 0.0, %v2043
        %v2045 = vpop.f32.mrf.mxu0
        %v2046 = vadd.f32 0.0, %v2045
        %2047 = vmatprep.mubr.bf16.mxu0 %v1620
        %2048 = vmatmul.mubr.bf16.gmra.mxu0 %v1365
        %v2049 = vpop.f32.mrf.mxu0
        %v2050 = vadd.f32 0.0, %v2049
        %v2051 = vpop.f32.mrf.mxu0
        %v2052 = vadd.f32 0.0, %v2051
        %v2053 = vpop.f32.mrf.mxu0
        %v2054 = vadd.f32 0.0, %v2053
        %v2055 = vpop.f32.mrf.mxu0
        %v2056 = vadd.f32 0.0, %v2055
        %2057 = vmatprep.mubr.bf16.mxu0 %v1623
        %2058 = vmatmul.mubr.bf16.gmra.mxu0 %v1367
        %v2059 = vpop.f32.mrf.mxu0
        %v2060 = vadd.f32 0.0, %v2059
        %v2061 = vpop.f32.mrf.mxu0
        %v2062 = vadd.f32 0.0, %v2061
        %v2063 = vpop.f32.mrf.mxu0
        %v2064 = vadd.f32 0.0, %v2063
        %v2065 = vpop.f32.mrf.mxu0
        %v2066 = vadd.f32 0.0, %v2065
        %2067 = vmatprep.mubr.bf16.mxu0 %v1626
        %2068 = vmatmul.mubr.bf16.gmra.mxu0 %v1369
        %v2069 = vpop.f32.mrf.mxu0
        %v2070 = vadd.f32 0.0, %v2069
        %v2071 = vpop.f32.mrf.mxu0
        %v2072 = vadd.f32 0.0, %v2071
        %v2073 = vpop.f32.mrf.mxu0
        %v2074 = vadd.f32 0.0, %v2073
        %v2075 = vpop.f32.mrf.mxu0
        %v2076 = vadd.f32 0.0, %v2075
        %2077 = vmatprep.mubr.bf16.mxu0 %v1629
        %2078 = vmatmul.mubr.bf16.gmra.mxu0 %v1371
        %v2079 = vpop.f32.mrf.mxu0
        %v2080 = vadd.f32 0.0, %v2079
        %v2081 = vpop.f32.mrf.mxu0
        %v2082 = vadd.f32 0.0, %v2081
        %v2083 = vpop.f32.mrf.mxu0
        %v2084 = vadd.f32 0.0, %v2083
        %v2085 = vpop.f32.mrf.mxu0
        %v2086 = vadd.f32 0.0, %v2085
        %2087 = vmatprep.mubr.bf16.mxu0 %v1632
        %2088 = vmatmul.mubr.bf16.gmra.mxu0 %v1373
        %v2089 = vpop.f32.mrf.mxu0
        %v2090 = vadd.f32 0.0, %v2089
        %v2091 = vpop.f32.mrf.mxu0
        %v2092 = vadd.f32 0.0, %v2091
        %v2093 = vpop.f32.mrf.mxu0
        %v2094 = vadd.f32 0.0, %v2093
        %v2095 = vpop.f32.mrf.mxu0
        %v2096 = vadd.f32 0.0, %v2095
        %2097 = vmatprep.mubr.bf16.mxu0 %v1635
        %2098 = vmatmul.mubr.bf16.gmra.mxu0 %v1375
        %v2099 = vpop.f32.mrf.mxu0
        %v2100 = vadd.f32 0.0, %v2099
        %v2101 = vpop.f32.mrf.mxu0
        %v2102 = vadd.f32 0.0, %v2101
        %v2103 = vpop.f32.mrf.mxu0
        %v2104 = vadd.f32 0.0, %v2103
        %v2105 = vpop.f32.mrf.mxu0
        %v2106 = vadd.f32 0.0, %v2105
        %2107 = vmatprep.mubr.bf16.mxu0 %v1638
        %2108 = vmatmul.mubr.bf16.gmra.mxu0 %v1377
        %v2109 = vpop.f32.mrf.mxu0
        %v2110 = vadd.f32 0.0, %v2109
        %v2111 = vpop.f32.mrf.mxu0
        %v2112 = vadd.f32 0.0, %v2111
        %v2113 = vpop.f32.mrf.mxu0
        %v2114 = vadd.f32 0.0, %v2113
        %v2115 = vpop.f32.mrf.mxu0
        %v2116 = vadd.f32 0.0, %v2115
        %2117 = vmatprep.mubr.bf16.mxu0 %v1641
        %2118 = vmatmul.mubr.bf16.gmra.mxu0 %v1379
        %v2119 = vpop.f32.mrf.mxu0
        %v2120 = vadd.f32 0.0, %v2119
        %v2121 = vpop.f32.mrf.mxu0
        %v2122 = vadd.f32 0.0, %v2121
        %v2123 = vpop.f32.mrf.mxu0
        %v2124 = vadd.f32 0.0, %v2123
        %v2125 = vpop.f32.mrf.mxu0
        %v2126 = vadd.f32 0.0, %v2125
        %2127 = vmatprep.mubr.bf16.mxu0 %v1644
        %2128 = vmatmul.mubr.bf16.gmra.mxu0 %v1381
        %v2129 = vpop.f32.mrf.mxu0
        %v2130 = vadd.f32 0.0, %v2129
        %v2131 = vpop.f32.mrf.mxu0
        %v2132 = vadd.f32 0.0, %v2131
        %v2133 = vpop.f32.mrf.mxu0
        %v2134 = vadd.f32 0.0, %v2133
        %v2135 = vpop.f32.mrf.mxu0
        %v2136 = vadd.f32 0.0, %v2135
        %2137 = vmatprep.mubr.bf16.mxu0 %v1647
        %2138 = vmatmul.mubr.bf16.gmra.mxu0 %v1383
        %v2139 = vpop.f32.mrf.mxu0
        %v2140 = vadd.f32 0.0, %v2139
        %v2141 = vpop.f32.mrf.mxu0
        %v2142 = vadd.f32 0.0, %v2141
        %v2143 = vpop.f32.mrf.mxu0
        %v2144 = vadd.f32 0.0, %v2143
        %v2145 = vpop.f32.mrf.mxu0
        %v2146 = vadd.f32 0.0, %v2145
        %2147 = vmatprep.mubr.bf16.mxu0 %v1650
        %2148 = vmatmul.mubr.bf16.gmra.mxu0 %v1385
        %v2149 = vpop.f32.mrf.mxu0
        %v2150 = vadd.f32 0.0, %v2149
        %v2151 = vpop.f32.mrf.mxu0
        %v2152 = vadd.f32 0.0, %v2151
        %v2153 = vpop.f32.mrf.mxu0
        %v2154 = vadd.f32 0.0, %v2153
        %v2155 = vpop.f32.mrf.mxu0
        %v2156 = vadd.f32 0.0, %v2155
        %2157 = vmatprep.mubr.bf16.mxu0 %v1653
        %2158 = vmatmul.mubr.bf16.gmra.mxu0 %v1387
        %v2159 = vpop.f32.mrf.mxu0
        %v2160 = vadd.f32 0.0, %v2159
        %v2161 = vpop.f32.mrf.mxu0
        %v2162 = vadd.f32 0.0, %v2161
        %v2163 = vpop.f32.mrf.mxu0
        %v2164 = vadd.f32 0.0, %v2163
        %v2165 = vpop.f32.mrf.mxu0
        %v2166 = vadd.f32 0.0, %v2165
        %2167 = vmatprep.mubr.bf16.mxu0 %v1656
        %2168 = vmatmul.mubr.bf16.gmra.mxu0 %v1389
        %v2169 = vpop.f32.mrf.mxu0
        %v2170 = vadd.f32 0.0, %v2169
        %v2171 = vpop.f32.mrf.mxu0
        %v2172 = vadd.f32 0.0, %v2171
        %v2173 = vpop.f32.mrf.mxu0
        %v2174 = vadd.f32 0.0, %v2173
        %v2175 = vpop.f32.mrf.mxu0
        %v2176 = vadd.f32 0.0, %v2175
        %2177 = vmatprep.mubr.bf16.mxu0 %v1659
        %2178 = vmatmul.mubr.bf16.gmra.mxu0 %v1391
        %v2179 = vpop.f32.mrf.mxu0
        %v2180 = vadd.f32 0.0, %v2179
        %v2181 = vpop.f32.mrf.mxu0
        %v2182 = vadd.f32 0.0, %v2181
        %v2183 = vpop.f32.mrf.mxu0
        %v2184 = vadd.f32 0.0, %v2183
        %v2185 = vpop.f32.mrf.mxu0
        %v2186 = vadd.f32 0.0, %v2185
        %2187 = vmatprep.mubr.bf16.mxu0 %v1662
        %2188 = vmatmul.mubr.bf16.gmra.mxu0 %v1393
        %v2189 = vpop.f32.mrf.mxu0
        %v2190 = vadd.f32 0.0, %v2189
        %v2191 = vpop.f32.mrf.mxu0
        %v2192 = vadd.f32 0.0, %v2191
        %v2193 = vpop.f32.mrf.mxu0
        %v2194 = vadd.f32 0.0, %v2193
        %v2195 = vpop.f32.mrf.mxu0
        %v2196 = vadd.f32 0.0, %v2195
        %2197 = vmatprep.mubr.bf16.mxu0 %v1665
        %2198 = vmatmul.mubr.bf16.gmra.mxu0 %v1395
        %v2199 = vpop.f32.mrf.mxu0
        %v2200 = vadd.f32 0.0, %v2199
        %v2201 = vpop.f32.mrf.mxu0
        %v2202 = vadd.f32 0.0, %v2201
        %v2203 = vpop.f32.mrf.mxu0
        %v2204 = vadd.f32 0.0, %v2203
        %v2205 = vpop.f32.mrf.mxu0
        %v2206 = vadd.f32 0.0, %v2205
        %2207 = vmatprep.mubr.bf16.mxu0 %v1668
        %2208 = vmatmul.mubr.bf16.gmra.mxu0 %v1397
        %v2209 = vpop.f32.mrf.mxu0
        %v2210 = vadd.f32 0.0, %v2209
        %v2211 = vpop.f32.mrf.mxu0
        %v2212 = vadd.f32 0.0, %v2211
        %v2213 = vpop.f32.mrf.mxu0
        %v2214 = vadd.f32 0.0, %v2213
        %v2215 = vpop.f32.mrf.mxu0
        %v2216 = vadd.f32 0.0, %v2215
        %2217 = vmatprep.mubr.bf16.mxu0 %v1671
        %2218 = vmatmul.mubr.bf16.gmra.mxu0 %v1399
        %v2219 = vpop.f32.mrf.mxu0
        %v2220 = vadd.f32 0.0, %v2219
        %v2221 = vpop.f32.mrf.mxu0
        %v2222 = vadd.f32 0.0, %v2221
        %v2223 = vpop.f32.mrf.mxu0
        %v2224 = vadd.f32 0.0, %v2223
        %v2225 = vpop.f32.mrf.mxu0
        %v2226 = vadd.f32 0.0, %v2225
        %2227 = vmatprep.mubr.bf16.mxu0 %v1674
        %2228 = vmatmul.mubr.bf16.gmra.mxu0 %v1401
        %v2229 = vpop.f32.mrf.mxu0
        %v2230 = vadd.f32 0.0, %v2229
        %v2231 = vpop.f32.mrf.mxu0
        %v2232 = vadd.f32 0.0, %v2231
        %v2233 = vpop.f32.mrf.mxu0
        %v2234 = vadd.f32 0.0, %v2233
        %v2235 = vpop.f32.mrf.mxu0
        %v2236 = vadd.f32 0.0, %v2235
        %2237 = vmatprep.mubr.bf16.mxu0 %v1677
        %2238 = vmatmul.mubr.bf16.gmra.mxu0 %v1403
        %v2239 = vpop.f32.mrf.mxu0
        %v2240 = vadd.f32 0.0, %v2239
        %v2241 = vpop.f32.mrf.mxu0
        %v2242 = vadd.f32 0.0, %v2241
        %v2243 = vpop.f32.mrf.mxu0
        %v2244 = vadd.f32 0.0, %v2243
        %v2245 = vpop.f32.mrf.mxu0
        %v2246 = vadd.f32 0.0, %v2245
        %2247 = vmatprep.mubr.bf16.mxu0 %v1680
        %2248 = vmatmul.mubr.bf16.gmra.mxu0 %v1405
        %v2249 = vpop.f32.mrf.mxu0
        %v2250 = vadd.f32 0.0, %v2249
        %v2251 = vpop.f32.mrf.mxu0
        %v2252 = vadd.f32 0.0, %v2251
        %v2253 = vpop.f32.mrf.mxu0
        %v2254 = vadd.f32 0.0, %v2253
        %v2255 = vpop.f32.mrf.mxu0
        %v2256 = vadd.f32 0.0, %v2255
        %2257 = vmatprep.mubr.bf16.mxu0 %v1683
        %2258 = vmatmul.mubr.bf16.gmra.mxu0 %v1407
        %v2259 = vpop.f32.mrf.mxu0
        %v2260 = vadd.f32 0.0, %v2259
        %v2261 = vpop.f32.mrf.mxu0
        %v2262 = vadd.f32 0.0, %v2261
        %v2263 = vpop.f32.mrf.mxu0
        %v2264 = vadd.f32 0.0, %v2263
        %v2265 = vpop.f32.mrf.mxu0
        %v2266 = vadd.f32 0.0, %v2265
        %2267 = vdwg.mxu0
        %v2268 = vpack.c.bf16 %v1724, %v1720
        %v2269 = vpack.c.bf16 %v1726, %v1722
        %v2270 = vpack.c.bf16 %v1734, %v1730
        %v2271 = vpack.c.bf16 %v1736, %v1732
        %v2272 = vpack.c.bf16 %v1744, %v1740
        %v2273 = vpack.c.bf16 %v1746, %v1742
        %v2274 = vpack.c.bf16 %v1754, %v1750
        %v2275 = vpack.c.bf16 %v1756, %v1752
        %v2276 = vpack.c.bf16 %v1764, %v1760
        %v2277 = vpack.c.bf16 %v1766, %v1762
        %v2278 = vpack.c.bf16 %v1774, %v1770
        %v2279 = vpack.c.bf16 %v1776, %v1772
        %v2280 = vpack.c.bf16 %v1784, %v1780
        %v2281 = vpack.c.bf16 %v1786, %v1782
        %v2282 = vpack.c.bf16 %v1794, %v1790
        %v2283 = vpack.c.bf16 %v1796, %v1792
        %v2284 = vpack.c.bf16 %v1804, %v1800
        %v2285 = vpack.c.bf16 %v1806, %v1802
        %v2286 = vpack.c.bf16 %v1814, %v1810
        %v2287 = vpack.c.bf16 %v1816, %v1812
        %v2288 = vpack.c.bf16 %v1824, %v1820
        %v2289 = vpack.c.bf16 %v1826, %v1822
        %v2311 = vunpack.c.l.b16 %v1146
        %v2312 = vunpack.c.h.b16 %v1146
        %v2313 = vunpack.c.l.b16 %v1147
        %v2314 = vunpack.c.h.b16 %v1147
        %v2315 = vunpack.c.l.b16 %v1148
        %v2316 = vunpack.c.h.b16 %v1148
        %v2317 = vunpack.c.l.b16 %v1149
        %v2318 = vunpack.c.h.b16 %v1149
        %v2319 = vunpack.c.l.b16 %v1150
        %v2320 = vunpack.c.h.b16 %v1150
        %v2321 = vunpack.c.l.b16 %v1151
        %v2322 = vunpack.c.h.b16 %v1151
        %v2323 = vunpack.c.l.b16 %v1152
        %v2324 = vunpack.c.h.b16 %v1152
        %v2325 = vunpack.c.l.b16 %v1153
        %v2326 = vunpack.c.h.b16 %v1153
        %v2327 = vunpack.c.l.b16 %v1154
        %v2328 = vunpack.c.h.b16 %v1154
        %v2329 = vunpack.c.l.b16 %v1155
        %v2330 = vunpack.c.h.b16 %v1155
        %v2331 = vunpack.c.l.b16 %v1156
        %v2332 = vunpack.c.h.b16 %v1156
        %v2333 = vunpack.c.l.b16 %v1157
        %v2334 = vunpack.c.h.b16 %v1157
        %v2335 = vunpack.c.l.b16 %v1158
        %v2336 = vunpack.c.h.b16 %v1158
        %v2337 = vunpack.c.l.b16 %v1159
        %v2338 = vunpack.c.h.b16 %v1159
        %v2339 = vunpack.c.l.b16 %v1160
        %v2340 = vunpack.c.h.b16 %v1160
        %v2341 = vunpack.c.l.b16 %v1161
        %v2342 = vunpack.c.h.b16 %v1161
        %v2343 = vunpack.c.l.b16 %v1162
        %v2344 = vunpack.c.h.b16 %v1162
        %v2345 = vunpack.c.l.b16 %v1163
        %v2346 = vunpack.c.h.b16 %v1163
        %v2347 = vunpack.c.l.b16 %v1164
        %v2348 = vunpack.c.h.b16 %v1164
        %v2349 = vunpack.c.l.b16 %v1165
        %v2350 = vunpack.c.h.b16 %v1165
        %v2351 = vunpack.c.l.b16 %v1166
        %v2352 = vunpack.c.h.b16 %v1166
        %v2353 = vpack.c.b16 %v2313, %v2311
        %v2354 = vpack.c.b16 %v2314, %v2312
        %v2355 = vpack.c.b16 %v2317, %v2315
        %v2356 = vpack.c.b16 %v2318, %v2316
        %v2357 = vpack.c.b16 %v2321, %v2319
        %v2358 = vpack.c.b16 %v2322, %v2320
        %v2359 = vpack.c.b16 %v2325, %v2323
        %v2360 = vpack.c.b16 %v2326, %v2324
        %v2361 = vpack.c.b16 %v2329, %v2327
        %v2362 = vpack.c.b16 %v2330, %v2328
        %v2363 = vpack.c.b16 %v2333, %v2331
        %v2364 = vpack.c.b16 %v2334, %v2332
        %v2365 = vpack.c.b16 %v2337, %v2335
        %v2366 = vpack.c.b16 %v2338, %v2336
        %v2367 = vpack.c.b16 %v2341, %v2339
        %v2368 = vpack.c.b16 %v2342, %v2340
        %v2369 = vpack.c.b16 %v2345, %v2343
        %v2370 = vpack.c.b16 %v2346, %v2344
        %v2371 = vpack.c.b16 %v2349, %v2347
        %v2372 = vpack.c.b16 %v2350, %v2348
        %v2373 = vpack.c.b16 %v2351, %v2351
        %v2374 = vpack.c.b16 %v2352, %v2352
        %v2387 = vsel %vm1519, %v2354, 0
        %v2390 = vsel %vm1519, %v2356, 0
        %v2393 = vsel %vm1519, %v2358, 0
        %v2396 = vsel %vm1519, %v2360, 0
        %v2399 = vsel %vm1519, %v2362, 0
        %v2402 = vsel %vm1519, %v2364, 0
        %v2405 = vsel %vm1519, %v2366, 0
        %v2408 = vsel %vm1519, %v2368, 0
        %v2411 = vsel %vm1519, %v2370, 0
        %v2414 = vsel %vm1519, %v2372, 0
        %v2417 = vsel %vm1519, %v2374, 0
        %2419 = vmatprep.subr.bf16.mxu0 %v2283
        %2420 = vmatpush1.bf16.msra.mxu0 %v2282
        %2421 = vmatprep.subr.bf16.mxu0 %v2281
        %2422 = vmatpush1.bf16.msra.mxu0 %v2280
        %2423 = vmatprep.subr.bf16.mxu0 %v2279
        %2424 = vmatpush1.bf16.msra.mxu0 %v2278
        %2425 = vmatprep.subr.bf16.mxu0 %v2277
        %2426 = vmatpush1.bf16.msra.mxu0 %v2276
        %2427 = vmatprep.subr.bf16.mxu0 %v2275
        %2428 = vmatpush1.bf16.msra.mxu0 %v2274
        %2429 = vmatprep.subr.bf16.mxu0 %v2273
        %2430 = vmatpush1.bf16.msra.mxu0 %v2272
        %2431 = vmatprep.subr.bf16.mxu0 %v2271
        %2432 = vmatpush1.bf16.msra.mxu0 %v2270
        %2433 = vmatprep.subr.bf16.mxu0 %v2269
        %2434 = vmatpush1.bf16.msra.mxu0 %v2268
        %2435 = vmatprep.subr.bf16.mxu0 0
        %2436 = vmatpush2.bf16.msra.mxu0 0
        %2437 = vmatprep.subr.bf16.mxu0 0
        %2438 = vmatpush2.bf16.msra.mxu0 0
        %2439 = vmatprep.subr.bf16.mxu0 0
        %2440 = vmatpush2.bf16.msra.mxu0 0
        %2441 = vmatprep.subr.bf16.mxu0 0
        %2442 = vmatpush2.bf16.msra.mxu0 0
        %2443 = vmatprep.subr.bf16.mxu0 0
        %2444 = vmatpush2.bf16.msra.mxu0 0
        %2445 = vmatprep.subr.bf16.mxu0 %v2289
        %2446 = vmatpush2.bf16.msra.mxu0 %v2288
        %2447 = vmatprep.subr.bf16.mxu0 %v2287
        %2448 = vmatpush2.bf16.msra.mxu0 %v2286
        %2449 = vmatprep.subr.bf16.mxu0 %v2285
        %2450 = vmatpush2.bf16.msra.mxu0 %v2284
        %2451 = vmatprep.mubr.bf16.mxu0 %v2387
        %2452 = vmatmul.mubr.bf16.gmra.mxu0 %v2353
        %v2453 = vpop.f32.mrf.mxu0
        %v2454 = vadd.f32 0.0, %v2453
        %v2455 = vpop.f32.mrf.mxu0
        %v2456 = vadd.f32 0.0, %v2455
        %v2457 = vpop.f32.mrf.mxu0
        %v2458 = vadd.f32 0.0, %v2457
        %v2459 = vpop.f32.mrf.mxu0
        %v2460 = vadd.f32 0.0, %v2459
        %2461 = vmatprep.mubr.bf16.mxu0 %v2390
        %2462 = vmatmul.mubr.bf16.gmra.mxu0 %v2355
        %v2463 = vpop.f32.mrf.mxu0
        %v2464 = vadd.f32 0.0, %v2463
        %v2465 = vpop.f32.mrf.mxu0
        %v2466 = vadd.f32 0.0, %v2465
        %v2467 = vpop.f32.mrf.mxu0
        %v2468 = vadd.f32 0.0, %v2467
        %v2469 = vpop.f32.mrf.mxu0
        %v2470 = vadd.f32 0.0, %v2469
        %2471 = vmatprep.mubr.bf16.mxu0 %v2393
        %2472 = vmatmul.mubr.bf16.gmra.mxu0 %v2357
        %v2473 = vpop.f32.mrf.mxu0
        %v2474 = vadd.f32 0.0, %v2473
        %v2475 = vpop.f32.mrf.mxu0
        %v2476 = vadd.f32 0.0, %v2475
        %v2477 = vpop.f32.mrf.mxu0
        %v2478 = vadd.f32 0.0, %v2477
        %v2479 = vpop.f32.mrf.mxu0
        %v2480 = vadd.f32 0.0, %v2479
        %2481 = vmatprep.mubr.bf16.mxu0 %v2396
        %2482 = vmatmul.mubr.bf16.gmra.mxu0 %v2359
        %v2483 = vpop.f32.mrf.mxu0
        %v2484 = vadd.f32 0.0, %v2483
        %v2485 = vpop.f32.mrf.mxu0
        %v2486 = vadd.f32 0.0, %v2485
        %v2487 = vpop.f32.mrf.mxu0
        %v2488 = vadd.f32 0.0, %v2487
        %v2489 = vpop.f32.mrf.mxu0
        %v2490 = vadd.f32 0.0, %v2489
        %2491 = vmatprep.mubr.bf16.mxu0 %v2399
        %2492 = vmatmul.mubr.bf16.gmra.mxu0 %v2361
        %v2493 = vpop.f32.mrf.mxu0
        %v2494 = vadd.f32 0.0, %v2493
        %v2495 = vpop.f32.mrf.mxu0
        %v2496 = vadd.f32 0.0, %v2495
        %v2497 = vpop.f32.mrf.mxu0
        %v2498 = vadd.f32 0.0, %v2497
        %v2499 = vpop.f32.mrf.mxu0
        %v2500 = vadd.f32 0.0, %v2499
        %2501 = vmatprep.mubr.bf16.mxu0 %v2402
        %2502 = vmatmul.mubr.bf16.gmra.mxu0 %v2363
        %v2503 = vpop.f32.mrf.mxu0
        %v2504 = vadd.f32 0.0, %v2503
        %v2505 = vpop.f32.mrf.mxu0
        %v2506 = vadd.f32 0.0, %v2505
        %v2507 = vpop.f32.mrf.mxu0
        %v2508 = vadd.f32 0.0, %v2507
        %v2509 = vpop.f32.mrf.mxu0
        %v2510 = vadd.f32 0.0, %v2509
        %2511 = vmatprep.mubr.bf16.mxu0 %v2405
        %2512 = vmatmul.mubr.bf16.gmra.mxu0 %v2365
        %v2513 = vpop.f32.mrf.mxu0
        %v2514 = vadd.f32 0.0, %v2513
        %v2515 = vpop.f32.mrf.mxu0
        %v2516 = vadd.f32 0.0, %v2515
        %v2517 = vpop.f32.mrf.mxu0
        %v2518 = vadd.f32 0.0, %v2517
        %v2519 = vpop.f32.mrf.mxu0
        %v2520 = vadd.f32 0.0, %v2519
        %2521 = vmatprep.mubr.bf16.mxu0 %v2408
        %2522 = vmatmul.mubr.bf16.gmra.mxu0 %v2367
        %v2523 = vpop.f32.mrf.mxu0
        %v2524 = vadd.f32 0.0, %v2523
        %v2525 = vpop.f32.mrf.mxu0
        %v2526 = vadd.f32 0.0, %v2525
        %v2527 = vpop.f32.mrf.mxu0
        %v2528 = vadd.f32 0.0, %v2527
        %v2529 = vpop.f32.mrf.mxu0
        %v2530 = vadd.f32 0.0, %v2529
        %2531 = vmatprep.mubr.bf16.mxu0 %v2411
        %2532 = vmatmul.mubr.bf16.gmra.mxu0 %v2369
        %v2533 = vpop.f32.mrf.mxu0
        %v2534 = vadd.f32 0.0, %v2533
        %v2535 = vpop.f32.mrf.mxu0
        %v2536 = vadd.f32 0.0, %v2535
        %v2537 = vpop.f32.mrf.mxu0
        %v2538 = vadd.f32 0.0, %v2537
        %v2539 = vpop.f32.mrf.mxu0
        %v2540 = vadd.f32 0.0, %v2539
        %2541 = vmatprep.mubr.bf16.mxu0 %v2414
        %2542 = vmatmul.mubr.bf16.gmra.mxu0 %v2371
        %v2543 = vpop.f32.mrf.mxu0
        %v2544 = vadd.f32 0.0, %v2543
        %v2545 = vpop.f32.mrf.mxu0
        %v2546 = vadd.f32 0.0, %v2545
        %v2547 = vpop.f32.mrf.mxu0
        %v2548 = vadd.f32 0.0, %v2547
        %v2549 = vpop.f32.mrf.mxu0
        %v2550 = vadd.f32 0.0, %v2549
        %2551 = vmatprep.mubr.bf16.mxu0 %v2417
        %2552 = vmatmul.mubr.bf16.gmra.mxu0 %v2373
        %v2553 = vpop.f32.mrf.mxu0
        %v2554 = vadd.f32 0.0, %v2553
        %v2555 = vpop.f32.mrf.mxu0
        %v2556 = vadd.f32 0.0, %v2555
        %v2557 = vpop.f32.mrf.mxu0
        %v2558 = vpop.f32.mrf.mxu0
        %2559 = vdwg.mxu0
        %v2560 = vpack.c.bf16 %v1834, %v1830
        %v2561 = vpack.c.bf16 %v1836, %v1832
        %v2562 = vpack.c.bf16 %v1844, %v1840
        %v2563 = vpack.c.bf16 %v1846, %v1842
        %v2564 = vpack.c.bf16 %v1854, %v1850
        %v2565 = vpack.c.bf16 %v1856, %v1852
        %v2566 = vpack.c.bf16 %v1864, %v1860
        %v2567 = vpack.c.bf16 %v1866, %v1862
        %v2568 = vpack.c.bf16 %v1874, %v1870
        %v2569 = vpack.c.bf16 %v1876, %v1872
        %v2570 = vpack.c.bf16 %v1884, %v1880
        %v2571 = vpack.c.bf16 %v1886, %v1882
        %v2572 = vpack.c.bf16 %v1894, %v1890
        %v2573 = vpack.c.bf16 %v1896, %v1892
        %v2574 = vpack.c.bf16 %v1904, %v1900
        %v2575 = vpack.c.bf16 %v1906, %v1902
        %v2576 = vpack.c.bf16 %v1914, %v1910
        %v2577 = vpack.c.bf16 %v1916, %v1912
        %v2578 = vpack.c.bf16 %v1924, %v1920
        %v2579 = vpack.c.bf16 %v1926, %v1922
        %v2580 = vpack.c.bf16 %v1934, %v1930
        %v2581 = vpack.c.bf16 %v1936, %v1932
        %2582 = vmatprep.subr.bf16.mxu0 %v2575
        %2583 = vmatpush1.bf16.msra.mxu0 %v2574
        %2584 = vmatprep.subr.bf16.mxu0 %v2573
        %2585 = vmatpush1.bf16.msra.mxu0 %v2572
        %2586 = vmatprep.subr.bf16.mxu0 %v2571
        %2587 = vmatpush1.bf16.msra.mxu0 %v2570
        %2588 = vmatprep.subr.bf16.mxu0 %v2569
        %2589 = vmatpush1.bf16.msra.mxu0 %v2568
        %2590 = vmatprep.subr.bf16.mxu0 %v2567
        %2591 = vmatpush1.bf16.msra.mxu0 %v2566
        %2592 = vmatprep.subr.bf16.mxu0 %v2565
        %2593 = vmatpush1.bf16.msra.mxu0 %v2564
        %2594 = vmatprep.subr.bf16.mxu0 %v2563
        %2595 = vmatpush1.bf16.msra.mxu0 %v2562
        %2596 = vmatprep.subr.bf16.mxu0 %v2561
        %2597 = vmatpush1.bf16.msra.mxu0 %v2560
        %2598 = vmatprep.subr.bf16.mxu0 0
        %2599 = vmatpush2.bf16.msra.mxu0 0
        %2600 = vmatprep.subr.bf16.mxu0 0
        %2601 = vmatpush2.bf16.msra.mxu0 0
        %2602 = vmatprep.subr.bf16.mxu0 0
        %2603 = vmatpush2.bf16.msra.mxu0 0
        %2604 = vmatprep.subr.bf16.mxu0 0
        %2605 = vmatpush2.bf16.msra.mxu0 0
        %2606 = vmatprep.subr.bf16.mxu0 0
        %2607 = vmatpush2.bf16.msra.mxu0 0
        %2608 = vmatprep.subr.bf16.mxu0 %v2581
        %2609 = vmatpush2.bf16.msra.mxu0 %v2580
        %2610 = vmatprep.subr.bf16.mxu0 %v2579
        %2611 = vmatpush2.bf16.msra.mxu0 %v2578
        %2612 = vmatprep.subr.bf16.mxu0 %v2577
        %2613 = vmatpush2.bf16.msra.mxu0 %v2576
        %2614 = vmatprep.mubr.bf16.mxu0 %v2387
        %2615 = vmatmul.mubr.bf16.gmra.mxu0 %v2353
        %v2616 = vpop.f32.mrf.mxu0
        %v2617 = vadd.f32 0.0, %v2616
        %v2618 = vpop.f32.mrf.mxu0
        %v2619 = vadd.f32 0.0, %v2618
        %v2620 = vpop.f32.mrf.mxu0
        %v2621 = vadd.f32 0.0, %v2620
        %v2622 = vpop.f32.mrf.mxu0
        %v2623 = vadd.f32 0.0, %v2622
        %2624 = vmatprep.mubr.bf16.mxu0 %v2390
        %2625 = vmatmul.mubr.bf16.gmra.mxu0 %v2355
        %v2626 = vpop.f32.mrf.mxu0
        %v2627 = vadd.f32 0.0, %v2626
        %v2628 = vpop.f32.mrf.mxu0
        %v2629 = vadd.f32 0.0, %v2628
        %v2630 = vpop.f32.mrf.mxu0
        %v2631 = vadd.f32 0.0, %v2630
        %v2632 = vpop.f32.mrf.mxu0
        %v2633 = vadd.f32 0.0, %v2632
        %2634 = vmatprep.mubr.bf16.mxu0 %v2393
        %2635 = vmatmul.mubr.bf16.gmra.mxu0 %v2357
        %v2636 = vpop.f32.mrf.mxu0
        %v2637 = vadd.f32 0.0, %v2636
        %v2638 = vpop.f32.mrf.mxu0
        %v2639 = vadd.f32 0.0, %v2638
        %v2640 = vpop.f32.mrf.mxu0
        %v2641 = vadd.f32 0.0, %v2640
        %v2642 = vpop.f32.mrf.mxu0
        %v2643 = vadd.f32 0.0, %v2642
        %2644 = vmatprep.mubr.bf16.mxu0 %v2396
        %2645 = vmatmul.mubr.bf16.gmra.mxu0 %v2359
        %v2646 = vpop.f32.mrf.mxu0
        %v2647 = vadd.f32 0.0, %v2646
        %v2648 = vpop.f32.mrf.mxu0
        %v2649 = vadd.f32 0.0, %v2648
        %v2650 = vpop.f32.mrf.mxu0
        %v2651 = vadd.f32 0.0, %v2650
        %v2652 = vpop.f32.mrf.mxu0
        %v2653 = vadd.f32 0.0, %v2652
        %2654 = vmatprep.mubr.bf16.mxu0 %v2399
        %2655 = vmatmul.mubr.bf16.gmra.mxu0 %v2361
        %v2656 = vpop.f32.mrf.mxu0
        %v2657 = vadd.f32 0.0, %v2656
        %v2658 = vpop.f32.mrf.mxu0
        %v2659 = vadd.f32 0.0, %v2658
        %v2660 = vpop.f32.mrf.mxu0
        %v2661 = vadd.f32 0.0, %v2660
        %v2662 = vpop.f32.mrf.mxu0
        %v2663 = vadd.f32 0.0, %v2662
        %2664 = vmatprep.mubr.bf16.mxu0 %v2402
        %2665 = vmatmul.mubr.bf16.gmra.mxu0 %v2363
        %v2666 = vpop.f32.mrf.mxu0
        %v2667 = vadd.f32 0.0, %v2666
        %v2668 = vpop.f32.mrf.mxu0
        %v2669 = vadd.f32 0.0, %v2668
        %v2670 = vpop.f32.mrf.mxu0
        %v2671 = vadd.f32 0.0, %v2670
        %v2672 = vpop.f32.mrf.mxu0
        %v2673 = vadd.f32 0.0, %v2672
        %2674 = vmatprep.mubr.bf16.mxu0 %v2405
        %2675 = vmatmul.mubr.bf16.gmra.mxu0 %v2365
        %v2676 = vpop.f32.mrf.mxu0
        %v2677 = vadd.f32 0.0, %v2676
        %v2678 = vpop.f32.mrf.mxu0
        %v2679 = vadd.f32 0.0, %v2678
        %v2680 = vpop.f32.mrf.mxu0
        %v2681 = vadd.f32 0.0, %v2680
        %v2682 = vpop.f32.mrf.mxu0
        %v2683 = vadd.f32 0.0, %v2682
        %2684 = vmatprep.mubr.bf16.mxu0 %v2408
        %2685 = vmatmul.mubr.bf16.gmra.mxu0 %v2367
        %v2686 = vpop.f32.mrf.mxu0
        %v2687 = vadd.f32 0.0, %v2686
        %v2688 = vpop.f32.mrf.mxu0
        %v2689 = vadd.f32 0.0, %v2688
        %v2690 = vpop.f32.mrf.mxu0
        %v2691 = vadd.f32 0.0, %v2690
        %v2692 = vpop.f32.mrf.mxu0
        %v2693 = vadd.f32 0.0, %v2692
        %2694 = vmatprep.mubr.bf16.mxu0 %v2411
        %2695 = vmatmul.mubr.bf16.gmra.mxu0 %v2369
        %v2696 = vpop.f32.mrf.mxu0
        %v2697 = vadd.f32 0.0, %v2696
        %v2698 = vpop.f32.mrf.mxu0
        %v2699 = vadd.f32 0.0, %v2698
        %v2700 = vpop.f32.mrf.mxu0
        %v2701 = vadd.f32 0.0, %v2700
        %v2702 = vpop.f32.mrf.mxu0
        %v2703 = vadd.f32 0.0, %v2702
        %2704 = vmatprep.mubr.bf16.mxu0 %v2414
        %2705 = vmatmul.mubr.bf16.gmra.mxu0 %v2371
        %v2706 = vpop.f32.mrf.mxu0
        %v2707 = vadd.f32 0.0, %v2706
        %v2708 = vpop.f32.mrf.mxu0
        %v2709 = vadd.f32 0.0, %v2708
        %v2710 = vpop.f32.mrf.mxu0
        %v2711 = vadd.f32 0.0, %v2710
        %v2712 = vpop.f32.mrf.mxu0
        %v2713 = vadd.f32 0.0, %v2712
        %2714 = vmatprep.mubr.bf16.mxu0 %v2417
        %2715 = vmatmul.mubr.bf16.gmra.mxu0 %v2373
        %v2716 = vpop.f32.mrf.mxu0
        %v2717 = vadd.f32 0.0, %v2716
        %v2718 = vpop.f32.mrf.mxu0
        %v2719 = vadd.f32 0.0, %v2718
        %v2720 = vpop.f32.mrf.mxu0
        %v2721 = vpop.f32.mrf.mxu0
        %2722 = vdwg.mxu0
        %v2723 = vpack.c.bf16 %v1944, %v1940
        %v2724 = vpack.c.bf16 %v1946, %v1942
        %v2725 = vpack.c.bf16 %v1954, %v1950
        %v2726 = vpack.c.bf16 %v1956, %v1952
        %v2727 = vpack.c.bf16 %v1964, %v1960
        %v2728 = vpack.c.bf16 %v1966, %v1962
        %v2729 = vpack.c.bf16 %v1974, %v1970
        %v2730 = vpack.c.bf16 %v1976, %v1972
        %v2731 = vpack.c.bf16 %v1984, %v1980
        %v2732 = vpack.c.bf16 %v1986, %v1982
        %v2733 = vpack.c.bf16 %v1994, %v1990
        %v2734 = vpack.c.bf16 %v1996, %v1992
        %v2735 = vpack.c.bf16 %v2004, %v2000
        %v2736 = vpack.c.bf16 %v2006, %v2002
        %v2737 = vpack.c.bf16 %v2014, %v2010
        %v2738 = vpack.c.bf16 %v2016, %v2012
        %v2739 = vpack.c.bf16 %v2024, %v2020
        %v2740 = vpack.c.bf16 %v2026, %v2022
        %v2741 = vpack.c.bf16 %v2034, %v2030
        %v2742 = vpack.c.bf16 %v2036, %v2032
        %v2743 = vpack.c.bf16 %v2044, %v2040
        %v2744 = vpack.c.bf16 %v2046, %v2042
        %2745 = vmatprep.subr.bf16.mxu0 %v2738
        %2746 = vmatpush1.bf16.msra.mxu0 %v2737
        %2747 = vmatprep.subr.bf16.mxu0 %v2736
        %2748 = vmatpush1.bf16.msra.mxu0 %v2735
        %2749 = vmatprep.subr.bf16.mxu0 %v2734
        %2750 = vmatpush1.bf16.msra.mxu0 %v2733
        %2751 = vmatprep.subr.bf16.mxu0 %v2732
        %2752 = vmatpush1.bf16.msra.mxu0 %v2731
        %2753 = vmatprep.subr.bf16.mxu0 %v2730
        %2754 = vmatpush1.bf16.msra.mxu0 %v2729
        %2755 = vmatprep.subr.bf16.mxu0 %v2728
        %2756 = vmatpush1.bf16.msra.mxu0 %v2727
        %2757 = vmatprep.subr.bf16.mxu0 %v2726
        %2758 = vmatpush1.bf16.msra.mxu0 %v2725
        %2759 = vmatprep.subr.bf16.mxu0 %v2724
        %2760 = vmatpush1.bf16.msra.mxu0 %v2723
        %2761 = vmatprep.subr.bf16.mxu0 0
        %2762 = vmatpush2.bf16.msra.mxu0 0
        %2763 = vmatprep.subr.bf16.mxu0 0
        %2764 = vmatpush2.bf16.msra.mxu0 0
        %2765 = vmatprep.subr.bf16.mxu0 0
        %2766 = vmatpush2.bf16.msra.mxu0 0
        %2767 = vmatprep.subr.bf16.mxu0 0
        %2768 = vmatpush2.bf16.msra.mxu0 0
        %2769 = vmatprep.subr.bf16.mxu0 0
        %2770 = vmatpush2.bf16.msra.mxu0 0
        %2771 = vmatprep.subr.bf16.mxu0 %v2744
        %2772 = vmatpush2.bf16.msra.mxu0 %v2743
        %2773 = vmatprep.subr.bf16.mxu0 %v2742
        %2774 = vmatpush2.bf16.msra.mxu0 %v2741
        %2775 = vmatprep.subr.bf16.mxu0 %v2740
        %2776 = vmatpush2.bf16.msra.mxu0 %v2739
        %2777 = vmatprep.mubr.bf16.mxu0 %v2387
        %2778 = vmatmul.mubr.bf16.gmra.mxu0 %v2353
        %v2779 = vpop.f32.mrf.mxu0
        %v2780 = vadd.f32 0.0, %v2779
        %v2781 = vpop.f32.mrf.mxu0
        %v2782 = vadd.f32 0.0, %v2781
        %v2783 = vpop.f32.mrf.mxu0
        %v2784 = vadd.f32 0.0, %v2783
        %v2785 = vpop.f32.mrf.mxu0
        %v2786 = vadd.f32 0.0, %v2785
        %2787 = vmatprep.mubr.bf16.mxu0 %v2390
        %2788 = vmatmul.mubr.bf16.gmra.mxu0 %v2355
        %v2789 = vpop.f32.mrf.mxu0
        %v2790 = vadd.f32 0.0, %v2789
        %v2791 = vpop.f32.mrf.mxu0
        %v2792 = vadd.f32 0.0, %v2791
        %v2793 = vpop.f32.mrf.mxu0
        %v2794 = vadd.f32 0.0, %v2793
        %v2795 = vpop.f32.mrf.mxu0
        %v2796 = vadd.f32 0.0, %v2795
        %2797 = vmatprep.mubr.bf16.mxu0 %v2393
        %2798 = vmatmul.mubr.bf16.gmra.mxu0 %v2357
        %v2799 = vpop.f32.mrf.mxu0
        %v2800 = vadd.f32 0.0, %v2799
        %v2801 = vpop.f32.mrf.mxu0
        %v2802 = vadd.f32 0.0, %v2801
        %v2803 = vpop.f32.mrf.mxu0
        %v2804 = vadd.f32 0.0, %v2803
        %v2805 = vpop.f32.mrf.mxu0
        %v2806 = vadd.f32 0.0, %v2805
        %2807 = vmatprep.mubr.bf16.mxu0 %v2396
        %2808 = vmatmul.mubr.bf16.gmra.mxu0 %v2359
        %v2809 = vpop.f32.mrf.mxu0
        %v2810 = vadd.f32 0.0, %v2809
        %v2811 = vpop.f32.mrf.mxu0
        %v2812 = vadd.f32 0.0, %v2811
        %v2813 = vpop.f32.mrf.mxu0
        %v2814 = vadd.f32 0.0, %v2813
        %v2815 = vpop.f32.mrf.mxu0
        %v2816 = vadd.f32 0.0, %v2815
        %2817 = vmatprep.mubr.bf16.mxu0 %v2399
        %2818 = vmatmul.mubr.bf16.gmra.mxu0 %v2361
        %v2819 = vpop.f32.mrf.mxu0
        %v2820 = vadd.f32 0.0, %v2819
        %v2821 = vpop.f32.mrf.mxu0
        %v2822 = vadd.f32 0.0, %v2821
        %v2823 = vpop.f32.mrf.mxu0
        %v2824 = vadd.f32 0.0, %v2823
        %v2825 = vpop.f32.mrf.mxu0
        %v2826 = vadd.f32 0.0, %v2825
        %2827 = vmatprep.mubr.bf16.mxu0 %v2402
        %2828 = vmatmul.mubr.bf16.gmra.mxu0 %v2363
        %v2829 = vpop.f32.mrf.mxu0
        %v2830 = vadd.f32 0.0, %v2829
        %v2831 = vpop.f32.mrf.mxu0
        %v2832 = vadd.f32 0.0, %v2831
        %v2833 = vpop.f32.mrf.mxu0
        %v2834 = vadd.f32 0.0, %v2833
        %v2835 = vpop.f32.mrf.mxu0
        %v2836 = vadd.f32 0.0, %v2835
        %2837 = vmatprep.mubr.bf16.mxu0 %v2405
        %2838 = vmatmul.mubr.bf16.gmra.mxu0 %v2365
        %v2839 = vpop.f32.mrf.mxu0
        %v2840 = vadd.f32 0.0, %v2839
        %v2841 = vpop.f32.mrf.mxu0
        %v2842 = vadd.f32 0.0, %v2841
        %v2843 = vpop.f32.mrf.mxu0
        %v2844 = vadd.f32 0.0, %v2843
        %v2845 = vpop.f32.mrf.mxu0
        %v2846 = vadd.f32 0.0, %v2845
        %2847 = vmatprep.mubr.bf16.mxu0 %v2408
        %2848 = vmatmul.mubr.bf16.gmra.mxu0 %v2367
        %v2849 = vpop.f32.mrf.mxu0
        %v2850 = vadd.f32 0.0, %v2849
        %v2851 = vpop.f32.mrf.mxu0
        %v2852 = vadd.f32 0.0, %v2851
        %v2853 = vpop.f32.mrf.mxu0
        %v2854 = vadd.f32 0.0, %v2853
        %v2855 = vpop.f32.mrf.mxu0
        %v2856 = vadd.f32 0.0, %v2855
        %2857 = vmatprep.mubr.bf16.mxu0 %v2411
        %2858 = vmatmul.mubr.bf16.gmra.mxu0 %v2369
        %v2859 = vpop.f32.mrf.mxu0
        %v2860 = vadd.f32 0.0, %v2859
        %v2861 = vpop.f32.mrf.mxu0
        %v2862 = vadd.f32 0.0, %v2861
        %v2863 = vpop.f32.mrf.mxu0
        %v2864 = vadd.f32 0.0, %v2863
        %v2865 = vpop.f32.mrf.mxu0
        %v2866 = vadd.f32 0.0, %v2865
        %2867 = vmatprep.mubr.bf16.mxu0 %v2414
        %2868 = vmatmul.mubr.bf16.gmra.mxu0 %v2371
        %v2869 = vpop.f32.mrf.mxu0
        %v2870 = vadd.f32 0.0, %v2869
        %v2871 = vpop.f32.mrf.mxu0
        %v2872 = vadd.f32 0.0, %v2871
        %v2873 = vpop.f32.mrf.mxu0
        %v2874 = vadd.f32 0.0, %v2873
        %v2875 = vpop.f32.mrf.mxu0
        %v2876 = vadd.f32 0.0, %v2875
        %2877 = vmatprep.mubr.bf16.mxu0 %v2417
        %2878 = vmatmul.mubr.bf16.gmra.mxu0 %v2373
        %v2879 = vpop.f32.mrf.mxu0
        %v2880 = vadd.f32 0.0, %v2879
        %v2881 = vpop.f32.mrf.mxu0
        %v2882 = vadd.f32 0.0, %v2881
        %v2883 = vpop.f32.mrf.mxu0
        %v2884 = vpop.f32.mrf.mxu0
        %2885 = vdwg.mxu0
        %v2886 = vpack.c.bf16 %v2054, %v2050
        %v2887 = vpack.c.bf16 %v2056, %v2052
        %v2888 = vpack.c.bf16 %v2064, %v2060
        %v2889 = vpack.c.bf16 %v2066, %v2062
        %v2890 = vpack.c.bf16 %v2074, %v2070
        %v2891 = vpack.c.bf16 %v2076, %v2072
        %v2892 = vpack.c.bf16 %v2084, %v2080
        %v2893 = vpack.c.bf16 %v2086, %v2082
        %v2894 = vpack.c.bf16 %v2094, %v2090
        %v2895 = vpack.c.bf16 %v2096, %v2092
        %v2896 = vpack.c.bf16 %v2104, %v2100
        %v2897 = vpack.c.bf16 %v2106, %v2102
        %v2898 = vpack.c.bf16 %v2114, %v2110
        %v2899 = vpack.c.bf16 %v2116, %v2112
        %v2900 = vpack.c.bf16 %v2124, %v2120
        %v2901 = vpack.c.bf16 %v2126, %v2122
        %v2902 = vpack.c.bf16 %v2134, %v2130
        %v2903 = vpack.c.bf16 %v2136, %v2132
        %v2904 = vpack.c.bf16 %v2144, %v2140
        %v2905 = vpack.c.bf16 %v2146, %v2142
        %v2906 = vpack.c.bf16 %v2154, %v2150
        %v2907 = vpack.c.bf16 %v2156, %v2152
        %2908 = vmatprep.subr.bf16.mxu0 %v2901
        %2909 = vmatpush1.bf16.msra.mxu0 %v2900
        %2910 = vmatprep.subr.bf16.mxu0 %v2899
        %2911 = vmatpush1.bf16.msra.mxu0 %v2898
        %2912 = vmatprep.subr.bf16.mxu0 %v2897
        %2913 = vmatpush1.bf16.msra.mxu0 %v2896
        %2914 = vmatprep.subr.bf16.mxu0 %v2895
        %2915 = vmatpush1.bf16.msra.mxu0 %v2894
        %2916 = vmatprep.subr.bf16.mxu0 %v2893
        %2917 = vmatpush1.bf16.msra.mxu0 %v2892
        %2918 = vmatprep.subr.bf16.mxu0 %v2891
        %2919 = vmatpush1.bf16.msra.mxu0 %v2890
        %2920 = vmatprep.subr.bf16.mxu0 %v2889
        %2921 = vmatpush1.bf16.msra.mxu0 %v2888
        %2922 = vmatprep.subr.bf16.mxu0 %v2887
        %2923 = vmatpush1.bf16.msra.mxu0 %v2886
        %2924 = vmatprep.subr.bf16.mxu0 0
        %2925 = vmatpush2.bf16.msra.mxu0 0
        %2926 = vmatprep.subr.bf16.mxu0 0
        %2927 = vmatpush2.bf16.msra.mxu0 0
        %2928 = vmatprep.subr.bf16.mxu0 0
        %2929 = vmatpush2.bf16.msra.mxu0 0
        %2930 = vmatprep.subr.bf16.mxu0 0
        %2931 = vmatpush2.bf16.msra.mxu0 0
        %2932 = vmatprep.subr.bf16.mxu0 0
        %2933 = vmatpush2.bf16.msra.mxu0 0
        %2934 = vmatprep.subr.bf16.mxu0 %v2907
        %2935 = vmatpush2.bf16.msra.mxu0 %v2906
        %2936 = vmatprep.subr.bf16.mxu0 %v2905
        %2937 = vmatpush2.bf16.msra.mxu0 %v2904
        %2938 = vmatprep.subr.bf16.mxu0 %v2903
        %2939 = vmatpush2.bf16.msra.mxu0 %v2902
        %2940 = vmatprep.mubr.bf16.mxu0 %v2387
        %2941 = vmatmul.mubr.bf16.gmra.mxu0 %v2353
        %v2942 = vpop.f32.mrf.mxu0
        %v2943 = vadd.f32 0.0, %v2942
        %v2944 = vpop.f32.mrf.mxu0
        %v2945 = vadd.f32 0.0, %v2944
        %v2946 = vpop.f32.mrf.mxu0
        %v2947 = vadd.f32 0.0, %v2946
        %v2948 = vpop.f32.mrf.mxu0
        %v2949 = vadd.f32 0.0, %v2948
        %2950 = vmatprep.mubr.bf16.mxu0 %v2390
        %2951 = vmatmul.mubr.bf16.gmra.mxu0 %v2355
        %v2952 = vpop.f32.mrf.mxu0
        %v2953 = vadd.f32 0.0, %v2952
        %v2954 = vpop.f32.mrf.mxu0
        %v2955 = vadd.f32 0.0, %v2954
        %v2956 = vpop.f32.mrf.mxu0
        %v2957 = vadd.f32 0.0, %v2956
        %v2958 = vpop.f32.mrf.mxu0
        %v2959 = vadd.f32 0.0, %v2958
        %2960 = vmatprep.mubr.bf16.mxu0 %v2393
        %2961 = vmatmul.mubr.bf16.gmra.mxu0 %v2357
        %v2962 = vpop.f32.mrf.mxu0
        %v2963 = vadd.f32 0.0, %v2962
        %v2964 = vpop.f32.mrf.mxu0
        %v2965 = vadd.f32 0.0, %v2964
        %v2966 = vpop.f32.mrf.mxu0
        %v2967 = vadd.f32 0.0, %v2966
        %v2968 = vpop.f32.mrf.mxu0
        %v2969 = vadd.f32 0.0, %v2968
        %2970 = vmatprep.mubr.bf16.mxu0 %v2396
        %2971 = vmatmul.mubr.bf16.gmra.mxu0 %v2359
        %v2972 = vpop.f32.mrf.mxu0
        %v2973 = vadd.f32 0.0, %v2972
        %v2974 = vpop.f32.mrf.mxu0
        %v2975 = vadd.f32 0.0, %v2974
        %v2976 = vpop.f32.mrf.mxu0
        %v2977 = vadd.f32 0.0, %v2976
        %v2978 = vpop.f32.mrf.mxu0
        %v2979 = vadd.f32 0.0, %v2978
        %2980 = vmatprep.mubr.bf16.mxu0 %v2399
        %2981 = vmatmul.mubr.bf16.gmra.mxu0 %v2361
        %v2982 = vpop.f32.mrf.mxu0
        %v2983 = vadd.f32 0.0, %v2982
        %v2984 = vpop.f32.mrf.mxu0
        %v2985 = vadd.f32 0.0, %v2984
        %v2986 = vpop.f32.mrf.mxu0
        %v2987 = vadd.f32 0.0, %v2986
        %v2988 = vpop.f32.mrf.mxu0
        %v2989 = vadd.f32 0.0, %v2988
        %2990 = vmatprep.mubr.bf16.mxu0 %v2402
        %2991 = vmatmul.mubr.bf16.gmra.mxu0 %v2363
        %v2992 = vpop.f32.mrf.mxu0
        %v2993 = vadd.f32 0.0, %v2992
        %v2994 = vpop.f32.mrf.mxu0
        %v2995 = vadd.f32 0.0, %v2994
        %v2996 = vpop.f32.mrf.mxu0
        %v2997 = vadd.f32 0.0, %v2996
        %v2998 = vpop.f32.mrf.mxu0
        %v2999 = vadd.f32 0.0, %v2998
        %3000 = vmatprep.mubr.bf16.mxu0 %v2405
        %3001 = vmatmul.mubr.bf16.gmra.mxu0 %v2365
        %v3002 = vpop.f32.mrf.mxu0
        %v3003 = vadd.f32 0.0, %v3002
        %v3004 = vpop.f32.mrf.mxu0
        %v3005 = vadd.f32 0.0, %v3004
        %v3006 = vpop.f32.mrf.mxu0
        %v3007 = vadd.f32 0.0, %v3006
        %v3008 = vpop.f32.mrf.mxu0
        %v3009 = vadd.f32 0.0, %v3008
        %3010 = vmatprep.mubr.bf16.mxu0 %v2408
        %3011 = vmatmul.mubr.bf16.gmra.mxu0 %v2367
        %v3012 = vpop.f32.mrf.mxu0
        %v3013 = vadd.f32 0.0, %v3012
        %v3014 = vpop.f32.mrf.mxu0
        %v3015 = vadd.f32 0.0, %v3014
        %v3016 = vpop.f32.mrf.mxu0
        %v3017 = vadd.f32 0.0, %v3016
        %v3018 = vpop.f32.mrf.mxu0
        %v3019 = vadd.f32 0.0, %v3018
        %3020 = vmatprep.mubr.bf16.mxu0 %v2411
        %3021 = vmatmul.mubr.bf16.gmra.mxu0 %v2369
        %v3022 = vpop.f32.mrf.mxu0
        %v3023 = vadd.f32 0.0, %v3022
        %v3024 = vpop.f32.mrf.mxu0
        %v3025 = vadd.f32 0.0, %v3024
        %v3026 = vpop.f32.mrf.mxu0
        %v3027 = vadd.f32 0.0, %v3026
        %v3028 = vpop.f32.mrf.mxu0
        %v3029 = vadd.f32 0.0, %v3028
        %3030 = vmatprep.mubr.bf16.mxu0 %v2414
        %3031 = vmatmul.mubr.bf16.gmra.mxu0 %v2371
        %v3032 = vpop.f32.mrf.mxu0
        %v3033 = vadd.f32 0.0, %v3032
        %v3034 = vpop.f32.mrf.mxu0
        %v3035 = vadd.f32 0.0, %v3034
        %v3036 = vpop.f32.mrf.mxu0
        %v3037 = vadd.f32 0.0, %v3036
        %v3038 = vpop.f32.mrf.mxu0
        %v3039 = vadd.f32 0.0, %v3038
        %3040 = vmatprep.mubr.bf16.mxu0 %v2417
        %3041 = vmatmul.mubr.bf16.gmra.mxu0 %v2373
        %v3042 = vpop.f32.mrf.mxu0
        %v3043 = vadd.f32 0.0, %v3042
        %v3044 = vpop.f32.mrf.mxu0
        %v3045 = vadd.f32 0.0, %v3044
        %v3046 = vpop.f32.mrf.mxu0
        %v3047 = vpop.f32.mrf.mxu0
        %3048 = vdwg.mxu0
        %v3049 = vpack.c.bf16 %v2164, %v2160
        %v3050 = vpack.c.bf16 %v2166, %v2162
        %v3051 = vpack.c.bf16 %v2174, %v2170
        %v3052 = vpack.c.bf16 %v2176, %v2172
        %v3053 = vpack.c.bf16 %v2184, %v2180
        %v3054 = vpack.c.bf16 %v2186, %v2182
        %v3055 = vpack.c.bf16 %v2194, %v2190
        %v3056 = vpack.c.bf16 %v2196, %v2192
        %v3057 = vpack.c.bf16 %v2204, %v2200
        %v3058 = vpack.c.bf16 %v2206, %v2202
        %v3059 = vpack.c.bf16 %v2214, %v2210
        %v3060 = vpack.c.bf16 %v2216, %v2212
        %v3061 = vpack.c.bf16 %v2224, %v2220
        %v3062 = vpack.c.bf16 %v2226, %v2222
        %v3063 = vpack.c.bf16 %v2234, %v2230
        %v3064 = vpack.c.bf16 %v2236, %v2232
        %v3065 = vpack.c.bf16 %v2244, %v2240
        %v3066 = vpack.c.bf16 %v2246, %v2242
        %v3067 = vpack.c.bf16 %v2254, %v2250
        %v3068 = vpack.c.bf16 %v2256, %v2252
        %v3069 = vpack.c.bf16 %v2264, %v2260
        %v3070 = vpack.c.bf16 %v2266, %v2262
        %3071 = vmatprep.subr.bf16.mxu0 %v3064
        %3072 = vmatpush1.bf16.msra.mxu0 %v3063
        %3073 = vmatprep.subr.bf16.mxu0 %v3062
        %3074 = vmatpush1.bf16.msra.mxu0 %v3061
        %3075 = vmatprep.subr.bf16.mxu0 %v3060
        %3076 = vmatpush1.bf16.msra.mxu0 %v3059
        %3077 = vmatprep.subr.bf16.mxu0 %v3058
        %3078 = vmatpush1.bf16.msra.mxu0 %v3057
        %3079 = vmatprep.subr.bf16.mxu0 %v3056
        %3080 = vmatpush1.bf16.msra.mxu0 %v3055
        %3081 = vmatprep.subr.bf16.mxu0 %v3054
        %3082 = vmatpush1.bf16.msra.mxu0 %v3053
        %3083 = vmatprep.subr.bf16.mxu0 %v3052
        %3084 = vmatpush1.bf16.msra.mxu0 %v3051
        %3085 = vmatprep.subr.bf16.mxu0 %v3050
        %3086 = vmatpush1.bf16.msra.mxu0 %v3049
        %3087 = vmatprep.subr.bf16.mxu0 0
        %3088 = vmatpush2.bf16.msra.mxu0 0
        %3089 = vmatprep.subr.bf16.mxu0 0
        %3090 = vmatpush2.bf16.msra.mxu0 0
        %3091 = vmatprep.subr.bf16.mxu0 0
        %3092 = vmatpush2.bf16.msra.mxu0 0
        %3093 = vmatprep.subr.bf16.mxu0 0
        %3094 = vmatpush2.bf16.msra.mxu0 0
        %3095 = vmatprep.subr.bf16.mxu0 0
        %3096 = vmatpush2.bf16.msra.mxu0 0
        %3097 = vmatprep.subr.bf16.mxu0 %v3070
        %3098 = vmatpush2.bf16.msra.mxu0 %v3069
        %3099 = vmatprep.subr.bf16.mxu0 %v3068
        %3100 = vmatpush2.bf16.msra.mxu0 %v3067
        %3101 = vmatprep.subr.bf16.mxu0 %v3066
        %3102 = vmatpush2.bf16.msra.mxu0 %v3065
        %3103 = vmatprep.mubr.bf16.mxu0 %v2387
        %3104 = vmatmul.mubr.bf16.gmra.mxu0 %v2353
        %v3105 = vpop.f32.mrf.mxu0
        %v3106 = vadd.f32 0.0, %v3105
        %v3107 = vpop.f32.mrf.mxu0
        %v3108 = vadd.f32 0.0, %v3107
        %v3109 = vpop.f32.mrf.mxu0
        %v3110 = vadd.f32 0.0, %v3109
        %v3111 = vpop.f32.mrf.mxu0
        %v3112 = vadd.f32 0.0, %v3111
        %3113 = vmatprep.mubr.bf16.mxu0 %v2390
        %3114 = vmatmul.mubr.bf16.gmra.mxu0 %v2355
        %v3115 = vpop.f32.mrf.mxu0
        %v3116 = vadd.f32 0.0, %v3115
        %v3117 = vpop.f32.mrf.mxu0
        %v3118 = vadd.f32 0.0, %v3117
        %v3119 = vpop.f32.mrf.mxu0
        %v3120 = vadd.f32 0.0, %v3119
        %v3121 = vpop.f32.mrf.mxu0
        %v3122 = vadd.f32 0.0, %v3121
        %3123 = vmatprep.mubr.bf16.mxu0 %v2393
        %3124 = vmatmul.mubr.bf16.gmra.mxu0 %v2357
        %v3125 = vpop.f32.mrf.mxu0
        %v3126 = vadd.f32 0.0, %v3125
        %v3127 = vpop.f32.mrf.mxu0
        %v3128 = vadd.f32 0.0, %v3127
        %v3129 = vpop.f32.mrf.mxu0
        %v3130 = vadd.f32 0.0, %v3129
        %v3131 = vpop.f32.mrf.mxu0
        %v3132 = vadd.f32 0.0, %v3131
        %3133 = vmatprep.mubr.bf16.mxu0 %v2396
        %3134 = vmatmul.mubr.bf16.gmra.mxu0 %v2359
        %v3135 = vpop.f32.mrf.mxu0
        %v3136 = vadd.f32 0.0, %v3135
        %v3137 = vpop.f32.mrf.mxu0
        %v3138 = vadd.f32 0.0, %v3137
        %v3139 = vpop.f32.mrf.mxu0
        %v3140 = vadd.f32 0.0, %v3139
        %v3141 = vpop.f32.mrf.mxu0
        %v3142 = vadd.f32 0.0, %v3141
        %3143 = vmatprep.mubr.bf16.mxu0 %v2399
        %3144 = vmatmul.mubr.bf16.gmra.mxu0 %v2361
        %v3145 = vpop.f32.mrf.mxu0
        %v3146 = vadd.f32 0.0, %v3145
        %v3147 = vpop.f32.mrf.mxu0
        %v3148 = vadd.f32 0.0, %v3147
        %v3149 = vpop.f32.mrf.mxu0
        %v3150 = vadd.f32 0.0, %v3149
        %v3151 = vpop.f32.mrf.mxu0
        %v3152 = vadd.f32 0.0, %v3151
        %3153 = vmatprep.mubr.bf16.mxu0 %v2402
        %3154 = vmatmul.mubr.bf16.gmra.mxu0 %v2363
        %v3155 = vpop.f32.mrf.mxu0
        %v3156 = vadd.f32 0.0, %v3155
        %v3157 = vpop.f32.mrf.mxu0
        %v3158 = vadd.f32 0.0, %v3157
        %v3159 = vpop.f32.mrf.mxu0
        %v3160 = vadd.f32 0.0, %v3159
        %v3161 = vpop.f32.mrf.mxu0
        %v3162 = vadd.f32 0.0, %v3161
        %3163 = vmatprep.mubr.bf16.mxu0 %v2405
        %3164 = vmatmul.mubr.bf16.gmra.mxu0 %v2365
        %v3165 = vpop.f32.mrf.mxu0
        %v3166 = vadd.f32 0.0, %v3165
        %v3167 = vpop.f32.mrf.mxu0
        %v3168 = vadd.f32 0.0, %v3167
        %v3169 = vpop.f32.mrf.mxu0
        %v3170 = vadd.f32 0.0, %v3169
        %v3171 = vpop.f32.mrf.mxu0
        %v3172 = vadd.f32 0.0, %v3171
        %3173 = vmatprep.mubr.bf16.mxu0 %v2408
        %3174 = vmatmul.mubr.bf16.gmra.mxu0 %v2367
        %v3175 = vpop.f32.mrf.mxu0
        %v3176 = vadd.f32 0.0, %v3175
        %v3177 = vpop.f32.mrf.mxu0
        %v3178 = vadd.f32 0.0, %v3177
        %v3179 = vpop.f32.mrf.mxu0
        %v3180 = vadd.f32 0.0, %v3179
        %v3181 = vpop.f32.mrf.mxu0
        %v3182 = vadd.f32 0.0, %v3181
        %3183 = vmatprep.mubr.bf16.mxu0 %v2411
        %3184 = vmatmul.mubr.bf16.gmra.mxu0 %v2369
        %v3185 = vpop.f32.mrf.mxu0
        %v3186 = vadd.f32 0.0, %v3185
        %v3187 = vpop.f32.mrf.mxu0
        %v3188 = vadd.f32 0.0, %v3187
        %v3189 = vpop.f32.mrf.mxu0
        %v3190 = vadd.f32 0.0, %v3189
        %v3191 = vpop.f32.mrf.mxu0
        %v3192 = vadd.f32 0.0, %v3191
        %3193 = vmatprep.mubr.bf16.mxu0 %v2414
        %3194 = vmatmul.mubr.bf16.gmra.mxu0 %v2371
        %v3195 = vpop.f32.mrf.mxu0
        %v3196 = vadd.f32 0.0, %v3195
        %v3197 = vpop.f32.mrf.mxu0
        %v3198 = vadd.f32 0.0, %v3197
        %v3199 = vpop.f32.mrf.mxu0
        %v3200 = vadd.f32 0.0, %v3199
        %v3201 = vpop.f32.mrf.mxu0
        %v3202 = vadd.f32 0.0, %v3201
        %3203 = vmatprep.mubr.bf16.mxu0 %v2417
        %3204 = vmatmul.mubr.bf16.gmra.mxu0 %v2373
        %v3205 = vpop.f32.mrf.mxu0
        %v3206 = vadd.f32 0.0, %v3205
        %v3207 = vpop.f32.mrf.mxu0
        %v3208 = vadd.f32 0.0, %v3207
        %v3209 = vpop.f32.mrf.mxu0
        %v3210 = vpop.f32.mrf.mxu0
        %3211 = vdwg.mxu0
        %v3212 = vmul.f32 %v2454, %v2454
        %v3213 = vmul.f32 %v2456, %v2456
        %v3214 = vmul.f32 %v2458, %v2458
        %v3215 = vmul.f32 %v2460, %v2460
        %v3216 = vmul.f32 %v2464, %v2464
        %v3217 = vmul.f32 %v2466, %v2466
        %v3218 = vmul.f32 %v2468, %v2468
        %v3219 = vmul.f32 %v2470, %v2470
        %v3220 = vmul.f32 %v2474, %v2474
        %v3221 = vmul.f32 %v2476, %v2476
        %v3222 = vmul.f32 %v2478, %v2478
        %v3223 = vmul.f32 %v2480, %v2480
        %v3224 = vmul.f32 %v2484, %v2484
        %v3225 = vmul.f32 %v2486, %v2486
        %v3226 = vmul.f32 %v2488, %v2488
        %v3227 = vmul.f32 %v2490, %v2490
        %v3228 = vmul.f32 %v2494, %v2494
        %v3229 = vmul.f32 %v2496, %v2496
        %v3230 = vmul.f32 %v2498, %v2498
        %v3231 = vmul.f32 %v2500, %v2500
        %v3232 = vmul.f32 %v2504, %v2504
        %v3233 = vmul.f32 %v2506, %v2506
        %v3234 = vmul.f32 %v2508, %v2508
        %v3235 = vmul.f32 %v2510, %v2510
        %v3236 = vmul.f32 %v2514, %v2514
        %v3237 = vmul.f32 %v2516, %v2516
        %v3238 = vmul.f32 %v2518, %v2518
        %v3239 = vmul.f32 %v2520, %v2520
        %v3240 = vmul.f32 %v2524, %v2524
        %v3241 = vmul.f32 %v2526, %v2526
        %v3242 = vmul.f32 %v2528, %v2528
        %v3243 = vmul.f32 %v2530, %v2530
        %v3244 = vmul.f32 %v2534, %v2534
        %v3245 = vmul.f32 %v2536, %v2536
        %v3246 = vmul.f32 %v2538, %v2538
        %v3247 = vmul.f32 %v2540, %v2540
        %v3248 = vmul.f32 %v2544, %v2544
        %v3249 = vmul.f32 %v2546, %v2546
        %v3250 = vmul.f32 %v2548, %v2548
        %v3251 = vmul.f32 %v2550, %v2550
        %v3252 = vmul.f32 %v2554, %v2554
        %v3253 = vmul.f32 %v2556, %v2556
        %v3254 = vmul.f32 %v2617, %v2617
        %v3255 = vmul.f32 %v2619, %v2619
        %v3256 = vmul.f32 %v2621, %v2621
        %v3257 = vmul.f32 %v2623, %v2623
        %v3258 = vmul.f32 %v2627, %v2627
        %v3259 = vmul.f32 %v2629, %v2629
        %v3260 = vmul.f32 %v2631, %v2631
        %v3261 = vmul.f32 %v2633, %v2633
        %v3262 = vmul.f32 %v2637, %v2637
        %v3263 = vmul.f32 %v2639, %v2639
        %v3264 = vmul.f32 %v2641, %v2641
        %v3265 = vmul.f32 %v2643, %v2643
        %v3266 = vmul.f32 %v2647, %v2647
        %v3267 = vmul.f32 %v2649, %v2649
        %v3268 = vmul.f32 %v2651, %v2651
        %v3269 = vmul.f32 %v2653, %v2653
        %v3270 = vmul.f32 %v2657, %v2657
        %v3271 = vmul.f32 %v2659, %v2659
        %v3272 = vmul.f32 %v2661, %v2661
        %v3273 = vmul.f32 %v2663, %v2663
        %v3274 = vmul.f32 %v2667, %v2667
        %v3275 = vmul.f32 %v2669, %v2669
        %v3276 = vmul.f32 %v2671, %v2671
        %v3277 = vmul.f32 %v2673, %v2673
        %v3278 = vmul.f32 %v2677, %v2677
        %v3279 = vmul.f32 %v2679, %v2679
        %v3280 = vmul.f32 %v2681, %v2681
        %v3281 = vmul.f32 %v2683, %v2683
        %v3282 = vmul.f32 %v2687, %v2687
        %v3283 = vmul.f32 %v2689, %v2689
        %v3284 = vmul.f32 %v2691, %v2691
        %v3285 = vmul.f32 %v2693, %v2693
        %v3286 = vmul.f32 %v2697, %v2697
        %v3287 = vmul.f32 %v2699, %v2699
        %v3288 = vmul.f32 %v2701, %v2701
        %v3289 = vmul.f32 %v2703, %v2703
        %v3290 = vmul.f32 %v2707, %v2707
        %v3291 = vmul.f32 %v2709, %v2709
        %v3292 = vmul.f32 %v2711, %v2711
        %v3293 = vmul.f32 %v2713, %v2713
        %v3294 = vmul.f32 %v2717, %v2717
        %v3295 = vmul.f32 %v2719, %v2719
        %v3296 = vmul.f32 %v2454, %v2617
        %v3297 = vmul.f32 %v2456, %v2619
        %v3298 = vmul.f32 %v2458, %v2621
        %v3299 = vmul.f32 %v2460, %v2623
        %v3300 = vmul.f32 %v2464, %v2627
        %v3301 = vmul.f32 %v2466, %v2629
        %v3302 = vmul.f32 %v2468, %v2631
        %v3303 = vmul.f32 %v2470, %v2633
        %v3304 = vmul.f32 %v2474, %v2637
        %v3305 = vmul.f32 %v2476, %v2639
        %v3306 = vmul.f32 %v2478, %v2641
        %v3307 = vmul.f32 %v2480, %v2643
        %v3308 = vmul.f32 %v2484, %v2647
        %v3309 = vmul.f32 %v2486, %v2649
        %v3310 = vmul.f32 %v2488, %v2651
        %v3311 = vmul.f32 %v2490, %v2653
        %v3312 = vmul.f32 %v2494, %v2657
        %v3313 = vmul.f32 %v2496, %v2659
        %v3314 = vmul.f32 %v2498, %v2661
        %v3315 = vmul.f32 %v2500, %v2663
        %v3316 = vmul.f32 %v2504, %v2667
        %v3317 = vmul.f32 %v2506, %v2669
        %v3318 = vmul.f32 %v2508, %v2671
        %v3319 = vmul.f32 %v2510, %v2673
        %v3320 = vmul.f32 %v2514, %v2677
        %v3321 = vmul.f32 %v2516, %v2679
        %v3322 = vmul.f32 %v2518, %v2681
        %v3323 = vmul.f32 %v2520, %v2683
        %v3324 = vmul.f32 %v2524, %v2687
        %v3325 = vmul.f32 %v2526, %v2689
        %v3326 = vmul.f32 %v2528, %v2691
        %v3327 = vmul.f32 %v2530, %v2693
        %v3328 = vmul.f32 %v2534, %v2697
        %v3329 = vmul.f32 %v2536, %v2699
        %v3330 = vmul.f32 %v2538, %v2701
        %v3331 = vmul.f32 %v2540, %v2703
        %v3332 = vmul.f32 %v2544, %v2707
        %v3333 = vmul.f32 %v2546, %v2709
        %v3334 = vmul.f32 %v2548, %v2711
        %v3335 = vmul.f32 %v2550, %v2713
        %v3336 = vmul.f32 %v2554, %v2717
        %v3337 = vmul.f32 %v2556, %v2719
        %v3338 = vsub.f32 %v2780, %v3212
        %v3339 = vsub.f32 %v2782, %v3213
        %v3340 = vsub.f32 %v2784, %v3214
        %v3341 = vsub.f32 %v2786, %v3215
        %v3342 = vsub.f32 %v2790, %v3216
        %v3343 = vsub.f32 %v2792, %v3217
        %v3344 = vsub.f32 %v2794, %v3218
        %v3345 = vsub.f32 %v2796, %v3219
        %v3346 = vsub.f32 %v2800, %v3220
        %v3347 = vsub.f32 %v2802, %v3221
        %v3348 = vsub.f32 %v2804, %v3222
        %v3349 = vsub.f32 %v2806, %v3223
        %v3350 = vsub.f32 %v2810, %v3224
        %v3351 = vsub.f32 %v2812, %v3225
        %v3352 = vsub.f32 %v2814, %v3226
        %v3353 = vsub.f32 %v2816, %v3227
        %v3354 = vsub.f32 %v2820, %v3228
        %v3355 = vsub.f32 %v2822, %v3229
        %v3356 = vsub.f32 %v2824, %v3230
        %v3357 = vsub.f32 %v2826, %v3231
        %v3358 = vsub.f32 %v2830, %v3232
        %v3359 = vsub.f32 %v2832, %v3233
        %v3360 = vsub.f32 %v2834, %v3234
        %v3361 = vsub.f32 %v2836, %v3235
        %v3362 = vsub.f32 %v2840, %v3236
        %v3363 = vsub.f32 %v2842, %v3237
        %v3364 = vsub.f32 %v2844, %v3238
        %v3365 = vsub.f32 %v2846, %v3239
        %v3366 = vsub.f32 %v2850, %v3240
        %v3367 = vsub.f32 %v2852, %v3241
        %v3368 = vsub.f32 %v2854, %v3242
        %v3369 = vsub.f32 %v2856, %v3243
        %v3370 = vsub.f32 %v2860, %v3244
        %v3371 = vsub.f32 %v2862, %v3245
        %v3372 = vsub.f32 %v2864, %v3246
        %v3373 = vsub.f32 %v2866, %v3247
        %v3374 = vsub.f32 %v2870, %v3248
        %v3375 = vsub.f32 %v2872, %v3249
        %v3376 = vsub.f32 %v2874, %v3250
        %v3377 = vsub.f32 %v2876, %v3251
        %v3378 = vsub.f32 %v2880, %v3252
        %v3379 = vsub.f32 %v2882, %v3253
        %v3380 = vsub.f32 %v2943, %v3254
        %v3381 = vsub.f32 %v2945, %v3255
        %v3382 = vsub.f32 %v2947, %v3256
        %v3383 = vsub.f32 %v2949, %v3257
        %v3384 = vsub.f32 %v2953, %v3258
        %v3385 = vsub.f32 %v2955, %v3259
        %v3386 = vsub.f32 %v2957, %v3260
        %v3387 = vsub.f32 %v2959, %v3261
        %v3388 = vsub.f32 %v2963, %v3262
        %v3389 = vsub.f32 %v2965, %v3263
        %v3390 = vsub.f32 %v2967, %v3264
        %v3391 = vsub.f32 %v2969, %v3265
        %v3392 = vsub.f32 %v2973, %v3266
        %v3393 = vsub.f32 %v2975, %v3267
        %v3394 = vsub.f32 %v2977, %v3268
        %v3395 = vsub.f32 %v2979, %v3269
        %v3396 = vsub.f32 %v2983, %v3270
        %v3397 = vsub.f32 %v2985, %v3271
        %v3398 = vsub.f32 %v2987, %v3272
        %v3399 = vsub.f32 %v2989, %v3273
        %v3400 = vsub.f32 %v2993, %v3274
        %v3401 = vsub.f32 %v2995, %v3275
        %v3402 = vsub.f32 %v2997, %v3276
        %v3403 = vsub.f32 %v2999, %v3277
        %v3404 = vsub.f32 %v3003, %v3278
        %v3405 = vsub.f32 %v3005, %v3279
        %v3406 = vsub.f32 %v3007, %v3280
        %v3407 = vsub.f32 %v3009, %v3281
        %v3408 = vsub.f32 %v3013, %v3282
        %v3409 = vsub.f32 %v3015, %v3283
        %v3410 = vsub.f32 %v3017, %v3284
        %v3411 = vsub.f32 %v3019, %v3285
        %v3412 = vsub.f32 %v3023, %v3286
        %v3413 = vsub.f32 %v3025, %v3287
        %v3414 = vsub.f32 %v3027, %v3288
        %v3415 = vsub.f32 %v3029, %v3289
        %v3416 = vsub.f32 %v3033, %v3290
        %v3417 = vsub.f32 %v3035, %v3291
        %v3418 = vsub.f32 %v3037, %v3292
        %v3419 = vsub.f32 %v3039, %v3293
        %v3420 = vsub.f32 %v3043, %v3294
        %v3421 = vsub.f32 %v3045, %v3295
        %v3422 = vsub.f32 %v3106, %v3296
        %v3423 = vsub.f32 %v3108, %v3297
        %v3424 = vsub.f32 %v3110, %v3298
        %v3425 = vsub.f32 %v3112, %v3299
        %v3426 = vsub.f32 %v3116, %v3300
        %v3427 = vsub.f32 %v3118, %v3301
        %v3428 = vsub.f32 %v3120, %v3302
        %v3429 = vsub.f32 %v3122, %v3303
        %v3430 = vsub.f32 %v3126, %v3304
        %v3431 = vsub.f32 %v3128, %v3305
        %v3432 = vsub.f32 %v3130, %v3306
        %v3433 = vsub.f32 %v3132, %v3307
        %v3434 = vsub.f32 %v3136, %v3308
        %v3435 = vsub.f32 %v3138, %v3309
        %v3436 = vsub.f32 %v3140, %v3310
        %v3437 = vsub.f32 %v3142, %v3311
        %v3438 = vsub.f32 %v3146, %v3312
        %v3439 = vsub.f32 %v3148, %v3313
        %v3440 = vsub.f32 %v3150, %v3314
        %v3441 = vsub.f32 %v3152, %v3315
        %v3442 = vsub.f32 %v3156, %v3316
        %v3443 = vsub.f32 %v3158, %v3317
        %v3444 = vsub.f32 %v3160, %v3318
        %v3445 = vsub.f32 %v3162, %v3319
        %v3446 = vsub.f32 %v3166, %v3320
        %v3447 = vsub.f32 %v3168, %v3321
        %v3448 = vsub.f32 %v3170, %v3322
        %v3449 = vsub.f32 %v3172, %v3323
        %v3450 = vsub.f32 %v3176, %v3324
        %v3451 = vsub.f32 %v3178, %v3325
        %v3452 = vsub.f32 %v3180, %v3326
        %v3453 = vsub.f32 %v3182, %v3327
        %v3454 = vsub.f32 %v3186, %v3328
        %v3455 = vsub.f32 %v3188, %v3329
        %v3456 = vsub.f32 %v3190, %v3330
        %v3457 = vsub.f32 %v3192, %v3331
        %v3458 = vsub.f32 %v3196, %v3332
        %v3459 = vsub.f32 %v3198, %v3333
        %v3460 = vsub.f32 %v3200, %v3334
        %v3461 = vsub.f32 %v3202, %v3335
        %v3462 = vsub.f32 %v3206, %v3336
        %v3463 = vsub.f32 %v3208, %v3337
        %v3464 = vmul.f32 %v3422, 2.0
        %v3465 = vmul.f32 %v3423, 2.0
        %v3466 = vmul.f32 %v3424, 2.0
        %v3467 = vmul.f32 %v3425, 2.0
        %v3468 = vmul.f32 %v3426, 2.0
        %v3469 = vmul.f32 %v3427, 2.0
        %v3470 = vmul.f32 %v3428, 2.0
        %v3471 = vmul.f32 %v3429, 2.0
        %v3472 = vmul.f32 %v3430, 2.0
        %v3473 = vmul.f32 %v3431, 2.0
        %v3474 = vmul.f32 %v3432, 2.0
        %v3475 = vmul.f32 %v3433, 2.0
        %v3476 = vmul.f32 %v3434, 2.0
        %v3477 = vmul.f32 %v3435, 2.0
        %v3478 = vmul.f32 %v3436, 2.0
        %v3479 = vmul.f32 %v3437, 2.0
        %v3480 = vmul.f32 %v3438, 2.0
        %v3481 = vmul.f32 %v3439, 2.0
        %v3482 = vmul.f32 %v3440, 2.0
        %v3483 = vmul.f32 %v3441, 2.0
        %v3484 = vmul.f32 %v3442, 2.0
        %v3485 = vmul.f32 %v3443, 2.0
        %v3486 = vmul.f32 %v3444, 2.0
        %v3487 = vmul.f32 %v3445, 2.0
        %v3488 = vmul.f32 %v3446, 2.0
        %v3489 = vmul.f32 %v3447, 2.0
        %v3490 = vmul.f32 %v3448, 2.0
        %v3491 = vmul.f32 %v3449, 2.0
        %v3492 = vmul.f32 %v3450, 2.0
        %v3493 = vmul.f32 %v3451, 2.0
        %v3494 = vmul.f32 %v3452, 2.0
        %v3495 = vmul.f32 %v3453, 2.0
        %v3496 = vmul.f32 %v3454, 2.0
        %v3497 = vmul.f32 %v3455, 2.0
        %v3498 = vmul.f32 %v3456, 2.0
        %v3499 = vmul.f32 %v3457, 2.0
        %v3500 = vmul.f32 %v3458, 2.0
        %v3501 = vmul.f32 %v3459, 2.0
        %v3502 = vmul.f32 %v3460, 2.0
        %v3503 = vmul.f32 %v3461, 2.0
        %v3504 = vmul.f32 %v3462, 2.0
        %v3505 = vmul.f32 %v3463, 2.0
        %v3506 = vadd.f32 %v3464, 0.0009
        %v3507 = vadd.f32 %v3465, 0.0009
        %v3508 = vadd.f32 %v3466, 0.0009
        %v3509 = vadd.f32 %v3467, 0.0009
        %v3510 = vadd.f32 %v3468, 0.0009
        %v3511 = vadd.f32 %v3469, 0.0009
        %v3512 = vadd.f32 %v3470, 0.0009
        %v3513 = vadd.f32 %v3471, 0.0009
        %v3514 = vadd.f32 %v3472, 0.0009
        %v3515 = vadd.f32 %v3473, 0.0009
        %v3516 = vadd.f32 %v3474, 0.0009
        %v3517 = vadd.f32 %v3475, 0.0009
        %v3518 = vadd.f32 %v3476, 0.0009
        %v3519 = vadd.f32 %v3477, 0.0009
        %v3520 = vadd.f32 %v3478, 0.0009
        %v3521 = vadd.f32 %v3479, 0.0009
        %v3522 = vadd.f32 %v3480, 0.0009
        %v3523 = vadd.f32 %v3481, 0.0009
        %v3524 = vadd.f32 %v3482, 0.0009
        %v3525 = vadd.f32 %v3483, 0.0009
        %v3526 = vadd.f32 %v3484, 0.0009
        %v3527 = vadd.f32 %v3485, 0.0009
        %v3528 = vadd.f32 %v3486, 0.0009
        %v3529 = vadd.f32 %v3487, 0.0009
        %v3530 = vadd.f32 %v3488, 0.0009
        %v3531 = vadd.f32 %v3489, 0.0009
        %v3532 = vadd.f32 %v3490, 0.0009
        %v3533 = vadd.f32 %v3491, 0.0009
        %v3534 = vadd.f32 %v3492, 0.0009
        %v3535 = vadd.f32 %v3493, 0.0009
        %v3536 = vadd.f32 %v3494, 0.0009
        %v3537 = vadd.f32 %v3495, 0.0009
        %v3538 = vadd.f32 %v3496, 0.0009
        %v3539 = vadd.f32 %v3497, 0.0009
        %v3540 = vadd.f32 %v3498, 0.0009
        %v3541 = vadd.f32 %v3499, 0.0009
        %v3542 = vadd.f32 %v3500, 0.0009
        %v3543 = vadd.f32 %v3501, 0.0009
        %v3544 = vadd.f32 %v3502, 0.0009
        %v3545 = vadd.f32 %v3503, 0.0009
        %v3546 = vadd.f32 %v3504, 0.0009
        %v3547 = vadd.f32 %v3505, 0.0009
        %v3548 = vadd.f32 %v3338, %v3380
        %v3549 = vadd.f32 %v3339, %v3381
        %v3550 = vadd.f32 %v3340, %v3382
        %v3551 = vadd.f32 %v3341, %v3383
        %v3552 = vadd.f32 %v3342, %v3384
        %v3553 = vadd.f32 %v3343, %v3385
        %v3554 = vadd.f32 %v3344, %v3386
        %v3555 = vadd.f32 %v3345, %v3387
        %v3556 = vadd.f32 %v3346, %v3388
        %v3557 = vadd.f32 %v3347, %v3389
        %v3558 = vadd.f32 %v3348, %v3390
        %v3559 = vadd.f32 %v3349, %v3391
        %v3560 = vadd.f32 %v3350, %v3392
        %v3561 = vadd.f32 %v3351, %v3393
        %v3562 = vadd.f32 %v3352, %v3394
        %v3563 = vadd.f32 %v3353, %v3395
        %v3564 = vadd.f32 %v3354, %v3396
        %v3565 = vadd.f32 %v3355, %v3397
        %v3566 = vadd.f32 %v3356, %v3398
        %v3567 = vadd.f32 %v3357, %v3399
        %v3568 = vadd.f32 %v3358, %v3400
        %v3569 = vadd.f32 %v3359, %v3401
        %v3570 = vadd.f32 %v3360, %v3402
        %v3571 = vadd.f32 %v3361, %v3403
        %v3572 = vadd.f32 %v3362, %v3404
        %v3573 = vadd.f32 %v3363, %v3405
        %v3574 = vadd.f32 %v3364, %v3406
        %v3575 = vadd.f32 %v3365, %v3407
        %v3576 = vadd.f32 %v3366, %v3408
        %v3577 = vadd.f32 %v3367, %v3409
        %v3578 = vadd.f32 %v3368, %v3410
        %v3579 = vadd.f32 %v3369, %v3411
        %v3580 = vadd.f32 %v3370, %v3412
        %v3581 = vadd.f32 %v3371, %v3413
        %v3582 = vadd.f32 %v3372, %v3414
        %v3583 = vadd.f32 %v3373, %v3415
        %v3584 = vadd.f32 %v3374, %v3416
        %v3585 = vadd.f32 %v3375, %v3417
        %v3586 = vadd.f32 %v3376, %v3418
        %v3587 = vadd.f32 %v3377, %v3419
        %v3588 = vadd.f32 %v3378, %v3420
        %v3589 = vadd.f32 %v3379, %v3421
        %v3590 = vadd.f32 %v3548, 0.0009
        %v3591 = vadd.f32 %v3549, 0.0009
        %v3592 = vadd.f32 %v3550, 0.0009
        %v3593 = vadd.f32 %v3551, 0.0009
        %v3594 = vadd.f32 %v3552, 0.0009
        %v3595 = vadd.f32 %v3553, 0.0009
        %v3596 = vadd.f32 %v3554, 0.0009
        %v3597 = vadd.f32 %v3555, 0.0009
        %v3598 = vadd.f32 %v3556, 0.0009
        %v3599 = vadd.f32 %v3557, 0.0009
        %v3600 = vadd.f32 %v3558, 0.0009
        %v3601 = vadd.f32 %v3559, 0.0009
        %v3602 = vadd.f32 %v3560, 0.0009
        %v3603 = vadd.f32 %v3561, 0.0009
        %v3604 = vadd.f32 %v3562, 0.0009
        %v3605 = vadd.f32 %v3563, 0.0009
        %v3606 = vadd.f32 %v3564, 0.0009
        %v3607 = vadd.f32 %v3565, 0.0009
        %v3608 = vadd.f32 %v3566, 0.0009
        %v3609 = vadd.f32 %v3567, 0.0009
        %v3610 = vadd.f32 %v3568, 0.0009
        %v3611 = vadd.f32 %v3569, 0.0009
        %v3612 = vadd.f32 %v3570, 0.0009
        %v3613 = vadd.f32 %v3571, 0.0009
        %v3614 = vadd.f32 %v3572, 0.0009
        %v3615 = vadd.f32 %v3573, 0.0009
        %v3616 = vadd.f32 %v3574, 0.0009
        %v3617 = vadd.f32 %v3575, 0.0009
        %v3618 = vadd.f32 %v3576, 0.0009
        %v3619 = vadd.f32 %v3577, 0.0009
        %v3620 = vadd.f32 %v3578, 0.0009
        %v3621 = vadd.f32 %v3579, 0.0009
        %v3622 = vadd.f32 %v3580, 0.0009
        %v3623 = vadd.f32 %v3581, 0.0009
        %v3624 = vadd.f32 %v3582, 0.0009
        %v3625 = vadd.f32 %v3583, 0.0009
        %v3626 = vadd.f32 %v3584, 0.0009
        %v3627 = vadd.f32 %v3585, 0.0009
        %v3628 = vadd.f32 %v3586, 0.0009
        %v3629 = vadd.f32 %v3587, 0.0009
        %v3630 = vadd.f32 %v3588, 0.0009
        %v3631 = vadd.f32 %v3589, 0.0009
        %v3632 = vrcp.pop %v3590
        %v3633 = vmul.f32 %v3506, %v3632
        %v3634 = vrcp.pop %v3591
        %v3635 = vmul.f32 %v3507, %v3634
        %v3636 = vrcp.pop %v3592
        %v3637 = vmul.f32 %v3508, %v3636
        %v3638 = vrcp.pop %v3593
        %v3639 = vmul.f32 %v3509, %v3638
        %v3640 = vrcp.pop %v3594
        %v3641 = vmul.f32 %v3510, %v3640
        %v3642 = vrcp.pop %v3595
        %v3643 = vmul.f32 %v3511, %v3642
        %v3644 = vrcp.pop %v3596
        %v3645 = vmul.f32 %v3512, %v3644
        %v3646 = vrcp.pop %v3597
        %v3647 = vmul.f32 %v3513, %v3646
        %v3648 = vrcp.pop %v3598
        %v3649 = vmul.f32 %v3514, %v3648
        %v3650 = vrcp.pop %v3599
        %v3651 = vmul.f32 %v3515, %v3650
        %v3652 = vrcp.pop %v3600
        %v3653 = vmul.f32 %v3516, %v3652
        %v3654 = vrcp.pop %v3601
        %v3655 = vmul.f32 %v3517, %v3654
        %v3656 = vrcp.pop %v3602
        %v3657 = vmul.f32 %v3518, %v3656
        %v3658 = vrcp.pop %v3603
        %v3659 = vmul.f32 %v3519, %v3658
        %v3660 = vrcp.pop %v3604
        %v3661 = vmul.f32 %v3520, %v3660
        %v3662 = vrcp.pop %v3605
        %v3663 = vmul.f32 %v3521, %v3662
        %v3664 = vrcp.pop %v3606
        %v3665 = vmul.f32 %v3522, %v3664
        %v3666 = vrcp.pop %v3607
        %v3667 = vmul.f32 %v3523, %v3666
        %v3668 = vrcp.pop %v3608
        %v3669 = vmul.f32 %v3524, %v3668
        %v3670 = vrcp.pop %v3609
        %v3671 = vmul.f32 %v3525, %v3670
        %v3672 = vrcp.pop %v3610
        %v3673 = vmul.f32 %v3526, %v3672
        %v3674 = vrcp.pop %v3611
        %v3675 = vmul.f32 %v3527, %v3674
        %v3676 = vrcp.pop %v3612
        %v3677 = vmul.f32 %v3528, %v3676
        %v3678 = vrcp.pop %v3613
        %v3679 = vmul.f32 %v3529, %v3678
        %v3680 = vrcp.pop %v3614
        %v3681 = vmul.f32 %v3530, %v3680
        %v3682 = vrcp.pop %v3615
        %v3683 = vmul.f32 %v3531, %v3682
        %v3684 = vrcp.pop %v3616
        %v3685 = vmul.f32 %v3532, %v3684
        %v3686 = vrcp.pop %v3617
        %v3687 = vmul.f32 %v3533, %v3686
        %v3688 = vrcp.pop %v3618
        %v3689 = vmul.f32 %v3534, %v3688
        %v3690 = vrcp.pop %v3619
        %v3691 = vmul.f32 %v3535, %v3690
        %v3692 = vrcp.pop %v3620
        %v3693 = vmul.f32 %v3536, %v3692
        %v3694 = vrcp.pop %v3621
        %v3695 = vmul.f32 %v3537, %v3694
        %v3696 = vrcp.pop %v3622
        %v3697 = vmul.f32 %v3538, %v3696
        %v3698 = vrcp.pop %v3623
        %v3699 = vmul.f32 %v3539, %v3698
        %v3700 = vrcp.pop %v3624
        %v3701 = vmul.f32 %v3540, %v3700
        %v3702 = vrcp.pop %v3625
        %v3703 = vmul.f32 %v3541, %v3702
        %v3704 = vrcp.pop %v3626
        %v3705 = vmul.f32 %v3542, %v3704
        %v3706 = vrcp.pop %v3627
        %v3707 = vmul.f32 %v3543, %v3706
        %v3708 = vrcp.pop %v3628
        %v3709 = vmul.f32 %v3544, %v3708
        %v3710 = vrcp.pop %v3629
        %v3711 = vmul.f32 %v3545, %v3710
        %v3712 = vrcp.pop %v3630
        %v3713 = vmul.f32 %v3546, %v3712
        %v3714 = vrcp.pop %v3631
        %v3715 = vmul.f32 %v3547, %v3714
        %v3716 = vsub.f32 %v3633, 1.0
        %v3717 = vsub.f32 %v3635, 1.0
        %v3718 = vsub.f32 %v3637, 1.0
        %v3719 = vsub.f32 %v3639, 1.0
        %v3720 = vsub.f32 %v3641, 1.0
        %v3721 = vsub.f32 %v3643, 1.0
        %v3722 = vsub.f32 %v3645, 1.0
        %v3723 = vsub.f32 %v3647, 1.0
        %v3724 = vsub.f32 %v3649, 1.0
        %v3725 = vsub.f32 %v3651, 1.0
        %v3726 = vsub.f32 %v3653, 1.0
        %v3727 = vsub.f32 %v3655, 1.0
        %v3728 = vsub.f32 %v3657, 1.0
        %v3729 = vsub.f32 %v3659, 1.0
        %v3730 = vsub.f32 %v3661, 1.0
        %v3731 = vsub.f32 %v3663, 1.0
        %v3732 = vsub.f32 %v3665, 1.0
        %v3733 = vsub.f32 %v3667, 1.0
        %v3734 = vsub.f32 %v3669, 1.0
        %v3735 = vsub.f32 %v3671, 1.0
        %v3736 = vsub.f32 %v3673, 1.0
        %v3737 = vsub.f32 %v3675, 1.0
        %v3738 = vsub.f32 %v3677, 1.0
        %v3739 = vsub.f32 %v3679, 1.0
        %v3740 = vsub.f32 %v3681, 1.0
        %v3741 = vsub.f32 %v3683, 1.0
        %v3742 = vsub.f32 %v3685, 1.0
        %v3743 = vsub.f32 %v3687, 1.0
        %v3744 = vsub.f32 %v3689, 1.0
        %v3745 = vsub.f32 %v3691, 1.0
        %v3746 = vsub.f32 %v3693, 1.0
        %v3747 = vsub.f32 %v3695, 1.0
        %v3748 = vsub.f32 %v3697, 1.0
        %v3749 = vsub.f32 %v3699, 1.0
        %v3750 = vsub.f32 %v3701, 1.0
        %v3751 = vsub.f32 %v3703, 1.0
        %v3752 = vsub.f32 %v3705, 1.0
        %v3753 = vsub.f32 %v3707, 1.0
        %v3754 = vsub.f32 %v3709, 1.0
        %v3755 = vsub.f32 %v3711, 1.0
        %v3756 = vsub.f32 %v3713, 1.0
        %v3757 = vsub.f32 %v3715, 1.0
        %v3758 = vadd.f32 %v3716, %v3717
        %v3759 = vadd.f32 %v3758, %v3718
        %v3760 = vadd.f32 %v3759, %v3719
        %v3761 = vadd.f32 %v3760, %v3720
        %v3762 = vadd.f32 %v3761, %v3721
        %v3763 = vadd.f32 %v3762, %v3722
        %v3764 = vadd.f32 %v3763, %v3723
        %v3765 = vadd.f32 %v3764, %v3724
        %v3766 = vadd.f32 %v3765, %v3725
        %v3767 = vadd.f32 %v3766, %v3726
        %v3768 = vadd.f32 %v3767, %v3727
        %v3769 = vadd.f32 %v3768, %v3728
        %v3770 = vadd.f32 %v3769, %v3729
        %v3771 = vadd.f32 %v3770, %v3730
        %v3772 = vadd.f32 %v3771, %v3731
        %v3773 = vadd.f32 %v3772, %v3732
        %v3774 = vadd.f32 %v3773, %v3733
        %v3775 = vadd.f32 %v3774, %v3734
        %v3776 = vadd.f32 %v3775, %v3735
        %v3777 = vadd.f32 %v3776, %v3736
        %v3778 = vadd.f32 %v3777, %v3737
        %v3779 = vadd.f32 %v3778, %v3738
        %v3780 = vadd.f32 %v3779, %v3739
        %v3781 = vadd.f32 %v3780, %v3740
        %v3782 = vadd.f32 %v3781, %v3741
        %v3783 = vadd.f32 %v3782, %v3742
        %v3784 = vadd.f32 %v3783, %v3743
        %v3785 = vadd.f32 %v3784, %v3744
        %v3786 = vadd.f32 %v3785, %v3745
        %v3787 = vadd.f32 %v3786, %v3746
        %v3788 = vadd.f32 %v3787, %v3747
        %v3789 = vadd.f32 %v3788, %v3748
        %v3790 = vadd.f32 %v3789, %v3749
        %v3791 = vadd.f32 %v3790, %v3750
        %v3792 = vadd.f32 %v3791, %v3751
        %v3793 = vadd.f32 %v3792, %v3752
        %v3794 = vadd.f32 %v3793, %v3753
        %v3795 = vadd.f32 %v3794, %v3754
        %v3796 = vadd.f32 %v3795, %v3755
        %v3797 = vadd.f32 %v3796, %v3756
        %v3798 = vadd.f32 %v3797, %v3757
        %3799 = vadd.xlane.f32.xlu0 %v3798
        %v3800 = vpop.xlane.xlu0 %3799
        %v3801 = vrot.slane %v3800, 4
        %v3802 = vadd.f32 %v3800, %v3801
        %v3803 = vrot.slane %v3802, 2
        %v3804 = vadd.f32 %v3802, %v3803
        %v3805 = vrot.slane %v3804, 1
        %v3806 = vadd.f32 %v3804, %v3805
        %s3807 = vtos %v3806
        %s3808 = smul.f32 %s3807, 3.6289737e-05
        %s3809 = sadd.f32 %s3808, 1.0
        %v3810 = vld [vmem:[#allocation22] sm:$0xf]
        %v3811 = vld [vmem:[#allocation22 + $0x4] sm:$0xf]
        %v3812 = vld [vmem:[#allocation22 + $0x8] sm:$0xf]
        %v3813 = vld [vmem:[#allocation22 + $0xc] sm:$0xf]
        %v3814 = vld [vmem:[#allocation22 + $0x10] sm:$0xf]
        %v3815 = vld [vmem:[#allocation22 + $0x14] sm:$0xf]
        %v3816 = vld [vmem:[#allocation22 + $0x18] sm:$0xf]
        %v3817 = vld [vmem:[#allocation22 + $0x1c] sm:$0xf]
        %v3818 = vld [vmem:[#allocation22 + $0x20] sm:$0xf]
        %v3819 = vld [vmem:[#allocation22 + $0x24] sm:$0xf]
        %v3820 = vld [vmem:[#allocation22 + $0x28] sm:$0xf]
        %v3821 = vld [vmem:[#allocation22 + $0x2c] sm:$0xf]
        %v3822 = vld [vmem:[#allocation22 + $0x30] sm:$0xf]
        %v3823 = vld [vmem:[#allocation22 + $0x34] sm:$0xf]
        %v3824 = vld [vmem:[#allocation22 + $0x38] sm:$0xf]
        %v3825 = vld [vmem:[#allocation22 + $0x3c] sm:$0xf]
        %v3826 = vld [vmem:[#allocation22 + $0x40] sm:$0xf]
        %v3827 = vld [vmem:[#allocation22 + $0x44] sm:$0xf]
        %v3828 = vld [vmem:[#allocation22 + $0x48] sm:$0xf]
        %v3829 = vld [vmem:[#allocation22 + $0x4c] sm:$0xf]
        %v3830 = vld [vmem:[#allocation22 + $0x50] sm:$0xf]
        %v3831 = vld [vmem:[#allocation22 + $0x54] sm:$0xf]
        %v3832 = vld [vmem:[#allocation23] sm:$0xff]
        %v3833 = vld [vmem:[#allocation23 + $0x8] sm:$0xff]
        %v3834 = vld [vmem:[#allocation23 + $0x10] sm:$0xff]
        %v3835 = vld [vmem:[#allocation23 + $0x18] sm:$0xff]
        %v3836 = vld [vmem:[#allocation23 + $0x20] sm:$0xff]
        %v3837 = vld [vmem:[#allocation23 + $0x28] sm:$0xff]
        %v3838 = vld [vmem:[#allocation23 + $0x30] sm:$0xff]
        %v3839 = vld [vmem:[#allocation23 + $0x38] sm:$0xff]
        %v3840 = vld [vmem:[#allocation23 + $0x40] sm:$0xff]
        %v3841 = vld [vmem:[#allocation23 + $0x48] sm:$0xff]
        %v3842 = vld [vmem:[#allocation23 + $0x50] sm:$0xff]
        %v3865 = vunpack.c.l.b16 %v3810
        %v3866 = vunpack.c.l.b16 %v3811
        %v3867 = vunpack.c.l.b16 %v3812
        %v3868 = vunpack.c.l.b16 %v3813
        %v3869 = vunpack.c.l.b16 %v3814
        %v3870 = vunpack.c.l.b16 %v3815
        %v3871 = vunpack.c.l.b16 %v3816
        %v3872 = vunpack.c.l.b16 %v3817
        %v3873 = vunpack.c.l.b16 %v3818
        %v3874 = vunpack.c.l.b16 %v3819
        %v3875 = vunpack.c.l.b16 %v3820
        %v3876 = vunpack.c.l.b16 %v3821
        %v3877 = vunpack.c.l.b16 %v3822
        %v3878 = vunpack.c.l.b16 %v3823
        %v3879 = vunpack.c.l.b16 %v3824
        %v3880 = vunpack.c.l.b16 %v3825
        %v3881 = vunpack.c.l.b16 %v3826
        %v3882 = vunpack.c.l.b16 %v3827
        %v3883 = vunpack.c.l.b16 %v3828
        %v3884 = vunpack.c.l.b16 %v3829
        %v3885 = vunpack.c.l.b16 %v3830
        %v3886 = vunpack.c.l.b16 %v3831
        %v3887 = vpack.c.b16 %v3866, %v3865
        %v3888 = vpack.c.b16 %v3868, %v3867
        %v3889 = vpack.c.b16 %v3870, %v3869
        %v3890 = vpack.c.b16 %v3872, %v3871
        %v3891 = vpack.c.b16 %v3874, %v3873
        %v3892 = vpack.c.b16 %v3876, %v3875
        %v3893 = vpack.c.b16 %v3878, %v3877
        %v3894 = vpack.c.b16 %v3880, %v3879
        %v3895 = vpack.c.b16 %v3882, %v3881
        %v3896 = vpack.c.b16 %v3884, %v3883
        %v3897 = vpack.c.b16 %v3886, %v3885
        %3909 = vmatprep.subr.bf16.mxu0 0
        %3910 = vmatpush1.bf16.msra.mxu0 %v3894
        %3911 = vmatprep.subr.bf16.mxu0 0
        %3912 = vmatpush1.bf16.msra.mxu0 %v3893
        %3913 = vmatprep.subr.bf16.mxu0 0
        %3914 = vmatpush1.bf16.msra.mxu0 %v3892
        %3915 = vmatprep.subr.bf16.mxu0 0
        %3916 = vmatpush1.bf16.msra.mxu0 %v3891
        %3917 = vmatprep.subr.bf16.mxu0 0
        %3918 = vmatpush1.bf16.msra.mxu0 %v3890
        %3919 = vmatprep.subr.bf16.mxu0 0
        %3920 = vmatpush1.bf16.msra.mxu0 %v3889
        %3921 = vmatprep.subr.bf16.mxu0 0
        %3922 = vmatpush1.bf16.msra.mxu0 %v3888
        %3923 = vmatprep.subr.bf16.mxu0 0
        %3924 = vmatpush1.bf16.msra.mxu0 %v3887
        %3925 = vmatprep.subr.bf16.mxu0 0
        %3926 = vmatpush2.bf16.msra.mxu0 0
        %3927 = vmatprep.subr.bf16.mxu0 0
        %3928 = vmatpush2.bf16.msra.mxu0 0
        %3929 = vmatprep.subr.bf16.mxu0 0
        %3930 = vmatpush2.bf16.msra.mxu0 0
        %3931 = vmatprep.subr.bf16.mxu0 0
        %3932 = vmatpush2.bf16.msra.mxu0 0
        %3933 = vmatprep.subr.bf16.mxu0 0
        %3934 = vmatpush2.bf16.msra.mxu0 0
        %3935 = vmatprep.subr.bf16.mxu0 0
        %3936 = vmatpush2.bf16.msra.mxu0 %v3897
        %3937 = vmatprep.subr.bf16.mxu0 0
        %3938 = vmatpush2.bf16.msra.mxu0 %v3896
        %3939 = vmatprep.subr.bf16.mxu0 0
        %3940 = vmatpush2.bf16.msra.mxu0 %v3895
        %3941 = vmatprep.mubr.bf16.mxu0 %v1521
        %3942 = vmatmul.mubr.bf16.gmra.mxu0 %v1167
        %v3943 = vpop.f32.mrf.mxu0
        %v3944 = vadd.f32 0.0, %v3943
        %v3945 = vpop.f32.mrf.mxu0
        %v3946 = vpop.f32.mrf.mxu0
        %v3947 = vadd.f32 0.0, %v3946
        %v3948 = vpop.f32.mrf.mxu0
        %3949 = vmatprep.mubr.bf16.mxu0 %v1524
        %3950 = vmatmul.mubr.bf16.gmra.mxu0 %v1169
        %v3951 = vpop.f32.mrf.mxu0
        %v3952 = vadd.f32 0.0, %v3951
        %v3953 = vpop.f32.mrf.mxu0
        %v3954 = vpop.f32.mrf.mxu0
        %v3955 = vadd.f32 0.0, %v3954
        %v3956 = vpop.f32.mrf.mxu0
        %3957 = vmatprep.mubr.bf16.mxu0 %v1527
        %3958 = vmatmul.mubr.bf16.gmra.mxu0 %v1171
        %v3959 = vpop.f32.mrf.mxu0
        %v3960 = vadd.f32 0.0, %v3959
        %v3961 = vpop.f32.mrf.mxu0
        %v3962 = vpop.f32.mrf.mxu0
        %v3963 = vadd.f32 0.0, %v3962
        %v3964 = vpop.f32.mrf.mxu0
        %3965 = vmatprep.mubr.bf16.mxu0 %v1530
        %3966 = vmatmul.mubr.bf16.gmra.mxu0 %v1173
        %v3967 = vpop.f32.mrf.mxu0
        %v3968 = vadd.f32 0.0, %v3967
        %v3969 = vpop.f32.mrf.mxu0
        %v3970 = vpop.f32.mrf.mxu0
        %v3971 = vadd.f32 0.0, %v3970
        %v3972 = vpop.f32.mrf.mxu0
        %3973 = vmatprep.mubr.bf16.mxu0 %v1533
        %3974 = vmatmul.mubr.bf16.gmra.mxu0 %v1175
        %v3975 = vpop.f32.mrf.mxu0
        %v3976 = vadd.f32 0.0, %v3975
        %v3977 = vpop.f32.mrf.mxu0
        %v3978 = vpop.f32.mrf.mxu0
        %v3979 = vadd.f32 0.0, %v3978
        %v3980 = vpop.f32.mrf.mxu0
        %3981 = vmatprep.mubr.bf16.mxu0 %v1536
        %3982 = vmatmul.mubr.bf16.gmra.mxu0 %v1177
        %v3983 = vpop.f32.mrf.mxu0
        %v3984 = vadd.f32 0.0, %v3983
        %v3985 = vpop.f32.mrf.mxu0
        %v3986 = vpop.f32.mrf.mxu0
        %v3987 = vadd.f32 0.0, %v3986
        %v3988 = vpop.f32.mrf.mxu0
        %3989 = vmatprep.mubr.bf16.mxu0 %v1539
        %3990 = vmatmul.mubr.bf16.gmra.mxu0 %v1179
        %v3991 = vpop.f32.mrf.mxu0
        %v3992 = vadd.f32 0.0, %v3991
        %v3993 = vpop.f32.mrf.mxu0
        %v3994 = vpop.f32.mrf.mxu0
        %v3995 = vadd.f32 0.0, %v3994
        %v3996 = vpop.f32.mrf.mxu0
        %3997 = vmatprep.mubr.bf16.mxu0 %v1542
        %3998 = vmatmul.mubr.bf16.gmra.mxu0 %v1181
        %v3999 = vpop.f32.mrf.mxu0
        %v4000 = vadd.f32 0.0, %v3999
        %v4001 = vpop.f32.mrf.mxu0
        %v4002 = vpop.f32.mrf.mxu0
        %v4003 = vadd.f32 0.0, %v4002
        %v4004 = vpop.f32.mrf.mxu0
        %4005 = vmatprep.mubr.bf16.mxu0 %v1545
        %4006 = vmatmul.mubr.bf16.gmra.mxu0 %v1183
        %v4007 = vpop.f32.mrf.mxu0
        %v4008 = vadd.f32 0.0, %v4007
        %v4009 = vpop.f32.mrf.mxu0
        %v4010 = vpop.f32.mrf.mxu0
        %v4011 = vadd.f32 0.0, %v4010
        %v4012 = vpop.f32.mrf.mxu0
        %4013 = vmatprep.mubr.bf16.mxu0 %v1548
        %4014 = vmatmul.mubr.bf16.gmra.mxu0 %v1185
        %v4015 = vpop.f32.mrf.mxu0
        %v4016 = vadd.f32 0.0, %v4015
        %v4017 = vpop.f32.mrf.mxu0
        %v4018 = vpop.f32.mrf.mxu0
        %v4019 = vadd.f32 0.0, %v4018
        %v4020 = vpop.f32.mrf.mxu0
        %4021 = vmatprep.mubr.bf16.mxu0 %v1551
        %4022 = vmatmul.mubr.bf16.gmra.mxu0 %v1187
        %v4023 = vpop.f32.mrf.mxu0
        %v4024 = vadd.f32 0.0, %v4023
        %v4025 = vpop.f32.mrf.mxu0
        %v4026 = vpop.f32.mrf.mxu0
        %v4027 = vadd.f32 0.0, %v4026
        %v4028 = vpop.f32.mrf.mxu0
        %4029 = vdwg.mxu0
        %v4030 = vpack.c.bf16 %v3947, %v3944
        %v4031 = vpack.c.bf16 %v3955, %v3952
        %v4032 = vpack.c.bf16 %v3963, %v3960
        %v4033 = vpack.c.bf16 %v3971, %v3968
        %v4034 = vpack.c.bf16 %v3979, %v3976
        %v4035 = vpack.c.bf16 %v3987, %v3984
        %v4036 = vpack.c.bf16 %v3995, %v3992
        %v4037 = vpack.c.bf16 %v4003, %v4000
        %v4038 = vpack.c.bf16 %v4011, %v4008
        %v4039 = vpack.c.bf16 %v4019, %v4016
        %v4040 = vpack.c.bf16 %v4027, %v4024
        %v4052 = vunpack.c.l.b16 %v3832
        %v4053 = vunpack.c.h.b16 %v3832
        %v4054 = vunpack.c.l.b16 %v3833
        %v4055 = vunpack.c.h.b16 %v3833
        %v4056 = vunpack.c.l.b16 %v3834
        %v4057 = vunpack.c.h.b16 %v3834
        %v4058 = vunpack.c.l.b16 %v3835
        %v4059 = vunpack.c.h.b16 %v3835
        %v4060 = vunpack.c.l.b16 %v3836
        %v4061 = vunpack.c.h.b16 %v3836
        %v4062 = vunpack.c.l.b16 %v3837
        %v4063 = vunpack.c.h.b16 %v3837
        %v4064 = vunpack.c.l.b16 %v3838
        %v4065 = vunpack.c.h.b16 %v3838
        %v4066 = vunpack.c.l.b16 %v3839
        %v4067 = vunpack.c.h.b16 %v3839
        %v4068 = vunpack.c.l.b16 %v3840
        %v4069 = vunpack.c.h.b16 %v3840
        %v4070 = vunpack.c.l.b16 %v3841
        %v4071 = vunpack.c.h.b16 %v3841
        %v4072 = vunpack.c.l.b16 %v3842
        %v4073 = vunpack.c.h.b16 %v3842
        %v4074 = vpack.c.b16 %v4054, %v4052
        %v4075 = vpack.c.b16 %v4055, %v4053
        %v4076 = vpack.c.b16 %v4058, %v4056
        %v4077 = vpack.c.b16 %v4059, %v4057
        %v4078 = vpack.c.b16 %v4062, %v4060
        %v4079 = vpack.c.b16 %v4063, %v4061
        %v4080 = vpack.c.b16 %v4066, %v4064
        %v4081 = vpack.c.b16 %v4067, %v4065
        %v4082 = vpack.c.b16 %v4070, %v4068
        %v4083 = vpack.c.b16 %v4071, %v4069
        %v4084 = vpack.c.b16 %v4072, %v4072
        %v4085 = vpack.c.b16 %v4073, %v4073
        %v4093 = vsel %vm1519, %v4075, 0
        %v4096 = vsel %vm1519, %v4077, 0
        %v4099 = vsel %vm1519, %v4079, 0
        %v4102 = vsel %vm1519, %v4081, 0
        %v4105 = vsel %vm1519, %v4083, 0
        %v4108 = vsel %vm1519, %v4085, 0
        %4110 = vmatprep.subr.bf16.mxu0 0
        %4111 = vmatpush1.bf16.msra.mxu0 %v4037
        %4112 = vmatprep.subr.bf16.mxu0 0
        %4113 = vmatpush1.bf16.msra.mxu0 %v4036
        %4114 = vmatprep.subr.bf16.mxu0 0
        %4115 = vmatpush1.bf16.msra.mxu0 %v4035
        %4116 = vmatprep.subr.bf16.mxu0 0
        %4117 = vmatpush1.bf16.msra.mxu0 %v4034
        %4118 = vmatprep.subr.bf16.mxu0 0
        %4119 = vmatpush1.bf16.msra.mxu0 %v4033
        %4120 = vmatprep.subr.bf16.mxu0 0
        %4121 = vmatpush1.bf16.msra.mxu0 %v4032
        %4122 = vmatprep.subr.bf16.mxu0 0
        %4123 = vmatpush1.bf16.msra.mxu0 %v4031
        %4124 = vmatprep.subr.bf16.mxu0 0
        %4125 = vmatpush1.bf16.msra.mxu0 %v4030
        %4126 = vmatprep.subr.bf16.mxu0 0
        %4127 = vmatpush2.bf16.msra.mxu0 0
        %4128 = vmatprep.subr.bf16.mxu0 0
        %4129 = vmatpush2.bf16.msra.mxu0 0
        %4130 = vmatprep.subr.bf16.mxu0 0
        %4131 = vmatpush2.bf16.msra.mxu0 0
        %4132 = vmatprep.subr.bf16.mxu0 0
        %4133 = vmatpush2.bf16.msra.mxu0 0
        %4134 = vmatprep.subr.bf16.mxu0 0
        %4135 = vmatpush2.bf16.msra.mxu0 0
        %4136 = vmatprep.subr.bf16.mxu0 0
        %4137 = vmatpush2.bf16.msra.mxu0 %v4040
        %4138 = vmatprep.subr.bf16.mxu0 0
        %4139 = vmatpush2.bf16.msra.mxu0 %v4039
        %4140 = vmatprep.subr.bf16.mxu0 0
        %4141 = vmatpush2.bf16.msra.mxu0 %v4038
        %4142 = vmatprep.mubr.bf16.mxu0 %v4093
        %4143 = vmatmul.mubr.bf16.gmra.mxu0 %v4074
        %v4144 = vpop.f32.mrf.mxu0
        %v4145 = vadd.f32 0.0, %v4144
        %v4146 = vpop.f32.mrf.mxu0
        %v4147 = vpop.f32.mrf.mxu0
        %v4148 = vadd.f32 0.0, %v4147
        %v4149 = vpop.f32.mrf.mxu0
        %4150 = vmatprep.mubr.bf16.mxu0 %v4096
        %4151 = vmatmul.mubr.bf16.gmra.mxu0 %v4076
        %v4152 = vpop.f32.mrf.mxu0
        %v4153 = vadd.f32 0.0, %v4152
        %v4154 = vpop.f32.mrf.mxu0
        %v4155 = vpop.f32.mrf.mxu0
        %v4156 = vadd.f32 0.0, %v4155
        %v4157 = vpop.f32.mrf.mxu0
        %4158 = vmatprep.mubr.bf16.mxu0 %v4099
        %4159 = vmatmul.mubr.bf16.gmra.mxu0 %v4078
        %v4160 = vpop.f32.mrf.mxu0
        %v4161 = vadd.f32 0.0, %v4160
        %v4162 = vpop.f32.mrf.mxu0
        %v4163 = vpop.f32.mrf.mxu0
        %v4164 = vadd.f32 0.0, %v4163
        %v4165 = vpop.f32.mrf.mxu0
        %4166 = vmatprep.mubr.bf16.mxu0 %v4102
        %4167 = vmatmul.mubr.bf16.gmra.mxu0 %v4080
        %v4168 = vpop.f32.mrf.mxu0
        %v4169 = vadd.f32 0.0, %v4168
        %v4170 = vpop.f32.mrf.mxu0
        %v4171 = vpop.f32.mrf.mxu0
        %v4172 = vadd.f32 0.0, %v4171
        %v4173 = vpop.f32.mrf.mxu0
        %4174 = vmatprep.mubr.bf16.mxu0 %v4105
        %4175 = vmatmul.mubr.bf16.gmra.mxu0 %v4082
        %v4176 = vpop.f32.mrf.mxu0
        %v4177 = vadd.f32 0.0, %v4176
        %v4178 = vpop.f32.mrf.mxu0
        %v4179 = vpop.f32.mrf.mxu0
        %v4180 = vadd.f32 0.0, %v4179
        %v4181 = vpop.f32.mrf.mxu0
        %4182 = vmatprep.mubr.bf16.mxu0 %v4108
        %4183 = vmatmul.mubr.bf16.gmra.mxu0 %v4084
        %v4184 = vpop.f32.mrf.mxu0
        %v4185 = vadd.f32 0.0, %v4184
        %v4186 = vpop.f32.mrf.mxu0
        %v4187 = vpop.f32.mrf.mxu0
        %v4188 = vpop.f32.mrf.mxu0
        %4189 = vdwg.mxu0
        %4190 = vmatprep.subr.bf16.mxu0 0
        %4191 = vmatpush1.bf16.msra.mxu0 %v3894
        %4192 = vmatprep.subr.bf16.mxu0 0
        %4193 = vmatpush1.bf16.msra.mxu0 %v3893
        %4194 = vmatprep.subr.bf16.mxu0 0
        %4195 = vmatpush1.bf16.msra.mxu0 %v3892
        %4196 = vmatprep.subr.bf16.mxu0 0
        %4197 = vmatpush1.bf16.msra.mxu0 %v3891
        %4198 = vmatprep.subr.bf16.mxu0 0
        %4199 = vmatpush1.bf16.msra.mxu0 %v3890
        %4200 = vmatprep.subr.bf16.mxu0 0
        %4201 = vmatpush1.bf16.msra.mxu0 %v3889
        %4202 = vmatprep.subr.bf16.mxu0 0
        %4203 = vmatpush1.bf16.msra.mxu0 %v3888
        %4204 = vmatprep.subr.bf16.mxu0 0
        %4205 = vmatpush1.bf16.msra.mxu0 %v3887
        %4206 = vmatprep.subr.bf16.mxu0 0
        %4207 = vmatpush2.bf16.msra.mxu0 0
        %4208 = vmatprep.subr.bf16.mxu0 0
        %4209 = vmatpush2.bf16.msra.mxu0 0
        %4210 = vmatprep.subr.bf16.mxu0 0
        %4211 = vmatpush2.bf16.msra.mxu0 0
        %4212 = vmatprep.subr.bf16.mxu0 0
        %4213 = vmatpush2.bf16.msra.mxu0 0
        %4214 = vmatprep.subr.bf16.mxu0 0
        %4215 = vmatpush2.bf16.msra.mxu0 0
        %4216 = vmatprep.subr.bf16.mxu0 0
        %4217 = vmatpush2.bf16.msra.mxu0 %v3897
        %4218 = vmatprep.subr.bf16.mxu0 0
        %4219 = vmatpush2.bf16.msra.mxu0 %v3896
        %4220 = vmatprep.subr.bf16.mxu0 0
        %4221 = vmatpush2.bf16.msra.mxu0 %v3895
        %4222 = vmatprep.mubr.bf16.mxu0 %v1554
        %4223 = vmatmul.mubr.bf16.gmra.mxu0 %v1189
        %v4224 = vpop.f32.mrf.mxu0
        %v4225 = vadd.f32 0.0, %v4224
        %v4226 = vpop.f32.mrf.mxu0
        %v4227 = vpop.f32.mrf.mxu0
        %v4228 = vadd.f32 0.0, %v4227
        %v4229 = vpop.f32.mrf.mxu0
        %4230 = vmatprep.mubr.bf16.mxu0 %v1557
        %4231 = vmatmul.mubr.bf16.gmra.mxu0 %v1191
        %v4232 = vpop.f32.mrf.mxu0
        %v4233 = vadd.f32 0.0, %v4232
        %v4234 = vpop.f32.mrf.mxu0
        %v4235 = vpop.f32.mrf.mxu0
        %v4236 = vadd.f32 0.0, %v4235
        %v4237 = vpop.f32.mrf.mxu0
        %4238 = vmatprep.mubr.bf16.mxu0 %v1560
        %4239 = vmatmul.mubr.bf16.gmra.mxu0 %v1193
        %v4240 = vpop.f32.mrf.mxu0
        %v4241 = vadd.f32 0.0, %v4240
        %v4242 = vpop.f32.mrf.mxu0
        %v4243 = vpop.f32.mrf.mxu0
        %v4244 = vadd.f32 0.0, %v4243
        %v4245 = vpop.f32.mrf.mxu0
        %4246 = vmatprep.mubr.bf16.mxu0 %v1563
        %4247 = vmatmul.mubr.bf16.gmra.mxu0 %v1195
        %v4248 = vpop.f32.mrf.mxu0
        %v4249 = vadd.f32 0.0, %v4248
        %v4250 = vpop.f32.mrf.mxu0
        %v4251 = vpop.f32.mrf.mxu0
        %v4252 = vadd.f32 0.0, %v4251
        %v4253 = vpop.f32.mrf.mxu0
        %4254 = vmatprep.mubr.bf16.mxu0 %v1566
        %4255 = vmatmul.mubr.bf16.gmra.mxu0 %v1197
        %v4256 = vpop.f32.mrf.mxu0
        %v4257 = vadd.f32 0.0, %v4256
        %v4258 = vpop.f32.mrf.mxu0
        %v4259 = vpop.f32.mrf.mxu0
        %v4260 = vadd.f32 0.0, %v4259
        %v4261 = vpop.f32.mrf.mxu0
        %4262 = vmatprep.mubr.bf16.mxu0 %v1569
        %4263 = vmatmul.mubr.bf16.gmra.mxu0 %v1199
        %v4264 = vpop.f32.mrf.mxu0
        %v4265 = vadd.f32 0.0, %v4264
        %v4266 = vpop.f32.mrf.mxu0
        %v4267 = vpop.f32.mrf.mxu0
        %v4268 = vadd.f32 0.0, %v4267
        %v4269 = vpop.f32.mrf.mxu0
        %4270 = vmatprep.mubr.bf16.mxu0 %v1572
        %4271 = vmatmul.mubr.bf16.gmra.mxu0 %v1201
        %v4272 = vpop.f32.mrf.mxu0
        %v4273 = vadd.f32 0.0, %v4272
        %v4274 = vpop.f32.mrf.mxu0
        %v4275 = vpop.f32.mrf.mxu0
        %v4276 = vadd.f32 0.0, %v4275
        %v4277 = vpop.f32.mrf.mxu0
        %4278 = vmatprep.mubr.bf16.mxu0 %v1575
        %4279 = vmatmul.mubr.bf16.gmra.mxu0 %v1203
        %v4280 = vpop.f32.mrf.mxu0
        %v4281 = vadd.f32 0.0, %v4280
        %v4282 = vpop.f32.mrf.mxu0
        %v4283 = vpop.f32.mrf.mxu0
        %v4284 = vadd.f32 0.0, %v4283
        %v4285 = vpop.f32.mrf.mxu0
        %4286 = vmatprep.mubr.bf16.mxu0 %v1578
        %4287 = vmatmul.mubr.bf16.gmra.mxu0 %v1205
        %v4288 = vpop.f32.mrf.mxu0
        %v4289 = vadd.f32 0.0, %v4288
        %v4290 = vpop.f32.mrf.mxu0
        %v4291 = vpop.f32.mrf.mxu0
        %v4292 = vadd.f32 0.0, %v4291
        %v4293 = vpop.f32.mrf.mxu0
        %4294 = vmatprep.mubr.bf16.mxu0 %v1581
        %4295 = vmatmul.mubr.bf16.gmra.mxu0 %v1207
        %v4296 = vpop.f32.mrf.mxu0
        %v4297 = vadd.f32 0.0, %v4296
        %v4298 = vpop.f32.mrf.mxu0
        %v4299 = vpop.f32.mrf.mxu0
        %v4300 = vadd.f32 0.0, %v4299
        %v4301 = vpop.f32.mrf.mxu0
        %4302 = vmatprep.mubr.bf16.mxu0 %v1584
        %4303 = vmatmul.mubr.bf16.gmra.mxu0 %v1209
        %v4304 = vpop.f32.mrf.mxu0
        %v4305 = vadd.f32 0.0, %v4304
        %v4306 = vpop.f32.mrf.mxu0
        %v4307 = vpop.f32.mrf.mxu0
        %v4308 = vadd.f32 0.0, %v4307
        %v4309 = vpop.f32.mrf.mxu0
        %4310 = vdwg.mxu0
        %v4311 = vpack.c.bf16 %v4228, %v4225
        %v4312 = vpack.c.bf16 %v4236, %v4233
        %v4313 = vpack.c.bf16 %v4244, %v4241
        %v4314 = vpack.c.bf16 %v4252, %v4249
        %v4315 = vpack.c.bf16 %v4260, %v4257
        %v4316 = vpack.c.bf16 %v4268, %v4265
        %v4317 = vpack.c.bf16 %v4276, %v4273
        %v4318 = vpack.c.bf16 %v4284, %v4281
        %v4319 = vpack.c.bf16 %v4292, %v4289
        %v4320 = vpack.c.bf16 %v4300, %v4297
        %v4321 = vpack.c.bf16 %v4308, %v4305
        %4322 = vmatprep.subr.bf16.mxu0 0
        %4323 = vmatpush1.bf16.msra.mxu0 %v4318
        %4324 = vmatprep.subr.bf16.mxu0 0
        %4325 = vmatpush1.bf16.msra.mxu0 %v4317
        %4326 = vmatprep.subr.bf16.mxu0 0
        %4327 = vmatpush1.bf16.msra.mxu0 %v4316
        %4328 = vmatprep.subr.bf16.mxu0 0
        %4329 = vmatpush1.bf16.msra.mxu0 %v4315
        %4330 = vmatprep.subr.bf16.mxu0 0
        %4331 = vmatpush1.bf16.msra.mxu0 %v4314
        %4332 = vmatprep.subr.bf16.mxu0 0
        %4333 = vmatpush1.bf16.msra.mxu0 %v4313
        %4334 = vmatprep.subr.bf16.mxu0 0
        %4335 = vmatpush1.bf16.msra.mxu0 %v4312
        %4336 = vmatprep.subr.bf16.mxu0 0
        %4337 = vmatpush1.bf16.msra.mxu0 %v4311
        %4338 = vmatprep.subr.bf16.mxu0 0
        %4339 = vmatpush2.bf16.msra.mxu0 0
        %4340 = vmatprep.subr.bf16.mxu0 0
        %4341 = vmatpush2.bf16.msra.mxu0 0
        %4342 = vmatprep.subr.bf16.mxu0 0
        %4343 = vmatpush2.bf16.msra.mxu0 0
        %4344 = vmatprep.subr.bf16.mxu0 0
        %4345 = vmatpush2.bf16.msra.mxu0 0
        %4346 = vmatprep.subr.bf16.mxu0 0
        %4347 = vmatpush2.bf16.msra.mxu0 0
        %4348 = vmatprep.subr.bf16.mxu0 0
        %4349 = vmatpush2.bf16.msra.mxu0 %v4321
        %4350 = vmatprep.subr.bf16.mxu0 0
        %4351 = vmatpush2.bf16.msra.mxu0 %v4320
        %4352 = vmatprep.subr.bf16.mxu0 0
        %4353 = vmatpush2.bf16.msra.mxu0 %v4319
        %4354 = vmatprep.mubr.bf16.mxu0 %v4093
        %4355 = vmatmul.mubr.bf16.gmra.mxu0 %v4074
        %v4356 = vpop.f32.mrf.mxu0
        %v4357 = vadd.f32 0.0, %v4356
        %v4358 = vpop.f32.mrf.mxu0
        %v4359 = vpop.f32.mrf.mxu0
        %v4360 = vadd.f32 0.0, %v4359
        %v4361 = vpop.f32.mrf.mxu0
        %4362 = vmatprep.mubr.bf16.mxu0 %v4096
        %4363 = vmatmul.mubr.bf16.gmra.mxu0 %v4076
        %v4364 = vpop.f32.mrf.mxu0
        %v4365 = vadd.f32 0.0, %v4364
        %v4366 = vpop.f32.mrf.mxu0
        %v4367 = vpop.f32.mrf.mxu0
        %v4368 = vadd.f32 0.0, %v4367
        %v4369 = vpop.f32.mrf.mxu0
        %4370 = vmatprep.mubr.bf16.mxu0 %v4099
        %4371 = vmatmul.mubr.bf16.gmra.mxu0 %v4078
        %v4372 = vpop.f32.mrf.mxu0
        %v4373 = vadd.f32 0.0, %v4372
        %v4374 = vpop.f32.mrf.mxu0
        %v4375 = vpop.f32.mrf.mxu0
        %v4376 = vadd.f32 0.0, %v4375
        %v4377 = vpop.f32.mrf.mxu0
        %4378 = vmatprep.mubr.bf16.mxu0 %v4102
        %4379 = vmatmul.mubr.bf16.gmra.mxu0 %v4080
        %v4380 = vpop.f32.mrf.mxu0
        %v4381 = vadd.f32 0.0, %v4380
        %v4382 = vpop.f32.mrf.mxu0
        %v4383 = vpop.f32.mrf.mxu0
        %v4384 = vadd.f32 0.0, %v4383
        %v4385 = vpop.f32.mrf.mxu0
        %4386 = vmatprep.mubr.bf16.mxu0 %v4105
        %4387 = vmatmul.mubr.bf16.gmra.mxu0 %v4082
        %v4388 = vpop.f32.mrf.mxu0
        %v4389 = vadd.f32 0.0, %v4388
        %v4390 = vpop.f32.mrf.mxu0
        %v4391 = vpop.f32.mrf.mxu0
        %v4392 = vadd.f32 0.0, %v4391
        %v4393 = vpop.f32.mrf.mxu0
        %4394 = vmatprep.mubr.bf16.mxu0 %v4108
        %4395 = vmatmul.mubr.bf16.gmra.mxu0 %v4084
        %v4396 = vpop.f32.mrf.mxu0
        %v4397 = vadd.f32 0.0, %v4396
        %v4398 = vpop.f32.mrf.mxu0
        %v4399 = vpop.f32.mrf.mxu0
        %v4400 = vpop.f32.mrf.mxu0
        %4401 = vdwg.mxu0
        %v4402 = vld [vmem:[#allocation10] sm:$0xf]
        %v4403 = vld [vmem:[#allocation10 + $0x4] sm:$0xf]
        %v4404 = vld [vmem:[#allocation10 + $0x8] sm:$0xf]
        %v4405 = vld [vmem:[#allocation10 + $0xc] sm:$0xf]
        %v4406 = vld [vmem:[#allocation10 + $0x10] sm:$0xf]
        %v4407 = vld [vmem:[#allocation10 + $0x14] sm:$0xf]
        %v4408 = vld [vmem:[#allocation10 + $0x18] sm:$0xf]
        %v4409 = vld [vmem:[#allocation10 + $0x1c] sm:$0xf]
        %v4410 = vld [vmem:[#allocation10 + $0x20] sm:$0xf]
        %v4411 = vld [vmem:[#allocation10 + $0x24] sm:$0xf]
        %v4412 = vld [vmem:[#allocation10 + $0x28] sm:$0xf]
        %v4413 = vld [vmem:[#allocation10 + $0x2c] sm:$0xf]
        %v4414 = vld [vmem:[#allocation10 + $0x30] sm:$0xf]
        %v4415 = vld [vmem:[#allocation10 + $0x34] sm:$0xf]
        %v4416 = vld [vmem:[#allocation10 + $0x38] sm:$0xf]
        %v4417 = vld [vmem:[#allocation10 + $0x3c] sm:$0xf]
        %v4418 = vld [vmem:[#allocation11] sm:$0xf]
        %v4419 = vld [vmem:[#allocation11 + $0x4] sm:$0xf]
        %v4420 = vld [vmem:[#allocation11 + $0x8] sm:$0xf]
        %v4421 = vld [vmem:[#allocation11 + $0xc] sm:$0xf]
        %v4422 = vld [vmem:[#allocation11 + $0x10] sm:$0xf]
        %v4423 = vld [vmem:[#allocation11 + $0x14] sm:$0xf]
        %v4424 = vld [vmem:[#allocation11 + $0x18] sm:$0xf]
        %v4425 = vld [vmem:[#allocation11 + $0x1c] sm:$0xf]
        %v4426 = vld [vmem:[#allocation11 + $0x20] sm:$0xf]
        %v4427 = vld [vmem:[#allocation11 + $0x24] sm:$0xf]
        %v4428 = vpack.c.bf16 %v4148, %v4145
        %v4429 = vpack.c.bf16 %v4156, %v4153
        %v4430 = vpack.c.bf16 %v4164, %v4161
        %v4431 = vpack.c.bf16 %v4172, %v4169
        %v4432 = vpack.c.bf16 %v4180, %v4177
        %v4433 = vpack.c.bf16 %v4185, %v4185
        %v4434 = vpack.c.bf16 %v4360, %v4357
        %v4435 = vpack.c.bf16 %v4368, %v4365
        %v4436 = vpack.c.bf16 %v4376, %v4373
        %v4437 = vpack.c.bf16 %v4384, %v4381
        %v4438 = vpack.c.bf16 %v4392, %v4389
        %v4439 = vpack.c.bf16 %v4397, %v4397
        %v4440 = vmul.f32 %v4145, %v4145
        %v4441 = vmul.f32 %v4148, %v4148
        %v4442 = vmul.f32 %v4153, %v4153
        %v4443 = vmul.f32 %v4156, %v4156
        %v4444 = vmul.f32 %v4161, %v4161
        %v4445 = vmul.f32 %v4164, %v4164
        %v4446 = vmul.f32 %v4169, %v4169
        %v4447 = vmul.f32 %v4172, %v4172
        %v4448 = vmul.f32 %v4177, %v4177
        %v4449 = vmul.f32 %v4180, %v4180
        %v4450 = vmul.f32 %v4185, %v4185
        %v4451 = vmul.f32 %v4357, %v4357
        %v4452 = vmul.f32 %v4360, %v4360
        %v4453 = vmul.f32 %v4365, %v4365
        %v4454 = vmul.f32 %v4368, %v4368
        %v4455 = vmul.f32 %v4373, %v4373
        %v4456 = vmul.f32 %v4376, %v4376
        %v4457 = vmul.f32 %v4381, %v4381
        %v4458 = vmul.f32 %v4384, %v4384
        %v4459 = vmul.f32 %v4389, %v4389
        %v4460 = vmul.f32 %v4392, %v4392
        %v4461 = vmul.f32 %v4397, %v4397
        %v4462 = vmul.f32 %v4145, %v4357
        %v4463 = vmul.f32 %v4148, %v4360
        %v4464 = vmul.f32 %v4153, %v4365
        %v4465 = vmul.f32 %v4156, %v4368
        %v4466 = vmul.f32 %v4161, %v4373
        %v4467 = vmul.f32 %v4164, %v4376
        %v4468 = vmul.f32 %v4169, %v4381
        %v4469 = vmul.f32 %v4172, %v4384
        %v4470 = vmul.f32 %v4177, %v4389
        %v4471 = vmul.f32 %v4180, %v4392
        %v4472 = vmul.f32 %v4185, %v4397
        %v4473 = vpack.c.bf16 %v4357, %v4185
        %v4474 = vpack.c.bf16 %v4365, %v4360
        %v4475 = vpack.c.bf16 %v4373, %v4368
        %v4476 = vpack.c.bf16 %v4381, %v4376
        %v4477 = vpack.c.bf16 %v4389, %v4384
        %v4478 = vpack.c.bf16 %v4397, %v4392
        %v4479 = vpack.c.bf16 %v4441, %v4440
        %v4480 = vpack.c.bf16 %v4443, %v4442
        %v4481 = vpack.c.bf16 %v4445, %v4444
        %v4482 = vpack.c.bf16 %v4447, %v4446
        %v4483 = vpack.c.bf16 %v4449, %v4448
        %v4484 = vpack.c.bf16 %v4451, %v4450
        %v4485 = vpack.c.bf16 %v4453, %v4452
        %v4486 = vpack.c.bf16 %v4455, %v4454
        %v4487 = vpack.c.bf16 %v4457, %v4456
        %v4488 = vpack.c.bf16 %v4459, %v4458
        %v4489 = vpack.c.bf16 %v4461, %v4460
        %v4490 = vpack.c.bf16 %v4463, %v4462
        %v4491 = vpack.c.bf16 %v4465, %v4464
        %v4492 = vpack.c.bf16 %v4467, %v4466
        %v4493 = vpack.c.bf16 %v4469, %v4468
        %v4494 = vpack.c.bf16 %v4471, %v4470
        %v4495 = vpack.c.bf16 %v4472, %v4472
        %v4512 = vunpack.c.l.b16 %v4402
        %v4513 = vunpack.c.l.b16 %v4403
        %v4514 = vunpack.c.l.b16 %v4404
        %v4515 = vunpack.c.l.b16 %v4405
        %v4516 = vunpack.c.l.b16 %v4406
        %v4517 = vunpack.c.l.b16 %v4407
        %v4518 = vunpack.c.l.b16 %v4408
        %v4519 = vunpack.c.l.b16 %v4409
        %v4520 = vunpack.c.l.b16 %v4410
        %v4521 = vunpack.c.l.b16 %v4411
        %v4522 = vunpack.c.l.b16 %v4412
        %v4523 = vunpack.c.l.b16 %v4413
        %v4524 = vunpack.c.l.b16 %v4414
        %v4525 = vunpack.c.l.b16 %v4415
        %v4526 = vunpack.c.l.b16 %v4416
        %v4527 = vunpack.c.l.b16 %v4417
        %v4528 = vpack.c.b16 %v4513, %v4512
        %v4529 = vpack.c.b16 %v4515, %v4514
        %v4530 = vpack.c.b16 %v4517, %v4516
        %v4531 = vpack.c.b16 %v4519, %v4518
        %v4532 = vpack.c.b16 %v4521, %v4520
        %v4533 = vpack.c.b16 %v4523, %v4522
        %v4534 = vpack.c.b16 %v4525, %v4524
        %v4535 = vpack.c.b16 %v4527, %v4526
        %4544 = vmatprep.subr.bf16.mxu0 0
        %4545 = vmatpush1.bf16.msra.mxu0 %v4535
        %4546 = vmatprep.subr.bf16.mxu0 0
        %4547 = vmatpush1.bf16.msra.mxu0 %v4534
        %4548 = vmatprep.subr.bf16.mxu0 0
        %4549 = vmatpush1.bf16.msra.mxu0 %v4533
        %4550 = vmatprep.subr.bf16.mxu0 0
        %4551 = vmatpush1.bf16.msra.mxu0 %v4532
        %4552 = vmatprep.subr.bf16.mxu0 0
        %4553 = vmatpush1.bf16.msra.mxu0 %v4531
        %4554 = vmatprep.subr.bf16.mxu0 0
        %4555 = vmatpush1.bf16.msra.mxu0 %v4530
        %4556 = vmatprep.subr.bf16.mxu0 0
        %4557 = vmatpush1.bf16.msra.mxu0 %v4529
        %4558 = vmatprep.subr.bf16.mxu0 0
        %4559 = vmatpush1.bf16.msra.mxu0 %v4528
        %4560 = vmatprep.subr.bf16.mxu0 0
        %4561 = vmatpush2.bf16.msra.mxu0 0
        %4562 = vmatprep.subr.bf16.mxu0 0
        %4563 = vmatpush2.bf16.msra.mxu0 0
        %4564 = vmatprep.subr.bf16.mxu0 0
        %4565 = vmatpush2.bf16.msra.mxu0 0
        %4566 = vmatprep.subr.bf16.mxu0 0
        %4567 = vmatpush2.bf16.msra.mxu0 0
        %4568 = vmatprep.subr.bf16.mxu0 0
        %4569 = vmatpush2.bf16.msra.mxu0 0
        %4570 = vmatprep.subr.bf16.mxu0 0
        %4571 = vmatpush2.bf16.msra.mxu0 0
        %4572 = vmatprep.subr.bf16.mxu0 0
        %4573 = vmatpush2.bf16.msra.mxu0 0
        %4574 = vmatprep.subr.bf16.mxu0 0
        %4575 = vmatpush2.bf16.msra.mxu0 0
        %4576 = vmatprep.mubr.bf16.mxu0 0
        %4577 = vmatmul.mubr.bf16.gmra.mxu0 %v4428
        %v4578 = vpop.f32.mrf.mxu0
        %v4579 = vadd.f32 0.0, %v4578
        %v4580 = vpop.f32.mrf.mxu0
        %v4581 = vpop.f32.mrf.mxu0
        %v4582 = vadd.f32 0.0, %v4581
        %v4583 = vpop.f32.mrf.mxu0
        %4584 = vmatprep.mubr.bf16.mxu0 0
        %4585 = vmatmul.mubr.bf16.gmra.mxu0 %v4429
        %v4586 = vpop.f32.mrf.mxu0
        %v4587 = vadd.f32 0.0, %v4586
        %v4588 = vpop.f32.mrf.mxu0
        %v4589 = vpop.f32.mrf.mxu0
        %v4590 = vadd.f32 0.0, %v4589
        %v4591 = vpop.f32.mrf.mxu0
        %4592 = vmatprep.mubr.bf16.mxu0 0
        %4593 = vmatmul.mubr.bf16.gmra.mxu0 %v4430
        %v4594 = vpop.f32.mrf.mxu0
        %v4595 = vadd.f32 0.0, %v4594
        %v4596 = vpop.f32.mrf.mxu0
        %v4597 = vpop.f32.mrf.mxu0
        %v4598 = vadd.f32 0.0, %v4597
        %v4599 = vpop.f32.mrf.mxu0
        %4600 = vmatprep.mubr.bf16.mxu0 0
        %4601 = vmatmul.mubr.bf16.gmra.mxu0 %v4431
        %v4602 = vpop.f32.mrf.mxu0
        %v4603 = vadd.f32 0.0, %v4602
        %v4604 = vpop.f32.mrf.mxu0
        %v4605 = vpop.f32.mrf.mxu0
        %v4606 = vadd.f32 0.0, %v4605
        %v4607 = vpop.f32.mrf.mxu0
        %4608 = vmatprep.mubr.bf16.mxu0 0
        %4609 = vmatmul.mubr.bf16.gmra.mxu0 %v4432
        %v4610 = vpop.f32.mrf.mxu0
        %v4611 = vadd.f32 0.0, %v4610
        %v4612 = vpop.f32.mrf.mxu0
        %v4613 = vpop.f32.mrf.mxu0
        %v4614 = vadd.f32 0.0, %v4613
        %v4615 = vpop.f32.mrf.mxu0
        %4616 = vmatprep.mubr.bf16.mxu0 0
        %4617 = vmatmul.mubr.bf16.gmra.mxu0 %v4473
        %v4618 = vpop.f32.mrf.mxu0
        %v4619 = vadd.f32 0.0, %v4618
        %v4620 = vpop.f32.mrf.mxu0
        %v4621 = vpop.f32.mrf.mxu0
        %v4622 = vadd.f32 0.0, %v4621
        %v4623 = vpop.f32.mrf.mxu0
        %4624 = vmatprep.mubr.bf16.mxu0 0
        %4625 = vmatmul.mubr.bf16.gmra.mxu0 %v4474
        %v4626 = vpop.f32.mrf.mxu0
        %v4627 = vadd.f32 0.0, %v4626
        %v4628 = vpop.f32.mrf.mxu0
        %v4629 = vpop.f32.mrf.mxu0
        %v4630 = vadd.f32 0.0, %v4629
        %v4631 = vpop.f32.mrf.mxu0
        %4632 = vmatprep.mubr.bf16.mxu0 0
        %4633 = vmatmul.mubr.bf16.gmra.mxu0 %v4475
        %v4634 = vpop.f32.mrf.mxu0
        %v4635 = vadd.f32 0.0, %v4634
        %v4636 = vpop.f32.mrf.mxu0
        %v4637 = vpop.f32.mrf.mxu0
        %v4638 = vadd.f32 0.0, %v4637
        %v4639 = vpop.f32.mrf.mxu0
        %4640 = vmatprep.mubr.bf16.mxu0 0
        %4641 = vmatmul.mubr.bf16.gmra.mxu0 %v4476
        %v4642 = vpop.f32.mrf.mxu0
        %v4643 = vadd.f32 0.0, %v4642
        %v4644 = vpop.f32.mrf.mxu0
        %v4645 = vpop.f32.mrf.mxu0
        %v4646 = vadd.f32 0.0, %v4645
        %v4647 = vpop.f32.mrf.mxu0
        %4648 = vmatprep.mubr.bf16.mxu0 0
        %4649 = vmatmul.mubr.bf16.gmra.mxu0 %v4477
        %v4650 = vpop.f32.mrf.mxu0
        %v4651 = vadd.f32 0.0, %v4650
        %v4652 = vpop.f32.mrf.mxu0
        %v4653 = vpop.f32.mrf.mxu0
        %v4654 = vadd.f32 0.0, %v4653
        %v4655 = vpop.f32.mrf.mxu0
        %4656 = vmatprep.mubr.bf16.mxu0 0
        %4657 = vmatmul.mubr.bf16.gmra.mxu0 %v4478
        %v4658 = vpop.f32.mrf.mxu0
        %v4659 = vadd.f32 0.0, %v4658
        %v4660 = vpop.f32.mrf.mxu0
        %v4661 = vpop.f32.mrf.mxu0
        %v4662 = vadd.f32 0.0, %v4661
        %v4663 = vpop.f32.mrf.mxu0
        %4664 = vmatprep.mubr.bf16.mxu0 0
        %4665 = vmatmul.mubr.bf16.gmra.mxu0 %v4479
        %v4666 = vpop.f32.mrf.mxu0
        %v4667 = vadd.f32 0.0, %v4666
        %v4668 = vpop.f32.mrf.mxu0
        %v4669 = vpop.f32.mrf.mxu0
        %v4670 = vadd.f32 0.0, %v4669
        %v4671 = vpop.f32.mrf.mxu0
        %4672 = vmatprep.mubr.bf16.mxu0 0
        %4673 = vmatmul.mubr.bf16.gmra.mxu0 %v4480
        %v4674 = vpop.f32.mrf.mxu0
        %v4675 = vadd.f32 0.0, %v4674
        %v4676 = vpop.f32.mrf.mxu0
        %v4677 = vpop.f32.mrf.mxu0
        %v4678 = vadd.f32 0.0, %v4677
        %v4679 = vpop.f32.mrf.mxu0
        %4680 = vmatprep.mubr.bf16.mxu0 0
        %4681 = vmatmul.mubr.bf16.gmra.mxu0 %v4481
        %v4682 = vpop.f32.mrf.mxu0
        %v4683 = vadd.f32 0.0, %v4682
        %v4684 = vpop.f32.mrf.mxu0
        %v4685 = vpop.f32.mrf.mxu0
        %v4686 = vadd.f32 0.0, %v4685
        %v4687 = vpop.f32.mrf.mxu0
        %4688 = vmatprep.mubr.bf16.mxu0 0
        %4689 = vmatmul.mubr.bf16.gmra.mxu0 %v4482
        %v4690 = vpop.f32.mrf.mxu0
        %v4691 = vadd.f32 0.0, %v4690
        %v4692 = vpop.f32.mrf.mxu0
        %v4693 = vpop.f32.mrf.mxu0
        %v4694 = vadd.f32 0.0, %v4693
        %v4695 = vpop.f32.mrf.mxu0
        %4696 = vmatprep.mubr.bf16.mxu0 0
        %4697 = vmatmul.mubr.bf16.gmra.mxu0 %v4483
        %v4698 = vpop.f32.mrf.mxu0
        %v4699 = vadd.f32 0.0, %v4698
        %v4700 = vpop.f32.mrf.mxu0
        %v4701 = vpop.f32.mrf.mxu0
        %v4702 = vadd.f32 0.0, %v4701
        %v4703 = vpop.f32.mrf.mxu0
        %4704 = vmatprep.mubr.bf16.mxu0 0
        %4705 = vmatmul.mubr.bf16.gmra.mxu0 %v4484
        %v4706 = vpop.f32.mrf.mxu0
        %v4707 = vadd.f32 0.0, %v4706
        %v4708 = vpop.f32.mrf.mxu0
        %v4709 = vpop.f32.mrf.mxu0
        %v4710 = vadd.f32 0.0, %v4709
        %v4711 = vpop.f32.mrf.mxu0
        %4712 = vmatprep.mubr.bf16.mxu0 0
        %4713 = vmatmul.mubr.bf16.gmra.mxu0 %v4485
        %v4714 = vpop.f32.mrf.mxu0
        %v4715 = vadd.f32 0.0, %v4714
        %v4716 = vpop.f32.mrf.mxu0
        %v4717 = vpop.f32.mrf.mxu0
        %v4718 = vadd.f32 0.0, %v4717
        %v4719 = vpop.f32.mrf.mxu0
        %4720 = vmatprep.mubr.bf16.mxu0 0
        %4721 = vmatmul.mubr.bf16.gmra.mxu0 %v4486
        %v4722 = vpop.f32.mrf.mxu0
        %v4723 = vadd.f32 0.0, %v4722
        %v4724 = vpop.f32.mrf.mxu0
        %v4725 = vpop.f32.mrf.mxu0
        %v4726 = vadd.f32 0.0, %v4725
        %v4727 = vpop.f32.mrf.mxu0
        %4728 = vmatprep.mubr.bf16.mxu0 0
        %4729 = vmatmul.mubr.bf16.gmra.mxu0 %v4487
        %v4730 = vpop.f32.mrf.mxu0
        %v4731 = vadd.f32 0.0, %v4730
        %v4732 = vpop.f32.mrf.mxu0
        %v4733 = vpop.f32.mrf.mxu0
        %v4734 = vadd.f32 0.0, %v4733
        %v4735 = vpop.f32.mrf.mxu0
        %4736 = vmatprep.mubr.bf16.mxu0 0
        %4737 = vmatmul.mubr.bf16.gmra.mxu0 %v4488
        %v4738 = vpop.f32.mrf.mxu0
        %v4739 = vadd.f32 0.0, %v4738
        %v4740 = vpop.f32.mrf.mxu0
        %v4741 = vpop.f32.mrf.mxu0
        %v4742 = vadd.f32 0.0, %v4741
        %v4743 = vpop.f32.mrf.mxu0
        %4744 = vmatprep.mubr.bf16.mxu0 0
        %4745 = vmatmul.mubr.bf16.gmra.mxu0 %v4489
        %v4746 = vpop.f32.mrf.mxu0
        %v4747 = vadd.f32 0.0, %v4746
        %v4748 = vpop.f32.mrf.mxu0
        %v4749 = vpop.f32.mrf.mxu0
        %v4750 = vadd.f32 0.0, %v4749
        %v4751 = vpop.f32.mrf.mxu0
        %4752 = vmatprep.mubr.bf16.mxu0 0
        %4753 = vmatmul.mubr.bf16.gmra.mxu0 %v4490
        %v4754 = vpop.f32.mrf.mxu0
        %v4755 = vadd.f32 0.0, %v4754
        %v4756 = vpop.f32.mrf.mxu0
        %v4757 = vpop.f32.mrf.mxu0
        %v4758 = vadd.f32 0.0, %v4757
        %v4759 = vpop.f32.mrf.mxu0
        %4760 = vmatprep.mubr.bf16.mxu0 0
        %4761 = vmatmul.mubr.bf16.gmra.mxu0 %v4491
        %v4762 = vpop.f32.mrf.mxu0
        %v4763 = vadd.f32 0.0, %v4762
        %v4764 = vpop.f32.mrf.mxu0
        %v4765 = vpop.f32.mrf.mxu0
        %v4766 = vadd.f32 0.0, %v4765
        %v4767 = vpop.f32.mrf.mxu0
        %4768 = vmatprep.mubr.bf16.mxu0 0
        %4769 = vmatmul.mubr.bf16.gmra.mxu0 %v4492
        %v4770 = vpop.f32.mrf.mxu0
        %v4771 = vadd.f32 0.0, %v4770
        %v4772 = vpop.f32.mrf.mxu0
        %v4773 = vpop.f32.mrf.mxu0
        %v4774 = vadd.f32 0.0, %v4773
        %v4775 = vpop.f32.mrf.mxu0
        %4776 = vmatprep.mubr.bf16.mxu0 0
        %4777 = vmatmul.mubr.bf16.gmra.mxu0 %v4493
        %v4778 = vpop.f32.mrf.mxu0
        %v4779 = vadd.f32 0.0, %v4778
        %v4780 = vpop.f32.mrf.mxu0
        %v4781 = vpop.f32.mrf.mxu0
        %v4782 = vadd.f32 0.0, %v4781
        %v4783 = vpop.f32.mrf.mxu0
        %4784 = vmatprep.mubr.bf16.mxu0 0
        %4785 = vmatmul.mubr.bf16.gmra.mxu0 %v4494
        %v4786 = vpop.f32.mrf.mxu0
        %v4787 = vadd.f32 0.0, %v4786
        %v4788 = vpop.f32.mrf.mxu0
        %v4789 = vpop.f32.mrf.mxu0
        %v4790 = vadd.f32 0.0, %v4789
        %v4791 = vpop.f32.mrf.mxu0
        %4792 = vmatprep.mubr.bf16.mxu0 0
        %4793 = vmatmul.mubr.bf16.gmra.mxu0 %v4495
        %v4794 = vpop.f32.mrf.mxu0
        %v4795 = vadd.f32 0.0, %v4794
        %v4796 = vpop.f32.mrf.mxu0
        %v4797 = vpop.f32.mrf.mxu0
        %v4798 = vpop.f32.mrf.mxu0
        %4799 = vdwg.mxu0
        %v4800 = vpack.c.bf16 %v4582, %v4579
        %v4801 = vpack.c.bf16 %v4590, %v4587
        %v4802 = vpack.c.bf16 %v4598, %v4595
        %v4803 = vpack.c.bf16 %v4606, %v4603
        %v4804 = vpack.c.bf16 %v4614, %v4611
        %v4805 = vpack.c.bf16 %v4619, %v4619
        %v4816 = vunpack.c.l.b16 %v4418
        %v4817 = vunpack.c.l.b16 %v4419
        %v4818 = vunpack.c.l.b16 %v4420
        %v4819 = vunpack.c.l.b16 %v4421
        %v4820 = vunpack.c.l.b16 %v4422
        %v4821 = vunpack.c.l.b16 %v4423
        %v4822 = vunpack.c.l.b16 %v4424
        %v4823 = vunpack.c.l.b16 %v4425
        %v4824 = vunpack.c.l.b16 %v4426
        %v4825 = vunpack.c.l.b16 %v4427
        %v4826 = vpack.c.b16 %v4817, %v4816
        %v4827 = vpack.c.b16 %v4819, %v4818
        %v4828 = vpack.c.b16 %v4821, %v4820
        %v4829 = vpack.c.b16 %v4823, %v4822
        %v4830 = vpack.c.b16 %v4825, %v4824
        %vm4831 = vcmask 719872
        %v4833 = vsel %vm4831, %v4826, 0
        %v4836 = vsel %vm4831, %v4827, 0
        %v4839 = vsel %vm4831, %v4828, 0
        %v4842 = vsel %vm4831, %v4829, 0
        %v4845 = vsel %vm4831, %v4830, 0
        %vm4847 = vcmask 1043456
        %v4849 = vsel %vm4847, %v4805, 0
        %4851 = vmatprep.subr.bf16.mxu0 0
        %4852 = vmatpush1.bf16.msra.mxu0 0
        %4853 = vmatprep.subr.bf16.mxu0 0
        %4854 = vmatpush1.bf16.msra.mxu0 0
        %4855 = vmatprep.subr.bf16.mxu0 0
        %4856 = vmatpush1.bf16.msra.mxu0 %v4849
        %4857 = vmatprep.subr.bf16.mxu0 0
        %4858 = vmatpush1.bf16.msra.mxu0 %v4804
        %4859 = vmatprep.subr.bf16.mxu0 0
        %4860 = vmatpush1.bf16.msra.mxu0 %v4803
        %4861 = vmatprep.subr.bf16.mxu0 0
        %4862 = vmatpush1.bf16.msra.mxu0 %v4802
        %4863 = vmatprep.subr.bf16.mxu0 0
        %4864 = vmatpush1.bf16.msra.mxu0 %v4801
        %4865 = vmatprep.subr.bf16.mxu0 0
        %4866 = vmatpush1.bf16.msra.mxu0 %v4800
        %4867 = vmatprep.subr.bf16.mxu0 0
        %4868 = vmatpush2.bf16.msra.mxu0 0
        %4869 = vmatprep.subr.bf16.mxu0 0
        %4870 = vmatpush2.bf16.msra.mxu0 0
        %4871 = vmatprep.subr.bf16.mxu0 0
        %4872 = vmatpush2.bf16.msra.mxu0 0
        %4873 = vmatprep.subr.bf16.mxu0 0
        %4874 = vmatpush2.bf16.msra.mxu0 0
        %4875 = vmatprep.subr.bf16.mxu0 0
        %4876 = vmatpush2.bf16.msra.mxu0 0
        %4877 = vmatprep.subr.bf16.mxu0 0
        %4878 = vmatpush2.bf16.msra.mxu0 0
        %4879 = vmatprep.subr.bf16.mxu0 0
        %4880 = vmatpush2.bf16.msra.mxu0 0
        %4881 = vmatprep.subr.bf16.mxu0 0
        %4882 = vmatpush2.bf16.msra.mxu0 0
        %4883 = vmatprep.mubr.bf16.mxu0 0
        %4884 = vmatmul.mubr.bf16.gmra.mxu0 %v4833
        %v4885 = vpop.f32.mrf.mxu0
        %v4886 = vadd.f32 0.0, %v4885
        %v4887 = vpop.f32.mrf.mxu0
        %v4888 = vpop.f32.mrf.mxu0
        %v4889 = vadd.f32 0.0, %v4888
        %v4890 = vpop.f32.mrf.mxu0
        %4891 = vmatprep.mubr.bf16.mxu0 0
        %4892 = vmatmul.mubr.bf16.gmra.mxu0 %v4836
        %v4893 = vpop.f32.mrf.mxu0
        %v4894 = vadd.f32 0.0, %v4893
        %v4895 = vpop.f32.mrf.mxu0
        %v4896 = vpop.f32.mrf.mxu0
        %v4897 = vadd.f32 0.0, %v4896
        %v4898 = vpop.f32.mrf.mxu0
        %4899 = vmatprep.mubr.bf16.mxu0 0
        %4900 = vmatmul.mubr.bf16.gmra.mxu0 %v4839
        %v4901 = vpop.f32.mrf.mxu0
        %v4902 = vadd.f32 0.0, %v4901
        %v4903 = vpop.f32.mrf.mxu0
        %v4904 = vpop.f32.mrf.mxu0
        %v4905 = vadd.f32 0.0, %v4904
        %v4906 = vpop.f32.mrf.mxu0
        %4907 = vmatprep.mubr.bf16.mxu0 0
        %4908 = vmatmul.mubr.bf16.gmra.mxu0 %v4842
        %v4909 = vpop.f32.mrf.mxu0
        %v4910 = vadd.f32 0.0, %v4909
        %v4911 = vpop.f32.mrf.mxu0
        %v4912 = vpop.f32.mrf.mxu0
        %v4913 = vadd.f32 0.0, %v4912
        %v4914 = vpop.f32.mrf.mxu0
        %4915 = vmatprep.mubr.bf16.mxu0 0
        %4916 = vmatmul.mubr.bf16.gmra.mxu0 %v4845
        %v4917 = vpop.f32.mrf.mxu0
        %v4918 = vadd.f32 0.0, %v4917
        %v4919 = vpop.f32.mrf.mxu0
        %v4920 = vpop.f32.mrf.mxu0
        %v4921 = vadd.f32 0.0, %v4920
        %v4922 = vpop.f32.mrf.mxu0
        %4923 = vdwg.mxu0
        %v4924 = vpack.c.bf16 %v4627, %v4622
        %v4925 = vpack.c.bf16 %v4635, %v4630
        %v4926 = vpack.c.bf16 %v4643, %v4638
        %v4927 = vpack.c.bf16 %v4651, %v4646
        %v4928 = vpack.c.bf16 %v4659, %v4654
        %v4929 = vpack.c.bf16 %v4662, %v4662
        %v4931 = vsel %vm4847, %v4929, 0
        %4933 = vmatprep.subr.bf16.mxu0 0
        %4934 = vmatpush1.bf16.msra.mxu0 0
        %4935 = vmatprep.subr.bf16.mxu0 0
        %4936 = vmatpush1.bf16.msra.mxu0 0
        %4937 = vmatprep.subr.bf16.mxu0 0
        %4938 = vmatpush1.bf16.msra.mxu0 %v4931
        %4939 = vmatprep.subr.bf16.mxu0 0
        %4940 = vmatpush1.bf16.msra.mxu0 %v4928
        %4941 = vmatprep.subr.bf16.mxu0 0
        %4942 = vmatpush1.bf16.msra.mxu0 %v4927
        %4943 = vmatprep.subr.bf16.mxu0 0
        %4944 = vmatpush1.bf16.msra.mxu0 %v4926
        %4945 = vmatprep.subr.bf16.mxu0 0
        %4946 = vmatpush1.bf16.msra.mxu0 %v4925
        %4947 = vmatprep.subr.bf16.mxu0 0
        %4948 = vmatpush1.bf16.msra.mxu0 %v4924
        %4949 = vmatprep.subr.bf16.mxu0 0
        %4950 = vmatpush2.bf16.msra.mxu0 0
        %4951 = vmatprep.subr.bf16.mxu0 0
        %4952 = vmatpush2.bf16.msra.mxu0 0
        %4953 = vmatprep.subr.bf16.mxu0 0
        %4954 = vmatpush2.bf16.msra.mxu0 0
        %4955 = vmatprep.subr.bf16.mxu0 0
        %4956 = vmatpush2.bf16.msra.mxu0 0
        %4957 = vmatprep.subr.bf16.mxu0 0
        %4958 = vmatpush2.bf16.msra.mxu0 0
        %4959 = vmatprep.subr.bf16.mxu0 0
        %4960 = vmatpush2.bf16.msra.mxu0 0
        %4961 = vmatprep.subr.bf16.mxu0 0
        %4962 = vmatpush2.bf16.msra.mxu0 0
        %4963 = vmatprep.subr.bf16.mxu0 0
        %4964 = vmatpush2.bf16.msra.mxu0 0
        %4965 = vmatprep.mubr.bf16.mxu0 0
        %4966 = vmatmul.mubr.bf16.gmra.mxu0 %v4833
        %v4967 = vpop.f32.mrf.mxu0
        %v4968 = vadd.f32 0.0, %v4967
        %v4969 = vpop.f32.mrf.mxu0
        %v4970 = vpop.f32.mrf.mxu0
        %v4971 = vadd.f32 0.0, %v4970
        %v4972 = vpop.f32.mrf.mxu0
        %4973 = vmatprep.mubr.bf16.mxu0 0
        %4974 = vmatmul.mubr.bf16.gmra.mxu0 %v4836
        %v4975 = vpop.f32.mrf.mxu0
        %v4976 = vadd.f32 0.0, %v4975
        %v4977 = vpop.f32.mrf.mxu0
        %v4978 = vpop.f32.mrf.mxu0
        %v4979 = vadd.f32 0.0, %v4978
        %v4980 = vpop.f32.mrf.mxu0
        %4981 = vmatprep.mubr.bf16.mxu0 0
        %4982 = vmatmul.mubr.bf16.gmra.mxu0 %v4839
        %v4983 = vpop.f32.mrf.mxu0
        %v4984 = vadd.f32 0.0, %v4983
        %v4985 = vpop.f32.mrf.mxu0
        %v4986 = vpop.f32.mrf.mxu0
        %v4987 = vadd.f32 0.0, %v4986
        %v4988 = vpop.f32.mrf.mxu0
        %4989 = vmatprep.mubr.bf16.mxu0 0
        %4990 = vmatmul.mubr.bf16.gmra.mxu0 %v4842
        %v4991 = vpop.f32.mrf.mxu0
        %v4992 = vadd.f32 0.0, %v4991
        %v4993 = vpop.f32.mrf.mxu0
        %v4994 = vpop.f32.mrf.mxu0
        %v4995 = vadd.f32 0.0, %v4994
        %v4996 = vpop.f32.mrf.mxu0
        %4997 = vmatprep.mubr.bf16.mxu0 0
        %4998 = vmatmul.mubr.bf16.gmra.mxu0 %v4845
        %v4999 = vpop.f32.mrf.mxu0
        %v5000 = vadd.f32 0.0, %v4999
        %v5001 = vpop.f32.mrf.mxu0
        %v5002 = vpop.f32.mrf.mxu0
        %v5003 = vadd.f32 0.0, %v5002
        %v5004 = vpop.f32.mrf.mxu0
        %5005 = vdwg.mxu0
        %v5006 = vpack.c.bf16 %v4670, %v4667
        %v5007 = vpack.c.bf16 %v4678, %v4675
        %v5008 = vpack.c.bf16 %v4686, %v4683
        %v5009 = vpack.c.bf16 %v4694, %v4691
        %v5010 = vpack.c.bf16 %v4702, %v4699
        %v5011 = vpack.c.bf16 %v4707, %v4707
        %v5013 = vsel %vm4847, %v5011, 0
        %5015 = vmatprep.subr.bf16.mxu0 0
        %5016 = vmatpush1.bf16.msra.mxu0 0
        %5017 = vmatprep.subr.bf16.mxu0 0
        %5018 = vmatpush1.bf16.msra.mxu0 0
        %5019 = vmatprep.subr.bf16.mxu0 0
        %5020 = vmatpush1.bf16.msra.mxu0 %v5013
        %5021 = vmatprep.subr.bf16.mxu0 0
        %5022 = vmatpush1.bf16.msra.mxu0 %v5010
        %5023 = vmatprep.subr.bf16.mxu0 0
        %5024 = vmatpush1.bf16.msra.mxu0 %v5009
        %5025 = vmatprep.subr.bf16.mxu0 0
        %5026 = vmatpush1.bf16.msra.mxu0 %v5008
        %5027 = vmatprep.subr.bf16.mxu0 0
        %5028 = vmatpush1.bf16.msra.mxu0 %v5007
        %5029 = vmatprep.subr.bf16.mxu0 0
        %5030 = vmatpush1.bf16.msra.mxu0 %v5006
        %5031 = vmatprep.subr.bf16.mxu0 0
        %5032 = vmatpush2.bf16.msra.mxu0 0
        %5033 = vmatprep.subr.bf16.mxu0 0
        %5034 = vmatpush2.bf16.msra.mxu0 0
        %5035 = vmatprep.subr.bf16.mxu0 0
        %5036 = vmatpush2.bf16.msra.mxu0 0
        %5037 = vmatprep.subr.bf16.mxu0 0
        %5038 = vmatpush2.bf16.msra.mxu0 0
        %5039 = vmatprep.subr.bf16.mxu0 0
        %5040 = vmatpush2.bf16.msra.mxu0 0
        %5041 = vmatprep.subr.bf16.mxu0 0
        %5042 = vmatpush2.bf16.msra.mxu0 0
        %5043 = vmatprep.subr.bf16.mxu0 0
        %5044 = vmatpush2.bf16.msra.mxu0 0
        %5045 = vmatprep.subr.bf16.mxu0 0
        %5046 = vmatpush2.bf16.msra.mxu0 0
        %5047 = vmatprep.mubr.bf16.mxu0 0
        %5048 = vmatmul.mubr.bf16.gmra.mxu0 %v4833
        %v5049 = vpop.f32.mrf.mxu0
        %v5050 = vadd.f32 0.0, %v5049
        %v5051 = vpop.f32.mrf.mxu0
        %v5052 = vpop.f32.mrf.mxu0
        %v5053 = vadd.f32 0.0, %v5052
        %v5054 = vpop.f32.mrf.mxu0
        %5055 = vmatprep.mubr.bf16.mxu0 0
        %5056 = vmatmul.mubr.bf16.gmra.mxu0 %v4836
        %v5057 = vpop.f32.mrf.mxu0
        %v5058 = vadd.f32 0.0, %v5057
        %v5059 = vpop.f32.mrf.mxu0
        %v5060 = vpop.f32.mrf.mxu0
        %v5061 = vadd.f32 0.0, %v5060
        %v5062 = vpop.f32.mrf.mxu0
        %5063 = vmatprep.mubr.bf16.mxu0 0
        %5064 = vmatmul.mubr.bf16.gmra.mxu0 %v4839
        %v5065 = vpop.f32.mrf.mxu0
        %v5066 = vadd.f32 0.0, %v5065
        %v5067 = vpop.f32.mrf.mxu0
        %v5068 = vpop.f32.mrf.mxu0
        %v5069 = vadd.f32 0.0, %v5068
        %v5070 = vpop.f32.mrf.mxu0
        %5071 = vmatprep.mubr.bf16.mxu0 0
        %5072 = vmatmul.mubr.bf16.gmra.mxu0 %v4842
        %v5073 = vpop.f32.mrf.mxu0
        %v5074 = vadd.f32 0.0, %v5073
        %v5075 = vpop.f32.mrf.mxu0
        %v5076 = vpop.f32.mrf.mxu0
        %v5077 = vadd.f32 0.0, %v5076
        %v5078 = vpop.f32.mrf.mxu0
        %5079 = vmatprep.mubr.bf16.mxu0 0
        %5080 = vmatmul.mubr.bf16.gmra.mxu0 %v4845
        %v5081 = vpop.f32.mrf.mxu0
        %v5082 = vadd.f32 0.0, %v5081
        %v5083 = vpop.f32.mrf.mxu0
        %v5084 = vpop.f32.mrf.mxu0
        %v5085 = vadd.f32 0.0, %v5084
        %v5086 = vpop.f32.mrf.mxu0
        %5087 = vdwg.mxu0
        %v5088 = vpack.c.bf16 %v4715, %v4710
        %v5089 = vpack.c.bf16 %v4723, %v4718
        %v5090 = vpack.c.bf16 %v4731, %v4726
        %v5091 = vpack.c.bf16 %v4739, %v4734
        %v5092 = vpack.c.bf16 %v4747, %v4742
        %v5093 = vpack.c.bf16 %v4750, %v4750
        %v5095 = vsel %vm4847, %v5093, 0
        %5097 = vmatprep.subr.bf16.mxu0 0
        %5098 = vmatpush1.bf16.msra.mxu0 0
        %5099 = vmatprep.subr.bf16.mxu0 0
        %5100 = vmatpush1.bf16.msra.mxu0 0
        %5101 = vmatprep.subr.bf16.mxu0 0
        %5102 = vmatpush1.bf16.msra.mxu0 %v5095
        %5103 = vmatprep.subr.bf16.mxu0 0
        %5104 = vmatpush1.bf16.msra.mxu0 %v5092
        %5105 = vmatprep.subr.bf16.mxu0 0
        %5106 = vmatpush1.bf16.msra.mxu0 %v5091
        %5107 = vmatprep.subr.bf16.mxu0 0
        %5108 = vmatpush1.bf16.msra.mxu0 %v5090
        %5109 = vmatprep.subr.bf16.mxu0 0
        %5110 = vmatpush1.bf16.msra.mxu0 %v5089
        %5111 = vmatprep.subr.bf16.mxu0 0
        %5112 = vmatpush1.bf16.msra.mxu0 %v5088
        %5113 = vmatprep.subr.bf16.mxu0 0
        %5114 = vmatpush2.bf16.msra.mxu0 0
        %5115 = vmatprep.subr.bf16.mxu0 0
        %5116 = vmatpush2.bf16.msra.mxu0 0
        %5117 = vmatprep.subr.bf16.mxu0 0
        %5118 = vmatpush2.bf16.msra.mxu0 0
        %5119 = vmatprep.subr.bf16.mxu0 0
        %5120 = vmatpush2.bf16.msra.mxu0 0
        %5121 = vmatprep.subr.bf16.mxu0 0
        %5122 = vmatpush2.bf16.msra.mxu0 0
        %5123 = vmatprep.subr.bf16.mxu0 0
        %5124 = vmatpush2.bf16.msra.mxu0 0
        %5125 = vmatprep.subr.bf16.mxu0 0
        %5126 = vmatpush2.bf16.msra.mxu0 0
        %5127 = vmatprep.subr.bf16.mxu0 0
        %5128 = vmatpush2.bf16.msra.mxu0 0
        %5129 = vmatprep.mubr.bf16.mxu0 0
        %5130 = vmatmul.mubr.bf16.gmra.mxu0 %v4833
        %v5131 = vpop.f32.mrf.mxu0
        %v5132 = vadd.f32 0.0, %v5131
        %v5133 = vpop.f32.mrf.mxu0
        %v5134 = vpop.f32.mrf.mxu0
        %v5135 = vadd.f32 0.0, %v5134
        %v5136 = vpop.f32.mrf.mxu0
        %5137 = vmatprep.mubr.bf16.mxu0 0
        %5138 = vmatmul.mubr.bf16.gmra.mxu0 %v4836
        %v5139 = vpop.f32.mrf.mxu0
        %v5140 = vadd.f32 0.0, %v5139
        %v5141 = vpop.f32.mrf.mxu0
        %v5142 = vpop.f32.mrf.mxu0
        %v5143 = vadd.f32 0.0, %v5142
        %v5144 = vpop.f32.mrf.mxu0
        %5145 = vmatprep.mubr.bf16.mxu0 0
        %5146 = vmatmul.mubr.bf16.gmra.mxu0 %v4839
        %v5147 = vpop.f32.mrf.mxu0
        %v5148 = vadd.f32 0.0, %v5147
        %v5149 = vpop.f32.mrf.mxu0
        %v5150 = vpop.f32.mrf.mxu0
        %v5151 = vadd.f32 0.0, %v5150
        %v5152 = vpop.f32.mrf.mxu0
        %5153 = vmatprep.mubr.bf16.mxu0 0
        %5154 = vmatmul.mubr.bf16.gmra.mxu0 %v4842
        %v5155 = vpop.f32.mrf.mxu0
        %v5156 = vadd.f32 0.0, %v5155
        %v5157 = vpop.f32.mrf.mxu0
        %v5158 = vpop.f32.mrf.mxu0
        %v5159 = vadd.f32 0.0, %v5158
        %v5160 = vpop.f32.mrf.mxu0
        %5161 = vmatprep.mubr.bf16.mxu0 0
        %5162 = vmatmul.mubr.bf16.gmra.mxu0 %v4845
        %v5163 = vpop.f32.mrf.mxu0
        %v5164 = vadd.f32 0.0, %v5163
        %v5165 = vpop.f32.mrf.mxu0
        %v5166 = vpop.f32.mrf.mxu0
        %v5167 = vadd.f32 0.0, %v5166
        %v5168 = vpop.f32.mrf.mxu0
        %5169 = vdwg.mxu0
        %v5170 = vpack.c.bf16 %v4758, %v4755
        %v5171 = vpack.c.bf16 %v4766, %v4763
        %v5172 = vpack.c.bf16 %v4774, %v4771
        %v5173 = vpack.c.bf16 %v4782, %v4779
        %v5174 = vpack.c.bf16 %v4790, %v4787
        %v5175 = vpack.c.bf16 %v4795, %v4795
        %v5177 = vsel %vm4847, %v5175, 0
        %5179 = vmatprep.subr.bf16.mxu0 0
        %5180 = vmatpush1.bf16.msra.mxu0 0
        %5181 = vmatprep.subr.bf16.mxu0 0
        %5182 = vmatpush1.bf16.msra.mxu0 0
        %5183 = vmatprep.subr.bf16.mxu0 0
        %5184 = vmatpush1.bf16.msra.mxu0 %v5177
        %5185 = vmatprep.subr.bf16.mxu0 0
        %5186 = vmatpush1.bf16.msra.mxu0 %v5174
        %5187 = vmatprep.subr.bf16.mxu0 0
        %5188 = vmatpush1.bf16.msra.mxu0 %v5173
        %5189 = vmatprep.subr.bf16.mxu0 0
        %5190 = vmatpush1.bf16.msra.mxu0 %v5172
        %5191 = vmatprep.subr.bf16.mxu0 0
        %5192 = vmatpush1.bf16.msra.mxu0 %v5171
        %5193 = vmatprep.subr.bf16.mxu0 0
        %5194 = vmatpush1.bf16.msra.mxu0 %v5170
        %5195 = vmatprep.subr.bf16.mxu0 0
        %5196 = vmatpush2.bf16.msra.mxu0 0
        %5197 = vmatprep.subr.bf16.mxu0 0
        %5198 = vmatpush2.bf16.msra.mxu0 0
        %5199 = vmatprep.subr.bf16.mxu0 0
        %5200 = vmatpush2.bf16.msra.mxu0 0
        %5201 = vmatprep.subr.bf16.mxu0 0
        %5202 = vmatpush2.bf16.msra.mxu0 0
        %5203 = vmatprep.subr.bf16.mxu0 0
        %5204 = vmatpush2.bf16.msra.mxu0 0
        %5205 = vmatprep.subr.bf16.mxu0 0
        %5206 = vmatpush2.bf16.msra.mxu0 0
        %5207 = vmatprep.subr.bf16.mxu0 0
        %5208 = vmatpush2.bf16.msra.mxu0 0
        %5209 = vmatprep.subr.bf16.mxu0 0
        %5210 = vmatpush2.bf16.msra.mxu0 0
        %5211 = vmatprep.mubr.bf16.mxu0 0
        %5212 = vmatmul.mubr.bf16.gmra.mxu0 %v4833
        %v5213 = vpop.f32.mrf.mxu0
        %v5214 = vadd.f32 0.0, %v5213
        %v5215 = vpop.f32.mrf.mxu0
        %v5216 = vpop.f32.mrf.mxu0
        %v5217 = vadd.f32 0.0, %v5216
        %v5218 = vpop.f32.mrf.mxu0
        %5219 = vmatprep.mubr.bf16.mxu0 0
        %5220 = vmatmul.mubr.bf16.gmra.mxu0 %v4836
        %v5221 = vpop.f32.mrf.mxu0
        %v5222 = vadd.f32 0.0, %v5221
        %v5223 = vpop.f32.mrf.mxu0
        %v5224 = vpop.f32.mrf.mxu0
        %v5225 = vadd.f32 0.0, %v5224
        %v5226 = vpop.f32.mrf.mxu0
        %5227 = vmatprep.mubr.bf16.mxu0 0
        %5228 = vmatmul.mubr.bf16.gmra.mxu0 %v4839
        %v5229 = vpop.f32.mrf.mxu0
        %v5230 = vadd.f32 0.0, %v5229
        %v5231 = vpop.f32.mrf.mxu0
        %v5232 = vpop.f32.mrf.mxu0
        %v5233 = vadd.f32 0.0, %v5232
        %v5234 = vpop.f32.mrf.mxu0
        %5235 = vmatprep.mubr.bf16.mxu0 0
        %5236 = vmatmul.mubr.bf16.gmra.mxu0 %v4842
        %v5237 = vpop.f32.mrf.mxu0
        %v5238 = vadd.f32 0.0, %v5237
        %v5239 = vpop.f32.mrf.mxu0
        %v5240 = vpop.f32.mrf.mxu0
        %v5241 = vadd.f32 0.0, %v5240
        %v5242 = vpop.f32.mrf.mxu0
        %5243 = vmatprep.mubr.bf16.mxu0 0
        %5244 = vmatmul.mubr.bf16.gmra.mxu0 %v4845
        %v5245 = vpop.f32.mrf.mxu0
        %v5246 = vadd.f32 0.0, %v5245
        %v5247 = vpop.f32.mrf.mxu0
        %v5248 = vpop.f32.mrf.mxu0
        %v5249 = vadd.f32 0.0, %v5248
        %v5250 = vpop.f32.mrf.mxu0
        %5251 = vdwg.mxu0
        %v5252 = vmul.f32 %v4886, %v4886
        %v5253 = vmul.f32 %v4889, %v4889
        %v5254 = vmul.f32 %v4894, %v4894
        %v5255 = vmul.f32 %v4897, %v4897
        %v5256 = vmul.f32 %v4902, %v4902
        %v5257 = vmul.f32 %v4905, %v4905
        %v5258 = vmul.f32 %v4910, %v4910
        %v5259 = vmul.f32 %v4913, %v4913
        %v5260 = vmul.f32 %v4918, %v4918
        %v5261 = vmul.f32 %v4921, %v4921
        %v5262 = vmul.f32 %v4968, %v4968
        %v5263 = vmul.f32 %v4971, %v4971
        %v5264 = vmul.f32 %v4976, %v4976
        %v5265 = vmul.f32 %v4979, %v4979
        %v5266 = vmul.f32 %v4984, %v4984
        %v5267 = vmul.f32 %v4987, %v4987
        %v5268 = vmul.f32 %v4992, %v4992
        %v5269 = vmul.f32 %v4995, %v4995
        %v5270 = vmul.f32 %v5000, %v5000
        %v5271 = vmul.f32 %v5003, %v5003
        %v5272 = vmul.f32 %v4886, %v4968
        %v5273 = vmul.f32 %v4889, %v4971
        %v5274 = vmul.f32 %v4894, %v4976
        %v5275 = vmul.f32 %v4897, %v4979
        %v5276 = vmul.f32 %v4902, %v4984
        %v5277 = vmul.f32 %v4905, %v4987
        %v5278 = vmul.f32 %v4910, %v4992
        %v5279 = vmul.f32 %v4913, %v4995
        %v5280 = vmul.f32 %v4918, %v5000
        %v5281 = vmul.f32 %v4921, %v5003
        %v5282 = vsub.f32 %v5050, %v5252
        %v5283 = vsub.f32 %v5053, %v5253
        %v5284 = vsub.f32 %v5058, %v5254
        %v5285 = vsub.f32 %v5061, %v5255
        %v5286 = vsub.f32 %v5066, %v5256
        %v5287 = vsub.f32 %v5069, %v5257
        %v5288 = vsub.f32 %v5074, %v5258
        %v5289 = vsub.f32 %v5077, %v5259
        %v5290 = vsub.f32 %v5082, %v5260
        %v5291 = vsub.f32 %v5085, %v5261
        %v5292 = vsub.f32 %v5132, %v5262
        %v5293 = vsub.f32 %v5135, %v5263
        %v5294 = vsub.f32 %v5140, %v5264
        %v5295 = vsub.f32 %v5143, %v5265
        %v5296 = vsub.f32 %v5148, %v5266
        %v5297 = vsub.f32 %v5151, %v5267
        %v5298 = vsub.f32 %v5156, %v5268
        %v5299 = vsub.f32 %v5159, %v5269
        %v5300 = vsub.f32 %v5164, %v5270
        %v5301 = vsub.f32 %v5167, %v5271
        %v5302 = vsub.f32 %v5214, %v5272
        %v5303 = vsub.f32 %v5217, %v5273
        %v5304 = vsub.f32 %v5222, %v5274
        %v5305 = vsub.f32 %v5225, %v5275
        %v5306 = vsub.f32 %v5230, %v5276
        %v5307 = vsub.f32 %v5233, %v5277
        %v5308 = vsub.f32 %v5238, %v5278
        %v5309 = vsub.f32 %v5241, %v5279
        %v5310 = vsub.f32 %v5246, %v5280
        %v5311 = vsub.f32 %v5249, %v5281
        %v5312 = vmul.f32 %v5302, 2.0
        %v5313 = vmul.f32 %v5303, 2.0
        %v5314 = vmul.f32 %v5304, 2.0
        %v5315 = vmul.f32 %v5305, 2.0
        %v5316 = vmul.f32 %v5306, 2.0
        %v5317 = vmul.f32 %v5307, 2.0
        %v5318 = vmul.f32 %v5308, 2.0
        %v5319 = vmul.f32 %v5309, 2.0
        %v5320 = vmul.f32 %v5310, 2.0
        %v5321 = vmul.f32 %v5311, 2.0
        %v5322 = vadd.f32 %v5312, 0.0009
        %v5323 = vadd.f32 %v5313, 0.0009
        %v5324 = vadd.f32 %v5314, 0.0009
        %v5325 = vadd.f32 %v5315, 0.0009
        %v5326 = vadd.f32 %v5316, 0.0009
        %v5327 = vadd.f32 %v5317, 0.0009
        %v5328 = vadd.f32 %v5318, 0.0009
        %v5329 = vadd.f32 %v5319, 0.0009
        %v5330 = vadd.f32 %v5320, 0.0009
        %v5331 = vadd.f32 %v5321, 0.0009
        %v5332 = vadd.f32 %v5282, %v5292
        %v5333 = vadd.f32 %v5283, %v5293
        %v5334 = vadd.f32 %v5284, %v5294
        %v5335 = vadd.f32 %v5285, %v5295
        %v5336 = vadd.f32 %v5286, %v5296
        %v5337 = vadd.f32 %v5287, %v5297
        %v5338 = vadd.f32 %v5288, %v5298
        %v5339 = vadd.f32 %v5289, %v5299
        %v5340 = vadd.f32 %v5290, %v5300
        %v5341 = vadd.f32 %v5291, %v5301
        %v5342 = vadd.f32 %v5332, 0.0009
        %v5343 = vadd.f32 %v5333, 0.0009
        %v5344 = vadd.f32 %v5334, 0.0009
        %v5345 = vadd.f32 %v5335, 0.0009
        %v5346 = vadd.f32 %v5336, 0.0009
        %v5347 = vadd.f32 %v5337, 0.0009
        %v5348 = vadd.f32 %v5338, 0.0009
        %v5349 = vadd.f32 %v5339, 0.0009
        %v5350 = vadd.f32 %v5340, 0.0009
        %v5351 = vadd.f32 %v5341, 0.0009
        %v5352 = vrcp.pop %v5342
        %v5353 = vmul.f32 %v5322, %v5352
        %v5354 = vrcp.pop %v5343
        %v5355 = vmul.f32 %v5323, %v5354
        %v5356 = vrcp.pop %v5344
        %v5357 = vmul.f32 %v5324, %v5356
        %v5358 = vrcp.pop %v5345
        %v5359 = vmul.f32 %v5325, %v5358
        %v5360 = vrcp.pop %v5346
        %v5361 = vmul.f32 %v5326, %v5360
        %v5362 = vrcp.pop %v5347
        %v5363 = vmul.f32 %v5327, %v5362
        %v5364 = vrcp.pop %v5348
        %v5365 = vmul.f32 %v5328, %v5364
        %v5366 = vrcp.pop %v5349
        %v5367 = vmul.f32 %v5329, %v5366
        %v5368 = vrcp.pop %v5350
        %v5369 = vmul.f32 %v5330, %v5368
        %v5370 = vrcp.pop %v5351
        %v5371 = vmul.f32 %v5331, %v5370
        %v5372 = vsub.f32 %v5353, 1.0
        %v5373 = vsub.f32 %v5355, 1.0
        %v5374 = vsub.f32 %v5357, 1.0
        %v5375 = vsub.f32 %v5359, 1.0
        %v5376 = vsub.f32 %v5361, 1.0
        %v5377 = vsub.f32 %v5363, 1.0
        %v5378 = vsub.f32 %v5365, 1.0
        %v5379 = vsub.f32 %v5367, 1.0
        %v5380 = vsub.f32 %v5369, 1.0
        %v5381 = vsub.f32 %v5371, 1.0
        %v5382 = vadd.f32 %v5372, %v5373
        %v5383 = vadd.f32 %v5382, %v5374
        %v5384 = vadd.f32 %v5383, %v5375
        %v5385 = vadd.f32 %v5384, %v5376
        %v5386 = vadd.f32 %v5385, %v5377
        %v5387 = vadd.f32 %v5386, %v5378
        %v5388 = vadd.f32 %v5387, %v5379
        %v5389 = vadd.f32 %v5388, %v5380
        %v5390 = vadd.f32 %v5389, %v5381
        %5391 = vadd.xlane.f32.xlu0 %v5390
        %v5392 = vpop.xlane.xlu0 %5391
        %v5393 = vrot.slane %v5392, 4
        %v5394 = vadd.f32 %v5392, %v5393
        %v5395 = vrot.slane %v5394, 2
        %v5396 = vadd.f32 %v5394, %v5395
        %v5397 = vrot.slane %v5396, 1
        %v5398 = vadd.f32 %v5396, %v5397
        %s5399 = vtos %v5398
        %s5400 = smul.f32 %s5399, 0.00016436556
        %s5401 = sadd.f32 %s5400, 1.0
        %v5402 = vld [vmem:[#allocation25] sm:$0xf]
        %v5403 = vld [vmem:[#allocation25 + $0x4] sm:$0xf]
        %v5404 = vld [vmem:[#allocation25 + $0x8] sm:$0xf]
        %v5405 = vld [vmem:[#allocation25 + $0xc] sm:$0xf]
        %v5406 = vld [vmem:[#allocation25 + $0x10] sm:$0xf]
        %v5407 = vld [vmem:[#allocation25 + $0x14] sm:$0xf]
        %v5408 = vld [vmem:[#allocation25 + $0x18] sm:$0xf]
        %v5409 = vld [vmem:[#allocation25 + $0x1c] sm:$0xf]
        %v5410 = vld [vmem:[#allocation25 + $0x20] sm:$0xf]
        %v5411 = vld [vmem:[#allocation25 + $0x24] sm:$0xf]
        %v5412 = vld [vmem:[#allocation25 + $0x28] sm:$0xf]
        %v5413 = vld [vmem:[#allocation25 + $0x2c] sm:$0xf]
        %v5414 = vld [vmem:[#allocation25 + $0x30] sm:$0xf]
        %v5415 = vld [vmem:[#allocation25 + $0x34] sm:$0xf]
        %v5416 = vld [vmem:[#allocation25 + $0x38] sm:$0xf]
        %v5417 = vld [vmem:[#allocation25 + $0x3c] sm:$0xf]
        %v5418 = vld [vmem:[#allocation26] sm:$0xf]
        %v5419 = vld [vmem:[#allocation26 + $0x4] sm:$0xf]
        %v5420 = vld [vmem:[#allocation26 + $0x8] sm:$0xf]
        %v5421 = vld [vmem:[#allocation26 + $0xc] sm:$0xf]
        %v5422 = vld [vmem:[#allocation26 + $0x10] sm:$0xf]
        %v5423 = vld [vmem:[#allocation26 + $0x14] sm:$0xf]
        %v5440 = vunpack.c.l.b16 %v5402
        %v5441 = vunpack.c.l.b16 %v5403
        %v5442 = vunpack.c.l.b16 %v5404
        %v5443 = vunpack.c.l.b16 %v5405
        %v5444 = vunpack.c.l.b16 %v5406
        %v5445 = vunpack.c.l.b16 %v5407
        %v5446 = vunpack.c.l.b16 %v5408
        %v5447 = vunpack.c.l.b16 %v5409
        %v5448 = vunpack.c.l.b16 %v5410
        %v5449 = vunpack.c.l.b16 %v5411
        %v5450 = vunpack.c.l.b16 %v5412
        %v5451 = vunpack.c.l.b16 %v5413
        %v5452 = vunpack.c.l.b16 %v5414
        %v5453 = vunpack.c.l.b16 %v5415
        %v5454 = vunpack.c.l.b16 %v5416
        %v5455 = vunpack.c.l.b16 %v5417
        %v5456 = vpack.c.b16 %v5441, %v5440
        %v5457 = vpack.c.b16 %v5443, %v5442
        %v5458 = vpack.c.b16 %v5445, %v5444
        %v5459 = vpack.c.b16 %v5447, %v5446
        %v5460 = vpack.c.b16 %v5449, %v5448
        %v5461 = vpack.c.b16 %v5451, %v5450
        %v5462 = vpack.c.b16 %v5453, %v5452
        %v5463 = vpack.c.b16 %v5455, %v5454
        %5472 = vmatprep.subr.bf16.mxu0 0
        %5473 = vmatpush1.bf16.msra.mxu0 %v5463
        %5474 = vmatprep.subr.bf16.mxu0 0
        %5475 = vmatpush1.bf16.msra.mxu0 %v5462
        %5476 = vmatprep.subr.bf16.mxu0 0
        %5477 = vmatpush1.bf16.msra.mxu0 %v5461
        %5478 = vmatprep.subr.bf16.mxu0 0
        %5479 = vmatpush1.bf16.msra.mxu0 %v5460
        %5480 = vmatprep.subr.bf16.mxu0 0
        %5481 = vmatpush1.bf16.msra.mxu0 %v5459
        %5482 = vmatprep.subr.bf16.mxu0 0
        %5483 = vmatpush1.bf16.msra.mxu0 %v5458
        %5484 = vmatprep.subr.bf16.mxu0 0
        %5485 = vmatpush1.bf16.msra.mxu0 %v5457
        %5486 = vmatprep.subr.bf16.mxu0 0
        %5487 = vmatpush1.bf16.msra.mxu0 %v5456
        %5488 = vmatprep.subr.bf16.mxu0 0
        %5489 = vmatpush2.bf16.msra.mxu0 0
        %5490 = vmatprep.subr.bf16.mxu0 0
        %5491 = vmatpush2.bf16.msra.mxu0 0
        %5492 = vmatprep.subr.bf16.mxu0 0
        %5493 = vmatpush2.bf16.msra.mxu0 0
        %5494 = vmatprep.subr.bf16.mxu0 0
        %5495 = vmatpush2.bf16.msra.mxu0 0
        %5496 = vmatprep.subr.bf16.mxu0 0
        %5497 = vmatpush2.bf16.msra.mxu0 0
        %5498 = vmatprep.subr.bf16.mxu0 0
        %5499 = vmatpush2.bf16.msra.mxu0 0
        %5500 = vmatprep.subr.bf16.mxu0 0
        %5501 = vmatpush2.bf16.msra.mxu0 0
        %5502 = vmatprep.subr.bf16.mxu0 0
        %5503 = vmatpush2.bf16.msra.mxu0 0
        %5504 = vmatprep.mubr.bf16.mxu0 0
        %5505 = vmatmul.mubr.bf16.gmra.mxu0 %v4428
        %v5506 = vpop.f32.mrf.mxu0
        %v5507 = vadd.f32 0.0, %v5506
        %v5508 = vpop.f32.mrf.mxu0
        %v5509 = vpop.f32.mrf.mxu0
        %v5510 = vadd.f32 0.0, %v5509
        %v5511 = vpop.f32.mrf.mxu0
        %5512 = vmatprep.mubr.bf16.mxu0 0
        %5513 = vmatmul.mubr.bf16.gmra.mxu0 %v4429
        %v5514 = vpop.f32.mrf.mxu0
        %v5515 = vadd.f32 0.0, %v5514
        %v5516 = vpop.f32.mrf.mxu0
        %v5517 = vpop.f32.mrf.mxu0
        %v5518 = vadd.f32 0.0, %v5517
        %v5519 = vpop.f32.mrf.mxu0
        %5520 = vmatprep.mubr.bf16.mxu0 0
        %5521 = vmatmul.mubr.bf16.gmra.mxu0 %v4430
        %v5522 = vpop.f32.mrf.mxu0
        %v5523 = vadd.f32 0.0, %v5522
        %v5524 = vpop.f32.mrf.mxu0
        %v5525 = vpop.f32.mrf.mxu0
        %v5526 = vadd.f32 0.0, %v5525
        %v5527 = vpop.f32.mrf.mxu0
        %5528 = vmatprep.mubr.bf16.mxu0 0
        %5529 = vmatmul.mubr.bf16.gmra.mxu0 %v4431
        %v5530 = vpop.f32.mrf.mxu0
        %v5531 = vadd.f32 0.0, %v5530
        %v5532 = vpop.f32.mrf.mxu0
        %v5533 = vpop.f32.mrf.mxu0
        %v5534 = vadd.f32 0.0, %v5533
        %v5535 = vpop.f32.mrf.mxu0
        %5536 = vmatprep.mubr.bf16.mxu0 0
        %5537 = vmatmul.mubr.bf16.gmra.mxu0 %v4432
        %v5538 = vpop.f32.mrf.mxu0
        %v5539 = vadd.f32 0.0, %v5538
        %v5540 = vpop.f32.mrf.mxu0
        %v5541 = vpop.f32.mrf.mxu0
        %v5542 = vadd.f32 0.0, %v5541
        %v5543 = vpop.f32.mrf.mxu0
        %5544 = vmatprep.mubr.bf16.mxu0 0
        %5545 = vmatmul.mubr.bf16.gmra.mxu0 %v4433
        %v5546 = vpop.f32.mrf.mxu0
        %v5547 = vadd.f32 0.0, %v5546
        %v5548 = vpop.f32.mrf.mxu0
        %v5549 = vpop.f32.mrf.mxu0
        %v5550 = vpop.f32.mrf.mxu0
        %5551 = vdwg.mxu0
        %v5552 = vpack.c.bf16 %v5510, %v5507
        %v5553 = vpack.c.bf16 %v5518, %v5515
        %v5554 = vpack.c.bf16 %v5526, %v5523
        %v5555 = vpack.c.bf16 %v5534, %v5531
        %v5556 = vpack.c.bf16 %v5542, %v5539
        %v5557 = vpack.c.bf16 %v5547, %v5547
        %v5564 = vunpack.c.l.b16 %v5418
        %v5565 = vunpack.c.l.b16 %v5419
        %v5566 = vunpack.c.l.b16 %v5420
        %v5567 = vunpack.c.l.b16 %v5421
        %v5568 = vunpack.c.l.b16 %v5422
        %v5569 = vunpack.c.l.b16 %v5423
        %v5570 = vpack.c.b16 %v5565, %v5564
        %v5571 = vpack.c.b16 %v5567, %v5566
        %v5572 = vpack.c.b16 %v5569, %v5568
        %v5574 = vsel %vm4831, %v5570, 0
        %v5577 = vsel %vm4831, %v5571, 0
        %v5580 = vsel %vm4831, %v5572, 0
        %v5583 = vsel %vm4847, %v5557, 0
        %5585 = vmatprep.subr.bf16.mxu0 0
        %5586 = vmatpush1.bf16.msra.mxu0 0
        %5587 = vmatprep.subr.bf16.mxu0 0
        %5588 = vmatpush1.bf16.msra.mxu0 0
        %5589 = vmatprep.subr.bf16.mxu0 0
        %5590 = vmatpush1.bf16.msra.mxu0 %v5583
        %5591 = vmatprep.subr.bf16.mxu0 0
        %5592 = vmatpush1.bf16.msra.mxu0 %v5556
        %5593 = vmatprep.subr.bf16.mxu0 0
        %5594 = vmatpush1.bf16.msra.mxu0 %v5555
        %5595 = vmatprep.subr.bf16.mxu0 0
        %5596 = vmatpush1.bf16.msra.mxu0 %v5554
        %5597 = vmatprep.subr.bf16.mxu0 0
        %5598 = vmatpush1.bf16.msra.mxu0 %v5553
        %5599 = vmatprep.subr.bf16.mxu0 0
        %5600 = vmatpush1.bf16.msra.mxu0 %v5552
        %5601 = vmatprep.subr.bf16.mxu0 0
        %5602 = vmatpush2.bf16.msra.mxu0 0
        %5603 = vmatprep.subr.bf16.mxu0 0
        %5604 = vmatpush2.bf16.msra.mxu0 0
        %5605 = vmatprep.subr.bf16.mxu0 0
        %5606 = vmatpush2.bf16.msra.mxu0 0
        %5607 = vmatprep.subr.bf16.mxu0 0
        %5608 = vmatpush2.bf16.msra.mxu0 0
        %5609 = vmatprep.subr.bf16.mxu0 0
        %5610 = vmatpush2.bf16.msra.mxu0 0
        %5611 = vmatprep.subr.bf16.mxu0 0
        %5612 = vmatpush2.bf16.msra.mxu0 0
        %5613 = vmatprep.subr.bf16.mxu0 0
        %5614 = vmatpush2.bf16.msra.mxu0 0
        %5615 = vmatprep.subr.bf16.mxu0 0
        %5616 = vmatpush2.bf16.msra.mxu0 0
        %5617 = vmatprep.mubr.bf16.mxu0 0
        %5618 = vmatmul.mubr.bf16.gmra.mxu0 %v5574
        %v5619 = vpop.f32.mrf.mxu0
        %v5620 = vadd.f32 0.0, %v5619
        %v5621 = vpop.f32.mrf.mxu0
        %v5622 = vpop.f32.mrf.mxu0
        %v5623 = vadd.f32 0.0, %v5622
        %v5624 = vpop.f32.mrf.mxu0
        %5625 = vmatprep.mubr.bf16.mxu0 0
        %5626 = vmatmul.mubr.bf16.gmra.mxu0 %v5577
        %v5627 = vpop.f32.mrf.mxu0
        %v5628 = vadd.f32 0.0, %v5627
        %v5629 = vpop.f32.mrf.mxu0
        %v5630 = vpop.f32.mrf.mxu0
        %v5631 = vadd.f32 0.0, %v5630
        %v5632 = vpop.f32.mrf.mxu0
        %5633 = vmatprep.mubr.bf16.mxu0 0
        %5634 = vmatmul.mubr.bf16.gmra.mxu0 %v5580
        %v5635 = vpop.f32.mrf.mxu0
        %v5636 = vadd.f32 0.0, %v5635
        %v5637 = vpop.f32.mrf.mxu0
        %v5638 = vpop.f32.mrf.mxu0
        %v5639 = vadd.f32 0.0, %v5638
        %v5640 = vpop.f32.mrf.mxu0
        %5641 = vdwg.mxu0
        %5642 = vmatprep.subr.bf16.mxu0 0
        %5643 = vmatpush1.bf16.msra.mxu0 %v5463
        %5644 = vmatprep.subr.bf16.mxu0 0
        %5645 = vmatpush1.bf16.msra.mxu0 %v5462
        %5646 = vmatprep.subr.bf16.mxu0 0
        %5647 = vmatpush1.bf16.msra.mxu0 %v5461
        %5648 = vmatprep.subr.bf16.mxu0 0
        %5649 = vmatpush1.bf16.msra.mxu0 %v5460
        %5650 = vmatprep.subr.bf16.mxu0 0
        %5651 = vmatpush1.bf16.msra.mxu0 %v5459
        %5652 = vmatprep.subr.bf16.mxu0 0
        %5653 = vmatpush1.bf16.msra.mxu0 %v5458
        %5654 = vmatprep.subr.bf16.mxu0 0
        %5655 = vmatpush1.bf16.msra.mxu0 %v5457
        %5656 = vmatprep.subr.bf16.mxu0 0
        %5657 = vmatpush1.bf16.msra.mxu0 %v5456
        %5658 = vmatprep.subr.bf16.mxu0 0
        %5659 = vmatpush2.bf16.msra.mxu0 0
        %5660 = vmatprep.subr.bf16.mxu0 0
        %5661 = vmatpush2.bf16.msra.mxu0 0
        %5662 = vmatprep.subr.bf16.mxu0 0
        %5663 = vmatpush2.bf16.msra.mxu0 0
        %5664 = vmatprep.subr.bf16.mxu0 0
        %5665 = vmatpush2.bf16.msra.mxu0 0
        %5666 = vmatprep.subr.bf16.mxu0 0
        %5667 = vmatpush2.bf16.msra.mxu0 0
        %5668 = vmatprep.subr.bf16.mxu0 0
        %5669 = vmatpush2.bf16.msra.mxu0 0
        %5670 = vmatprep.subr.bf16.mxu0 0
        %5671 = vmatpush2.bf16.msra.mxu0 0
        %5672 = vmatprep.subr.bf16.mxu0 0
        %5673 = vmatpush2.bf16.msra.mxu0 0
        %5674 = vmatprep.mubr.bf16.mxu0 0
        %5675 = vmatmul.mubr.bf16.gmra.mxu0 %v4434
        %v5676 = vpop.f32.mrf.mxu0
        %v5677 = vadd.f32 0.0, %v5676
        %v5678 = vpop.f32.mrf.mxu0
        %v5679 = vpop.f32.mrf.mxu0
        %v5680 = vadd.f32 0.0, %v5679
        %v5681 = vpop.f32.mrf.mxu0
        %5682 = vmatprep.mubr.bf16.mxu0 0
        %5683 = vmatmul.mubr.bf16.gmra.mxu0 %v4435
        %v5684 = vpop.f32.mrf.mxu0
        %v5685 = vadd.f32 0.0, %v5684
        %v5686 = vpop.f32.mrf.mxu0
        %v5687 = vpop.f32.mrf.mxu0
        %v5688 = vadd.f32 0.0, %v5687
        %v5689 = vpop.f32.mrf.mxu0
        %5690 = vmatprep.mubr.bf16.mxu0 0
        %5691 = vmatmul.mubr.bf16.gmra.mxu0 %v4436
        %v5692 = vpop.f32.mrf.mxu0
        %v5693 = vadd.f32 0.0, %v5692
        %v5694 = vpop.f32.mrf.mxu0
        %v5695 = vpop.f32.mrf.mxu0
        %v5696 = vadd.f32 0.0, %v5695
        %v5697 = vpop.f32.mrf.mxu0
        %5698 = vmatprep.mubr.bf16.mxu0 0
        %5699 = vmatmul.mubr.bf16.gmra.mxu0 %v4437
        %v5700 = vpop.f32.mrf.mxu0
        %v5701 = vadd.f32 0.0, %v5700
        %v5702 = vpop.f32.mrf.mxu0
        %v5703 = vpop.f32.mrf.mxu0
        %v5704 = vadd.f32 0.0, %v5703
        %v5705 = vpop.f32.mrf.mxu0
        %5706 = vmatprep.mubr.bf16.mxu0 0
        %5707 = vmatmul.mubr.bf16.gmra.mxu0 %v4438
        %v5708 = vpop.f32.mrf.mxu0
        %v5709 = vadd.f32 0.0, %v5708
        %v5710 = vpop.f32.mrf.mxu0
        %v5711 = vpop.f32.mrf.mxu0
        %v5712 = vadd.f32 0.0, %v5711
        %v5713 = vpop.f32.mrf.mxu0
        %5714 = vmatprep.mubr.bf16.mxu0 0
        %5715 = vmatmul.mubr.bf16.gmra.mxu0 %v4439
        %v5716 = vpop.f32.mrf.mxu0
        %v5717 = vadd.f32 0.0, %v5716
        %v5718 = vpop.f32.mrf.mxu0
        %v5719 = vpop.f32.mrf.mxu0
        %v5720 = vpop.f32.mrf.mxu0
        %5721 = vdwg.mxu0
        %v5722 = vpack.c.bf16 %v5680, %v5677
        %v5723 = vpack.c.bf16 %v5688, %v5685
        %v5724 = vpack.c.bf16 %v5696, %v5693
        %v5725 = vpack.c.bf16 %v5704, %v5701
        %v5726 = vpack.c.bf16 %v5712, %v5709
        %v5727 = vpack.c.bf16 %v5717, %v5717
        %v5729 = vsel %vm4847, %v5727, 0
        %5731 = vmatprep.subr.bf16.mxu0 0
        %5732 = vmatpush1.bf16.msra.mxu0 0
        %5733 = vmatprep.subr.bf16.mxu0 0
        %5734 = vmatpush1.bf16.msra.mxu0 0
        %5735 = vmatprep.subr.bf16.mxu0 0
        %5736 = vmatpush1.bf16.msra.mxu0 %v5729
        %5737 = vmatprep.subr.bf16.mxu0 0
        %5738 = vmatpush1.bf16.msra.mxu0 %v5726
        %5739 = vmatprep.subr.bf16.mxu0 0
        %5740 = vmatpush1.bf16.msra.mxu0 %v5725
        %5741 = vmatprep.subr.bf16.mxu0 0
        %5742 = vmatpush1.bf16.msra.mxu0 %v5724
        %5743 = vmatprep.subr.bf16.mxu0 0
        %5744 = vmatpush1.bf16.msra.mxu0 %v5723
        %5745 = vmatprep.subr.bf16.mxu0 0
        %5746 = vmatpush1.bf16.msra.mxu0 %v5722
        %5747 = vmatprep.subr.bf16.mxu0 0
        %5748 = vmatpush2.bf16.msra.mxu0 0
        %5749 = vmatprep.subr.bf16.mxu0 0
        %5750 = vmatpush2.bf16.msra.mxu0 0
        %5751 = vmatprep.subr.bf16.mxu0 0
        %5752 = vmatpush2.bf16.msra.mxu0 0
        %5753 = vmatprep.subr.bf16.mxu0 0
        %5754 = vmatpush2.bf16.msra.mxu0 0
        %5755 = vmatprep.subr.bf16.mxu0 0
        %5756 = vmatpush2.bf16.msra.mxu0 0
        %5757 = vmatprep.subr.bf16.mxu0 0
        %5758 = vmatpush2.bf16.msra.mxu0 0
        %5759 = vmatprep.subr.bf16.mxu0 0
        %5760 = vmatpush2.bf16.msra.mxu0 0
        %5761 = vmatprep.subr.bf16.mxu0 0
        %5762 = vmatpush2.bf16.msra.mxu0 0
        %5763 = vmatprep.mubr.bf16.mxu0 0
        %5764 = vmatmul.mubr.bf16.gmra.mxu0 %v5574
        %v5765 = vpop.f32.mrf.mxu0
        %v5766 = vadd.f32 0.0, %v5765
        %v5767 = vpop.f32.mrf.mxu0
        %v5768 = vpop.f32.mrf.mxu0
        %v5769 = vadd.f32 0.0, %v5768
        %v5770 = vpop.f32.mrf.mxu0
        %5771 = vmatprep.mubr.bf16.mxu0 0
        %5772 = vmatmul.mubr.bf16.gmra.mxu0 %v5577
        %v5773 = vpop.f32.mrf.mxu0
        %v5774 = vadd.f32 0.0, %v5773
        %v5775 = vpop.f32.mrf.mxu0
        %v5776 = vpop.f32.mrf.mxu0
        %v5777 = vadd.f32 0.0, %v5776
        %v5778 = vpop.f32.mrf.mxu0
        %5779 = vmatprep.mubr.bf16.mxu0 0
        %5780 = vmatmul.mubr.bf16.gmra.mxu0 %v5580
        %v5781 = vpop.f32.mrf.mxu0
        %v5782 = vadd.f32 0.0, %v5781
        %v5783 = vpop.f32.mrf.mxu0
        %v5784 = vpop.f32.mrf.mxu0
        %v5785 = vadd.f32 0.0, %v5784
        %v5786 = vpop.f32.mrf.mxu0
        %5787 = vdwg.mxu0
        %v5788 = vld [vmem:[#allocation13] sm:$0xf]
        %v5789 = vld [vmem:[#allocation13 + $0x4] sm:$0xf]
        %v5790 = vld [vmem:[#allocation13 + $0x8] sm:$0xf]
        %v5791 = vld [vmem:[#allocation13 + $0xc] sm:$0xf]
        %v5792 = vld [vmem:[#allocation13 + $0x10] sm:$0xf]
        %v5793 = vld [vmem:[#allocation13 + $0x14] sm:$0xf]
        %v5794 = vld [vmem:[#allocation13 + $0x18] sm:$0xf]
        %v5795 = vld [vmem:[#allocation13 + $0x1c] sm:$0xf]
        %v5796 = vld [vmem:[#allocation13 + $0x20] sm:$0xf]
        %v5797 = vld [vmem:[#allocation13 + $0x24] sm:$0xf]
        %v5798 = vld [vmem:[#allocation13 + $0x28] sm:$0xf]
        %v5799 = vld [vmem:[#allocation13 + $0x2c] sm:$0xf]
        %v5800 = vld [vmem:[#allocation13 + $0x30] sm:$0xf]
        %v5801 = vld [vmem:[#allocation13 + $0x34] sm:$0xf]
        %v5802 = vld [vmem:[#allocation13 + $0x38] sm:$0xf]
        %v5803 = vld [vmem:[#allocation13 + $0x3c] sm:$0xf]
        %v5804 = vld [vmem:[#allocation14] sm:$0xf]
        %v5805 = vld [vmem:[#allocation14 + $0x4] sm:$0xf]
        %v5806 = vld [vmem:[#allocation14 + $0x8] sm:$0xf]
        %v5807 = vld [vmem:[#allocation14 + $0xc] sm:$0xf]
        %v5808 = vld [vmem:[#allocation14 + $0x10] sm:$0xf]
        %v5809 = vpack.c.bf16 %v5623, %v5620
        %v5810 = vpack.c.bf16 %v5631, %v5628
        %v5811 = vpack.c.bf16 %v5639, %v5636
        %v5812 = vpack.c.bf16 %v5769, %v5766
        %v5813 = vpack.c.bf16 %v5777, %v5774
        %v5814 = vpack.c.bf16 %v5785, %v5782
        %v5815 = vmul.f32 %v5620, %v5620
        %v5816 = vmul.f32 %v5623, %v5623
        %v5817 = vmul.f32 %v5628, %v5628
        %v5818 = vmul.f32 %v5631, %v5631
        %v5819 = vmul.f32 %v5636, %v5636
        %v5820 = vmul.f32 %v5639, %v5639
        %v5821 = vmul.f32 %v5766, %v5766
        %v5822 = vmul.f32 %v5769, %v5769
        %v5823 = vmul.f32 %v5774, %v5774
        %v5824 = vmul.f32 %v5777, %v5777
        %v5825 = vmul.f32 %v5782, %v5782
        %v5826 = vmul.f32 %v5785, %v5785
        %v5827 = vmul.f32 %v5620, %v5766
        %v5828 = vmul.f32 %v5623, %v5769
        %v5829 = vmul.f32 %v5628, %v5774
        %v5830 = vmul.f32 %v5631, %v5777
        %v5831 = vmul.f32 %v5636, %v5782
        %v5832 = vmul.f32 %v5639, %v5785
        %v5833 = vpack.c.bf16 %v5816, %v5815
        %v5834 = vpack.c.bf16 %v5818, %v5817
        %v5835 = vpack.c.bf16 %v5820, %v5819
        %v5836 = vpack.c.bf16 %v5822, %v5821
        %v5837 = vpack.c.bf16 %v5824, %v5823
        %v5838 = vpack.c.bf16 %v5826, %v5825
        %v5839 = vpack.c.bf16 %v5828, %v5827
        %v5840 = vpack.c.bf16 %v5830, %v5829
        %v5841 = vpack.c.bf16 %v5832, %v5831
        %v5858 = vunpack.c.l.b16 %v5788
        %v5859 = vunpack.c.l.b16 %v5789
        %v5860 = vunpack.c.l.b16 %v5790
        %v5861 = vunpack.c.l.b16 %v5791
        %v5862 = vunpack.c.l.b16 %v5792
        %v5863 = vunpack.c.l.b16 %v5793
        %v5864 = vunpack.c.l.b16 %v5794
        %v5865 = vunpack.c.l.b16 %v5795
        %v5866 = vunpack.c.l.b16 %v5796
        %v5867 = vunpack.c.l.b16 %v5797
        %v5868 = vunpack.c.l.b16 %v5798
        %v5869 = vunpack.c.l.b16 %v5799
        %v5870 = vunpack.c.l.b16 %v5800
        %v5871 = vunpack.c.l.b16 %v5801
        %v5872 = vunpack.c.l.b16 %v5802
        %v5873 = vunpack.c.l.b16 %v5803
        %v5874 = vpack.c.b16 %v5859, %v5858
        %v5875 = vpack.c.b16 %v5861, %v5860
        %v5876 = vpack.c.b16 %v5863, %v5862
        %v5877 = vpack.c.b16 %v5865, %v5864
        %v5878 = vpack.c.b16 %v5867, %v5866
        %v5879 = vpack.c.b16 %v5869, %v5868
        %v5880 = vpack.c.b16 %v5871, %v5870
        %v5881 = vpack.c.b16 %v5873, %v5872
        %5890 = vmatprep.subr.bf16.mxu0 0
        %5891 = vmatpush1.bf16.msra.mxu0 %v5881
        %5892 = vmatprep.subr.bf16.mxu0 0
        %5893 = vmatpush1.bf16.msra.mxu0 %v5880
        %5894 = vmatprep.subr.bf16.mxu0 0
        %5895 = vmatpush1.bf16.msra.mxu0 %v5879
        %5896 = vmatprep.subr.bf16.mxu0 0
        %5897 = vmatpush1.bf16.msra.mxu0 %v5878
        %5898 = vmatprep.subr.bf16.mxu0 0
        %5899 = vmatpush1.bf16.msra.mxu0 %v5877
        %5900 = vmatprep.subr.bf16.mxu0 0
        %5901 = vmatpush1.bf16.msra.mxu0 %v5876
        %5902 = vmatprep.subr.bf16.mxu0 0
        %5903 = vmatpush1.bf16.msra.mxu0 %v5875
        %5904 = vmatprep.subr.bf16.mxu0 0
        %5905 = vmatpush1.bf16.msra.mxu0 %v5874
        %5906 = vmatprep.subr.bf16.mxu0 0
        %5907 = vmatpush2.bf16.msra.mxu0 0
        %5908 = vmatprep.subr.bf16.mxu0 0
        %5909 = vmatpush2.bf16.msra.mxu0 0
        %5910 = vmatprep.subr.bf16.mxu0 0
        %5911 = vmatpush2.bf16.msra.mxu0 0
        %5912 = vmatprep.subr.bf16.mxu0 0
        %5913 = vmatpush2.bf16.msra.mxu0 0
        %5914 = vmatprep.subr.bf16.mxu0 0
        %5915 = vmatpush2.bf16.msra.mxu0 0
        %5916 = vmatprep.subr.bf16.mxu0 0
        %5917 = vmatpush2.bf16.msra.mxu0 0
        %5918 = vmatprep.subr.bf16.mxu0 0
        %5919 = vmatpush2.bf16.msra.mxu0 0
        %5920 = vmatprep.subr.bf16.mxu0 0
        %5921 = vmatpush2.bf16.msra.mxu0 0
        %5922 = vmatprep.mubr.bf16.mxu0 0
        %5923 = vmatmul.mubr.bf16.gmra.mxu0 %v5809
        %v5924 = vpop.f32.mrf.mxu0
        %v5925 = vadd.f32 0.0, %v5924
        %v5926 = vpop.f32.mrf.mxu0
        %v5927 = vpop.f32.mrf.mxu0
        %v5928 = vadd.f32 0.0, %v5927
        %v5929 = vpop.f32.mrf.mxu0
        %5930 = vmatprep.mubr.bf16.mxu0 0
        %5931 = vmatmul.mubr.bf16.gmra.mxu0 %v5810
        %v5932 = vpop.f32.mrf.mxu0
        %v5933 = vadd.f32 0.0, %v5932
        %v5934 = vpop.f32.mrf.mxu0
        %v5935 = vpop.f32.mrf.mxu0
        %v5936 = vadd.f32 0.0, %v5935
        %v5937 = vpop.f32.mrf.mxu0
        %5938 = vmatprep.mubr.bf16.mxu0 0
        %5939 = vmatmul.mubr.bf16.gmra.mxu0 %v5811
        %v5940 = vpop.f32.mrf.mxu0
        %v5941 = vadd.f32 0.0, %v5940
        %v5942 = vpop.f32.mrf.mxu0
        %v5943 = vpop.f32.mrf.mxu0
        %v5944 = vadd.f32 0.0, %v5943
        %v5945 = vpop.f32.mrf.mxu0
        %5946 = vmatprep.mubr.bf16.mxu0 0
        %5947 = vmatmul.mubr.bf16.gmra.mxu0 %v5812
        %v5948 = vpop.f32.mrf.mxu0
        %v5949 = vadd.f32 0.0, %v5948
        %v5950 = vpop.f32.mrf.mxu0
        %v5951 = vpop.f32.mrf.mxu0
        %v5952 = vadd.f32 0.0, %v5951
        %v5953 = vpop.f32.mrf.mxu0
        %5954 = vmatprep.mubr.bf16.mxu0 0
        %5955 = vmatmul.mubr.bf16.gmra.mxu0 %v5813
        %v5956 = vpop.f32.mrf.mxu0
        %v5957 = vadd.f32 0.0, %v5956
        %v5958 = vpop.f32.mrf.mxu0
        %v5959 = vpop.f32.mrf.mxu0
        %v5960 = vadd.f32 0.0, %v5959
        %v5961 = vpop.f32.mrf.mxu0
        %5962 = vmatprep.mubr.bf16.mxu0 0
        %5963 = vmatmul.mubr.bf16.gmra.mxu0 %v5814
        %v5964 = vpop.f32.mrf.mxu0
        %v5965 = vadd.f32 0.0, %v5964
        %v5966 = vpop.f32.mrf.mxu0
        %v5967 = vpop.f32.mrf.mxu0
        %v5968 = vadd.f32 0.0, %v5967
        %v5969 = vpop.f32.mrf.mxu0
        %5970 = vmatprep.mubr.bf16.mxu0 0
        %5971 = vmatmul.mubr.bf16.gmra.mxu0 %v5833
        %v5972 = vpop.f32.mrf.mxu0
        %v5973 = vadd.f32 0.0, %v5972
        %v5974 = vpop.f32.mrf.mxu0
        %v5975 = vpop.f32.mrf.mxu0
        %v5976 = vadd.f32 0.0, %v5975
        %v5977 = vpop.f32.mrf.mxu0
        %5978 = vmatprep.mubr.bf16.mxu0 0
        %5979 = vmatmul.mubr.bf16.gmra.mxu0 %v5834
        %v5980 = vpop.f32.mrf.mxu0
        %v5981 = vadd.f32 0.0, %v5980
        %v5982 = vpop.f32.mrf.mxu0
        %v5983 = vpop.f32.mrf.mxu0
        %v5984 = vadd.f32 0.0, %v5983
        %v5985 = vpop.f32.mrf.mxu0
        %5986 = vmatprep.mubr.bf16.mxu0 0
        %5987 = vmatmul.mubr.bf16.gmra.mxu0 %v5835
        %v5988 = vpop.f32.mrf.mxu0
        %v5989 = vadd.f32 0.0, %v5988
        %v5990 = vpop.f32.mrf.mxu0
        %v5991 = vpop.f32.mrf.mxu0
        %v5992 = vadd.f32 0.0, %v5991
        %v5993 = vpop.f32.mrf.mxu0
        %5994 = vmatprep.mubr.bf16.mxu0 0
        %5995 = vmatmul.mubr.bf16.gmra.mxu0 %v5836
        %v5996 = vpop.f32.mrf.mxu0
        %v5997 = vadd.f32 0.0, %v5996
        %v5998 = vpop.f32.mrf.mxu0
        %v5999 = vpop.f32.mrf.mxu0
        %v6000 = vadd.f32 0.0, %v5999
        %v6001 = vpop.f32.mrf.mxu0
        %6002 = vmatprep.mubr.bf16.mxu0 0
        %6003 = vmatmul.mubr.bf16.gmra.mxu0 %v5837
        %v6004 = vpop.f32.mrf.mxu0
        %v6005 = vadd.f32 0.0, %v6004
        %v6006 = vpop.f32.mrf.mxu0
        %v6007 = vpop.f32.mrf.mxu0
        %v6008 = vadd.f32 0.0, %v6007
        %v6009 = vpop.f32.mrf.mxu0
        %6010 = vmatprep.mubr.bf16.mxu0 0
        %6011 = vmatmul.mubr.bf16.gmra.mxu0 %v5838
        %v6012 = vpop.f32.mrf.mxu0
        %v6013 = vadd.f32 0.0, %v6012
        %v6014 = vpop.f32.mrf.mxu0
        %v6015 = vpop.f32.mrf.mxu0
        %v6016 = vadd.f32 0.0, %v6015
        %v6017 = vpop.f32.mrf.mxu0
        %6018 = vmatprep.mubr.bf16.mxu0 0
        %6019 = vmatmul.mubr.bf16.gmra.mxu0 %v5839
        %v6020 = vpop.f32.mrf.mxu0
        %v6021 = vadd.f32 0.0, %v6020
        %v6022 = vpop.f32.mrf.mxu0
        %v6023 = vpop.f32.mrf.mxu0
        %v6024 = vadd.f32 0.0, %v6023
        %v6025 = vpop.f32.mrf.mxu0
        %6026 = vmatprep.mubr.bf16.mxu0 0
        %6027 = vmatmul.mubr.bf16.gmra.mxu0 %v5840
        %v6028 = vpop.f32.mrf.mxu0
        %v6029 = vadd.f32 0.0, %v6028
        %v6030 = vpop.f32.mrf.mxu0
        %v6031 = vpop.f32.mrf.mxu0
        %v6032 = vadd.f32 0.0, %v6031
        %v6033 = vpop.f32.mrf.mxu0
        %6034 = vmatprep.mubr.bf16.mxu0 0
        %6035 = vmatmul.mubr.bf16.gmra.mxu0 %v5841
        %v6036 = vpop.f32.mrf.mxu0
        %v6037 = vadd.f32 0.0, %v6036
        %v6038 = vpop.f32.mrf.mxu0
        %v6039 = vpop.f32.mrf.mxu0
        %v6040 = vadd.f32 0.0, %v6039
        %v6041 = vpop.f32.mrf.mxu0
        %6042 = vdwg.mxu0
        %v6043 = vpack.c.bf16 %v5928, %v5925
        %v6044 = vpack.c.bf16 %v5936, %v5933
        %v6045 = vpack.c.bf16 %v5944, %v5941
        %v6051 = vunpack.c.l.b16 %v5804
        %v6052 = vunpack.c.l.b16 %v5805
        %v6053 = vunpack.c.l.b16 %v5806
        %v6054 = vunpack.c.l.b16 %v5807
        %v6055 = vunpack.c.l.b16 %v5808
        %v6056 = vpack.c.b16 %v6052, %v6051
        %v6057 = vpack.c.b16 %v6054, %v6053
        %v6058 = vpack.c.b16 %v6055, %v6055
        %v6060 = vsel %vm1519, %v6056, 0
        %v6063 = vsel %vm1519, %v6057, 0
        %v6066 = vsel %vm1519, %v6058, 0
        %6068 = vmatprep.subr.bf16.mxu0 0
        %6069 = vmatpush1.bf16.msra.mxu0 0
        %6070 = vmatprep.subr.bf16.mxu0 0
        %6071 = vmatpush1.bf16.msra.mxu0 0
        %6072 = vmatprep.subr.bf16.mxu0 0
        %6073 = vmatpush1.bf16.msra.mxu0 0
        %6074 = vmatprep.subr.bf16.mxu0 0
        %6075 = vmatpush1.bf16.msra.mxu0 0
        %6076 = vmatprep.subr.bf16.mxu0 0
        %6077 = vmatpush1.bf16.msra.mxu0 0
        %6078 = vmatprep.subr.bf16.mxu0 0
        %6079 = vmatpush1.bf16.msra.mxu0 %v6045
        %6080 = vmatprep.subr.bf16.mxu0 0
        %6081 = vmatpush1.bf16.msra.mxu0 %v6044
        %6082 = vmatprep.subr.bf16.mxu0 0
        %6083 = vmatpush1.bf16.msra.mxu0 %v6043
        %6084 = vmatprep.subr.bf16.mxu0 0
        %6085 = vmatpush2.bf16.msra.mxu0 0
        %6086 = vmatprep.subr.bf16.mxu0 0
        %6087 = vmatpush2.bf16.msra.mxu0 0
        %6088 = vmatprep.subr.bf16.mxu0 0
        %6089 = vmatpush2.bf16.msra.mxu0 0
        %6090 = vmatprep.subr.bf16.mxu0 0
        %6091 = vmatpush2.bf16.msra.mxu0 0
        %6092 = vmatprep.subr.bf16.mxu0 0
        %6093 = vmatpush2.bf16.msra.mxu0 0
        %6094 = vmatprep.subr.bf16.mxu0 0
        %6095 = vmatpush2.bf16.msra.mxu0 0
        %6096 = vmatprep.subr.bf16.mxu0 0
        %6097 = vmatpush2.bf16.msra.mxu0 0
        %6098 = vmatprep.subr.bf16.mxu0 0
        %6099 = vmatpush2.bf16.msra.mxu0 0
        %6100 = vmatprep.mubr.bf16.mxu0 0
        %6101 = vmatmul.mubr.bf16.gmra.mxu0 %v6060
        %v6102 = vpop.f32.mrf.mxu0
        %v6103 = vadd.f32 0.0, %v6102
        %v6104 = vpop.f32.mrf.mxu0
        %v6105 = vpop.f32.mrf.mxu0
        %v6106 = vadd.f32 0.0, %v6105
        %v6107 = vpop.f32.mrf.mxu0
        %6108 = vmatprep.mubr.bf16.mxu0 0
        %6109 = vmatmul.mubr.bf16.gmra.mxu0 %v6063
        %v6110 = vpop.f32.mrf.mxu0
        %v6111 = vadd.f32 0.0, %v6110
        %v6112 = vpop.f32.mrf.mxu0
        %v6113 = vpop.f32.mrf.mxu0
        %v6114 = vadd.f32 0.0, %v6113
        %v6115 = vpop.f32.mrf.mxu0
        %6116 = vmatprep.mubr.bf16.mxu0 0
        %6117 = vmatmul.mubr.bf16.gmra.mxu0 %v6066
        %v6118 = vpop.f32.mrf.mxu0
        %v6119 = vadd.f32 0.0, %v6118
        %v6120 = vpop.f32.mrf.mxu0
        %v6121 = vpop.f32.mrf.mxu0
        %v6122 = vpop.f32.mrf.mxu0
        %6123 = vdwg.mxu0
        %v6124 = vpack.c.bf16 %v5952, %v5949
        %v6125 = vpack.c.bf16 %v5960, %v5957
        %v6126 = vpack.c.bf16 %v5968, %v5965
        %6127 = vmatprep.subr.bf16.mxu0 0
        %6128 = vmatpush1.bf16.msra.mxu0 0
        %6129 = vmatprep.subr.bf16.mxu0 0
        %6130 = vmatpush1.bf16.msra.mxu0 0
        %6131 = vmatprep.subr.bf16.mxu0 0
        %6132 = vmatpush1.bf16.msra.mxu0 0
        %6133 = vmatprep.subr.bf16.mxu0 0
        %6134 = vmatpush1.bf16.msra.mxu0 0
        %6135 = vmatprep.subr.bf16.mxu0 0
        %6136 = vmatpush1.bf16.msra.mxu0 0
        %6137 = vmatprep.subr.bf16.mxu0 0
        %6138 = vmatpush1.bf16.msra.mxu0 %v6126
        %6139 = vmatprep.subr.bf16.mxu0 0
        %6140 = vmatpush1.bf16.msra.mxu0 %v6125
        %6141 = vmatprep.subr.bf16.mxu0 0
        %6142 = vmatpush1.bf16.msra.mxu0 %v6124
        %6143 = vmatprep.subr.bf16.mxu0 0
        %6144 = vmatpush2.bf16.msra.mxu0 0
        %6145 = vmatprep.subr.bf16.mxu0 0
        %6146 = vmatpush2.bf16.msra.mxu0 0
        %6147 = vmatprep.subr.bf16.mxu0 0
        %6148 = vmatpush2.bf16.msra.mxu0 0
        %6149 = vmatprep.subr.bf16.mxu0 0
        %6150 = vmatpush2.bf16.msra.mxu0 0
        %6151 = vmatprep.subr.bf16.mxu0 0
        %6152 = vmatpush2.bf16.msra.mxu0 0
        %6153 = vmatprep.subr.bf16.mxu0 0
        %6154 = vmatpush2.bf16.msra.mxu0 0
        %6155 = vmatprep.subr.bf16.mxu0 0
        %6156 = vmatpush2.bf16.msra.mxu0 0
        %6157 = vmatprep.subr.bf16.mxu0 0
        %6158 = vmatpush2.bf16.msra.mxu0 0
        %6159 = vmatprep.mubr.bf16.mxu0 0
        %6160 = vmatmul.mubr.bf16.gmra.mxu0 %v6060
        %v6161 = vpop.f32.mrf.mxu0
        %v6162 = vadd.f32 0.0, %v6161
        %v6163 = vpop.f32.mrf.mxu0
        %v6164 = vpop.f32.mrf.mxu0
        %v6165 = vadd.f32 0.0, %v6164
        %v6166 = vpop.f32.mrf.mxu0
        %6167 = vmatprep.mubr.bf16.mxu0 0
        %6168 = vmatmul.mubr.bf16.gmra.mxu0 %v6063
        %v6169 = vpop.f32.mrf.mxu0
        %v6170 = vadd.f32 0.0, %v6169
        %v6171 = vpop.f32.mrf.mxu0
        %v6172 = vpop.f32.mrf.mxu0
        %v6173 = vadd.f32 0.0, %v6172
        %v6174 = vpop.f32.mrf.mxu0
        %6175 = vmatprep.mubr.bf16.mxu0 0
        %6176 = vmatmul.mubr.bf16.gmra.mxu0 %v6066
        %v6177 = vpop.f32.mrf.mxu0
        %v6178 = vadd.f32 0.0, %v6177
        %v6179 = vpop.f32.mrf.mxu0
        %v6180 = vpop.f32.mrf.mxu0
        %v6181 = vpop.f32.mrf.mxu0
        %6182 = vdwg.mxu0
        %v6183 = vpack.c.bf16 %v5976, %v5973
        %v6184 = vpack.c.bf16 %v5984, %v5981
        %v6185 = vpack.c.bf16 %v5992, %v5989
        %6186 = vmatprep.subr.bf16.mxu0 0
        %6187 = vmatpush1.bf16.msra.mxu0 0
        %6188 = vmatprep.subr.bf16.mxu0 0
        %6189 = vmatpush1.bf16.msra.mxu0 0
        %6190 = vmatprep.subr.bf16.mxu0 0
        %6191 = vmatpush1.bf16.msra.mxu0 0
        %6192 = vmatprep.subr.bf16.mxu0 0
        %6193 = vmatpush1.bf16.msra.mxu0 0
        %6194 = vmatprep.subr.bf16.mxu0 0
        %6195 = vmatpush1.bf16.msra.mxu0 0
        %6196 = vmatprep.subr.bf16.mxu0 0
        %6197 = vmatpush1.bf16.msra.mxu0 %v6185
        %6198 = vmatprep.subr.bf16.mxu0 0
        %6199 = vmatpush1.bf16.msra.mxu0 %v6184
        %6200 = vmatprep.subr.bf16.mxu0 0
        %6201 = vmatpush1.bf16.msra.mxu0 %v6183
        %6202 = vmatprep.subr.bf16.mxu0 0
        %6203 = vmatpush2.bf16.msra.mxu0 0
        %6204 = vmatprep.subr.bf16.mxu0 0
        %6205 = vmatpush2.bf16.msra.mxu0 0
        %6206 = vmatprep.subr.bf16.mxu0 0
        %6207 = vmatpush2.bf16.msra.mxu0 0
        %6208 = vmatprep.subr.bf16.mxu0 0
        %6209 = vmatpush2.bf16.msra.mxu0 0
        %6210 = vmatprep.subr.bf16.mxu0 0
        %6211 = vmatpush2.bf16.msra.mxu0 0
        %6212 = vmatprep.subr.bf16.mxu0 0
        %6213 = vmatpush2.bf16.msra.mxu0 0
        %6214 = vmatprep.subr.bf16.mxu0 0
        %6215 = vmatpush2.bf16.msra.mxu0 0
        %6216 = vmatprep.subr.bf16.mxu0 0
        %6217 = vmatpush2.bf16.msra.mxu0 0
        %6218 = vmatprep.mubr.bf16.mxu0 0
        %6219 = vmatmul.mubr.bf16.gmra.mxu0 %v6060
        %v6220 = vpop.f32.mrf.mxu0
        %v6221 = vadd.f32 0.0, %v6220
        %v6222 = vpop.f32.mrf.mxu0
        %v6223 = vpop.f32.mrf.mxu0
        %v6224 = vadd.f32 0.0, %v6223
        %v6225 = vpop.f32.mrf.mxu0
        %6226 = vmatprep.mubr.bf16.mxu0 0
        %6227 = vmatmul.mubr.bf16.gmra.mxu0 %v6063
        %v6228 = vpop.f32.mrf.mxu0
        %v6229 = vadd.f32 0.0, %v6228
        %v6230 = vpop.f32.mrf.mxu0
        %v6231 = vpop.f32.mrf.mxu0
        %v6232 = vadd.f32 0.0, %v6231
        %v6233 = vpop.f32.mrf.mxu0
        %6234 = vmatprep.mubr.bf16.mxu0 0
        %6235 = vmatmul.mubr.bf16.gmra.mxu0 %v6066
        %v6236 = vpop.f32.mrf.mxu0
        %v6237 = vadd.f32 0.0, %v6236
        %v6238 = vpop.f32.mrf.mxu0
        %v6239 = vpop.f32.mrf.mxu0
        %v6240 = vpop.f32.mrf.mxu0
        %6241 = vdwg.mxu0
        %v6242 = vpack.c.bf16 %v6000, %v5997
        %v6243 = vpack.c.bf16 %v6008, %v6005
        %v6244 = vpack.c.bf16 %v6016, %v6013
        %6245 = vmatprep.subr.bf16.mxu0 0
        %6246 = vmatpush1.bf16.msra.mxu0 0
        %6247 = vmatprep.subr.bf16.mxu0 0
        %6248 = vmatpush1.bf16.msra.mxu0 0
        %6249 = vmatprep.subr.bf16.mxu0 0
        %6250 = vmatpush1.bf16.msra.mxu0 0
        %6251 = vmatprep.subr.bf16.mxu0 0
        %6252 = vmatpush1.bf16.msra.mxu0 0
        %6253 = vmatprep.subr.bf16.mxu0 0
        %6254 = vmatpush1.bf16.msra.mxu0 0
        %6255 = vmatprep.subr.bf16.mxu0 0
        %6256 = vmatpush1.bf16.msra.mxu0 %v6244
        %6257 = vmatprep.subr.bf16.mxu0 0
        %6258 = vmatpush1.bf16.msra.mxu0 %v6243
        %6259 = vmatprep.subr.bf16.mxu0 0
        %6260 = vmatpush1.bf16.msra.mxu0 %v6242
        %6261 = vmatprep.subr.bf16.mxu0 0
        %6262 = vmatpush2.bf16.msra.mxu0 0
        %6263 = vmatprep.subr.bf16.mxu0 0
        %6264 = vmatpush2.bf16.msra.mxu0 0
        %6265 = vmatprep.subr.bf16.mxu0 0
        %6266 = vmatpush2.bf16.msra.mxu0 0
        %6267 = vmatprep.subr.bf16.mxu0 0
        %6268 = vmatpush2.bf16.msra.mxu0 0
        %6269 = vmatprep.subr.bf16.mxu0 0
        %6270 = vmatpush2.bf16.msra.mxu0 0
        %6271 = vmatprep.subr.bf16.mxu0 0
        %6272 = vmatpush2.bf16.msra.mxu0 0
        %6273 = vmatprep.subr.bf16.mxu0 0
        %6274 = vmatpush2.bf16.msra.mxu0 0
        %6275 = vmatprep.subr.bf16.mxu0 0
        %6276 = vmatpush2.bf16.msra.mxu0 0
        %6277 = vmatprep.mubr.bf16.mxu0 0
        %6278 = vmatmul.mubr.bf16.gmra.mxu0 %v6060
        %v6279 = vpop.f32.mrf.mxu0
        %v6280 = vadd.f32 0.0, %v6279
        %v6281 = vpop.f32.mrf.mxu0
        %v6282 = vpop.f32.mrf.mxu0
        %v6283 = vadd.f32 0.0, %v6282
        %v6284 = vpop.f32.mrf.mxu0
        %6285 = vmatprep.mubr.bf16.mxu0 0
        %6286 = vmatmul.mubr.bf16.gmra.mxu0 %v6063
        %v6287 = vpop.f32.mrf.mxu0
        %v6288 = vadd.f32 0.0, %v6287
        %v6289 = vpop.f32.mrf.mxu0
        %v6290 = vpop.f32.mrf.mxu0
        %v6291 = vadd.f32 0.0, %v6290
        %v6292 = vpop.f32.mrf.mxu0
        %6293 = vmatprep.mubr.bf16.mxu0 0
        %6294 = vmatmul.mubr.bf16.gmra.mxu0 %v6066
        %v6295 = vpop.f32.mrf.mxu0
        %v6296 = vadd.f32 0.0, %v6295
        %v6297 = vpop.f32.mrf.mxu0
        %v6298 = vpop.f32.mrf.mxu0
        %v6299 = vpop.f32.mrf.mxu0
        %6300 = vdwg.mxu0
        %v6301 = vpack.c.bf16 %v6024, %v6021
        %v6302 = vpack.c.bf16 %v6032, %v6029
        %v6303 = vpack.c.bf16 %v6040, %v6037
        %6304 = vmatprep.subr.bf16.mxu0 0
        %6305 = vmatpush1.bf16.msra.mxu0 0
        %6306 = vmatprep.subr.bf16.mxu0 0
        %6307 = vmatpush1.bf16.msra.mxu0 0
        %6308 = vmatprep.subr.bf16.mxu0 0
        %6309 = vmatpush1.bf16.msra.mxu0 0
        %6310 = vmatprep.subr.bf16.mxu0 0
        %6311 = vmatpush1.bf16.msra.mxu0 0
        %6312 = vmatprep.subr.bf16.mxu0 0
        %6313 = vmatpush1.bf16.msra.mxu0 0
        %6314 = vmatprep.subr.bf16.mxu0 0
        %6315 = vmatpush1.bf16.msra.mxu0 %v6303
        %6316 = vmatprep.subr.bf16.mxu0 0
        %6317 = vmatpush1.bf16.msra.mxu0 %v6302
        %6318 = vmatprep.subr.bf16.mxu0 0
        %6319 = vmatpush1.bf16.msra.mxu0 %v6301
        %6320 = vmatprep.subr.bf16.mxu0 0
        %6321 = vmatpush2.bf16.msra.mxu0 0
        %6322 = vmatprep.subr.bf16.mxu0 0
        %6323 = vmatpush2.bf16.msra.mxu0 0
        %6324 = vmatprep.subr.bf16.mxu0 0
        %6325 = vmatpush2.bf16.msra.mxu0 0
        %6326 = vmatprep.subr.bf16.mxu0 0
        %6327 = vmatpush2.bf16.msra.mxu0 0
        %6328 = vmatprep.subr.bf16.mxu0 0
        %6329 = vmatpush2.bf16.msra.mxu0 0
        %6330 = vmatprep.subr.bf16.mxu0 0
        %6331 = vmatpush2.bf16.msra.mxu0 0
        %6332 = vmatprep.subr.bf16.mxu0 0
        %6333 = vmatpush2.bf16.msra.mxu0 0
        %6334 = vmatprep.subr.bf16.mxu0 0
        %6335 = vmatpush2.bf16.msra.mxu0 0
        %6336 = vmatprep.mubr.bf16.mxu0 0
        %6337 = vmatmul.mubr.bf16.gmra.mxu0 %v6060
        %v6338 = vpop.f32.mrf.mxu0
        %v6339 = vadd.f32 0.0, %v6338
        %v6340 = vpop.f32.mrf.mxu0
        %v6341 = vpop.f32.mrf.mxu0
        %v6342 = vadd.f32 0.0, %v6341
        %v6343 = vpop.f32.mrf.mxu0
        %6344 = vmatprep.mubr.bf16.mxu0 0
        %6345 = vmatmul.mubr.bf16.gmra.mxu0 %v6063
        %v6346 = vpop.f32.mrf.mxu0
        %v6347 = vadd.f32 0.0, %v6346
        %v6348 = vpop.f32.mrf.mxu0
        %v6349 = vpop.f32.mrf.mxu0
        %v6350 = vadd.f32 0.0, %v6349
        %v6351 = vpop.f32.mrf.mxu0
        %6352 = vmatprep.mubr.bf16.mxu0 0
        %6353 = vmatmul.mubr.bf16.gmra.mxu0 %v6066
        %v6354 = vpop.f32.mrf.mxu0
        %v6355 = vadd.f32 0.0, %v6354
        %v6356 = vpop.f32.mrf.mxu0
        %v6357 = vpop.f32.mrf.mxu0
        %v6358 = vpop.f32.mrf.mxu0
        %6359 = vdwg.mxu0
        %v6360 = vmul.f32 %v6103, %v6103
        %v6361 = vmul.f32 %v6106, %v6106
        %v6362 = vmul.f32 %v6111, %v6111
        %v6363 = vmul.f32 %v6114, %v6114
        %v6364 = vmul.f32 %v6119, %v6119
        %v6365 = vmul.f32 %v6162, %v6162
        %v6366 = vmul.f32 %v6165, %v6165
        %v6367 = vmul.f32 %v6170, %v6170
        %v6368 = vmul.f32 %v6173, %v6173
        %v6369 = vmul.f32 %v6178, %v6178
        %v6370 = vmul.f32 %v6103, %v6162
        %v6371 = vmul.f32 %v6106, %v6165
        %v6372 = vmul.f32 %v6111, %v6170
        %v6373 = vmul.f32 %v6114, %v6173
        %v6374 = vmul.f32 %v6119, %v6178
        %v6375 = vsub.f32 %v6221, %v6360
        %v6376 = vsub.f32 %v6224, %v6361
        %v6377 = vsub.f32 %v6229, %v6362
        %v6378 = vsub.f32 %v6232, %v6363
        %v6379 = vsub.f32 %v6237, %v6364
        %v6380 = vsub.f32 %v6280, %v6365
        %v6381 = vsub.f32 %v6283, %v6366
        %v6382 = vsub.f32 %v6288, %v6367
        %v6383 = vsub.f32 %v6291, %v6368
        %v6384 = vsub.f32 %v6296, %v6369
        %v6385 = vsub.f32 %v6339, %v6370
        %v6386 = vsub.f32 %v6342, %v6371
        %v6387 = vsub.f32 %v6347, %v6372
        %v6388 = vsub.f32 %v6350, %v6373
        %v6389 = vsub.f32 %v6355, %v6374
        %v6390 = vmul.f32 %v6385, 2.0
        %v6391 = vmul.f32 %v6386, 2.0
        %v6392 = vmul.f32 %v6387, 2.0
        %v6393 = vmul.f32 %v6388, 2.0
        %v6394 = vmul.f32 %v6389, 2.0
        %v6395 = vadd.f32 %v6390, 0.0009
        %v6396 = vadd.f32 %v6391, 0.0009
        %v6397 = vadd.f32 %v6392, 0.0009
        %v6398 = vadd.f32 %v6393, 0.0009
        %v6399 = vadd.f32 %v6394, 0.0009
        %v6400 = vadd.f32 %v6375, %v6380
        %v6401 = vadd.f32 %v6376, %v6381
        %v6402 = vadd.f32 %v6377, %v6382
        %v6403 = vadd.f32 %v6378, %v6383
        %v6404 = vadd.f32 %v6379, %v6384
        %v6405 = vadd.f32 %v6400, 0.0009
        %v6406 = vadd.f32 %v6401, 0.0009
        %v6407 = vadd.f32 %v6402, 0.0009
        %v6408 = vadd.f32 %v6403, 0.0009
        %v6409 = vadd.f32 %v6404, 0.0009
        %v6410 = vrcp.pop %v6405
        %v6411 = vmul.f32 %v6395, %v6410
        %v6412 = vrcp.pop %v6406
        %v6413 = vmul.f32 %v6396, %v6412
        %v6414 = vrcp.pop %v6407
        %v6415 = vmul.f32 %v6397, %v6414
        %v6416 = vrcp.pop %v6408
        %v6417 = vmul.f32 %v6398, %v6416
        %v6418 = vrcp.pop %v6409
        %v6419 = vmul.f32 %v6399, %v6418
        %v6420 = vsub.f32 %v6411, 1.0
        %v6421 = vsub.f32 %v6413, 1.0
        %v6422 = vsub.f32 %v6415, 1.0
        %v6423 = vsub.f32 %v6417, 1.0
        %v6424 = vsub.f32 %v6419, 1.0
        %v6425 = vadd.f32 %v6420, %v6421
        %v6426 = vadd.f32 %v6425, %v6422
        %v6427 = vadd.f32 %v6426, %v6423
        %v6428 = vadd.f32 %v6427, %v6424
        %6429 = vadd.xlane.f32.xlu0 %v6428
        %v6430 = vpop.xlane.xlu0 %6429
        %v6431 = vrot.slane %v6430, 4
        %v6432 = vadd.f32 %v6430, %v6431
        %v6433 = vrot.slane %v6432, 2
        %v6434 = vadd.f32 %v6432, %v6433
        %v6435 = vrot.slane %v6434, 1
        %v6436 = vadd.f32 %v6434, %v6435
        %s6437 = vtos %v6436
        %s6438 = smul.f32 %s6437, 0.00086505193
        %s6439 = sadd.f32 %s6438, 1.0
        %v6440 = vld [vmem:[#allocation28] sm:$0xf]
        %v6441 = vld [vmem:[#allocation28 + $0x4] sm:$0xf]
        %v6442 = vld [vmem:[#allocation28 + $0x8] sm:$0xf]
        %v6443 = vld [vmem:[#allocation28 + $0xc] sm:$0xf]
        %v6444 = vld [vmem:[#allocation28 + $0x10] sm:$0xf]
        %v6445 = vld [vmem:[#allocation28 + $0x14] sm:$0xf]
        %v6446 = vld [vmem:[#allocation28 + $0x18] sm:$0xf]
        %v6447 = vld [vmem:[#allocation28 + $0x1c] sm:$0xf]
        %v6448 = vld [vmem:[#allocation28 + $0x20] sm:$0xf]
        %v6449 = vld [vmem:[#allocation28 + $0x24] sm:$0xf]
        %v6450 = vld [vmem:[#allocation28 + $0x28] sm:$0xf]
        %v6451 = vld [vmem:[#allocation28 + $0x2c] sm:$0xf]
        %v6452 = vld [vmem:[#allocation28 + $0x30] sm:$0xf]
        %v6453 = vld [vmem:[#allocation28 + $0x34] sm:$0xf]
        %v6454 = vld [vmem:[#allocation28 + $0x38] sm:$0xf]
        %v6455 = vld [vmem:[#allocation28 + $0x3c] sm:$0xf]
        %v6456 = vld [vmem:[#allocation29] sm:$0xf]
        %v6457 = vld [vmem:[#allocation29 + $0x4] sm:$0xf]
        %v6458 = vld [vmem:[#allocation29 + $0x8] sm:$0xf]
        %v6475 = vunpack.c.l.b16 %v6440
        %v6476 = vunpack.c.l.b16 %v6441
        %v6477 = vunpack.c.l.b16 %v6442
        %v6478 = vunpack.c.l.b16 %v6443
        %v6479 = vunpack.c.l.b16 %v6444
        %v6480 = vunpack.c.l.b16 %v6445
        %v6481 = vunpack.c.l.b16 %v6446
        %v6482 = vunpack.c.l.b16 %v6447
        %v6483 = vunpack.c.l.b16 %v6448
        %v6484 = vunpack.c.l.b16 %v6449
        %v6485 = vunpack.c.l.b16 %v6450
        %v6486 = vunpack.c.l.b16 %v6451
        %v6487 = vunpack.c.l.b16 %v6452
        %v6488 = vunpack.c.l.b16 %v6453
        %v6489 = vunpack.c.l.b16 %v6454
        %v6490 = vunpack.c.l.b16 %v6455
        %v6491 = vpack.c.b16 %v6476, %v6475
        %v6492 = vpack.c.b16 %v6478, %v6477
        %v6493 = vpack.c.b16 %v6480, %v6479
        %v6494 = vpack.c.b16 %v6482, %v6481
        %v6495 = vpack.c.b16 %v6484, %v6483
        %v6496 = vpack.c.b16 %v6486, %v6485
        %v6497 = vpack.c.b16 %v6488, %v6487
        %v6498 = vpack.c.b16 %v6490, %v6489
        %6507 = vmatprep.subr.bf16.mxu0 0
        %6508 = vmatpush1.bf16.msra.mxu0 %v6498
        %6509 = vmatprep.subr.bf16.mxu0 0
        %6510 = vmatpush1.bf16.msra.mxu0 %v6497
        %6511 = vmatprep.subr.bf16.mxu0 0
        %6512 = vmatpush1.bf16.msra.mxu0 %v6496
        %6513 = vmatprep.subr.bf16.mxu0 0
        %6514 = vmatpush1.bf16.msra.mxu0 %v6495
        %6515 = vmatprep.subr.bf16.mxu0 0
        %6516 = vmatpush1.bf16.msra.mxu0 %v6494
        %6517 = vmatprep.subr.bf16.mxu0 0
        %6518 = vmatpush1.bf16.msra.mxu0 %v6493
        %6519 = vmatprep.subr.bf16.mxu0 0
        %6520 = vmatpush1.bf16.msra.mxu0 %v6492
        %6521 = vmatprep.subr.bf16.mxu0 0
        %6522 = vmatpush1.bf16.msra.mxu0 %v6491
        %6523 = vmatprep.subr.bf16.mxu0 0
        %6524 = vmatpush2.bf16.msra.mxu0 0
        %6525 = vmatprep.subr.bf16.mxu0 0
        %6526 = vmatpush2.bf16.msra.mxu0 0
        %6527 = vmatprep.subr.bf16.mxu0 0
        %6528 = vmatpush2.bf16.msra.mxu0 0
        %6529 = vmatprep.subr.bf16.mxu0 0
        %6530 = vmatpush2.bf16.msra.mxu0 0
        %6531 = vmatprep.subr.bf16.mxu0 0
        %6532 = vmatpush2.bf16.msra.mxu0 0
        %6533 = vmatprep.subr.bf16.mxu0 0
        %6534 = vmatpush2.bf16.msra.mxu0 0
        %6535 = vmatprep.subr.bf16.mxu0 0
        %6536 = vmatpush2.bf16.msra.mxu0 0
        %6537 = vmatprep.subr.bf16.mxu0 0
        %6538 = vmatpush2.bf16.msra.mxu0 0
        %6539 = vmatprep.mubr.bf16.mxu0 0
        %6540 = vmatmul.mubr.bf16.gmra.mxu0 %v5809
        %v6541 = vpop.f32.mrf.mxu0
        %v6542 = vadd.f32 0.0, %v6541
        %v6543 = vpop.f32.mrf.mxu0
        %v6544 = vpop.f32.mrf.mxu0
        %v6545 = vadd.f32 0.0, %v6544
        %v6546 = vpop.f32.mrf.mxu0
        %6547 = vmatprep.mubr.bf16.mxu0 0
        %6548 = vmatmul.mubr.bf16.gmra.mxu0 %v5810
        %v6549 = vpop.f32.mrf.mxu0
        %v6550 = vadd.f32 0.0, %v6549
        %v6551 = vpop.f32.mrf.mxu0
        %v6552 = vpop.f32.mrf.mxu0
        %v6553 = vadd.f32 0.0, %v6552
        %v6554 = vpop.f32.mrf.mxu0
        %6555 = vmatprep.mubr.bf16.mxu0 0
        %6556 = vmatmul.mubr.bf16.gmra.mxu0 %v5811
        %v6557 = vpop.f32.mrf.mxu0
        %v6558 = vadd.f32 0.0, %v6557
        %v6559 = vpop.f32.mrf.mxu0
        %v6560 = vpop.f32.mrf.mxu0
        %v6561 = vadd.f32 0.0, %v6560
        %v6562 = vpop.f32.mrf.mxu0
        %6563 = vdwg.mxu0
        %v6564 = vpack.c.bf16 %v6545, %v6542
        %v6565 = vpack.c.bf16 %v6553, %v6550
        %v6566 = vpack.c.bf16 %v6561, %v6558
        %v6570 = vunpack.c.l.b16 %v6456
        %v6571 = vunpack.c.l.b16 %v6457
        %v6572 = vunpack.c.l.b16 %v6458
        %v6573 = vpack.c.b16 %v6571, %v6570
        %v6574 = vpack.c.b16 %v6572, %v6572
        %v6576 = vsel %vm1519, %v6573, 0
        %v6579 = vsel %vm1519, %v6574, 0
        %6581 = vmatprep.subr.bf16.mxu0 0
        %6582 = vmatpush1.bf16.msra.mxu0 0
        %6583 = vmatprep.subr.bf16.mxu0 0
        %6584 = vmatpush1.bf16.msra.mxu0 0
        %6585 = vmatprep.subr.bf16.mxu0 0
        %6586 = vmatpush1.bf16.msra.mxu0 0
        %6587 = vmatprep.subr.bf16.mxu0 0
        %6588 = vmatpush1.bf16.msra.mxu0 0
        %6589 = vmatprep.subr.bf16.mxu0 0
        %6590 = vmatpush1.bf16.msra.mxu0 0
        %6591 = vmatprep.subr.bf16.mxu0 0
        %6592 = vmatpush1.bf16.msra.mxu0 %v6566
        %6593 = vmatprep.subr.bf16.mxu0 0
        %6594 = vmatpush1.bf16.msra.mxu0 %v6565
        %6595 = vmatprep.subr.bf16.mxu0 0
        %6596 = vmatpush1.bf16.msra.mxu0 %v6564
        %6597 = vmatprep.subr.bf16.mxu0 0
        %6598 = vmatpush2.bf16.msra.mxu0 0
        %6599 = vmatprep.subr.bf16.mxu0 0
        %6600 = vmatpush2.bf16.msra.mxu0 0
        %6601 = vmatprep.subr.bf16.mxu0 0
        %6602 = vmatpush2.bf16.msra.mxu0 0
        %6603 = vmatprep.subr.bf16.mxu0 0
        %6604 = vmatpush2.bf16.msra.mxu0 0
        %6605 = vmatprep.subr.bf16.mxu0 0
        %6606 = vmatpush2.bf16.msra.mxu0 0
        %6607 = vmatprep.subr.bf16.mxu0 0
        %6608 = vmatpush2.bf16.msra.mxu0 0
        %6609 = vmatprep.subr.bf16.mxu0 0
        %6610 = vmatpush2.bf16.msra.mxu0 0
        %6611 = vmatprep.subr.bf16.mxu0 0
        %6612 = vmatpush2.bf16.msra.mxu0 0
        %6613 = vmatprep.mubr.bf16.mxu0 0
        %6614 = vmatmul.mubr.bf16.gmra.mxu0 %v6576
        %v6615 = vpop.f32.mrf.mxu0
        %v6616 = vadd.f32 0.0, %v6615
        %v6617 = vpop.f32.mrf.mxu0
        %v6618 = vpop.f32.mrf.mxu0
        %v6619 = vadd.f32 0.0, %v6618
        %v6620 = vpop.f32.mrf.mxu0
        %6621 = vmatprep.mubr.bf16.mxu0 0
        %6622 = vmatmul.mubr.bf16.gmra.mxu0 %v6579
        %v6623 = vpop.f32.mrf.mxu0
        %v6624 = vadd.f32 0.0, %v6623
        %v6625 = vpop.f32.mrf.mxu0
        %v6626 = vpop.f32.mrf.mxu0
        %v6627 = vpop.f32.mrf.mxu0
        %6628 = vdwg.mxu0
        %6629 = vmatprep.subr.bf16.mxu0 0
        %6630 = vmatpush1.bf16.msra.mxu0 %v6498
        %6631 = vmatprep.subr.bf16.mxu0 0
        %6632 = vmatpush1.bf16.msra.mxu0 %v6497
        %6633 = vmatprep.subr.bf16.mxu0 0
        %6634 = vmatpush1.bf16.msra.mxu0 %v6496
        %6635 = vmatprep.subr.bf16.mxu0 0
        %6636 = vmatpush1.bf16.msra.mxu0 %v6495
        %6637 = vmatprep.subr.bf16.mxu0 0
        %6638 = vmatpush1.bf16.msra.mxu0 %v6494
        %6639 = vmatprep.subr.bf16.mxu0 0
        %6640 = vmatpush1.bf16.msra.mxu0 %v6493
        %6641 = vmatprep.subr.bf16.mxu0 0
        %6642 = vmatpush1.bf16.msra.mxu0 %v6492
        %6643 = vmatprep.subr.bf16.mxu0 0
        %6644 = vmatpush1.bf16.msra.mxu0 %v6491
        %6645 = vmatprep.subr.bf16.mxu0 0
        %6646 = vmatpush2.bf16.msra.mxu0 0
        %6647 = vmatprep.subr.bf16.mxu0 0
        %6648 = vmatpush2.bf16.msra.mxu0 0
        %6649 = vmatprep.subr.bf16.mxu0 0
        %6650 = vmatpush2.bf16.msra.mxu0 0
        %6651 = vmatprep.subr.bf16.mxu0 0
        %6652 = vmatpush2.bf16.msra.mxu0 0
        %6653 = vmatprep.subr.bf16.mxu0 0
        %6654 = vmatpush2.bf16.msra.mxu0 0
        %6655 = vmatprep.subr.bf16.mxu0 0
        %6656 = vmatpush2.bf16.msra.mxu0 0
        %6657 = vmatprep.subr.bf16.mxu0 0
        %6658 = vmatpush2.bf16.msra.mxu0 0
        %6659 = vmatprep.subr.bf16.mxu0 0
        %6660 = vmatpush2.bf16.msra.mxu0 0
        %6661 = vmatprep.mubr.bf16.mxu0 0
        %6662 = vmatmul.mubr.bf16.gmra.mxu0 %v5812
        %v6663 = vpop.f32.mrf.mxu0
        %v6664 = vadd.f32 0.0, %v6663
        %v6665 = vpop.f32.mrf.mxu0
        %v6666 = vpop.f32.mrf.mxu0
        %v6667 = vadd.f32 0.0, %v6666
        %v6668 = vpop.f32.mrf.mxu0
        %6669 = vmatprep.mubr.bf16.mxu0 0
        %6670 = vmatmul.mubr.bf16.gmra.mxu0 %v5813
        %v6671 = vpop.f32.mrf.mxu0
        %v6672 = vadd.f32 0.0, %v6671
        %v6673 = vpop.f32.mrf.mxu0
        %v6674 = vpop.f32.mrf.mxu0
        %v6675 = vadd.f32 0.0, %v6674
        %v6676 = vpop.f32.mrf.mxu0
        %6677 = vmatprep.mubr.bf16.mxu0 0
        %6678 = vmatmul.mubr.bf16.gmra.mxu0 %v5814
        %v6679 = vpop.f32.mrf.mxu0
        %v6680 = vadd.f32 0.0, %v6679
        %v6681 = vpop.f32.mrf.mxu0
        %v6682 = vpop.f32.mrf.mxu0
        %v6683 = vadd.f32 0.0, %v6682
        %v6684 = vpop.f32.mrf.mxu0
        %6685 = vdwg.mxu0
        %v6686 = vpack.c.bf16 %v6667, %v6664
        %v6687 = vpack.c.bf16 %v6675, %v6672
        %v6688 = vpack.c.bf16 %v6683, %v6680
        %6689 = vmatprep.subr.bf16.mxu0 0
        %6690 = vmatpush1.bf16.msra.mxu0 0
        %6691 = vmatprep.subr.bf16.mxu0 0
        %6692 = vmatpush1.bf16.msra.mxu0 0
        %6693 = vmatprep.subr.bf16.mxu0 0
        %6694 = vmatpush1.bf16.msra.mxu0 0
        %6695 = vmatprep.subr.bf16.mxu0 0
        %6696 = vmatpush1.bf16.msra.mxu0 0
        %6697 = vmatprep.subr.bf16.mxu0 0
        %6698 = vmatpush1.bf16.msra.mxu0 0
        %6699 = vmatprep.subr.bf16.mxu0 0
        %6700 = vmatpush1.bf16.msra.mxu0 %v6688
        %6701 = vmatprep.subr.bf16.mxu0 0
        %6702 = vmatpush1.bf16.msra.mxu0 %v6687
        %6703 = vmatprep.subr.bf16.mxu0 0
        %6704 = vmatpush1.bf16.msra.mxu0 %v6686
        %6705 = vmatprep.subr.bf16.mxu0 0
        %6706 = vmatpush2.bf16.msra.mxu0 0
        %6707 = vmatprep.subr.bf16.mxu0 0
        %6708 = vmatpush2.bf16.msra.mxu0 0
        %6709 = vmatprep.subr.bf16.mxu0 0
        %6710 = vmatpush2.bf16.msra.mxu0 0
        %6711 = vmatprep.subr.bf16.mxu0 0
        %6712 = vmatpush2.bf16.msra.mxu0 0
        %6713 = vmatprep.subr.bf16.mxu0 0
        %6714 = vmatpush2.bf16.msra.mxu0 0
        %6715 = vmatprep.subr.bf16.mxu0 0
        %6716 = vmatpush2.bf16.msra.mxu0 0
        %6717 = vmatprep.subr.bf16.mxu0 0
        %6718 = vmatpush2.bf16.msra.mxu0 0
        %6719 = vmatprep.subr.bf16.mxu0 0
        %6720 = vmatpush2.bf16.msra.mxu0 0
        %6721 = vmatprep.mubr.bf16.mxu0 0
        %6722 = vmatmul.mubr.bf16.gmra.mxu0 %v6576
        %v6723 = vpop.f32.mrf.mxu0
        %v6724 = vadd.f32 0.0, %v6723
        %v6725 = vpop.f32.mrf.mxu0
        %v6726 = vpop.f32.mrf.mxu0
        %v6727 = vadd.f32 0.0, %v6726
        %v6728 = vpop.f32.mrf.mxu0
        %6729 = vmatprep.mubr.bf16.mxu0 0
        %6730 = vmatmul.mubr.bf16.gmra.mxu0 %v6579
        %v6731 = vpop.f32.mrf.mxu0
        %v6732 = vadd.f32 0.0, %v6731
        %v6733 = vpop.f32.mrf.mxu0
        %v6734 = vpop.f32.mrf.mxu0
        %v6735 = vpop.f32.mrf.mxu0
        %6736 = vdwg.mxu0
        %v6737 = vld [vmem:[#allocation16] sm:$0xf]
        %v6738 = vld [vmem:[#allocation16 + $0x4] sm:$0xf]
        %v6739 = vld [vmem:[#allocation16 + $0x8] sm:$0xf]
        %v6740 = vld [vmem:[#allocation16 + $0xc] sm:$0xf]
        %v6741 = vld [vmem:[#allocation16 + $0x10] sm:$0xf]
        %v6742 = vld [vmem:[#allocation16 + $0x14] sm:$0xf]
        %v6743 = vld [vmem:[#allocation16 + $0x18] sm:$0xf]
        %v6744 = vld [vmem:[#allocation16 + $0x1c] sm:$0xf]
        %v6745 = vld [vmem:[#allocation16 + $0x20] sm:$0xf]
        %v6746 = vld [vmem:[#allocation16 + $0x24] sm:$0xf]
        %v6747 = vld [vmem:[#allocation16 + $0x28] sm:$0xf]
        %v6748 = vld [vmem:[#allocation16 + $0x2c] sm:$0xf]
        %v6749 = vld [vmem:[#allocation16 + $0x30] sm:$0xf]
        %v6750 = vld [vmem:[#allocation16 + $0x34] sm:$0xf]
        %v6751 = vld [vmem:[#allocation16 + $0x38] sm:$0xf]
        %v6752 = vld [vmem:[#allocation16 + $0x3c] sm:$0xf]
        %v6753 = vld [vmem:[#allocation17] sm:$0xf]
        %v6754 = vld [vmem:[#allocation17 + $0x4] sm:$0xf]
        %v6755 = vpack.c.bf16 %v6619, %v6616
        %v6756 = vpack.c.bf16 %v6624, %v6624
        %v6757 = vpack.c.bf16 %v6727, %v6724
        %v6758 = vpack.c.bf16 %v6732, %v6732
        %v6759 = vmul.f32 %v6616, %v6616
        %v6760 = vmul.f32 %v6619, %v6619
        %v6761 = vmul.f32 %v6624, %v6624
        %v6762 = vmul.f32 %v6724, %v6724
        %v6763 = vmul.f32 %v6727, %v6727
        %v6764 = vmul.f32 %v6732, %v6732
        %v6765 = vmul.f32 %v6616, %v6724
        %v6766 = vmul.f32 %v6619, %v6727
        %v6767 = vmul.f32 %v6624, %v6732
        %v6768 = vpack.c.bf16 %v6724, %v6624
        %v6769 = vpack.c.bf16 %v6732, %v6727
        %v6770 = vpack.c.bf16 %v6760, %v6759
        %v6771 = vpack.c.bf16 %v6762, %v6761
        %v6772 = vpack.c.bf16 %v6764, %v6763
        %v6773 = vpack.c.bf16 %v6766, %v6765
        %v6774 = vpack.c.bf16 %v6767, %v6767
        %v6791 = vunpack.c.l.b16 %v6737
        %v6792 = vunpack.c.l.b16 %v6738
        %v6793 = vunpack.c.l.b16 %v6739
        %v6794 = vunpack.c.l.b16 %v6740
        %v6795 = vunpack.c.l.b16 %v6741
        %v6796 = vunpack.c.l.b16 %v6742
        %v6797 = vunpack.c.l.b16 %v6743
        %v6798 = vunpack.c.l.b16 %v6744
        %v6799 = vunpack.c.l.b16 %v6745
        %v6800 = vunpack.c.l.b16 %v6746
        %v6801 = vunpack.c.l.b16 %v6747
        %v6802 = vunpack.c.l.b16 %v6748
        %v6803 = vunpack.c.l.b16 %v6749
        %v6804 = vunpack.c.l.b16 %v6750
        %v6805 = vunpack.c.l.b16 %v6751
        %v6806 = vunpack.c.l.b16 %v6752
        %v6807 = vpack.c.b16 %v6792, %v6791
        %v6808 = vpack.c.b16 %v6794, %v6793
        %v6809 = vpack.c.b16 %v6796, %v6795
        %v6810 = vpack.c.b16 %v6798, %v6797
        %v6811 = vpack.c.b16 %v6800, %v6799
        %v6812 = vpack.c.b16 %v6802, %v6801
        %v6813 = vpack.c.b16 %v6804, %v6803
        %v6814 = vpack.c.b16 %v6806, %v6805
        %6823 = vmatprep.subr.bf16.mxu0 0
        %6824 = vmatpush1.bf16.msra.mxu0 %v6814
        %6825 = vmatprep.subr.bf16.mxu0 0
        %6826 = vmatpush1.bf16.msra.mxu0 %v6813
        %6827 = vmatprep.subr.bf16.mxu0 0
        %6828 = vmatpush1.bf16.msra.mxu0 %v6812
        %6829 = vmatprep.subr.bf16.mxu0 0
        %6830 = vmatpush1.bf16.msra.mxu0 %v6811
        %6831 = vmatprep.subr.bf16.mxu0 0
        %6832 = vmatpush1.bf16.msra.mxu0 %v6810
        %6833 = vmatprep.subr.bf16.mxu0 0
        %6834 = vmatpush1.bf16.msra.mxu0 %v6809
        %6835 = vmatprep.subr.bf16.mxu0 0
        %6836 = vmatpush1.bf16.msra.mxu0 %v6808
        %6837 = vmatprep.subr.bf16.mxu0 0
        %6838 = vmatpush1.bf16.msra.mxu0 %v6807
        %6839 = vmatprep.subr.bf16.mxu0 0
        %6840 = vmatpush2.bf16.msra.mxu0 0
        %6841 = vmatprep.subr.bf16.mxu0 0
        %6842 = vmatpush2.bf16.msra.mxu0 0
        %6843 = vmatprep.subr.bf16.mxu0 0
        %6844 = vmatpush2.bf16.msra.mxu0 0
        %6845 = vmatprep.subr.bf16.mxu0 0
        %6846 = vmatpush2.bf16.msra.mxu0 0
        %6847 = vmatprep.subr.bf16.mxu0 0
        %6848 = vmatpush2.bf16.msra.mxu0 0
        %6849 = vmatprep.subr.bf16.mxu0 0
        %6850 = vmatpush2.bf16.msra.mxu0 0
        %6851 = vmatprep.subr.bf16.mxu0 0
        %6852 = vmatpush2.bf16.msra.mxu0 0
        %6853 = vmatprep.subr.bf16.mxu0 0
        %6854 = vmatpush2.bf16.msra.mxu0 0
        %6855 = vmatprep.mubr.bf16.mxu0 0
        %6856 = vmatmul.mubr.bf16.gmra.mxu0 %v6755
        %v6857 = vpop.f32.mrf.mxu0
        %v6858 = vadd.f32 0.0, %v6857
        %v6859 = vpop.f32.mrf.mxu0
        %v6860 = vpop.f32.mrf.mxu0
        %v6861 = vadd.f32 0.0, %v6860
        %v6862 = vpop.f32.mrf.mxu0
        %6863 = vmatprep.mubr.bf16.mxu0 0
        %6864 = vmatmul.mubr.bf16.gmra.mxu0 %v6768
        %v6865 = vpop.f32.mrf.mxu0
        %v6866 = vadd.f32 0.0, %v6865
        %v6867 = vpop.f32.mrf.mxu0
        %v6868 = vpop.f32.mrf.mxu0
        %v6869 = vadd.f32 0.0, %v6868
        %v6870 = vpop.f32.mrf.mxu0
        %6871 = vmatprep.mubr.bf16.mxu0 0
        %6872 = vmatmul.mubr.bf16.gmra.mxu0 %v6769
        %v6873 = vpop.f32.mrf.mxu0
        %v6874 = vadd.f32 0.0, %v6873
        %v6875 = vpop.f32.mrf.mxu0
        %v6876 = vpop.f32.mrf.mxu0
        %v6877 = vadd.f32 0.0, %v6876
        %v6878 = vpop.f32.mrf.mxu0
        %6879 = vmatprep.mubr.bf16.mxu0 0
        %6880 = vmatmul.mubr.bf16.gmra.mxu0 %v6770
        %v6881 = vpop.f32.mrf.mxu0
        %v6882 = vadd.f32 0.0, %v6881
        %v6883 = vpop.f32.mrf.mxu0
        %v6884 = vpop.f32.mrf.mxu0
        %v6885 = vadd.f32 0.0, %v6884
        %v6886 = vpop.f32.mrf.mxu0
        %6887 = vmatprep.mubr.bf16.mxu0 0
        %6888 = vmatmul.mubr.bf16.gmra.mxu0 %v6771
        %v6889 = vpop.f32.mrf.mxu0
        %v6890 = vadd.f32 0.0, %v6889
        %v6891 = vpop.f32.mrf.mxu0
        %v6892 = vpop.f32.mrf.mxu0
        %v6893 = vadd.f32 0.0, %v6892
        %v6894 = vpop.f32.mrf.mxu0
        %6895 = vmatprep.mubr.bf16.mxu0 0
        %6896 = vmatmul.mubr.bf16.gmra.mxu0 %v6772
        %v6897 = vpop.f32.mrf.mxu0
        %v6898 = vadd.f32 0.0, %v6897
        %v6899 = vpop.f32.mrf.mxu0
        %v6900 = vpop.f32.mrf.mxu0
        %v6901 = vadd.f32 0.0, %v6900
        %v6902 = vpop.f32.mrf.mxu0
        %6903 = vmatprep.mubr.bf16.mxu0 0
        %6904 = vmatmul.mubr.bf16.gmra.mxu0 %v6773
        %v6905 = vpop.f32.mrf.mxu0
        %v6906 = vadd.f32 0.0, %v6905
        %v6907 = vpop.f32.mrf.mxu0
        %v6908 = vpop.f32.mrf.mxu0
        %v6909 = vadd.f32 0.0, %v6908
        %v6910 = vpop.f32.mrf.mxu0
        %6911 = vmatprep.mubr.bf16.mxu0 0
        %6912 = vmatmul.mubr.bf16.gmra.mxu0 %v6774
        %v6913 = vpop.f32.mrf.mxu0
        %v6914 = vadd.f32 0.0, %v6913
        %v6915 = vpop.f32.mrf.mxu0
        %v6916 = vpop.f32.mrf.mxu0
        %v6917 = vpop.f32.mrf.mxu0
        %6918 = vdwg.mxu0
        %v6919 = vpack.c.bf16 %v6861, %v6858
        %v6920 = vpack.c.bf16 %v6866, %v6866
        %v6923 = vunpack.c.l.b16 %v6753
        %v6924 = vunpack.c.l.b16 %v6754
        %v6925 = vpack.c.b16 %v6924, %v6923
        %vm6926 = vcmask 195584
        %v6928 = vsel %vm6926, %v6925, 0
        %v6931 = vsel %vm4847, %v6920, 0
        %6933 = vmatprep.subr.bf16.mxu0 0
        %6934 = vmatpush1.bf16.msra.mxu0 0
        %6935 = vmatprep.subr.bf16.mxu0 0
        %6936 = vmatpush1.bf16.msra.mxu0 0
        %6937 = vmatprep.subr.bf16.mxu0 0
        %6938 = vmatpush1.bf16.msra.mxu0 0
        %6939 = vmatprep.subr.bf16.mxu0 0
        %6940 = vmatpush1.bf16.msra.mxu0 0
        %6941 = vmatprep.subr.bf16.mxu0 0
        %6942 = vmatpush1.bf16.msra.mxu0 0
        %6943 = vmatprep.subr.bf16.mxu0 0
        %6944 = vmatpush1.bf16.msra.mxu0 0
        %6945 = vmatprep.subr.bf16.mxu0 0
        %6946 = vmatpush1.bf16.msra.mxu0 %v6931
        %6947 = vmatprep.subr.bf16.mxu0 0
        %6948 = vmatpush1.bf16.msra.mxu0 %v6919
        %6949 = vmatprep.subr.bf16.mxu0 0
        %6950 = vmatpush2.bf16.msra.mxu0 0
        %6951 = vmatprep.subr.bf16.mxu0 0
        %6952 = vmatpush2.bf16.msra.mxu0 0
        %6953 = vmatprep.subr.bf16.mxu0 0
        %6954 = vmatpush2.bf16.msra.mxu0 0
        %6955 = vmatprep.subr.bf16.mxu0 0
        %6956 = vmatpush2.bf16.msra.mxu0 0
        %6957 = vmatprep.subr.bf16.mxu0 0
        %6958 = vmatpush2.bf16.msra.mxu0 0
        %6959 = vmatprep.subr.bf16.mxu0 0
        %6960 = vmatpush2.bf16.msra.mxu0 0
        %6961 = vmatprep.subr.bf16.mxu0 0
        %6962 = vmatpush2.bf16.msra.mxu0 0
        %6963 = vmatprep.subr.bf16.mxu0 0
        %6964 = vmatpush2.bf16.msra.mxu0 0
        %6965 = vmatprep.mubr.bf16.mxu0 0
        %6966 = vmatmul.mubr.bf16.gmra.mxu0 %v6928
        %v6967 = vpop.f32.mrf.mxu0
        %v6968 = vadd.f32 0.0, %v6967
        %v6969 = vpop.f32.mrf.mxu0
        %v6970 = vpop.f32.mrf.mxu0
        %v6971 = vadd.f32 0.0, %v6970
        %v6972 = vpop.f32.mrf.mxu0
        %6973 = vdwg.mxu0
        %v6974 = vpack.c.bf16 %v6874, %v6869
        %v6975 = vpack.c.bf16 %v6877, %v6877
        %v6977 = vsel %vm4847, %v6975, 0
        %6979 = vmatprep.subr.bf16.mxu0 0
        %6980 = vmatpush1.bf16.msra.mxu0 0
        %6981 = vmatprep.subr.bf16.mxu0 0
        %6982 = vmatpush1.bf16.msra.mxu0 0
        %6983 = vmatprep.subr.bf16.mxu0 0
        %6984 = vmatpush1.bf16.msra.mxu0 0
        %6985 = vmatprep.subr.bf16.mxu0 0
        %6986 = vmatpush1.bf16.msra.mxu0 0
        %6987 = vmatprep.subr.bf16.mxu0 0
        %6988 = vmatpush1.bf16.msra.mxu0 0
        %6989 = vmatprep.subr.bf16.mxu0 0
        %6990 = vmatpush1.bf16.msra.mxu0 0
        %6991 = vmatprep.subr.bf16.mxu0 0
        %6992 = vmatpush1.bf16.msra.mxu0 %v6977
        %6993 = vmatprep.subr.bf16.mxu0 0
        %6994 = vmatpush1.bf16.msra.mxu0 %v6974
        %6995 = vmatprep.subr.bf16.mxu0 0
        %6996 = vmatpush2.bf16.msra.mxu0 0
        %6997 = vmatprep.subr.bf16.mxu0 0
        %6998 = vmatpush2.bf16.msra.mxu0 0
        %6999 = vmatprep.subr.bf16.mxu0 0
        %7000 = vmatpush2.bf16.msra.mxu0 0
        %7001 = vmatprep.subr.bf16.mxu0 0
        %7002 = vmatpush2.bf16.msra.mxu0 0
        %7003 = vmatprep.subr.bf16.mxu0 0
        %7004 = vmatpush2.bf16.msra.mxu0 0
        %7005 = vmatprep.subr.bf16.mxu0 0
        %7006 = vmatpush2.bf16.msra.mxu0 0
        %7007 = vmatprep.subr.bf16.mxu0 0
        %7008 = vmatpush2.bf16.msra.mxu0 0
        %7009 = vmatprep.subr.bf16.mxu0 0
        %7010 = vmatpush2.bf16.msra.mxu0 0
        %7011 = vmatprep.mubr.bf16.mxu0 0
        %7012 = vmatmul.mubr.bf16.gmra.mxu0 %v6928
        %v7013 = vpop.f32.mrf.mxu0
        %v7014 = vadd.f32 0.0, %v7013
        %v7015 = vpop.f32.mrf.mxu0
        %v7016 = vpop.f32.mrf.mxu0
        %v7017 = vadd.f32 0.0, %v7016
        %v7018 = vpop.f32.mrf.mxu0
        %7019 = vdwg.mxu0
        %v7020 = vpack.c.bf16 %v6885, %v6882
        %v7021 = vpack.c.bf16 %v6890, %v6890
        %v7023 = vsel %vm4847, %v7021, 0
        %7025 = vmatprep.subr.bf16.mxu0 0
        %7026 = vmatpush1.bf16.msra.mxu0 0
        %7027 = vmatprep.subr.bf16.mxu0 0
        %7028 = vmatpush1.bf16.msra.mxu0 0
        %7029 = vmatprep.subr.bf16.mxu0 0
        %7030 = vmatpush1.bf16.msra.mxu0 0
        %7031 = vmatprep.subr.bf16.mxu0 0
        %7032 = vmatpush1.bf16.msra.mxu0 0
        %7033 = vmatprep.subr.bf16.mxu0 0
        %7034 = vmatpush1.bf16.msra.mxu0 0
        %7035 = vmatprep.subr.bf16.mxu0 0
        %7036 = vmatpush1.bf16.msra.mxu0 0
        %7037 = vmatprep.subr.bf16.mxu0 0
        %7038 = vmatpush1.bf16.msra.mxu0 %v7023
        %7039 = vmatprep.subr.bf16.mxu0 0
        %7040 = vmatpush1.bf16.msra.mxu0 %v7020
        %7041 = vmatprep.subr.bf16.mxu0 0
        %7042 = vmatpush2.bf16.msra.mxu0 0
        %7043 = vmatprep.subr.bf16.mxu0 0
        %7044 = vmatpush2.bf16.msra.mxu0 0
        %7045 = vmatprep.subr.bf16.mxu0 0
        %7046 = vmatpush2.bf16.msra.mxu0 0
        %7047 = vmatprep.subr.bf16.mxu0 0
        %7048 = vmatpush2.bf16.msra.mxu0 0
        %7049 = vmatprep.subr.bf16.mxu0 0
        %7050 = vmatpush2.bf16.msra.mxu0 0
        %7051 = vmatprep.subr.bf16.mxu0 0
        %7052 = vmatpush2.bf16.msra.mxu0 0
        %7053 = vmatprep.subr.bf16.mxu0 0
        %7054 = vmatpush2.bf16.msra.mxu0 0
        %7055 = vmatprep.subr.bf16.mxu0 0
        %7056 = vmatpush2.bf16.msra.mxu0 0
        %7057 = vmatprep.mubr.bf16.mxu0 0
        %7058 = vmatmul.mubr.bf16.gmra.mxu0 %v6928
        %v7059 = vpop.f32.mrf.mxu0
        %v7060 = vadd.f32 0.0, %v7059
        %v7061 = vpop.f32.mrf.mxu0
        %v7062 = vpop.f32.mrf.mxu0
        %v7063 = vadd.f32 0.0, %v7062
        %v7064 = vpop.f32.mrf.mxu0
        %7065 = vdwg.mxu0
        %v7066 = vpack.c.bf16 %v6898, %v6893
        %v7067 = vpack.c.bf16 %v6901, %v6901
        %v7069 = vsel %vm4847, %v7067, 0
        %7071 = vmatprep.subr.bf16.mxu0 0
        %7072 = vmatpush1.bf16.msra.mxu0 0
        %7073 = vmatprep.subr.bf16.mxu0 0
        %7074 = vmatpush1.bf16.msra.mxu0 0
        %7075 = vmatprep.subr.bf16.mxu0 0
        %7076 = vmatpush1.bf16.msra.mxu0 0
        %7077 = vmatprep.subr.bf16.mxu0 0
        %7078 = vmatpush1.bf16.msra.mxu0 0
        %7079 = vmatprep.subr.bf16.mxu0 0
        %7080 = vmatpush1.bf16.msra.mxu0 0
        %7081 = vmatprep.subr.bf16.mxu0 0
        %7082 = vmatpush1.bf16.msra.mxu0 0
        %7083 = vmatprep.subr.bf16.mxu0 0
        %7084 = vmatpush1.bf16.msra.mxu0 %v7069
        %7085 = vmatprep.subr.bf16.mxu0 0
        %7086 = vmatpush1.bf16.msra.mxu0 %v7066
        %7087 = vmatprep.subr.bf16.mxu0 0
        %7088 = vmatpush2.bf16.msra.mxu0 0
        %7089 = vmatprep.subr.bf16.mxu0 0
        %7090 = vmatpush2.bf16.msra.mxu0 0
        %7091 = vmatprep.subr.bf16.mxu0 0
        %7092 = vmatpush2.bf16.msra.mxu0 0
        %7093 = vmatprep.subr.bf16.mxu0 0
        %7094 = vmatpush2.bf16.msra.mxu0 0
        %7095 = vmatprep.subr.bf16.mxu0 0
        %7096 = vmatpush2.bf16.msra.mxu0 0
        %7097 = vmatprep.subr.bf16.mxu0 0
        %7098 = vmatpush2.bf16.msra.mxu0 0
        %7099 = vmatprep.subr.bf16.mxu0 0
        %7100 = vmatpush2.bf16.msra.mxu0 0
        %7101 = vmatprep.subr.bf16.mxu0 0
        %7102 = vmatpush2.bf16.msra.mxu0 0
        %7103 = vmatprep.mubr.bf16.mxu0 0
        %7104 = vmatmul.mubr.bf16.gmra.mxu0 %v6928
        %v7105 = vpop.f32.mrf.mxu0
        %v7106 = vadd.f32 0.0, %v7105
        %v7107 = vpop.f32.mrf.mxu0
        %v7108 = vpop.f32.mrf.mxu0
        %v7109 = vadd.f32 0.0, %v7108
        %v7110 = vpop.f32.mrf.mxu0
        %7111 = vdwg.mxu0
        %v7112 = vpack.c.bf16 %v6909, %v6906
        %v7113 = vpack.c.bf16 %v6914, %v6914
        %v7115 = vsel %vm4847, %v7113, 0
        %7117 = vmatprep.subr.bf16.mxu0 0
        %7118 = vmatpush1.bf16.msra.mxu0 0
        %7119 = vmatprep.subr.bf16.mxu0 0
        %7120 = vmatpush1.bf16.msra.mxu0 0
        %7121 = vmatprep.subr.bf16.mxu0 0
        %7122 = vmatpush1.bf16.msra.mxu0 0
        %7123 = vmatprep.subr.bf16.mxu0 0
        %7124 = vmatpush1.bf16.msra.mxu0 0
        %7125 = vmatprep.subr.bf16.mxu0 0
        %7126 = vmatpush1.bf16.msra.mxu0 0
        %7127 = vmatprep.subr.bf16.mxu0 0
        %7128 = vmatpush1.bf16.msra.mxu0 0
        %7129 = vmatprep.subr.bf16.mxu0 0
        %7130 = vmatpush1.bf16.msra.mxu0 %v7115
        %7131 = vmatprep.subr.bf16.mxu0 0
        %7132 = vmatpush1.bf16.msra.mxu0 %v7112
        %7133 = vmatprep.subr.bf16.mxu0 0
        %7134 = vmatpush2.bf16.msra.mxu0 0
        %7135 = vmatprep.subr.bf16.mxu0 0
        %7136 = vmatpush2.bf16.msra.mxu0 0
        %7137 = vmatprep.subr.bf16.mxu0 0
        %7138 = vmatpush2.bf16.msra.mxu0 0
        %7139 = vmatprep.subr.bf16.mxu0 0
        %7140 = vmatpush2.bf16.msra.mxu0 0
        %7141 = vmatprep.subr.bf16.mxu0 0
        %7142 = vmatpush2.bf16.msra.mxu0 0
        %7143 = vmatprep.subr.bf16.mxu0 0
        %7144 = vmatpush2.bf16.msra.mxu0 0
        %7145 = vmatprep.subr.bf16.mxu0 0
        %7146 = vmatpush2.bf16.msra.mxu0 0
        %7147 = vmatprep.subr.bf16.mxu0 0
        %7148 = vmatpush2.bf16.msra.mxu0 0
        %7149 = vmatprep.mubr.bf16.mxu0 0
        %7150 = vmatmul.mubr.bf16.gmra.mxu0 %v6928
        %v7151 = vpop.f32.mrf.mxu0
        %v7152 = vadd.f32 0.0, %v7151
        %v7153 = vpop.f32.mrf.mxu0
        %v7154 = vpop.f32.mrf.mxu0
        %v7155 = vadd.f32 0.0, %v7154
        %v7156 = vpop.f32.mrf.mxu0
        %7157 = vdwg.mxu0
        %v7158 = vmul.f32 %v6968, %v6968
        %v7159 = vmul.f32 %v6971, %v6971
        %v7160 = vmul.f32 %v7014, %v7014
        %v7161 = vmul.f32 %v7017, %v7017
        %v7162 = vmul.f32 %v6968, %v7014
        %v7163 = vmul.f32 %v6971, %v7017
        %v7164 = vsub.f32 %v7060, %v7158
        %v7165 = vsub.f32 %v7063, %v7159
        %v7166 = vsub.f32 %v7106, %v7160
        %v7167 = vsub.f32 %v7109, %v7161
        %v7168 = vsub.f32 %v7152, %v7162
        %v7169 = vsub.f32 %v7155, %v7163
        %v7170 = vmul.f32 %v7168, 2.0
        %v7171 = vmul.f32 %v7169, 2.0
        %v7172 = vadd.f32 %v7170, 0.0009
        %v7173 = vadd.f32 %v7171, 0.0009
        %v7174 = vadd.f32 %v7164, %v7166
        %v7175 = vadd.f32 %v7165, %v7167
        %v7176 = vadd.f32 %v7174, 0.0009
        %v7177 = vadd.f32 %v7175, 0.0009
        %v7178 = vrcp.pop %v7176
        %v7179 = vmul.f32 %v7172, %v7178
        %v7180 = vrcp.pop %v7177
        %v7181 = vmul.f32 %v7173, %v7180
        %v7182 = vsub.f32 %v7179, 1.0
        %v7183 = vsub.f32 %v7181, 1.0
        %v7184 = vadd.f32 %v7182, %v7183
        %7185 = vadd.xlane.f32.xlu0 %v7184
        %v7186 = vpop.xlane.xlu0 %7185
        %v7187 = vrot.slane %v7186, 4
        %v7188 = vadd.f32 %v7186, %v7187
        %v7189 = vrot.slane %v7188, 2
        %v7190 = vadd.f32 %v7188, %v7189
        %v7191 = vrot.slane %v7190, 1
        %v7192 = vadd.f32 %v7190, %v7191
        %s7193 = vtos %v7192
        %s7194 = smul.f32 %s7193, 0.0069444445
        %s7195 = sadd.f32 %s7194, 1.0
        %v7196 = vld [vmem:[#allocation31] sm:$0xf]
        %v7197 = vld [vmem:[#allocation31 + $0x4] sm:$0xf]
        %v7198 = vld [vmem:[#allocation31 + $0x8] sm:$0xf]
        %v7199 = vld [vmem:[#allocation31 + $0xc] sm:$0xf]
        %v7200 = vld [vmem:[#allocation31 + $0x10] sm:$0xf]
        %v7201 = vld [vmem:[#allocation31 + $0x14] sm:$0xf]
        %v7202 = vld [vmem:[#allocation31 + $0x18] sm:$0xf]
        %v7203 = vld [vmem:[#allocation31 + $0x1c] sm:$0xf]
        %v7204 = vld [vmem:[#allocation31 + $0x20] sm:$0xf]
        %v7205 = vld [vmem:[#allocation31 + $0x24] sm:$0xf]
        %v7206 = vld [vmem:[#allocation31 + $0x28] sm:$0xf]
        %v7207 = vld [vmem:[#allocation31 + $0x2c] sm:$0xf]
        %v7208 = vld [vmem:[#allocation31 + $0x30] sm:$0xf]
        %v7209 = vld [vmem:[#allocation31 + $0x34] sm:$0xf]
        %v7210 = vld [vmem:[#allocation31 + $0x38] sm:$0xf]
        %v7211 = vld [vmem:[#allocation31 + $0x3c] sm:$0xf]
        %v7212 = vld [vmem:[#allocation32] sm:$0xf]
        %v7213 = vld [vmem:[#allocation32 + $0x4] sm:$0xf]
        %v7230 = vunpack.c.l.b16 %v7196
        %v7231 = vunpack.c.l.b16 %v7197
        %v7232 = vunpack.c.l.b16 %v7198
        %v7233 = vunpack.c.l.b16 %v7199
        %v7234 = vunpack.c.l.b16 %v7200
        %v7235 = vunpack.c.l.b16 %v7201
        %v7236 = vunpack.c.l.b16 %v7202
        %v7237 = vunpack.c.l.b16 %v7203
        %v7238 = vunpack.c.l.b16 %v7204
        %v7239 = vunpack.c.l.b16 %v7205
        %v7240 = vunpack.c.l.b16 %v7206
        %v7241 = vunpack.c.l.b16 %v7207
        %v7242 = vunpack.c.l.b16 %v7208
        %v7243 = vunpack.c.l.b16 %v7209
        %v7244 = vunpack.c.l.b16 %v7210
        %v7245 = vunpack.c.l.b16 %v7211
        %v7246 = vpack.c.b16 %v7231, %v7230
        %v7247 = vpack.c.b16 %v7233, %v7232
        %v7248 = vpack.c.b16 %v7235, %v7234
        %v7249 = vpack.c.b16 %v7237, %v7236
        %v7250 = vpack.c.b16 %v7239, %v7238
        %v7251 = vpack.c.b16 %v7241, %v7240
        %v7252 = vpack.c.b16 %v7243, %v7242
        %v7253 = vpack.c.b16 %v7245, %v7244
        %7262 = vmatprep.subr.bf16.mxu0 0
        %7263 = vmatpush1.bf16.msra.mxu0 %v7253
        %7264 = vmatprep.subr.bf16.mxu0 0
        %7265 = vmatpush1.bf16.msra.mxu0 %v7252
        %7266 = vmatprep.subr.bf16.mxu0 0
        %7267 = vmatpush1.bf16.msra.mxu0 %v7251
        %7268 = vmatprep.subr.bf16.mxu0 0
        %7269 = vmatpush1.bf16.msra.mxu0 %v7250
        %7270 = vmatprep.subr.bf16.mxu0 0
        %7271 = vmatpush1.bf16.msra.mxu0 %v7249
        %7272 = vmatprep.subr.bf16.mxu0 0
        %7273 = vmatpush1.bf16.msra.mxu0 %v7248
        %7274 = vmatprep.subr.bf16.mxu0 0
        %7275 = vmatpush1.bf16.msra.mxu0 %v7247
        %7276 = vmatprep.subr.bf16.mxu0 0
        %7277 = vmatpush1.bf16.msra.mxu0 %v7246
        %7278 = vmatprep.subr.bf16.mxu0 0
        %7279 = vmatpush2.bf16.msra.mxu0 0
        %7280 = vmatprep.subr.bf16.mxu0 0
        %7281 = vmatpush2.bf16.msra.mxu0 0
        %7282 = vmatprep.subr.bf16.mxu0 0
        %7283 = vmatpush2.bf16.msra.mxu0 0
        %7284 = vmatprep.subr.bf16.mxu0 0
        %7285 = vmatpush2.bf16.msra.mxu0 0
        %7286 = vmatprep.subr.bf16.mxu0 0
        %7287 = vmatpush2.bf16.msra.mxu0 0
        %7288 = vmatprep.subr.bf16.mxu0 0
        %7289 = vmatpush2.bf16.msra.mxu0 0
        %7290 = vmatprep.subr.bf16.mxu0 0
        %7291 = vmatpush2.bf16.msra.mxu0 0
        %7292 = vmatprep.subr.bf16.mxu0 0
        %7293 = vmatpush2.bf16.msra.mxu0 0
        %7294 = vmatprep.mubr.bf16.mxu0 0
        %7295 = vmatmul.mubr.bf16.gmra.mxu0 %v6755
        %v7296 = vpop.f32.mrf.mxu0
        %v7297 = vadd.f32 0.0, %v7296
        %v7298 = vpop.f32.mrf.mxu0
        %v7299 = vpop.f32.mrf.mxu0
        %v7300 = vadd.f32 0.0, %v7299
        %v7301 = vpop.f32.mrf.mxu0
        %7302 = vmatprep.mubr.bf16.mxu0 0
        %7303 = vmatmul.mubr.bf16.gmra.mxu0 %v6756
        %v7304 = vpop.f32.mrf.mxu0
        %v7305 = vadd.f32 0.0, %v7304
        %v7306 = vpop.f32.mrf.mxu0
        %v7307 = vpop.f32.mrf.mxu0
        %v7308 = vpop.f32.mrf.mxu0
        %7309 = vdwg.mxu0
        %v7310 = vpack.c.bf16 %v7300, %v7297
        %v7311 = vpack.c.bf16 %v7305, %v7305
        %v7314 = vunpack.c.l.b16 %v7212
        %v7315 = vunpack.c.l.b16 %v7213
        %v7316 = vpack.c.b16 %v7315, %v7314
        %v7318 = vsel %vm6926, %v7316, 0
        %v7321 = vsel %vm4847, %v7311, 0
        %7323 = vmatprep.subr.bf16.mxu0 0
        %7324 = vmatpush1.bf16.msra.mxu0 0
        %7325 = vmatprep.subr.bf16.mxu0 0
        %7326 = vmatpush1.bf16.msra.mxu0 0
        %7327 = vmatprep.subr.bf16.mxu0 0
        %7328 = vmatpush1.bf16.msra.mxu0 0
        %7329 = vmatprep.subr.bf16.mxu0 0
        %7330 = vmatpush1.bf16.msra.mxu0 0
        %7331 = vmatprep.subr.bf16.mxu0 0
        %7332 = vmatpush1.bf16.msra.mxu0 0
        %7333 = vmatprep.subr.bf16.mxu0 0
        %7334 = vmatpush1.bf16.msra.mxu0 0
        %7335 = vmatprep.subr.bf16.mxu0 0
        %7336 = vmatpush1.bf16.msra.mxu0 %v7321
        %7337 = vmatprep.subr.bf16.mxu0 0
        %7338 = vmatpush1.bf16.msra.mxu0 %v7310
        %7339 = vmatprep.subr.bf16.mxu0 0
        %7340 = vmatpush2.bf16.msra.mxu0 0
        %7341 = vmatprep.subr.bf16.mxu0 0
        %7342 = vmatpush2.bf16.msra.mxu0 0
        %7343 = vmatprep.subr.bf16.mxu0 0
        %7344 = vmatpush2.bf16.msra.mxu0 0
        %7345 = vmatprep.subr.bf16.mxu0 0
        %7346 = vmatpush2.bf16.msra.mxu0 0
        %7347 = vmatprep.subr.bf16.mxu0 0
        %7348 = vmatpush2.bf16.msra.mxu0 0
        %7349 = vmatprep.subr.bf16.mxu0 0
        %7350 = vmatpush2.bf16.msra.mxu0 0
        %7351 = vmatprep.subr.bf16.mxu0 0
        %7352 = vmatpush2.bf16.msra.mxu0 0
        %7353 = vmatprep.subr.bf16.mxu0 0
        %7354 = vmatpush2.bf16.msra.mxu0 0
        %7355 = vmatprep.mubr.bf16.mxu0 0
        %7356 = vmatmul.mubr.bf16.gmra.mxu0 %v7318
        %v7357 = vpop.f32.mrf.mxu0
        %v7358 = vadd.f32 0.0, %v7357
        %v7359 = vpop.f32.mrf.mxu0
        %v7360 = vpop.f32.mrf.mxu0
        %v7361 = vadd.f32 0.0, %v7360
        %v7362 = vpop.f32.mrf.mxu0
        %7363 = vdwg.mxu0
        %7364 = vmatprep.subr.bf16.mxu0 0
        %7365 = vmatpush1.bf16.msra.mxu0 %v7253
        %7366 = vmatprep.subr.bf16.mxu0 0
        %7367 = vmatpush1.bf16.msra.mxu0 %v7252
        %7368 = vmatprep.subr.bf16.mxu0 0
        %7369 = vmatpush1.bf16.msra.mxu0 %v7251
        %7370 = vmatprep.subr.bf16.mxu0 0
        %7371 = vmatpush1.bf16.msra.mxu0 %v7250
        %7372 = vmatprep.subr.bf16.mxu0 0
        %7373 = vmatpush1.bf16.msra.mxu0 %v7249
        %7374 = vmatprep.subr.bf16.mxu0 0
        %7375 = vmatpush1.bf16.msra.mxu0 %v7248
        %7376 = vmatprep.subr.bf16.mxu0 0
        %7377 = vmatpush1.bf16.msra.mxu0 %v7247
        %7378 = vmatprep.subr.bf16.mxu0 0
        %7379 = vmatpush1.bf16.msra.mxu0 %v7246
        %7380 = vmatprep.subr.bf16.mxu0 0
        %7381 = vmatpush2.bf16.msra.mxu0 0
        %7382 = vmatprep.subr.bf16.mxu0 0
        %7383 = vmatpush2.bf16.msra.mxu0 0
        %7384 = vmatprep.subr.bf16.mxu0 0
        %7385 = vmatpush2.bf16.msra.mxu0 0
        %7386 = vmatprep.subr.bf16.mxu0 0
        %7387 = vmatpush2.bf16.msra.mxu0 0
        %7388 = vmatprep.subr.bf16.mxu0 0
        %7389 = vmatpush2.bf16.msra.mxu0 0
        %7390 = vmatprep.subr.bf16.mxu0 0
        %7391 = vmatpush2.bf16.msra.mxu0 0
        %7392 = vmatprep.subr.bf16.mxu0 0
        %7393 = vmatpush2.bf16.msra.mxu0 0
        %7394 = vmatprep.subr.bf16.mxu0 0
        %7395 = vmatpush2.bf16.msra.mxu0 0
        %7396 = vmatprep.mubr.bf16.mxu0 0
        %7397 = vmatmul.mubr.bf16.gmra.mxu0 %v6757
        %v7398 = vpop.f32.mrf.mxu0
        %v7399 = vadd.f32 0.0, %v7398
        %v7400 = vpop.f32.mrf.mxu0
        %v7401 = vpop.f32.mrf.mxu0
        %v7402 = vadd.f32 0.0, %v7401
        %v7403 = vpop.f32.mrf.mxu0
        %7404 = vmatprep.mubr.bf16.mxu0 0
        %7405 = vmatmul.mubr.bf16.gmra.mxu0 %v6758
        %v7406 = vpop.f32.mrf.mxu0
        %v7407 = vadd.f32 0.0, %v7406
        %v7408 = vpop.f32.mrf.mxu0
        %v7409 = vpop.f32.mrf.mxu0
        %v7410 = vpop.f32.mrf.mxu0
        %7411 = vdwg.mxu0
        %v7412 = vpack.c.bf16 %v7402, %v7399
        %v7413 = vpack.c.bf16 %v7407, %v7407
        %v7415 = vsel %vm4847, %v7413, 0
        %7417 = vmatprep.subr.bf16.mxu0 0
        %7418 = vmatpush1.bf16.msra.mxu0 0
        %7419 = vmatprep.subr.bf16.mxu0 0
        %7420 = vmatpush1.bf16.msra.mxu0 0
        %7421 = vmatprep.subr.bf16.mxu0 0
        %7422 = vmatpush1.bf16.msra.mxu0 0
        %7423 = vmatprep.subr.bf16.mxu0 0
        %7424 = vmatpush1.bf16.msra.mxu0 0
        %7425 = vmatprep.subr.bf16.mxu0 0
        %7426 = vmatpush1.bf16.msra.mxu0 0
        %7427 = vmatprep.subr.bf16.mxu0 0
        %7428 = vmatpush1.bf16.msra.mxu0 0
        %7429 = vmatprep.subr.bf16.mxu0 0
        %7430 = vmatpush1.bf16.msra.mxu0 %v7415
        %7431 = vmatprep.subr.bf16.mxu0 0
        %7432 = vmatpush1.bf16.msra.mxu0 %v7412
        %7433 = vmatprep.subr.bf16.mxu0 0
        %7434 = vmatpush2.bf16.msra.mxu0 0
        %7435 = vmatprep.subr.bf16.mxu0 0
        %7436 = vmatpush2.bf16.msra.mxu0 0
        %7437 = vmatprep.subr.bf16.mxu0 0
        %7438 = vmatpush2.bf16.msra.mxu0 0
        %7439 = vmatprep.subr.bf16.mxu0 0
        %7440 = vmatpush2.bf16.msra.mxu0 0
        %7441 = vmatprep.subr.bf16.mxu0 0
        %7442 = vmatpush2.bf16.msra.mxu0 0
        %7443 = vmatprep.subr.bf16.mxu0 0
        %7444 = vmatpush2.bf16.msra.mxu0 0
        %7445 = vmatprep.subr.bf16.mxu0 0
        %7446 = vmatpush2.bf16.msra.mxu0 0
        %7447 = vmatprep.subr.bf16.mxu0 0
        %7448 = vmatpush2.bf16.msra.mxu0 0
        %7449 = vmatprep.mubr.bf16.mxu0 0
        %7450 = vmatmul.mubr.bf16.gmra.mxu0 %v7318
        %v7451 = vpop.f32.mrf.mxu0
        %v7452 = vadd.f32 0.0, %v7451
        %v7453 = vpop.f32.mrf.mxu0
        %v7454 = vpop.f32.mrf.mxu0
        %v7455 = vadd.f32 0.0, %v7454
        %v7456 = vpop.f32.mrf.mxu0
        %7457 = vdwg.mxu0
        %v7458 = vld [vmem:[#allocation19] sm:$0xf]
        %v7459 = vld [vmem:[#allocation19 + $0x4] sm:$0xf]
        %v7460 = vld [vmem:[#allocation19 + $0x8] sm:$0xf]
        %v7461 = vld [vmem:[#allocation19 + $0xc] sm:$0xf]
        %v7462 = vld [vmem:[#allocation19 + $0x10] sm:$0xf]
        %v7463 = vld [vmem:[#allocation19 + $0x14] sm:$0xf]
        %v7464 = vld [vmem:[#allocation19 + $0x18] sm:$0xf]
        %v7465 = vld [vmem:[#allocation19 + $0x1c] sm:$0xf]
        %v7466 = vld [vmem:[#allocation19 + $0x20] sm:$0xf]
        %v7467 = vld [vmem:[#allocation19 + $0x24] sm:$0xf]
        %v7468 = vld [vmem:[#allocation19 + $0x28] sm:$0xf]
        %v7469 = vld [vmem:[#allocation19 + $0x2c] sm:$0xf]
        %v7470 = vld [vmem:[#allocation19 + $0x30] sm:$0xf]
        %v7471 = vld [vmem:[#allocation19 + $0x34] sm:$0xf]
        %v7472 = vld [vmem:[#allocation19 + $0x38] sm:$0xf]
        %v7473 = vld [vmem:[#allocation19 + $0x3c] sm:$0xf]
        %v7474 = vld [vmem:[#allocation20] sm:$0xf]
        %v7475 = vmul.f32 %v7358, %v7358
        %v7476 = vmul.f32 %v7361, %v7361
        %v7477 = vmul.f32 %v7452, %v7452
        %v7478 = vmul.f32 %v7455, %v7455
        %v7479 = vmul.f32 %v7358, %v7452
        %v7480 = vmul.f32 %v7361, %v7455
        %v7481 = vpack.c.bf16 %v7361, %v7358
        %v7482 = vpack.c.bf16 %v7455, %v7452
        %v7483 = vpack.c.bf16 %v7476, %v7475
        %v7484 = vpack.c.bf16 %v7478, %v7477
        %v7485 = vpack.c.bf16 %v7480, %v7479
        %v7502 = vunpack.c.l.b16 %v7458
        %v7503 = vunpack.c.l.b16 %v7459
        %v7504 = vunpack.c.l.b16 %v7460
        %v7505 = vunpack.c.l.b16 %v7461
        %v7506 = vunpack.c.l.b16 %v7462
        %v7507 = vunpack.c.l.b16 %v7463
        %v7508 = vunpack.c.l.b16 %v7464
        %v7509 = vunpack.c.l.b16 %v7465
        %v7510 = vunpack.c.l.b16 %v7466
        %v7511 = vunpack.c.l.b16 %v7467
        %v7512 = vunpack.c.l.b16 %v7468
        %v7513 = vunpack.c.l.b16 %v7469
        %v7514 = vunpack.c.l.b16 %v7470
        %v7515 = vunpack.c.l.b16 %v7471
        %v7516 = vunpack.c.l.b16 %v7472
        %v7517 = vunpack.c.l.b16 %v7473
        %v7518 = vpack.c.b16 %v7503, %v7502
        %v7519 = vpack.c.b16 %v7505, %v7504
        %v7520 = vpack.c.b16 %v7507, %v7506
        %v7521 = vpack.c.b16 %v7509, %v7508
        %v7522 = vpack.c.b16 %v7511, %v7510
        %v7523 = vpack.c.b16 %v7513, %v7512
        %v7524 = vpack.c.b16 %v7515, %v7514
        %v7525 = vpack.c.b16 %v7517, %v7516
        %7534 = vmatprep.subr.bf16.mxu0 0
        %7535 = vmatpush1.bf16.msra.mxu0 %v7525
        %7536 = vmatprep.subr.bf16.mxu0 0
        %7537 = vmatpush1.bf16.msra.mxu0 %v7524
        %7538 = vmatprep.subr.bf16.mxu0 0
        %7539 = vmatpush1.bf16.msra.mxu0 %v7523
        %7540 = vmatprep.subr.bf16.mxu0 0
        %7541 = vmatpush1.bf16.msra.mxu0 %v7522
        %7542 = vmatprep.subr.bf16.mxu0 0
        %7543 = vmatpush1.bf16.msra.mxu0 %v7521
        %7544 = vmatprep.subr.bf16.mxu0 0
        %7545 = vmatpush1.bf16.msra.mxu0 %v7520
        %7546 = vmatprep.subr.bf16.mxu0 0
        %7547 = vmatpush1.bf16.msra.mxu0 %v7519
        %7548 = vmatprep.subr.bf16.mxu0 0
        %7549 = vmatpush1.bf16.msra.mxu0 %v7518
        %7550 = vmatprep.subr.bf16.mxu0 0
        %7551 = vmatpush2.bf16.msra.mxu0 0
        %7552 = vmatprep.subr.bf16.mxu0 0
        %7553 = vmatpush2.bf16.msra.mxu0 0
        %7554 = vmatprep.subr.bf16.mxu0 0
        %7555 = vmatpush2.bf16.msra.mxu0 0
        %7556 = vmatprep.subr.bf16.mxu0 0
        %7557 = vmatpush2.bf16.msra.mxu0 0
        %7558 = vmatprep.subr.bf16.mxu0 0
        %7559 = vmatpush2.bf16.msra.mxu0 0
        %7560 = vmatprep.subr.bf16.mxu0 0
        %7561 = vmatpush2.bf16.msra.mxu0 0
        %7562 = vmatprep.subr.bf16.mxu0 0
        %7563 = vmatpush2.bf16.msra.mxu0 0
        %7564 = vmatprep.subr.bf16.mxu0 0
        %7565 = vmatpush2.bf16.msra.mxu0 0
        %7566 = vmatprep.mubr.bf16.mxu0 0
        %7567 = vmatmul.mubr.bf16.gmra.mxu0 %v7481
        %v7568 = vpop.f32.mrf.mxu0
        %v7569 = vadd.f32 0.0, %v7568
        %v7570 = vpop.f32.mrf.mxu0
        %v7571 = vpop.f32.mrf.mxu0
        %v7572 = vadd.f32 0.0, %v7571
        %v7573 = vpop.f32.mrf.mxu0
        %7574 = vmatprep.mubr.bf16.mxu0 0
        %7575 = vmatmul.mubr.bf16.gmra.mxu0 %v7482
        %v7576 = vpop.f32.mrf.mxu0
        %v7577 = vadd.f32 0.0, %v7576
        %v7578 = vpop.f32.mrf.mxu0
        %v7579 = vpop.f32.mrf.mxu0
        %v7580 = vadd.f32 0.0, %v7579
        %v7581 = vpop.f32.mrf.mxu0
        %7582 = vmatprep.mubr.bf16.mxu0 0
        %7583 = vmatmul.mubr.bf16.gmra.mxu0 %v7483
        %v7584 = vpop.f32.mrf.mxu0
        %v7585 = vadd.f32 0.0, %v7584
        %v7586 = vpop.f32.mrf.mxu0
        %v7587 = vpop.f32.mrf.mxu0
        %v7588 = vadd.f32 0.0, %v7587
        %v7589 = vpop.f32.mrf.mxu0
        %7590 = vmatprep.mubr.bf16.mxu0 0
        %7591 = vmatmul.mubr.bf16.gmra.mxu0 %v7484
        %v7592 = vpop.f32.mrf.mxu0
        %v7593 = vadd.f32 0.0, %v7592
        %v7594 = vpop.f32.mrf.mxu0
        %v7595 = vpop.f32.mrf.mxu0
        %v7596 = vadd.f32 0.0, %v7595
        %v7597 = vpop.f32.mrf.mxu0
        %7598 = vmatprep.mubr.bf16.mxu0 0
        %7599 = vmatmul.mubr.bf16.gmra.mxu0 %v7485
        %v7600 = vpop.f32.mrf.mxu0
        %v7601 = vadd.f32 0.0, %v7600
        %v7602 = vpop.f32.mrf.mxu0
        %v7603 = vpop.f32.mrf.mxu0
        %v7604 = vadd.f32 0.0, %v7603
        %v7605 = vpop.f32.mrf.mxu0
        %7606 = vdwg.mxu0
        %v7607 = vpack.c.bf16 %v7572, %v7569
        %vm7608 = vcmask 130048
        %v7610 = vsel %vm7608, %v7474, 0
        %7612 = vmatprep.subr.bf16.mxu0 0
        %7613 = vmatpush1.bf16.msra.mxu0 0
        %7614 = vmatprep.subr.bf16.mxu0 0
        %7615 = vmatpush1.bf16.msra.mxu0 0
        %7616 = vmatprep.subr.bf16.mxu0 0
        %7617 = vmatpush1.bf16.msra.mxu0 0
        %7618 = vmatprep.subr.bf16.mxu0 0
        %7619 = vmatpush1.bf16.msra.mxu0 0
        %7620 = vmatprep.subr.bf16.mxu0 0
        %7621 = vmatpush1.bf16.msra.mxu0 0
        %7622 = vmatprep.subr.bf16.mxu0 0
        %7623 = vmatpush1.bf16.msra.mxu0 0
        %7624 = vmatprep.subr.bf16.mxu0 0
        %7625 = vmatpush1.bf16.msra.mxu0 0
        %7626 = vmatprep.subr.bf16.mxu0 0
        %7627 = vmatpush1.bf16.msra.mxu0 %v7607
        %7628 = vmatprep.subr.bf16.mxu0 0
        %7629 = vmatpush2.bf16.msra.mxu0 0
        %7630 = vmatprep.subr.bf16.mxu0 0
        %7631 = vmatpush2.bf16.msra.mxu0 0
        %7632 = vmatprep.subr.bf16.mxu0 0
        %7633 = vmatpush2.bf16.msra.mxu0 0
        %7634 = vmatprep.subr.bf16.mxu0 0
        %7635 = vmatpush2.bf16.msra.mxu0 0
        %7636 = vmatprep.subr.bf16.mxu0 0
        %7637 = vmatpush2.bf16.msra.mxu0 0
        %7638 = vmatprep.subr.bf16.mxu0 0
        %7639 = vmatpush2.bf16.msra.mxu0 0
        %7640 = vmatprep.subr.bf16.mxu0 0
        %7641 = vmatpush2.bf16.msra.mxu0 0
        %7642 = vmatprep.subr.bf16.mxu0 0
        %7643 = vmatpush2.bf16.msra.mxu0 0
        %7644 = vmatprep.mubr.bf16.mxu0 0
        %7645 = vmatmul.mubr.bf16.gmra.mxu0 %v7610
        %v7646 = vpop.f32.mrf.mxu0
        %v7647 = vadd.f32 0.0, %v7646
        %v7648 = vpop.f32.mrf.mxu0
        %v7649 = vpop.f32.mrf.mxu0
        %v7650 = vpop.f32.mrf.mxu0
        %7651 = vdwg.mxu0
        %v7652 = vpack.c.bf16 %v7580, %v7577
        %7653 = vmatprep.subr.bf16.mxu0 0
        %7654 = vmatpush1.bf16.msra.mxu0 0
        %7655 = vmatprep.subr.bf16.mxu0 0
        %7656 = vmatpush1.bf16.msra.mxu0 0
        %7657 = vmatprep.subr.bf16.mxu0 0
        %7658 = vmatpush1.bf16.msra.mxu0 0
        %7659 = vmatprep.subr.bf16.mxu0 0
        %7660 = vmatpush1.bf16.msra.mxu0 0
        %7661 = vmatprep.subr.bf16.mxu0 0
        %7662 = vmatpush1.bf16.msra.mxu0 0
        %7663 = vmatprep.subr.bf16.mxu0 0
        %7664 = vmatpush1.bf16.msra.mxu0 0
        %7665 = vmatprep.subr.bf16.mxu0 0
        %7666 = vmatpush1.bf16.msra.mxu0 0
        %7667 = vmatprep.subr.bf16.mxu0 0
        %7668 = vmatpush1.bf16.msra.mxu0 %v7652
        %7669 = vmatprep.subr.bf16.mxu0 0
        %7670 = vmatpush2.bf16.msra.mxu0 0
        %7671 = vmatprep.subr.bf16.mxu0 0
        %7672 = vmatpush2.bf16.msra.mxu0 0
        %7673 = vmatprep.subr.bf16.mxu0 0
        %7674 = vmatpush2.bf16.msra.mxu0 0
        %7675 = vmatprep.subr.bf16.mxu0 0
        %7676 = vmatpush2.bf16.msra.mxu0 0
        %7677 = vmatprep.subr.bf16.mxu0 0
        %7678 = vmatpush2.bf16.msra.mxu0 0
        %7679 = vmatprep.subr.bf16.mxu0 0
        %7680 = vmatpush2.bf16.msra.mxu0 0
        %7681 = vmatprep.subr.bf16.mxu0 0
        %7682 = vmatpush2.bf16.msra.mxu0 0
        %7683 = vmatprep.subr.bf16.mxu0 0
        %7684 = vmatpush2.bf16.msra.mxu0 0
        %7685 = vmatprep.mubr.bf16.mxu0 0
        %7686 = vmatmul.mubr.bf16.gmra.mxu0 %v7610
        %v7687 = vpop.f32.mrf.mxu0
        %v7688 = vadd.f32 0.0, %v7687
        %v7689 = vpop.f32.mrf.mxu0
        %v7690 = vpop.f32.mrf.mxu0
        %v7691 = vpop.f32.mrf.mxu0
        %7692 = vdwg.mxu0
        %v7693 = vpack.c.bf16 %v7588, %v7585
        %7694 = vmatprep.subr.bf16.mxu0 0
        %7695 = vmatpush1.bf16.msra.mxu0 0
        %7696 = vmatprep.subr.bf16.mxu0 0
        %7697 = vmatpush1.bf16.msra.mxu0 0
        %7698 = vmatprep.subr.bf16.mxu0 0
        %7699 = vmatpush1.bf16.msra.mxu0 0
        %7700 = vmatprep.subr.bf16.mxu0 0
        %7701 = vmatpush1.bf16.msra.mxu0 0
        %7702 = vmatprep.subr.bf16.mxu0 0
        %7703 = vmatpush1.bf16.msra.mxu0 0
        %7704 = vmatprep.subr.bf16.mxu0 0
        %7705 = vmatpush1.bf16.msra.mxu0 0
        %7706 = vmatprep.subr.bf16.mxu0 0
        %7707 = vmatpush1.bf16.msra.mxu0 0
        %7708 = vmatprep.subr.bf16.mxu0 0
        %7709 = vmatpush1.bf16.msra.mxu0 %v7693
        %7710 = vmatprep.subr.bf16.mxu0 0
        %7711 = vmatpush2.bf16.msra.mxu0 0
        %7712 = vmatprep.subr.bf16.mxu0 0
        %7713 = vmatpush2.bf16.msra.mxu0 0
        %7714 = vmatprep.subr.bf16.mxu0 0
        %7715 = vmatpush2.bf16.msra.mxu0 0
        %7716 = vmatprep.subr.bf16.mxu0 0
        %7717 = vmatpush2.bf16.msra.mxu0 0
        %7718 = vmatprep.subr.bf16.mxu0 0
        %7719 = vmatpush2.bf16.msra.mxu0 0
        %7720 = vmatprep.subr.bf16.mxu0 0
        %7721 = vmatpush2.bf16.msra.mxu0 0
        %7722 = vmatprep.subr.bf16.mxu0 0
        %7723 = vmatpush2.bf16.msra.mxu0 0
        %7724 = vmatprep.subr.bf16.mxu0 0
        %7725 = vmatpush2.bf16.msra.mxu0 0
        %7726 = vmatprep.mubr.bf16.mxu0 0
        %7727 = vmatmul.mubr.bf16.gmra.mxu0 %v7610
        %v7728 = vpop.f32.mrf.mxu0
        %v7729 = vadd.f32 0.0, %v7728
        %v7730 = vpop.f32.mrf.mxu0
        %v7731 = vpop.f32.mrf.mxu0
        %v7732 = vpop.f32.mrf.mxu0
        %7733 = vdwg.mxu0
        %v7734 = vpack.c.bf16 %v7596, %v7593
        %7735 = vmatprep.subr.bf16.mxu0 0
        %7736 = vmatpush1.bf16.msra.mxu0 0
        %7737 = vmatprep.subr.bf16.mxu0 0
        %7738 = vmatpush1.bf16.msra.mxu0 0
        %7739 = vmatprep.subr.bf16.mxu0 0
        %7740 = vmatpush1.bf16.msra.mxu0 0
        %7741 = vmatprep.subr.bf16.mxu0 0
        %7742 = vmatpush1.bf16.msra.mxu0 0
        %7743 = vmatprep.subr.bf16.mxu0 0
        %7744 = vmatpush1.bf16.msra.mxu0 0
        %7745 = vmatprep.subr.bf16.mxu0 0
        %7746 = vmatpush1.bf16.msra.mxu0 0
        %7747 = vmatprep.subr.bf16.mxu0 0
        %7748 = vmatpush1.bf16.msra.mxu0 0
        %7749 = vmatprep.subr.bf16.mxu0 0
        %7750 = vmatpush1.bf16.msra.mxu0 %v7734
        %7751 = vmatprep.subr.bf16.mxu0 0
        %7752 = vmatpush2.bf16.msra.mxu0 0
        %7753 = vmatprep.subr.bf16.mxu0 0
        %7754 = vmatpush2.bf16.msra.mxu0 0
        %7755 = vmatprep.subr.bf16.mxu0 0
        %7756 = vmatpush2.bf16.msra.mxu0 0
        %7757 = vmatprep.subr.bf16.mxu0 0
        %7758 = vmatpush2.bf16.msra.mxu0 0
        %7759 = vmatprep.subr.bf16.mxu0 0
        %7760 = vmatpush2.bf16.msra.mxu0 0
        %7761 = vmatprep.subr.bf16.mxu0 0
        %7762 = vmatpush2.bf16.msra.mxu0 0
        %7763 = vmatprep.subr.bf16.mxu0 0
        %7764 = vmatpush2.bf16.msra.mxu0 0
        %7765 = vmatprep.subr.bf16.mxu0 0
        %7766 = vmatpush2.bf16.msra.mxu0 0
        %7767 = vmatprep.mubr.bf16.mxu0 0
        %7768 = vmatmul.mubr.bf16.gmra.mxu0 %v7610
        %v7769 = vpop.f32.mrf.mxu0
        %v7770 = vadd.f32 0.0, %v7769
        %v7771 = vpop.f32.mrf.mxu0
        %v7772 = vpop.f32.mrf.mxu0
        %v7773 = vpop.f32.mrf.mxu0
        %7774 = vdwg.mxu0
        %v7775 = vpack.c.bf16 %v7604, %v7601
        %7776 = vmatprep.subr.bf16.mxu0 0
        %7777 = vmatpush1.bf16.msra.mxu0 0
        %7778 = vmatprep.subr.bf16.mxu0 0
        %7779 = vmatpush1.bf16.msra.mxu0 0
        %7780 = vmatprep.subr.bf16.mxu0 0
        %7781 = vmatpush1.bf16.msra.mxu0 0
        %7782 = vmatprep.subr.bf16.mxu0 0
        %7783 = vmatpush1.bf16.msra.mxu0 0
        %7784 = vmatprep.subr.bf16.mxu0 0
        %7785 = vmatpush1.bf16.msra.mxu0 0
        %7786 = vmatprep.subr.bf16.mxu0 0
        %7787 = vmatpush1.bf16.msra.mxu0 0
        %7788 = vmatprep.subr.bf16.mxu0 0
        %7789 = vmatpush1.bf16.msra.mxu0 0
        %7790 = vmatprep.subr.bf16.mxu0 0
        %7791 = vmatpush1.bf16.msra.mxu0 %v7775
        %7792 = vmatprep.subr.bf16.mxu0 0
        %7793 = vmatpush2.bf16.msra.mxu0 0
        %7794 = vmatprep.subr.bf16.mxu0 0
        %7795 = vmatpush2.bf16.msra.mxu0 0
        %7796 = vmatprep.subr.bf16.mxu0 0
        %7797 = vmatpush2.bf16.msra.mxu0 0
        %7798 = vmatprep.subr.bf16.mxu0 0
        %7799 = vmatpush2.bf16.msra.mxu0 0
        %7800 = vmatprep.subr.bf16.mxu0 0
        %7801 = vmatpush2.bf16.msra.mxu0 0
        %7802 = vmatprep.subr.bf16.mxu0 0
        %7803 = vmatpush2.bf16.msra.mxu0 0
        %7804 = vmatprep.subr.bf16.mxu0 0
        %7805 = vmatpush2.bf16.msra.mxu0 0
        %7806 = vmatprep.subr.bf16.mxu0 0
        %7807 = vmatpush2.bf16.msra.mxu0 0
        %7808 = vmatprep.mubr.bf16.mxu0 0
        %7809 = vmatmul.mubr.bf16.gmra.mxu0 %v7610
        %v7810 = vpop.f32.mrf.mxu0
        %v7811 = vadd.f32 0.0, %v7810
        %v7812 = vpop.f32.mrf.mxu0
        %v7813 = vpop.f32.mrf.mxu0
        %v7814 = vpop.f32.mrf.mxu0
        %7815 = vdwg.mxu0
        %v7816 = vmul.f32 %v7647, %v7647
        %v7817 = vmul.f32 %v7688, %v7688
        %v7818 = vmul.f32 %v7647, %v7688
        %v7819 = vsub.f32 %v7729, %v7816
        %v7820 = vsub.f32 %v7770, %v7817
        %v7821 = vsub.f32 %v7811, %v7818
        %v7822 = vmul.f32 %v7821, 2.0
        %v7823 = vadd.f32 %v7822, 0.0009
        %v7824 = vadd.f32 %v7819, %v7820
        %v7825 = vadd.f32 %v7824, 0.0009
        %v7826 = vrcp.pop %v7825
        %v7827 = vmul.f32 %v7823, %v7826
        %v7828 = vmul.f32 %v7818, 2.0
        %v7829 = vadd.f32 %v7828, 0.0001
        %v7830 = vadd.f32 %v7816, %v7817
        %v7831 = vadd.f32 %v7830, 0.0001
        %v7832 = vrcp.pop %v7831
        %v7833 = vmul.f32 %v7829, %v7832
        %v7834 = vmul.f32 %v7833, %v7827
        %v7835 = vsub.f32 %v7834, 1.0
        %7836 = vadd.xlane.f32.xlu0 %v7835
        %v7837 = vpop.xlane.xlu0 %7836
        %v7838 = vrot.slane %v7837, 4
        %v7839 = vadd.f32 %v7837, %v7838
        %v7840 = vrot.slane %v7839, 2
        %v7841 = vadd.f32 %v7839, %v7840
        %v7842 = vrot.slane %v7841, 1
        %v7843 = vadd.f32 %v7841, %v7842
        %s7844 = vtos %v7843
        %s7845 = sadd.f32 %s7844, 1.0
        %v7846 = vlaneseq
        %v7847 = vshrl.u32 %v7846, 7
        %vm7848 = vcmp.eq.s32.totalorder %v7847, 0
        %v7849 = vstv %s3809
        %v7850 = vsel %vm7848, %v7849, 0.0
        %vm7851 = vcmp.eq.s32.totalorder %v7847, 1
        %v7852 = vstv %s5401
        %v7853 = vsel %vm7851, %v7852, %v7850
        %vm7854 = vcmp.eq.s32.totalorder %v7847, 2
        %v7855 = vstv %s6439
        %v7856 = vsel %vm7854, %v7855, %v7853
        %vm7857 = vcmp.eq.s32.totalorder %v7847, 3
        %v7858 = vstv %s7195
        %v7859 = vsel %vm7857, %v7858, %v7856
        %vm7860 = vcmp.eq.s32.totalorder %v7847, 4
        %v7861 = vstv %s7845
        %v7862 = vsel %vm7860, %v7861, %v7859
        %7863 = vst [vmem:[%s946] sm:$0xff] %v7862
        %s7864 = sand.u32 %s487, 1
        %s7865 = scalar_lea.sflag [#allocation4], %s7864
        %s7866 = sand.u32 %s487, 1
        %s7867 = smul.addr %s7866, 8
        %s7868 = scalar_lea.vmem [#allocation34], %s7867
        // Predicated region
        $region181: #{tpu_custom_call.1} parent=99 // pred_check
          %p7869 = pneg %p497
        $region182: #{tpu_custom_call.1} parent=99 // pred_check_branch
          %7871 = sbr.rel (%p7869) target = $region184
        $region183: #{tpu_custom_call.1} parent=99 // pred_region
          %s7873 = ssub.s32 128, 128
          %7874 = vsyncadd %s7865, %s7873
          %s7875 = smul.addr %s49, 128
          %s7876 = scalar_lea.hbm %s20, %s7875
          %s7878 = sshll.u32 %s7868, 4
          %s7879 = int_to_ptr.vmem [resolvable:$true] %s7878
          %7881 = dma.vmem_to_hbm [thread:$0]  %s7879, 128, %s7876, %s7865
        $region184: #{tpu_custom_call.1} parent=99 // pred_fallthru
          _
      $region100: #{tpu_custom_call.1} parent=5 // pred_fallthru
        _
      %p7882 = scmp.le.s32.totalorder 2, %s44
      // Predicated region
      $region185: #{tpu_custom_call.1} parent=5 // pred_check
        %p7883 = pneg %p7882
      $region186: #{tpu_custom_call.1} parent=5 // pred_check_branch
        %7885 = sbr.rel (%p7883) target = $region188
      $region187: #{tpu_custom_call.1} parent=5 // pred_region
        %s7886 = ssub.s32 %s44, 2
        // Predicated region
        $region189: #{tpu_custom_call.1} parent=187 // pred_check
          %p7887 = pneg %p503
        $region190: #{tpu_custom_call.1} parent=187 // pred_check_branch
          %7889 = sbr.rel (%p7887) target = $region192
        $region191: #{tpu_custom_call.1} parent=187 // pred_region
          %s7890 = sand.u32 %s488, 1
          %s7891 = scalar_lea.sflag [#allocation4], %s7890
          %s7892 = sand.u32 %s488, 1
          %s7893 = smul.addr %s7892, 8
          %s7894 = scalar_lea.vmem [#allocation34], %s7893
          %7895 = dma.done %s7891, 128
        $region192: #{tpu_custom_call.1} parent=187 // pred_fallthru
          _
      $region188: #{tpu_custom_call.1} parent=5 // pred_fallthru
        _
    $region6: #{tpu_custom_call.1} parent=1 // loop_footer
      %s48 = sadd.s32 1, %s44
    $region7: #{tpu_custom_call.1} parent=1 // loop_footer_branch
      %43 = sbr.rel target = $region3
    $region8: #{tpu_custom_call.1} parent=1 // loop_exit
      _
    %7896 = vsyncpa [#allocation3], 1
    %s7897 = scalar_lea.sflag [#allocation3], 1
    %7898 = vsyncpa %s7897, 1
    %7899 = vsyncpa [#allocation6], 1
    %s7900 = scalar_lea.sflag [#allocation6], 1
    %7901 = vsyncpa %s7900, 1
    %7902 = vsyncpa [#allocation9], 1
    %7903 = vsyncpa [#allocation12], 1
    %7904 = vsyncpa [#allocation15], 1
    %7905 = vsyncpa [#allocation18], 1
    %7906 = vsyncpa [#allocation21], 1
    %7907 = vsyncpa [#allocation24], 1
    %7908 = vsyncpa [#allocation27], 1
    %7909 = vsyncpa [#allocation30], 1
    %7910 = vsyncpa [#allocation33], 1
    %7911 = vsyncpa [#allocation4], 1
    %s7912 = scalar_lea.sflag [#allocation4], 1
    %7913 = vsyncpa %s7912, 1

</llo_original>
